<compile_context>
chip_gen: v7x
topology: tpu7x:2x2x1
jax: 0.10.0
libtpu: 0.0.40
codegen_flags: <defaults>
</compile_context>

<pallas_src>
import functools

import jax
import jax.numpy as jnp
from jax.experimental import pallas as pl
from jax.experimental.pallas import tpu as pltpu


# ------------------------------ helpers -------------------------------------

def _round_up(x, m):
    return (x + m - 1) // m * m


# --------------------------- tiled MXU matmul --------------------------------

def _matmul_kernel(a_ref, b_ref, o_ref, acc_ref, *, act):
    @pl.when(pl.program_id(2) == 0)
    def _():
        acc_ref[...] = jnp.zeros_like(acc_ref)

    acc_ref[...] += jnp.dot(a_ref[...], b_ref[...],
                            preferred_element_type=jnp.float32)

    @pl.when(pl.program_id(2) == pl.num_programs(2) - 1)
    def _():
        y = acc_ref[...]
        if act == "tanh":
            y = jnp.tanh(y)
        o_ref[...] = y


def pallas_matmul(a, b, act="none"):
    """(M, K) @ (K, N) -> (M, N) f32.

    Tiled MXU matmul: bf16 operands, f32 VMEM accumulator across the K grid axis,
    optional tanh fused into the store epilogue.  Inputs are zero-padded to tile
    multiples (zero K-padding is exact) and the result is sliced back.
    """
    M, K = a.shape
    _, N = b.shape
    tm = min(256, _round_up(M, 16))     # multiple of 16 (bf16 sublane packing)
    tn = min(256, _round_up(N, 128))    # lane-dense output tiles
    tk = min(512, _round_up(K, 128))
    Mp, Kp, Np = _round_up(M, tm), _round_up(K, tk), _round_up(N, tn)
    a_p = jnp.pad(a, ((0, Mp - M), (0, Kp - K))).astype(jnp.bfloat16)
    b_p = jnp.pad(b, ((0, Kp - K), (0, Np - N))).astype(jnp.bfloat16)
    grid = (Mp // tm, Np // tn, Kp // tk)
    out = pl.pallas_call(
        functools.partial(_matmul_kernel, act=act),
        out_shape=jax.ShapeDtypeStruct((Mp, Np), jnp.float32),
        grid=grid,
        in_specs=[pl.BlockSpec((tm, tk), lambda i, j, k: (i, k)),
                  # weight tile independent of i -> not re-DMA'd per M tile
                  pl.BlockSpec((tk, tn), lambda i, j, k: (k, j))],
        out_specs=pl.BlockSpec((tm, tn), lambda i, j, k: (i, j)),
        scratch_shapes=[pltpu.VMEM((tm, tn), jnp.float32)],
        compiler_params=pltpu.CompilerParams(
            dimension_semantics=("parallel", "parallel", "arbitrary")),
    )(a_p, b_p)
    return out[:M, :N]


# ------------------- InstanceNorm (+ReLU, +fused residual) -------------------

def _instnorm_kernel(x_ref, g_ref, b_ref, o_ref, *, act):
    x = x_ref[0]                                      # (HW, Ct), f32
    mean = jnp.mean(x, axis=0, keepdims=True)
    var = jnp.mean(jnp.square(x - mean), axis=0, keepdims=True)
    y = (x - mean) * jax.lax.rsqrt(var + 1e-5)
    y = y * g_ref[...] + b_ref[...]
    if act == "relu":
        y = jnp.maximum(y, 0.0)
    o_ref[0] = y


def _instnorm_skip_kernel(x_ref, g_ref, b_ref, skip_ref, o_ref):
    # InstanceNorm (no activation) + fused residual add.
    x = x_ref[0]
    mean = jnp.mean(x, axis=0, keepdims=True)
    var = jnp.mean(jnp.square(x - mean), axis=0, keepdims=True)
    y = (x - mean) * jax.lax.rsqrt(var + 1e-5)
    y = y * g_ref[...] + b_ref[...]
    o_ref[0] = y + skip_ref[0]


def pallas_instance_norm(x, gamma, beta, act="none", skip=None):
    """x: (N, HW, C) f32.  Per-sample / per-channel norm over HW, affine,
    optional ReLU, optional fused residual add.  Tiled over (sample, C-block);
    per-channel statistics are independent so no cross-tile reduction is needed.
    """
    # TODO(synk): for very large HW (e.g. 128x128 images) also tile HW with a
    # two-pass stats/normalize sweep to bound VMEM; not needed at demo sizes.
    N, HW, C = x.shape
    ct = 128 if (C % 128 == 0) else C
    grid = (N, C // ct)
    g = gamma.reshape(1, C).astype(jnp.float32)
    b = beta.reshape(1, C).astype(jnp.float32)

    x_spec = pl.BlockSpec((1, HW, ct), lambda n, cb: (n, 0, cb))
    p_spec = pl.BlockSpec((1, ct), lambda n, cb: (0, cb))
    in_specs = [x_spec, p_spec, p_spec]
    args = [x, g, b]
    if skip is None:
        kern = functools.partial(_instnorm_kernel, act=act)
    else:
        in_specs.append(x_spec)
        args.append(skip)
        kern = _instnorm_skip_kernel

    return pl.pallas_call(
        kern,
        out_shape=jax.ShapeDtypeStruct((N, HW, C), jnp.float32),
        grid=grid,
        in_specs=in_specs,
        out_specs=x_spec,
        compiler_params=pltpu.CompilerParams(
            dimension_semantics=("parallel", "parallel")),
    )(*args)


# ------------------------- conv lowering (JAX glue) ---------------------------

def _im2col(x, k, stride, pad):
    # x: (N, H, W, C) NHWC; pad: ((top, bottom), (left, right))
    # -> (N, Ho*Wo, k*k*C) with patch ordering (kh, kw, cin)
    N, H, W, C = x.shape
    (pt, pb), (pleft, pright) = pad
    xp = jnp.pad(x, ((0, 0), (pt, pb), (pleft, pright), (0, 0)))
    Ho = (H + pt + pb - k) // stride + 1
    Wo = (W + pleft + pright - k) // stride + 1
    cols = []
    for di in range(k):
        for dj in range(k):
            cols.append(xp[:, di:di + stride * Ho:stride,
                           dj:dj + stride * Wo:stride, :])
    cols = jnp.concatenate(cols, axis=-1)              # (N, Ho, Wo, k*k*C)
    return cols.reshape(N, Ho * Wo, k * k * C), Ho, Wo


def conv2d(x, w_flat, k, stride, pad, act="none"):
    # x: (N, H, W, Cin);  w_flat: (k*k*Cin, Cout) flattened as (kh, kw, cin)
    # TODO(synk): fold patch extraction into the matmul's K grid axis (shifted-
    # window index maps) to avoid the k^2 im2col materialization at large sizes.
    if isinstance(pad, int):
        pad = ((pad, pad), (pad, pad))
    N = x.shape[0]
    cols, Ho, Wo = _im2col(x.astype(jnp.bfloat16), k, stride, pad)
    KKC = cols.shape[-1]
    Cout = w_flat.shape[1]
    out = pallas_matmul(cols.reshape(N * Ho * Wo, KKC), w_flat, act=act)
    return out.reshape(N, Ho, Wo, Cout)


def conv_transpose2d(x, subs):
    """ConvTranspose2d(k=4, s=2, p=1) via 4 stride-1 sub-pixel 2x2 convolutions.

    subs: list of 4 flattened (2*2*Cin, Cout) kernels ordered
          [(even_y,even_x), (even_y,odd_x), (odd_y,even_x), (odd_y,odd_x)].
    out[:, 2m+py, 2n+px, :] = subconv_{py,px}(x)[:, m, n, :]
    """
    N, H, W, _ = x.shape
    cout = subs[0].shape[1]
    quads = []
    for py in (0, 1):
        for px in (0, 1):
            pad = (((1, 0) if py == 0 else (0, 1)),
                   ((1, 0) if px == 0 else (0, 1)))
            quads.append(conv2d(x, subs[py * 2 + px], 2, 1, pad))
    q = jnp.stack(quads, axis=0).reshape(2, 2, N, H, W, cout)
    out = jnp.transpose(q, (2, 3, 0, 4, 1, 5))         # (N, H, py, W, px, C)
    return out.reshape(N, 2 * H, 2 * W, cout)


# --------------------------- parameter construction ---------------------------

def conv_weight(key, cin, cout, k):
    # PyTorch Conv2d weight (cout, cin, kh, kw) -> (kh*kw*cin, cout) (im2col order)
    w = jax.random.normal(key, (cout, cin, k, k), jnp.float32) * 0.05
    return jnp.transpose(w, (2, 3, 1, 0)).reshape(k * k * cin, cout)


def convT_subkernels(w):
    # w: PyTorch ConvTranspose2d weight (cin, cout, 4, 4), stride=2, pad=1.
    # Even output parity uses taps ky in {3,1}; odd parity uses {2,0} (per axis).
    cin, cout = w.shape[0], w.shape[1]
    sel = {0: jnp.array([3, 1]), 1: jnp.array([2, 0])}
    subs = []
    for py in (0, 1):
        for px in (0, 1):
            sub = w[:, :, sel[py], :][:, :, :, sel[px]]        # (cin, cout, 2, 2)
            sub = jnp.transpose(sub, (2, 3, 0, 1)).reshape(4 * cin, cout)
            subs.append(sub)
    return subs


def convT_weight(key, cin, cout):
    w = jax.random.normal(key, (cin, cout, 4, 4), jnp.float32) * 0.05
    return convT_subkernels(w)


def init_generator_params(key, conv_dim=64, c_dim=5, repeat_num=6):
    n_keys = 1 + 2 + 2 * repeat_num + 2 + 1
    keys = jax.random.split(key, n_keys)
    ki = iter(range(n_keys))
    p = {}
    p["conv1_w"] = conv_weight(keys[next(ki)], 3 + c_dim, conv_dim, 7)
    p["in1_g"] = jnp.ones((conv_dim,), jnp.float32)
    p["in1_b"] = jnp.zeros((conv_dim,), jnp.float32)
    curr = conv_dim
    p["down"] = []
    for _ in range(2):
        p["down"].append({"w": conv_weight(keys[next(ki)], curr, curr * 2, 4),
                          "g": jnp.ones((curr * 2,), jnp.float32),
                          "b": jnp.zeros((curr * 2,), jnp.float32)})
        curr *= 2
    p["res"] = []
    for _ in range(repeat_num):
        p["res"].append({"w1": conv_weight(keys[next(ki)], curr, curr, 3),
                         "g1": jnp.ones((curr,), jnp.float32),
                         "b1": jnp.zeros((curr,), jnp.float32),
                         "w2": conv_weight(keys[next(ki)], curr, curr, 3),
                         "g2": jnp.ones((curr,), jnp.float32),
                         "b2": jnp.zeros((curr,), jnp.float32)})
    p["up"] = []
    for _ in range(2):
        p["up"].append({"subs": convT_weight(keys[next(ki)], curr, curr // 2),
                        "g": jnp.ones((curr // 2,), jnp.float32),
                        "b": jnp.zeros((curr // 2,), jnp.float32)})
        curr //= 2
    p["conv_out_w"] = conv_weight(keys[next(ki)], curr, 3, 7)
    return p


# ----------------------------------- forward ----------------------------------

def _conv_in_relu(x, w, g, b, k, stride, pad):
    y = conv2d(x, w, k, stride, pad)
    n, ho, wo, c = y.shape
    y = pallas_instance_norm(y.reshape(n, ho * wo, c), g, b, act="relu")
    return y.reshape(n, ho, wo, c)


@jax.jit
def generator_forward(params, x_nchw, c):
    N, _, H, W = x_nchw.shape
    c_map = jnp.broadcast_to(c[:, :, None, None].astype(jnp.float32),
                             (N, c.shape[1], H, W))
    x = jnp.concatenate([x_nchw.astype(jnp.float32), c_map], axis=1)
    x = jnp.transpose(x, (0, 2, 3, 1))                                 # NHWC

    # stem: 7x7 conv, IN, ReLU
    x = _conv_in_relu(x, params["conv1_w"], params["in1_g"], params["in1_b"], 7, 1, 3)

    # down-sampling
    for layer in params["down"]:
        x = _conv_in_relu(x, layer["w"], layer["g"], layer["b"], 4, 2, 1)

    # residual bottleneck (residual add fused into the second InstanceNorm)
    for blk in params["res"]:
        n, ho, wo, cc = x.shape
        y = conv2d(x, blk["w1"], 3, 1, 1)
        y = pallas_instance_norm(y.reshape(n, ho * wo, cc), blk["g1"], blk["b1"],
                                 act="relu").reshape(n, ho, wo, cc)
        y = conv2d(y, blk["w2"], 3, 1, 1)
        x = pallas_instance_norm(y.reshape(n, ho * wo, cc), blk["g2"], blk["b2"],
                                 act="none",
                                 skip=x.reshape(n, ho * wo, cc)).reshape(n, ho, wo, cc)

    # up-sampling (sub-pixel transposed conv)
    for layer in params["up"]:
        y = conv_transpose2d(x, layer["subs"])
        n, ho, wo, cc = y.shape
        x = pallas_instance_norm(y.reshape(n, ho * wo, cc), layer["g"], layer["b"],
                                 act="relu").reshape(n, ho, wo, cc)

    # output head: 7x7 conv with tanh fused into the matmul epilogue
    y = conv2d(x, params["conv_out_w"], 7, 1, 3, act="tanh")
    return jnp.transpose(y, (0, 3, 1, 2))                              # back to NCHW


# ------------------------------------ main -------------------------------------

if __name__ == "__main__":
    # Small but structurally faithful config: conv_dim=32, c_dim=5, repeat_num=2.
    conv_dim, c_dim, repeat_num = 32, 5, 2
    key = jax.random.PRNGKey(0)
    kp, kx, kc = jax.random.split(key, 3)

    params = init_generator_params(kp, conv_dim=conv_dim, c_dim=c_dim,
                                   repeat_num=repeat_num)
    x = jax.random.normal(kx, (2, 3, 16, 16), jnp.float32)   # NCHW, like PyTorch
    c = jax.random.normal(kc, (2, c_dim), jnp.float32)

    out = generator_forward(params, x, c)
    out = jax.block_until_ready(out)
    assert out.shape == (2, 3, 16, 16), out.shape
    assert bool(jnp.all(jnp.isfinite(out)))
    print("KERNEL_OK")
</pallas_src>

<mosaic_0001>
module attributes {stable_mosaic.version = 11 : i64} {
  func.func @_matmul_kernel(%arg0: i32, %arg1: i32, %arg2: i32, %arg3: memref<256x512xbf16, #tpu.memory_space<vmem>>, %arg4: memref<512x128xbf16, #tpu.memory_space<vmem>>, %arg5: memref<256x128xf32, #tpu.memory_space<vmem>>, %arg6: memref<256x128xf32, #tpu.memory_space<vmem>>) attributes {dimension_semantics = [#tpu.dimension_semantics<parallel>, #tpu.dimension_semantics<parallel>, #tpu.dimension_semantics<arbitrary>], iteration_bounds = array<i64: 2, 1, 1>, scalar_prefetch = 0 : i64, scratch_operands = 1 : i64, tpu.core_type = #tpu.core_type<tc>, window_params = [{transform_indices = @transform_0, window_bounds = array<i64: 256, 512>}, {transform_indices = @transform_1, window_bounds = array<i64: 512, 128>}, {transform_indices = @transform_2, window_bounds = array<i64: 256, 128>}]} {
    %c0_i32 = arith.constant 0 : i32
    %0 = arith.cmpi eq, %arg2, %c0_i32 : i32
    %1 = arith.extui %0 : i1 to i32
    %c0_i32_0 = arith.constant 0 : i32
    %2 = arith.cmpi ne, %1, %c0_i32_0 : i32
    scf.if %2 {
      %cst_10 = arith.constant 0.000000e+00 : f32
      %12 = vector.broadcast %cst_10 : f32 to vector<256x128xf32>
      %c0_11 = arith.constant 0 : index
      %c0_12 = arith.constant 0 : index
      %13 = vector.load %arg6[%c0_11, %c0_12] : memref<256x128xf32, #tpu.memory_space<vmem>>, vector<256x128xf32>
      tpu.vector_store %arg6[%c0_11, %c0_12], %12 {strides = array<i32>} : memref<256x128xf32, #tpu.memory_space<vmem>>, vector<256x128xf32>,
    } else {
    }
    %c0 = arith.constant 0 : index
    %c0_1 = arith.constant 0 : index
    %3 = vector.load %arg6[%c0, %c0_1] : memref<256x128xf32, #tpu.memory_space<vmem>>, vector<256x128xf32>
    %c0_2 = arith.constant 0 : index
    %c0_3 = arith.constant 0 : index
    %4 = vector.load %arg3[%c0_2, %c0_3] : memref<256x512xbf16, #tpu.memory_space<vmem>>, vector<256x512xbf16>
    %c0_4 = arith.constant 0 : index
    %c0_5 = arith.constant 0 : index
    %5 = vector.load %arg4[%c0_4, %c0_5] : memref<512x128xbf16, #tpu.memory_space<vmem>>, vector<512x128xbf16>
    %cst = arith.constant dense<0.000000e+00> : vector<256x128xf32>
    %6 = tpu.matmul %4, %5, %cst {dimension_numbers = #tpu.dot_dimension_numbers<[1], [0], [0], [1], [0, 0, 1, 1], [], []>} : vector<256x512xbf16>, vector<512x128xbf16>, vector<256x128xf32> -> vector<256x128xf32>
    %7 = arith.addf %3, %6 : vector<256x128xf32>
    %c0_6 = arith.constant 0 : index
    %c0_7 = arith.constant 0 : index
    %8 = vector.load %arg6[%c0_6, %c0_7] : memref<256x128xf32, #tpu.memory_space<vmem>>, vector<256x128xf32>
    tpu.vector_store %arg6[%c0_6, %c0_7], %7 {strides = array<i32>} : memref<256x128xf32, #tpu.memory_space<vmem>>, vector<256x128xf32>,
    %c0_i32_8 = arith.constant 0 : i32
    %9 = arith.cmpi eq, %arg2, %c0_i32_8 : i32
    %10 = arith.extui %9 : i1 to i32
    %c0_i32_9 = arith.constant 0 : i32
    %11 = arith.cmpi ne, %10, %c0_i32_9 : i32
    scf.if %11 {
      %c0_10 = arith.constant 0 : index
      %c0_11 = arith.constant 0 : index
      %12 = vector.load %arg6[%c0_10, %c0_11] : memref<256x128xf32, #tpu.memory_space<vmem>>, vector<256x128xf32>
      %c0_12 = arith.constant 0 : index
      %c0_13 = arith.constant 0 : index
      %13 = vector.load %arg5[%c0_12, %c0_13] : memref<256x128xf32, #tpu.memory_space<vmem>>, vector<256x128xf32>
      tpu.vector_store %arg5[%c0_12, %c0_13], %12 {strides = array<i32>} : memref<256x128xf32, #tpu.memory_space<vmem>>, vector<256x128xf32>,
    } else {
    }
    return
  }
  func.func @transform_0(%arg0: i32, %arg1: i32, %arg2: i32) -> (i32, i32) {
    %c0_i32 = arith.constant 0 : i32
    return %arg0, %arg2 : i32, i32
  }
  func.func @transform_1(%arg0: i32, %arg1: i32, %arg2: i32) -> (i32, i32) {
    %c0_i32 = arith.constant 0 : i32
    return %arg2, %arg1 : i32, i32
  }
  func.func @transform_2(%arg0: i32, %arg1: i32, %arg2: i32) -> (i32, i32) {
    %c0_i32 = arith.constant 0 : i32
    return %arg0, %arg1 : i32, i32
  }
}

module attributes {stable_mosaic.version = 11 : i64} {
  func.func @_instnorm_kernel(%arg0: i32, %arg1: i32, %arg2: memref<1x256x32xf32, #tpu.memory_space<vmem>>, %arg3: memref<1x32xf32, #tpu.memory_space<vmem>>, %arg4: memref<1x32xf32, #tpu.memory_space<vmem>>, %arg5: memref<1x256x32xf32, #tpu.memory_space<vmem>>) attributes {dimension_semantics = [#tpu.dimension_semantics<parallel>, #tpu.dimension_semantics<parallel>], iteration_bounds = array<i64: 2, 1>, scalar_prefetch = 0 : i64, scratch_operands = 0 : i64, tpu.core_type = #tpu.core_type<tc>, window_params = [{transform_indices = @transform_0, window_bounds = array<i64: 1, 256, 32>}, {transform_indices = @transform_1, window_bounds = array<i64: 1, 32>}, {transform_indices = @transform_2, window_bounds = array<i64: 1, 32>}, {transform_indices = @transform_3, window_bounds = array<i64: 1, 256, 32>}]} {
    %c0 = arith.constant 0 : index
    %c0_0 = arith.constant 0 : index
    %c0_1 = arith.constant 0 : index
    %0 = vector.load %arg2[%c0, %c0_0, %c0_1] : memref<1x256x32xf32, #tpu.memory_space<vmem>>, vector<1x256x32xf32>
    %1 = vector.shape_cast %0 : vector<1x256x32xf32> to vector<256x32xf32>
    %cst = arith.constant dense<0.000000e+00> : vector<32xf32>
    %2 = vector.multi_reduction <add>, %1, %cst [0] : vector<256x32xf32> to vector<32xf32>
    %3 = vector.shape_cast %2 : vector<32xf32> to vector<1x32xf32>
    %cst_2 = arith.constant 2.560000e+02 : f32
    %4 = vector.broadcast %cst_2 : f32 to vector<1x32xf32>
    %5 = arith.divf %3, %4 : vector<1x32xf32>
    %6 = vector.broadcast %5 : vector<1x32xf32> to vector<256x32xf32>
    %7 = arith.subf %1, %6 : vector<256x32xf32>
    %8 = arith.mulf %7, %7 : vector<256x32xf32>
    %cst_3 = arith.constant dense<0.000000e+00> : vector<32xf32>
    %9 = vector.multi_reduction <add>, %8, %cst_3 [0] : vector<256x32xf32> to vector<32xf32>
    %10 = vector.shape_cast %9 : vector<32xf32> to vector<1x32xf32>
    %cst_4 = arith.constant 2.560000e+02 : f32
    %11 = vector.broadcast %cst_4 : f32 to vector<1x32xf32>
    %12 = arith.divf %10, %11 : vector<1x32xf32>
    %13 = vector.broadcast %5 : vector<1x32xf32> to vector<256x32xf32>
    %14 = arith.subf %1, %13 : vector<256x32xf32>
    %cst_5 = arith.constant 9.99999974E-6 : f32
    %15 = vector.broadcast %cst_5 : f32 to vector<1x32xf32>
    %16 = arith.addf %12, %15 : vector<1x32xf32>
    %17 = math.rsqrt %16 : vector<1x32xf32>
    %18 = vector.broadcast %17 : vector<1x32xf32> to vector<256x32xf32>
    %19 = arith.mulf %14, %18 : vector<256x32xf32>
    %c0_6 = arith.constant 0 : index
    %c0_7 = arith.constant 0 : index
    %20 = vector.load %arg3[%c0_6, %c0_7] : memref<1x32xf32, #tpu.memory_space<vmem>>, vector<1x32xf32>
    %21 = vector.broadcast %20 : vector<1x32xf32> to vector<256x32xf32>
    %22 = arith.mulf %19, %21 : vector<256x32xf32>
    %c0_8 = arith.constant 0 : index
    %c0_9 = arith.constant 0 : index
    %23 = vector.load %arg4[%c0_8, %c0_9] : memref<1x32xf32, #tpu.memory_space<vmem>>, vector<1x32xf32>
    %24 = vector.broadcast %23 : vector<1x32xf32> to vector<256x32xf32>
    %25 = arith.addf %22, %24 : vector<256x32xf32>
    %cst_10 = arith.constant 0.000000e+00 : f32
    %26 = vector.broadcast %cst_10 : f32 to vector<256x32xf32>
    %27 = arith.maximumf %25, %26 : vector<256x32xf32>
    %c0_11 = arith.constant 0 : index
    %c0_12 = arith.constant 0 : index
    %c0_13 = arith.constant 0 : index
    %28 = vector.load %arg5[%c0_11, %c0_12, %c0_13] : memref<1x256x32xf32, #tpu.memory_space<vmem>>, vector<1x256x32xf32>
    %29 = vector.shape_cast %28 : vector<1x256x32xf32> to vector<256x32xf32>
    %30 = vector.shape_cast %27 : vector<256x32xf32> to vector<1x256x32xf32>
    tpu.vector_store %arg5[%c0_11, %c0_12, %c0_13], %30 {strides = array<i32>} : memref<1x256x32xf32, #tpu.memory_space<vmem>>, vector<1x256x32xf32>,
    return
  }
  func.func @transform_0(%arg0: i32, %arg1: i32) -> (i32, i32, i32) {
    %c0_i32 = arith.constant 0 : i32
    %c0_i32_0 = arith.constant 0 : i32
    return %arg0, %c0_i32, %arg1 : i32, i32, i32
  }
  func.func @transform_1(%arg0: i32, %arg1: i32) -> (i32, i32) {
    %c0_i32 = arith.constant 0 : i32
    %c0_i32_0 = arith.constant 0 : i32
    return %c0_i32, %arg1 : i32, i32
  }
  func.func @transform_2(%arg0: i32, %arg1: i32) -> (i32, i32) {
    %c0_i32 = arith.constant 0 : i32
    %c0_i32_0 = arith.constant 0 : i32
    return %c0_i32, %arg1 : i32, i32
  }
  func.func @transform_3(%arg0: i32, %arg1: i32) -> (i32, i32, i32) {
    %c0_i32 = arith.constant 0 : i32
    %c0_i32_0 = arith.constant 0 : i32
    return %arg0, %c0_i32, %arg1 : i32, i32, i32
  }
}

module attributes {stable_mosaic.version = 11 : i64} {
  func.func @_matmul_kernel(%arg0: i32, %arg1: i32, %arg2: i32, %arg3: memref<128x512xbf16, #tpu.memory_space<vmem>>, %arg4: memref<512x128xbf16, #tpu.memory_space<vmem>>, %arg5: memref<128x128xf32, #tpu.memory_space<vmem>>, %arg6: memref<128x128xf32, #tpu.memory_space<vmem>>) attributes {dimension_semantics = [#tpu.dimension_semantics<parallel>, #tpu.dimension_semantics<parallel>, #tpu.dimension_semantics<arbitrary>], iteration_bounds = array<i64: 1, 1, 1>, scalar_prefetch = 0 : i64, scratch_operands = 1 : i64, tpu.core_type = #tpu.core_type<tc>, window_params = [{transform_indices = @transform_0, window_bounds = array<i64: 128, 512>}, {transform_indices = @transform_1, window_bounds = array<i64: 512, 128>}, {transform_indices = @transform_2, window_bounds = array<i64: 128, 128>}]} {
    %c0_i32 = arith.constant 0 : i32
    %0 = arith.cmpi eq, %arg2, %c0_i32 : i32
    %1 = arith.extui %0 : i1 to i32
    %c0_i32_0 = arith.constant 0 : i32
    %2 = arith.cmpi ne, %1, %c0_i32_0 : i32
    scf.if %2 {
      %cst_10 = arith.constant 0.000000e+00 : f32
      %12 = vector.broadcast %cst_10 : f32 to vector<128x128xf32>
      %c0_11 = arith.constant 0 : index
      %c0_12 = arith.constant 0 : index
      %13 = vector.load %arg6[%c0_11, %c0_12] : memref<128x128xf32, #tpu.memory_space<vmem>>, vector<128x128xf32>
      tpu.vector_store %arg6[%c0_11, %c0_12], %12 {strides = array<i32>} : memref<128x128xf32, #tpu.memory_space<vmem>>, vector<128x128xf32>,
    } else {
    }
    %c0 = arith.constant 0 : index
    %c0_1 = arith.constant 0 : index
    %3 = vector.load %arg6[%c0, %c0_1] : memref<128x128xf32, #tpu.memory_space<vmem>>, vector<128x128xf32>
    %c0_2 = arith.constant 0 : index
    %c0_3 = arith.constant 0 : index
    %4 = vector.load %arg3[%c0_2, %c0_3] : memref<128x512xbf16, #tpu.memory_space<vmem>>, vector<128x512xbf16>
    %c0_4 = arith.constant 0 : index
    %c0_5 = arith.constant 0 : index
    %5 = vector.load %arg4[%c0_4, %c0_5] : memref<512x128xbf16, #tpu.memory_space<vmem>>, vector<512x128xbf16>
    %cst = arith.constant dense<0.000000e+00> : vector<128x128xf32>
    %6 = tpu.matmul %4, %5, %cst {dimension_numbers = #tpu.dot_dimension_numbers<[1], [0], [0], [1], [0, 0, 1, 1], [], []>} : vector<128x512xbf16>, vector<512x128xbf16>, vector<128x128xf32> -> vector<128x128xf32>
    %7 = arith.addf %3, %6 : vector<128x128xf32>
    %c0_6 = arith.constant 0 : index
    %c0_7 = arith.constant 0 : index
    %8 = vector.load %arg6[%c0_6, %c0_7] : memref<128x128xf32, #tpu.memory_space<vmem>>, vector<128x128xf32>
    tpu.vector_store %arg6[%c0_6, %c0_7], %7 {strides = array<i32>} : memref<128x128xf32, #tpu.memory_space<vmem>>, vector<128x128xf32>,
    %c0_i32_8 = arith.constant 0 : i32
    %9 = arith.cmpi eq, %arg2, %c0_i32_8 : i32
    %10 = arith.extui %9 : i1 to i32
    %c0_i32_9 = arith.constant 0 : i32
    %11 = arith.cmpi ne, %10, %c0_i32_9 : i32
    scf.if %11 {
      %c0_10 = arith.constant 0 : index
      %c0_11 = arith.constant 0 : index
      %12 = vector.load %arg6[%c0_10, %c0_11] : memref<128x128xf32, #tpu.memory_space<vmem>>, vector<128x128xf32>
      %c0_12 = arith.constant 0 : index
      %c0_13 = arith.constant 0 : index
      %13 = vector.load %arg5[%c0_12, %c0_13] : memref<128x128xf32, #tpu.memory_space<vmem>>, vector<128x128xf32>
      tpu.vector_store %arg5[%c0_12, %c0_13], %12 {strides = array<i32>} : memref<128x128xf32, #tpu.memory_space<vmem>>, vector<128x128xf32>,
    } else {
    }
    return
  }
  func.func @transform_0(%arg0: i32, %arg1: i32, %arg2: i32) -> (i32, i32) {
    %c0_i32 = arith.constant 0 : i32
    return %arg0, %arg2 : i32, i32
  }
  func.func @transform_1(%arg0: i32, %arg1: i32, %arg2: i32) -> (i32, i32) {
    %c0_i32 = arith.constant 0 : i32
    return %arg2, %arg1 : i32, i32
  }
  func.func @transform_2(%arg0: i32, %arg1: i32, %arg2: i32) -> (i32, i32) {
    %c0_i32 = arith.constant 0 : i32
    return %arg0, %arg1 : i32, i32
  }
}

module attributes {stable_mosaic.version = 11 : i64} {
  func.func @_instnorm_kernel(%arg0: i32, %arg1: i32, %arg2: memref<1x64x64xf32, #tpu.memory_space<vmem>>, %arg3: memref<1x64xf32, #tpu.memory_space<vmem>>, %arg4: memref<1x64xf32, #tpu.memory_space<vmem>>, %arg5: memref<1x64x64xf32, #tpu.memory_space<vmem>>) attributes {dimension_semantics = [#tpu.dimension_semantics<parallel>, #tpu.dimension_semantics<parallel>], iteration_bounds = array<i64: 2, 1>, scalar_prefetch = 0 : i64, scratch_operands = 0 : i64, tpu.core_type = #tpu.core_type<tc>, window_params = [{transform_indices = @transform_0, window_bounds = array<i64: 1, 64, 64>}, {transform_indices = @transform_1, window_bounds = array<i64: 1, 64>}, {transform_indices = @transform_2, window_bounds = array<i64: 1, 64>}, {transform_indices = @transform_3, window_bounds = array<i64: 1, 64, 64>}]} {
    %c0 = arith.constant 0 : index
    %c0_0 = arith.constant 0 : index
    %c0_1 = arith.constant 0 : index
    %0 = vector.load %arg2[%c0, %c0_0, %c0_1] : memref<1x64x64xf32, #tpu.memory_space<vmem>>, vector<1x64x64xf32>
    %1 = vector.shape_cast %0 : vector<1x64x64xf32> to vector<64x64xf32>
    %cst = arith.constant dense<0.000000e+00> : vector<64xf32>
    %2 = vector.multi_reduction <add>, %1, %cst [0] : vector<64x64xf32> to vector<64xf32>
    %3 = vector.shape_cast %2 : vector<64xf32> to vector<1x64xf32>
    %cst_2 = arith.constant 6.400000e+01 : f32
    %4 = vector.broadcast %cst_2 : f32 to vector<1x64xf32>
    %5 = arith.divf %3, %4 : vector<1x64xf32>
    %6 = vector.broadcast %5 : vector<1x64xf32> to vector<64x64xf32>
    %7 = arith.subf %1, %6 : vector<64x64xf32>
    %8 = arith.mulf %7, %7 : vector<64x64xf32>
    %cst_3 = arith.constant dense<0.000000e+00> : vector<64xf32>
    %9 = vector.multi_reduction <add>, %8, %cst_3 [0] : vector<64x64xf32> to vector<64xf32>
    %10 = vector.shape_cast %9 : vector<64xf32> to vector<1x64xf32>
    %cst_4 = arith.constant 6.400000e+01 : f32
    %11 = vector.broadcast %cst_4 : f32 to vector<1x64xf32>
    %12 = arith.divf %10, %11 : vector<1x64xf32>
    %13 = vector.broadcast %5 : vector<1x64xf32> to vector<64x64xf32>
    %14 = arith.subf %1, %13 : vector<64x64xf32>
    %cst_5 = arith.constant 9.99999974E-6 : f32
    %15 = vector.broadcast %cst_5 : f32 to vector<1x64xf32>
    %16 = arith.addf %12, %15 : vector<1x64xf32>
    %17 = math.rsqrt %16 : vector<1x64xf32>
    %18 = vector.broadcast %17 : vector<1x64xf32> to vector<64x64xf32>
    %19 = arith.mulf %14, %18 : vector<64x64xf32>
    %c0_6 = arith.constant 0 : index
    %c0_7 = arith.constant 0 : index
    %20 = vector.load %arg3[%c0_6, %c0_7] : memref<1x64xf32, #tpu.memory_space<vmem>>, vector<1x64xf32>
    %21 = vector.broadcast %20 : vector<1x64xf32> to vector<64x64xf32>
    %22 = arith.mulf %19, %21 : vector<64x64xf32>
    %c0_8 = arith.constant 0 : index
    %c0_9 = arith.constant 0 : index
    %23 = vector.load %arg4[%c0_8, %c0_9] : memref<1x64xf32, #tpu.memory_space<vmem>>, vector<1x64xf32>
    %24 = vector.broadcast %23 : vector<1x64xf32> to vector<64x64xf32>
    %25 = arith.addf %22, %24 : vector<64x64xf32>
    %cst_10 = arith.constant 0.000000e+00 : f32
    %26 = vector.broadcast %cst_10 : f32 to vector<64x64xf32>
    %27 = arith.maximumf %25, %26 : vector<64x64xf32>
    %c0_11 = arith.constant 0 : index
    %c0_12 = arith.constant 0 : index
    %c0_13 = arith.constant 0 : index
    %28 = vector.load %arg5[%c0_11, %c0_12, %c0_13] : memref<1x64x64xf32, #tpu.memory_space<vmem>>, vector<1x64x64xf32>
    %29 = vector.shape_cast %28 : vector<1x64x64xf32> to vector<64x64xf32>
    %30 = vector.shape_cast %27 : vector<64x64xf32> to vector<1x64x64xf32>
    tpu.vector_store %arg5[%c0_11, %c0_12, %c0_13], %30 {strides = array<i32>} : memref<1x64x64xf32, #tpu.memory_space<vmem>>, vector<1x64x64xf32>,
    return
  }
  func.func @transform_0(%arg0: i32, %arg1: i32) -> (i32, i32, i32) {
    %c0_i32 = arith.constant 0 : i32
    %c0_i32_0 = arith.constant 0 : i32
    return %arg0, %c0_i32, %arg1 : i32, i32, i32
  }
  func.func @transform_1(%arg0: i32, %arg1: i32) -> (i32, i32) {
    %c0_i32 = arith.constant 0 : i32
    %c0_i32_0 = arith.constant 0 : i32
    return %c0_i32, %arg1 : i32, i32
  }
  func.func @transform_2(%arg0: i32, %arg1: i32) -> (i32, i32) {
    %c0_i32 = arith.constant 0 : i32
    %c0_i32_0 = arith.constant 0 : i32
    return %c0_i32, %arg1 : i32, i32
  }
  func.func @transform_3(%arg0: i32, %arg1: i32) -> (i32, i32, i32) {
    %c0_i32 = arith.constant 0 : i32
    %c0_i32_0 = arith.constant 0 : i32
    return %arg0, %c0_i32, %arg1 : i32, i32, i32
  }
}

module attributes {stable_mosaic.version = 11 : i64} {
  func.func @_matmul_kernel(%arg0: i32, %arg1: i32, %arg2: i32, %arg3: memref<32x512xbf16, #tpu.memory_space<vmem>>, %arg4: memref<512x128xbf16, #tpu.memory_space<vmem>>, %arg5: memref<32x128xf32, #tpu.memory_space<vmem>>, %arg6: memref<32x128xf32, #tpu.memory_space<vmem>>) attributes {dimension_semantics = [#tpu.dimension_semantics<parallel>, #tpu.dimension_semantics<parallel>, #tpu.dimension_semantics<arbitrary>], iteration_bounds = array<i64: 1, 1, 2>, scalar_prefetch = 0 : i64, scratch_operands = 1 : i64, tpu.core_type = #tpu.core_type<tc>, window_params = [{transform_indices = @transform_0, window_bounds = array<i64: 32, 512>}, {transform_indices = @transform_1, window_bounds = array<i64: 512, 128>}, {transform_indices = @transform_2, window_bounds = array<i64: 32, 128>}]} {
    %c0_i32 = arith.constant 0 : i32
    %0 = arith.cmpi eq, %arg2, %c0_i32 : i32
    %1 = arith.extui %0 : i1 to i32
    %c0_i32_0 = arith.constant 0 : i32
    %2 = arith.cmpi ne, %1, %c0_i32_0 : i32
    scf.if %2 {
      %cst_9 = arith.constant 0.000000e+00 : f32
      %12 = vector.broadcast %cst_9 : f32 to vector<32x128xf32>
      %c0_10 = arith.constant 0 : index
      %c0_11 = arith.constant 0 : index
      %13 = vector.load %arg6[%c0_10, %c0_11] : memref<32x128xf32, #tpu.memory_space<vmem>>, vector<32x128xf32>
      tpu.vector_store %arg6[%c0_10, %c0_11], %12 {strides = array<i32>} : memref<32x128xf32, #tpu.memory_space<vmem>>, vector<32x128xf32>,
    } else {
    }
    %c0 = arith.constant 0 : index
    %c0_1 = arith.constant 0 : index
    %3 = vector.load %arg6[%c0, %c0_1] : memref<32x128xf32, #tpu.memory_space<vmem>>, vector<32x128xf32>
    %c0_2 = arith.constant 0 : index
    %c0_3 = arith.constant 0 : index
    %4 = vector.load %arg3[%c0_2, %c0_3] : memref<32x512xbf16, #tpu.memory_space<vmem>>, vector<32x512xbf16>
    %c0_4 = arith.constant 0 : index
    %c0_5 = arith.constant 0 : index
    %5 = vector.load %arg4[%c0_4, %c0_5] : memref<512x128xbf16, #tpu.memory_space<vmem>>, vector<512x128xbf16>
    %cst = arith.constant dense<0.000000e+00> : vector<32x128xf32>
    %6 = tpu.matmul %4, %5, %cst {dimension_numbers = #tpu.dot_dimension_numbers<[1], [0], [0], [1], [0, 0, 1, 1], [], []>} : vector<32x512xbf16>, vector<512x128xbf16>, vector<32x128xf32> -> vector<32x128xf32>
    %7 = arith.addf %3, %6 : vector<32x128xf32>
    %c0_6 = arith.constant 0 : index
    %c0_7 = arith.constant 0 : index
    %8 = vector.load %arg6[%c0_6, %c0_7] : memref<32x128xf32, #tpu.memory_space<vmem>>, vector<32x128xf32>
    tpu.vector_store %arg6[%c0_6, %c0_7], %7 {strides = array<i32>} : memref<32x128xf32, #tpu.memory_space<vmem>>, vector<32x128xf32>,
    %c1_i32 = arith.constant 1 : i32
    %9 = arith.cmpi eq, %arg2, %c1_i32 : i32
    %10 = arith.extui %9 : i1 to i32
    %c0_i32_8 = arith.constant 0 : i32
    %11 = arith.cmpi ne, %10, %c0_i32_8 : i32
    scf.if %11 {
      %c0_9 = arith.constant 0 : index
      %c0_10 = arith.constant 0 : index
      %12 = vector.load %arg6[%c0_9, %c0_10] : memref<32x128xf32, #tpu.memory_space<vmem>>, vector<32x128xf32>
      %c0_11 = arith.constant 0 : index
      %c0_12 = arith.constant 0 : index
      %13 = vector.load %arg5[%c0_11, %c0_12] : memref<32x128xf32, #tpu.memory_space<vmem>>, vector<32x128xf32>
      tpu.vector_store %arg5[%c0_11, %c0_12], %12 {strides = array<i32>} : memref<32x128xf32, #tpu.memory_space<vmem>>, vector<32x128xf32>,
    } else {
    }
    return
  }
  func.func @transform_0(%arg0: i32, %arg1: i32, %arg2: i32) -> (i32, i32) {
    %c0_i32 = arith.constant 0 : i32
    return %arg0, %arg2 : i32, i32
  }
  func.func @transform_1(%arg0: i32, %arg1: i32, %arg2: i32) -> (i32, i32) {
    %c0_i32 = arith.constant 0 : i32
    return %arg2, %arg1 : i32, i32
  }
  func.func @transform_2(%arg0: i32, %arg1: i32, %arg2: i32) -> (i32, i32) {
    %c0_i32 = arith.constant 0 : i32
    return %arg0, %arg1 : i32, i32
  }
}

module attributes {stable_mosaic.version = 11 : i64} {
  func.func @_instnorm_kernel(%arg0: i32, %arg1: i32, %arg2: memref<1x16x128xf32, #tpu.memory_space<vmem>>, %arg3: memref<1x128xf32, #tpu.memory_space<vmem>>, %arg4: memref<1x128xf32, #tpu.memory_space<vmem>>, %arg5: memref<1x16x128xf32, #tpu.memory_space<vmem>>) attributes {dimension_semantics = [#tpu.dimension_semantics<parallel>, #tpu.dimension_semantics<parallel>], iteration_bounds = array<i64: 2, 1>, scalar_prefetch = 0 : i64, scratch_operands = 0 : i64, tpu.core_type = #tpu.core_type<tc>, window_params = [{transform_indices = @transform_0, window_bounds = array<i64: 1, 16, 128>}, {transform_indices = @transform_1, window_bounds = array<i64: 1, 128>}, {transform_indices = @transform_2, window_bounds = array<i64: 1, 128>}, {transform_indices = @transform_3, window_bounds = array<i64: 1, 16, 128>}]} {
    %c0 = arith.constant 0 : index
    %c0_0 = arith.constant 0 : index
    %c0_1 = arith.constant 0 : index
    %0 = vector.load %arg2[%c0, %c0_0, %c0_1] : memref<1x16x128xf32, #tpu.memory_space<vmem>>, vector<1x16x128xf32>
    %1 = vector.shape_cast %0 : vector<1x16x128xf32> to vector<16x128xf32>
    %cst = arith.constant dense<0.000000e+00> : vector<128xf32>
    %2 = vector.multi_reduction <add>, %1, %cst [0] : vector<16x128xf32> to vector<128xf32>
    %3 = vector.shape_cast %2 : vector<128xf32> to vector<1x128xf32>
    %cst_2 = arith.constant 1.600000e+01 : f32
    %4 = vector.broadcast %cst_2 : f32 to vector<1x128xf32>
    %5 = arith.divf %3, %4 : vector<1x128xf32>
    %6 = vector.broadcast %5 : vector<1x128xf32> to vector<16x128xf32>
    %7 = arith.subf %1, %6 : vector<16x128xf32>
    %8 = arith.mulf %7, %7 : vector<16x128xf32>
    %cst_3 = arith.constant dense<0.000000e+00> : vector<128xf32>
    %9 = vector.multi_reduction <add>, %8, %cst_3 [0] : vector<16x128xf32> to vector<128xf32>
    %10 = vector.shape_cast %9 : vector<128xf32> to vector<1x128xf32>
    %cst_4 = arith.constant 1.600000e+01 : f32
    %11 = vector.broadcast %cst_4 : f32 to vector<1x128xf32>
    %12 = arith.divf %10, %11 : vector<1x128xf32>
    %13 = vector.broadcast %5 : vector<1x128xf32> to vector<16x128xf32>
    %14 = arith.subf %1, %13 : vector<16x128xf32>
    %cst_5 = arith.constant 9.99999974E-6 : f32
    %15 = vector.broadcast %cst_5 : f32 to vector<1x128xf32>
    %16 = arith.addf %12, %15 : vector<1x128xf32>
    %17 = math.rsqrt %16 : vector<1x128xf32>
    %18 = vector.broadcast %17 : vector<1x128xf32> to vector<16x128xf32>
    %19 = arith.mulf %14, %18 : vector<16x128xf32>
    %c0_6 = arith.constant 0 : index
    %c0_7 = arith.constant 0 : index
    %20 = vector.load %arg3[%c0_6, %c0_7] : memref<1x128xf32, #tpu.memory_space<vmem>>, vector<1x128xf32>
    %21 = vector.broadcast %20 : vector<1x128xf32> to vector<16x128xf32>
    %22 = arith.mulf %19, %21 : vector<16x128xf32>
    %c0_8 = arith.constant 0 : index
    %c0_9 = arith.constant 0 : index
    %23 = vector.load %arg4[%c0_8, %c0_9] : memref<1x128xf32, #tpu.memory_space<vmem>>, vector<1x128xf32>
    %24 = vector.broadcast %23 : vector<1x128xf32> to vector<16x128xf32>
    %25 = arith.addf %22, %24 : vector<16x128xf32>
    %cst_10 = arith.constant 0.000000e+00 : f32
    %26 = vector.broadcast %cst_10 : f32 to vector<16x128xf32>
    %27 = arith.maximumf %25, %26 : vector<16x128xf32>
    %c0_11 = arith.constant 0 : index
    %c0_12 = arith.constant 0 : index
    %c0_13 = arith.constant 0 : index
    %28 = vector.load %arg5[%c0_11, %c0_12, %c0_13] : memref<1x16x128xf32, #tpu.memory_space<vmem>>, vector<1x16x128xf32>
    %29 = vector.shape_cast %28 : vector<1x16x128xf32> to vector<16x128xf32>
    %30 = vector.shape_cast %27 : vector<16x128xf32> to vector<1x16x128xf32>
    tpu.vector_store %arg5[%c0_11, %c0_12, %c0_13], %30 {strides = array<i32>} : memref<1x16x128xf32, #tpu.memory_space<vmem>>, vector<1x16x128xf32>,
    return
  }
  func.func @transform_0(%arg0: i32, %arg1: i32) -> (i32, i32, i32) {
    %c0_i32 = arith.constant 0 : i32
    %c0_i32_0 = arith.constant 0 : i32
    return %arg0, %c0_i32, %arg1 : i32, i32, i32
  }
  func.func @transform_1(%arg0: i32, %arg1: i32) -> (i32, i32) {
    %c0_i32 = arith.constant 0 : i32
    %c0_i32_0 = arith.constant 0 : i32
    return %c0_i32, %arg1 : i32, i32
  }
  func.func @transform_2(%arg0: i32, %arg1: i32) -> (i32, i32) {
    %c0_i32 = arith.constant 0 : i32
    %c0_i32_0 = arith.constant 0 : i32
    return %c0_i32, %arg1 : i32, i32
  }
  func.func @transform_3(%arg0: i32, %arg1: i32) -> (i32, i32, i32) {
    %c0_i32 = arith.constant 0 : i32
    %c0_i32_0 = arith.constant 0 : i32
    return %arg0, %c0_i32, %arg1 : i32, i32, i32
  }
}

module attributes {stable_mosaic.version = 11 : i64} {
  func.func @_instnorm_skip_kernel(%arg0: i32, %arg1: i32, %arg2: memref<1x16x128xf32, #tpu.memory_space<vmem>>, %arg3: memref<1x128xf32, #tpu.memory_space<vmem>>, %arg4: memref<1x128xf32, #tpu.memory_space<vmem>>, %arg5: memref<1x16x128xf32, #tpu.memory_space<vmem>>, %arg6: memref<1x16x128xf32, #tpu.memory_space<vmem>>) attributes {dimension_semantics = [#tpu.dimension_semantics<parallel>, #tpu.dimension_semantics<parallel>], iteration_bounds = array<i64: 2, 1>, scalar_prefetch = 0 : i64, scratch_operands = 0 : i64, tpu.core_type = #tpu.core_type<tc>, window_params = [{transform_indices = @transform_0, window_bounds = array<i64: 1, 16, 128>}, {transform_indices = @transform_1, window_bounds = array<i64: 1, 128>}, {transform_indices = @transform_2, window_bounds = array<i64: 1, 128>}, {transform_indices = @transform_3, window_bounds = array<i64: 1, 16, 128>}, {transform_indices = @transform_4, window_bounds = array<i64: 1, 16, 128>}]} {
    %c0 = arith.constant 0 : index
    %c0_0 = arith.constant 0 : index
    %c0_1 = arith.constant 0 : index
    %0 = vector.load %arg2[%c0, %c0_0, %c0_1] : memref<1x16x128xf32, #tpu.memory_space<vmem>>, vector<1x16x128xf32>
    %1 = vector.shape_cast %0 : vector<1x16x128xf32> to vector<16x128xf32>
    %cst = arith.constant dense<0.000000e+00> : vector<128xf32>
    %2 = vector.multi_reduction <add>, %1, %cst [0] : vector<16x128xf32> to vector<128xf32>
    %3 = vector.shape_cast %2 : vector<128xf32> to vector<1x128xf32>
    %cst_2 = arith.constant 1.600000e+01 : f32
    %4 = vector.broadcast %cst_2 : f32 to vector<1x128xf32>
    %5 = arith.divf %3, %4 : vector<1x128xf32>
    %6 = vector.broadcast %5 : vector<1x128xf32> to vector<16x128xf32>
    %7 = arith.subf %1, %6 : vector<16x128xf32>
    %8 = arith.mulf %7, %7 : vector<16x128xf32>
    %cst_3 = arith.constant dense<0.000000e+00> : vector<128xf32>
    %9 = vector.multi_reduction <add>, %8, %cst_3 [0] : vector<16x128xf32> to vector<128xf32>
    %10 = vector.shape_cast %9 : vector<128xf32> to vector<1x128xf32>
    %cst_4 = arith.constant 1.600000e+01 : f32
    %11 = vector.broadcast %cst_4 : f32 to vector<1x128xf32>
    %12 = arith.divf %10, %11 : vector<1x128xf32>
    %13 = vector.broadcast %5 : vector<1x128xf32> to vector<16x128xf32>
    %14 = arith.subf %1, %13 : vector<16x128xf32>
    %cst_5 = arith.constant 9.99999974E-6 : f32
    %15 = vector.broadcast %cst_5 : f32 to vector<1x128xf32>
    %16 = arith.addf %12, %15 : vector<1x128xf32>
    %17 = math.rsqrt %16 : vector<1x128xf32>
    %18 = vector.broadcast %17 : vector<1x128xf32> to vector<16x128xf32>
    %19 = arith.mulf %14, %18 : vector<16x128xf32>
    %c0_6 = arith.constant 0 : index
    %c0_7 = arith.constant 0 : index
    %20 = vector.load %arg3[%c0_6, %c0_7] : memref<1x128xf32, #tpu.memory_space<vmem>>, vector<1x128xf32>
    %21 = vector.broadcast %20 : vector<1x128xf32> to vector<16x128xf32>
    %22 = arith.mulf %19, %21 : vector<16x128xf32>
    %c0_8 = arith.constant 0 : index
    %c0_9 = arith.constant 0 : index
    %23 = vector.load %arg4[%c0_8, %c0_9] : memref<1x128xf32, #tpu.memory_space<vmem>>, vector<1x128xf32>
    %24 = vector.broadcast %23 : vector<1x128xf32> to vector<16x128xf32>
    %25 = arith.addf %22, %24 : vector<16x128xf32>
    %c0_10 = arith.constant 0 : index
    %c0_11 = arith.constant 0 : index
    %c0_12 = arith.constant 0 : index
    %26 = vector.load %arg5[%c0_10, %c0_11, %c0_12] : memref<1x16x128xf32, #tpu.memory_space<vmem>>, vector<1x16x128xf32>
    %27 = vector.shape_cast %26 : vector<1x16x128xf32> to vector<16x128xf32>
    %28 = arith.addf %25, %27 : vector<16x128xf32>
    %c0_13 = arith.constant 0 : index
    %c0_14 = arith.constant 0 : index
    %c0_15 = arith.constant 0 : index
    %29 = vector.load %arg6[%c0_13, %c0_14, %c0_15] : memref<1x16x128xf32, #tpu.memory_space<vmem>>, vector<1x16x128xf32>
    %30 = vector.shape_cast %29 : vector<1x16x128xf32> to vector<16x128xf32>
    %31 = vector.shape_cast %28 : vector<16x128xf32> to vector<1x16x128xf32>
    tpu.vector_store %arg6[%c0_13, %c0_14, %c0_15], %31 {strides = array<i32>} : memref<1x16x128xf32, #tpu.memory_space<vmem>>, vector<1x16x128xf32>,
    return
  }
  func.func @transform_0(%arg0: i32, %arg1: i32) -> (i32, i32, i32) {
    %c0_i32 = arith.constant 0 : i32
    %c0_i32_0 = arith.constant 0 : i32
    return %arg0, %c0_i32, %arg1 : i32, i32, i32
  }
  func.func @transform_1(%arg0: i32, %arg1: i32) -> (i32, i32) {
    %c0_i32 = arith.constant 0 : i32
    %c0_i32_0 = arith.constant 0 : i32
    return %c0_i32, %arg1 : i32, i32
  }
  func.func @transform_2(%arg0: i32, %arg1: i32) -> (i32, i32) {
    %c0_i32 = arith.constant 0 : i32
    %c0_i32_0 = arith.constant 0 : i32
    return %c0_i32, %arg1 : i32, i32
  }
  func.func @transform_3(%arg0: i32, %arg1: i32) -> (i32, i32, i32) {
    %c0_i32 = arith.constant 0 : i32
    %c0_i32_0 = arith.constant 0 : i32
    return %arg0, %c0_i32, %arg1 : i32, i32, i32
  }
  func.func @transform_4(%arg0: i32, %arg1: i32) -> (i32, i32, i32) {
    %c0_i32 = arith.constant 0 : i32
    %c0_i32_0 = arith.constant 0 : i32
    return %arg0, %c0_i32, %arg1 : i32, i32, i32
  }
}

module attributes {stable_mosaic.version = 11 : i64} {
  func.func @_matmul_kernel(%arg0: i32, %arg1: i32, %arg2: i32, %arg3: memref<32x512xbf16, #tpu.memory_space<vmem>>, %arg4: memref<512x128xbf16, #tpu.memory_space<vmem>>, %arg5: memref<32x128xf32, #tpu.memory_space<vmem>>, %arg6: memref<32x128xf32, #tpu.memory_space<vmem>>) attributes {dimension_semantics = [#tpu.dimension_semantics<parallel>, #tpu.dimension_semantics<parallel>, #tpu.dimension_semantics<arbitrary>], iteration_bounds = array<i64: 1, 1, 3>, scalar_prefetch = 0 : i64, scratch_operands = 1 : i64, tpu.core_type = #tpu.core_type<tc>, window_params = [{transform_indices = @transform_0, window_bounds = array<i64: 32, 512>}, {transform_indices = @transform_1, window_bounds = array<i64: 512, 128>}, {transform_indices = @transform_2, window_bounds = array<i64: 32, 128>}]} {
    %c0_i32 = arith.constant 0 : i32
    %0 = arith.cmpi eq, %arg2, %c0_i32 : i32
    %1 = arith.extui %0 : i1 to i32
    %c0_i32_0 = arith.constant 0 : i32
    %2 = arith.cmpi ne, %1, %c0_i32_0 : i32
    scf.if %2 {
      %cst_9 = arith.constant 0.000000e+00 : f32
      %12 = vector.broadcast %cst_9 : f32 to vector<32x128xf32>
      %c0_10 = arith.constant 0 : index
      %c0_11 = arith.constant 0 : index
      %13 = vector.load %arg6[%c0_10, %c0_11] : memref<32x128xf32, #tpu.memory_space<vmem>>, vector<32x128xf32>
      tpu.vector_store %arg6[%c0_10, %c0_11], %12 {strides = array<i32>} : memref<32x128xf32, #tpu.memory_space<vmem>>, vector<32x128xf32>,
    } else {
    }
    %c0 = arith.constant 0 : index
    %c0_1 = arith.constant 0 : index
    %3 = vector.load %arg6[%c0, %c0_1] : memref<32x128xf32, #tpu.memory_space<vmem>>, vector<32x128xf32>
    %c0_2 = arith.constant 0 : index
    %c0_3 = arith.constant 0 : index
    %4 = vector.load %arg3[%c0_2, %c0_3] : memref<32x512xbf16, #tpu.memory_space<vmem>>, vector<32x512xbf16>
    %c0_4 = arith.constant 0 : index
    %c0_5 = arith.constant 0 : index
    %5 = vector.load %arg4[%c0_4, %c0_5] : memref<512x128xbf16, #tpu.memory_space<vmem>>, vector<512x128xbf16>
    %cst = arith.constant dense<0.000000e+00> : vector<32x128xf32>
    %6 = tpu.matmul %4, %5, %cst {dimension_numbers = #tpu.dot_dimension_numbers<[1], [0], [0], [1], [0, 0, 1, 1], [], []>} : vector<32x512xbf16>, vector<512x128xbf16>, vector<32x128xf32> -> vector<32x128xf32>
    %7 = arith.addf %3, %6 : vector<32x128xf32>
    %c0_6 = arith.constant 0 : index
    %c0_7 = arith.constant 0 : index
    %8 = vector.load %arg6[%c0_6, %c0_7] : memref<32x128xf32, #tpu.memory_space<vmem>>, vector<32x128xf32>
    tpu.vector_store %arg6[%c0_6, %c0_7], %7 {strides = array<i32>} : memref<32x128xf32, #tpu.memory_space<vmem>>, vector<32x128xf32>,
    %c2_i32 = arith.constant 2 : i32
    %9 = arith.cmpi eq, %arg2, %c2_i32 : i32
    %10 = arith.extui %9 : i1 to i32
    %c0_i32_8 = arith.constant 0 : i32
    %11 = arith.cmpi ne, %10, %c0_i32_8 : i32
    scf.if %11 {
      %c0_9 = arith.constant 0 : index
      %c0_10 = arith.constant 0 : index
      %12 = vector.load %arg6[%c0_9, %c0_10] : memref<32x128xf32, #tpu.memory_space<vmem>>, vector<32x128xf32>
      %c0_11 = arith.constant 0 : index
      %c0_12 = arith.constant 0 : index
      %13 = vector.load %arg5[%c0_11, %c0_12] : memref<32x128xf32, #tpu.memory_space<vmem>>, vector<32x128xf32>
      tpu.vector_store %arg5[%c0_11, %c0_12], %12 {strides = array<i32>} : memref<32x128xf32, #tpu.memory_space<vmem>>, vector<32x128xf32>,
    } else {
    }
    return
  }
  func.func @transform_0(%arg0: i32, %arg1: i32, %arg2: i32) -> (i32, i32) {
    %c0_i32 = arith.constant 0 : i32
    return %arg0, %arg2 : i32, i32
  }
  func.func @transform_1(%arg0: i32, %arg1: i32, %arg2: i32) -> (i32, i32) {
    %c0_i32 = arith.constant 0 : i32
    return %arg2, %arg1 : i32, i32
  }
  func.func @transform_2(%arg0: i32, %arg1: i32, %arg2: i32) -> (i32, i32) {
    %c0_i32 = arith.constant 0 : i32
    return %arg0, %arg1 : i32, i32
  }
}

module attributes {stable_mosaic.version = 11 : i64} {
  func.func @_matmul_kernel(%arg0: i32, %arg1: i32, %arg2: i32, %arg3: memref<32x512xbf16, #tpu.memory_space<vmem>>, %arg4: memref<512x128xbf16, #tpu.memory_space<vmem>>, %arg5: memref<32x128xf32, #tpu.memory_space<vmem>>, %arg6: memref<32x128xf32, #tpu.memory_space<vmem>>) attributes {dimension_semantics = [#tpu.dimension_semantics<parallel>, #tpu.dimension_semantics<parallel>, #tpu.dimension_semantics<arbitrary>], iteration_bounds = array<i64: 1, 1, 1>, scalar_prefetch = 0 : i64, scratch_operands = 1 : i64, tpu.core_type = #tpu.core_type<tc>, window_params = [{transform_indices = @transform_0, window_bounds = array<i64: 32, 512>}, {transform_indices = @transform_1, window_bounds = array<i64: 512, 128>}, {transform_indices = @transform_2, window_bounds = array<i64: 32, 128>}]} {
    %c0_i32 = arith.constant 0 : i32
    %0 = arith.cmpi eq, %arg2, %c0_i32 : i32
    %1 = arith.extui %0 : i1 to i32
    %c0_i32_0 = arith.constant 0 : i32
    %2 = arith.cmpi ne, %1, %c0_i32_0 : i32
    scf.if %2 {
      %cst_10 = arith.constant 0.000000e+00 : f32
      %12 = vector.broadcast %cst_10 : f32 to vector<32x128xf32>
      %c0_11 = arith.constant 0 : index
      %c0_12 = arith.constant 0 : index
      %13 = vector.load %arg6[%c0_11, %c0_12] : memref<32x128xf32, #tpu.memory_space<vmem>>, vector<32x128xf32>
      tpu.vector_store %arg6[%c0_11, %c0_12], %12 {strides = array<i32>} : memref<32x128xf32, #tpu.memory_space<vmem>>, vector<32x128xf32>,
    } else {
    }
    %c0 = arith.constant 0 : index
    %c0_1 = arith.constant 0 : index
    %3 = vector.load %arg6[%c0, %c0_1] : memref<32x128xf32, #tpu.memory_space<vmem>>, vector<32x128xf32>
    %c0_2 = arith.constant 0 : index
    %c0_3 = arith.constant 0 : index
    %4 = vector.load %arg3[%c0_2, %c0_3] : memref<32x512xbf16, #tpu.memory_space<vmem>>, vector<32x512xbf16>
    %c0_4 = arith.constant 0 : index
    %c0_5 = arith.constant 0 : index
    %5 = vector.load %arg4[%c0_4, %c0_5] : memref<512x128xbf16, #tpu.memory_space<vmem>>, vector<512x128xbf16>
    %cst = arith.constant dense<0.000000e+00> : vector<32x128xf32>
    %6 = tpu.matmul %4, %5, %cst {dimension_numbers = #tpu.dot_dimension_numbers<[1], [0], [0], [1], [0, 0, 1, 1], [], []>} : vector<32x512xbf16>, vector<512x128xbf16>, vector<32x128xf32> -> vector<32x128xf32>
    %7 = arith.addf %3, %6 : vector<32x128xf32>
    %c0_6 = arith.constant 0 : index
    %c0_7 = arith.constant 0 : index
    %8 = vector.load %arg6[%c0_6, %c0_7] : memref<32x128xf32, #tpu.memory_space<vmem>>, vector<32x128xf32>
    tpu.vector_store %arg6[%c0_6, %c0_7], %7 {strides = array<i32>} : memref<32x128xf32, #tpu.memory_space<vmem>>, vector<32x128xf32>,
    %c0_i32_8 = arith.constant 0 : i32
    %9 = arith.cmpi eq, %arg2, %c0_i32_8 : i32
    %10 = arith.extui %9 : i1 to i32
    %c0_i32_9 = arith.constant 0 : i32
    %11 = arith.cmpi ne, %10, %c0_i32_9 : i32
    scf.if %11 {
      %c0_10 = arith.constant 0 : index
      %c0_11 = arith.constant 0 : index
      %12 = vector.load %arg6[%c0_10, %c0_11] : memref<32x128xf32, #tpu.memory_space<vmem>>, vector<32x128xf32>
      %c0_12 = arith.constant 0 : index
      %c0_13 = arith.constant 0 : index
      %13 = vector.load %arg5[%c0_12, %c0_13] : memref<32x128xf32, #tpu.memory_space<vmem>>, vector<32x128xf32>
      tpu.vector_store %arg5[%c0_12, %c0_13], %12 {strides = array<i32>} : memref<32x128xf32, #tpu.memory_space<vmem>>, vector<32x128xf32>,
    } else {
    }
    return
  }
  func.func @transform_0(%arg0: i32, %arg1: i32, %arg2: i32) -> (i32, i32) {
    %c0_i32 = arith.constant 0 : i32
    return %arg0, %arg2 : i32, i32
  }
  func.func @transform_1(%arg0: i32, %arg1: i32, %arg2: i32) -> (i32, i32) {
    %c0_i32 = arith.constant 0 : i32
    return %arg2, %arg1 : i32, i32
  }
  func.func @transform_2(%arg0: i32, %arg1: i32, %arg2: i32) -> (i32, i32) {
    %c0_i32 = arith.constant 0 : i32
    return %arg0, %arg1 : i32, i32
  }
}

module attributes {stable_mosaic.version = 11 : i64} {
  func.func @_matmul_kernel(%arg0: i32, %arg1: i32, %arg2: i32, %arg3: memref<128x256xbf16, #tpu.memory_space<vmem>>, %arg4: memref<256x128xbf16, #tpu.memory_space<vmem>>, %arg5: memref<128x128xf32, #tpu.memory_space<vmem>>, %arg6: memref<128x128xf32, #tpu.memory_space<vmem>>) attributes {dimension_semantics = [#tpu.dimension_semantics<parallel>, #tpu.dimension_semantics<parallel>, #tpu.dimension_semantics<arbitrary>], iteration_bounds = array<i64: 1, 1, 1>, scalar_prefetch = 0 : i64, scratch_operands = 1 : i64, tpu.core_type = #tpu.core_type<tc>, window_params = [{transform_indices = @transform_0, window_bounds = array<i64: 128, 256>}, {transform_indices = @transform_1, window_bounds = array<i64: 256, 128>}, {transform_indices = @transform_2, window_bounds = array<i64: 128, 128>}]} {
    %c0_i32 = arith.constant 0 : i32
    %0 = arith.cmpi eq, %arg2, %c0_i32 : i32
    %1 = arith.extui %0 : i1 to i32
    %c0_i32_0 = arith.constant 0 : i32
    %2 = arith.cmpi ne, %1, %c0_i32_0 : i32
    scf.if %2 {
      %cst_10 = arith.constant 0.000000e+00 : f32
      %12 = vector.broadcast %cst_10 : f32 to vector<128x128xf32>
      %c0_11 = arith.constant 0 : index
      %c0_12 = arith.constant 0 : index
      %13 = vector.load %arg6[%c0_11, %c0_12] : memref<128x128xf32, #tpu.memory_space<vmem>>, vector<128x128xf32>
      tpu.vector_store %arg6[%c0_11, %c0_12], %12 {strides = array<i32>} : memref<128x128xf32, #tpu.memory_space<vmem>>, vector<128x128xf32>,
    } else {
    }
    %c0 = arith.constant 0 : index
    %c0_1 = arith.constant 0 : index
    %3 = vector.load %arg6[%c0, %c0_1] : memref<128x128xf32, #tpu.memory_space<vmem>>, vector<128x128xf32>
    %c0_2 = arith.constant 0 : index
    %c0_3 = arith.constant 0 : index
    %4 = vector.load %arg3[%c0_2, %c0_3] : memref<128x256xbf16, #tpu.memory_space<vmem>>, vector<128x256xbf16>
    %c0_4 = arith.constant 0 : index
    %c0_5 = arith.constant 0 : index
    %5 = vector.load %arg4[%c0_4, %c0_5] : memref<256x128xbf16, #tpu.memory_space<vmem>>, vector<256x128xbf16>
    %cst = arith.constant dense<0.000000e+00> : vector<128x128xf32>
    %6 = tpu.matmul %4, %5, %cst {dimension_numbers = #tpu.dot_dimension_numbers<[1], [0], [0], [1], [0, 0, 1, 1], [], []>} : vector<128x256xbf16>, vector<256x128xbf16>, vector<128x128xf32> -> vector<128x128xf32>
    %7 = arith.addf %3, %6 : vector<128x128xf32>
    %c0_6 = arith.constant 0 : index
    %c0_7 = arith.constant 0 : index
    %8 = vector.load %arg6[%c0_6, %c0_7] : memref<128x128xf32, #tpu.memory_space<vmem>>, vector<128x128xf32>
    tpu.vector_store %arg6[%c0_6, %c0_7], %7 {strides = array<i32>} : memref<128x128xf32, #tpu.memory_space<vmem>>, vector<128x128xf32>,
    %c0_i32_8 = arith.constant 0 : i32
    %9 = arith.cmpi eq, %arg2, %c0_i32_8 : i32
    %10 = arith.extui %9 : i1 to i32
    %c0_i32_9 = arith.constant 0 : i32
    %11 = arith.cmpi ne, %10, %c0_i32_9 : i32
    scf.if %11 {
      %c0_10 = arith.constant 0 : index
      %c0_11 = arith.constant 0 : index
      %12 = vector.load %arg6[%c0_10, %c0_11] : memref<128x128xf32, #tpu.memory_space<vmem>>, vector<128x128xf32>
      %c0_12 = arith.constant 0 : index
      %c0_13 = arith.constant 0 : index
      %13 = vector.load %arg5[%c0_12, %c0_13] : memref<128x128xf32, #tpu.memory_space<vmem>>, vector<128x128xf32>
      tpu.vector_store %arg5[%c0_12, %c0_13], %12 {strides = array<i32>} : memref<128x128xf32, #tpu.memory_space<vmem>>, vector<128x128xf32>,
    } else {
    }
    return
  }
  func.func @transform_0(%arg0: i32, %arg1: i32, %arg2: i32) -> (i32, i32) {
    %c0_i32 = arith.constant 0 : i32
    return %arg0, %arg2 : i32, i32
  }
  func.func @transform_1(%arg0: i32, %arg1: i32, %arg2: i32) -> (i32, i32) {
    %c0_i32 = arith.constant 0 : i32
    return %arg2, %arg1 : i32, i32
  }
  func.func @transform_2(%arg0: i32, %arg1: i32, %arg2: i32) -> (i32, i32) {
    %c0_i32 = arith.constant 0 : i32
    return %arg0, %arg1 : i32, i32
  }
}

module attributes {stable_mosaic.version = 11 : i64} {
  func.func @_matmul_kernel(%arg0: i32, %arg1: i32, %arg2: i32, %arg3: memref<256x512xbf16, #tpu.memory_space<vmem>>, %arg4: memref<512x128xbf16, #tpu.memory_space<vmem>>, %arg5: memref<256x128xf32, #tpu.memory_space<vmem>>, %arg6: memref<256x128xf32, #tpu.memory_space<vmem>>) attributes {dimension_semantics = [#tpu.dimension_semantics<parallel>, #tpu.dimension_semantics<parallel>, #tpu.dimension_semantics<arbitrary>], iteration_bounds = array<i64: 2, 1, 4>, scalar_prefetch = 0 : i64, scratch_operands = 1 : i64, tpu.core_type = #tpu.core_type<tc>, window_params = [{transform_indices = @transform_0, window_bounds = array<i64: 256, 512>}, {transform_indices = @transform_1, window_bounds = array<i64: 512, 128>}, {transform_indices = @transform_2, window_bounds = array<i64: 256, 128>}]} {
    %c0_i32 = arith.constant 0 : i32
    %0 = arith.cmpi eq, %arg2, %c0_i32 : i32
    %1 = arith.extui %0 : i1 to i32
    %c0_i32_0 = arith.constant 0 : i32
    %2 = arith.cmpi ne, %1, %c0_i32_0 : i32
    scf.if %2 {
      %cst_9 = arith.constant 0.000000e+00 : f32
      %12 = vector.broadcast %cst_9 : f32 to vector<256x128xf32>
      %c0_10 = arith.constant 0 : index
      %c0_11 = arith.constant 0 : index
      %13 = vector.load %arg6[%c0_10, %c0_11] : memref<256x128xf32, #tpu.memory_space<vmem>>, vector<256x128xf32>
      tpu.vector_store %arg6[%c0_10, %c0_11], %12 {strides = array<i32>} : memref<256x128xf32, #tpu.memory_space<vmem>>, vector<256x128xf32>,
    } else {
    }
    %c0 = arith.constant 0 : index
    %c0_1 = arith.constant 0 : index
    %3 = vector.load %arg6[%c0, %c0_1] : memref<256x128xf32, #tpu.memory_space<vmem>>, vector<256x128xf32>
    %c0_2 = arith.constant 0 : index
    %c0_3 = arith.constant 0 : index
    %4 = vector.load %arg3[%c0_2, %c0_3] : memref<256x512xbf16, #tpu.memory_space<vmem>>, vector<256x512xbf16>
    %c0_4 = arith.constant 0 : index
    %c0_5 = arith.constant 0 : index
    %5 = vector.load %arg4[%c0_4, %c0_5] : memref<512x128xbf16, #tpu.memory_space<vmem>>, vector<512x128xbf16>
    %cst = arith.constant dense<0.000000e+00> : vector<256x128xf32>
    %6 = tpu.matmul %4, %5, %cst {dimension_numbers = #tpu.dot_dimension_numbers<[1], [0], [0], [1], [0, 0, 1, 1], [], []>} : vector<256x512xbf16>, vector<512x128xbf16>, vector<256x128xf32> -> vector<256x128xf32>
    %7 = arith.addf %3, %6 : vector<256x128xf32>
    %c0_6 = arith.constant 0 : index
    %c0_7 = arith.constant 0 : index
    %8 = vector.load %arg6[%c0_6, %c0_7] : memref<256x128xf32, #tpu.memory_space<vmem>>, vector<256x128xf32>
    tpu.vector_store %arg6[%c0_6, %c0_7], %7 {strides = array<i32>} : memref<256x128xf32, #tpu.memory_space<vmem>>, vector<256x128xf32>,
    %c3_i32 = arith.constant 3 : i32
    %9 = arith.cmpi eq, %arg2, %c3_i32 : i32
    %10 = arith.extui %9 : i1 to i32
    %c0_i32_8 = arith.constant 0 : i32
    %11 = arith.cmpi ne, %10, %c0_i32_8 : i32
    scf.if %11 {
      %c0_9 = arith.constant 0 : index
      %c0_10 = arith.constant 0 : index
      %12 = vector.load %arg6[%c0_9, %c0_10] : memref<256x128xf32, #tpu.memory_space<vmem>>, vector<256x128xf32>
      %13 = math.tanh %12 : vector<256x128xf32>
      %c0_11 = arith.constant 0 : index
      %c0_12 = arith.constant 0 : index
      %14 = vector.load %arg5[%c0_11, %c0_12] : memref<256x128xf32, #tpu.memory_space<vmem>>, vector<256x128xf32>
      tpu.vector_store %arg5[%c0_11, %c0_12], %13 {strides = array<i32>} : memref<256x128xf32, #tpu.memory_space<vmem>>, vector<256x128xf32>,
    } else {
    }
    return
  }
  func.func @transform_0(%arg0: i32, %arg1: i32, %arg2: i32) -> (i32, i32) {
    %c0_i32 = arith.constant 0 : i32
    return %arg0, %arg2 : i32, i32
  }
  func.func @transform_1(%arg0: i32, %arg1: i32, %arg2: i32) -> (i32, i32) {
    %c0_i32 = arith.constant 0 : i32
    return %arg2, %arg1 : i32, i32
  }
  func.func @transform_2(%arg0: i32, %arg1: i32, %arg2: i32) -> (i32, i32) {
    %c0_i32 = arith.constant 0 : i32
    return %arg0, %arg1 : i32, i32
  }
}

</mosaic_0001>

<llo_original>
// kernel: generator_forward.25
$region0: #{generator_forward.25}
  #allocation0 [shape = 'u32[]', space=smem, size = 0x4, offset = 0x4, fixed_abs, tag = 'smem constant byte address 0x4 - core index']
  #allocation1 [shape = 'u32[144,128]{1,0:T(1,128)}', space=vmem, size = 0x12000, scoped, tag = 'internal scratch']
  #allocation2 [shape = 'f32[256,128]{1,0:T(8,128)}', space=vmem, size = 0x20000, scoped, tag = 'scratch operand']
  %s0 = inlined_call_operand.vmem [shape: bf16[512,512], index: 0, kind: input, shape index: {}]
  %s1 = inlined_call_operand.vmem [shape: bf16[512,128], index: 1, kind: input, shape index: {}]
  %s2 = inlined_call_operand.vmem [shape: f32[512,128], index: 2, kind: output, shape index: {}]
  %s3 = sld [smem:[#allocation0]]
  $region49: #{generator_forward.25} parent=0
    _
  %s5 = ssub.s32 1, %s3
  %s6 = scalar_select 0, %s5, %s3
  loop: start=0, step=1, limit=4
  $region2: #{generator_forward.25} parent=0 // loop_pre_header
    _
  $region3: #{generator_forward.25} parent=0 // loop_header
    %s8 = sphi 0, %s12
    %p9 = scmp.ge.s32.totalorder %s8, 4
    %s15 = sphi 0, %s34
    %s16 = sphi 0, %s30
    %s17 = sphi 0, %s26
    %s18 = sphi 0, %s15
    %s19 = sphi 0, %s16
    %s20 = sphi 0, %s17
    %s21 = sphi 0, %s18
    %s22 = sphi 0, %s19
    %s23 = sphi 0, %s20
    %s39 = sphi 0, %s41
    %s42 = sphi 0, %s39
    %s43 = sphi 0, %s42
    %s59 = sphi 0, %s43
    %s67 = sphi 0, %s69
    %s70 = sphi 0, %s67
    %s71 = sphi 0, %s70
    %s87 = sphi 0, %s71
    %s95 = sphi 0, %s97
    %s98 = sphi 0, %s95
    %s99 = sphi 0, %s98
    %s115 = sphi 0, %s99
  $region4: #{generator_forward.25} parent=0 // loop_header_branch
    %11 = sbr.rel (%p9) target = $region8
  $region5: #{generator_forward.25} parent=0 // loop_body
    %s13 = ssub.s32 %s8, 1
    %s14 = ssub.s32 %s8, 2
    %s24 = sadd.s32 1, %s17
    %p25 = scmp.ge.s32.totalorder %s24, 1
    %s26 = scalar_select %p25, 0, %s24
    %s27 = sadd.s32 1, %s16
    %s28 = scalar_select %p25, %s27, %s16
    %p29 = scmp.ge.s32.totalorder %s28, 1
    %s30 = scalar_select %p29, 0, %s28
    %s31 = sadd.s32 1, %s15
    %s32 = scalar_select %p29, %s31, %s15
    %p33 = scmp.ge.s32.totalorder %s32, 2
    %s34 = scalar_select %p33, 0, %s32
    %s35 = ssub.s32 %s15, %s34
    %s36 = ssub.s32 %s17, %s26
    %s37 = sor.u32 %s35, %s36
    %p38 = scmp.eq.s32.totalorder %s37, 0
    %s40 = sadd.s32 %s39, 1
    %s41 = scalar_select %p38, %s39, %s40
    %p44 = pneg %p38
    %p45 = scmp.eq.s32.totalorder %s8, 1
    %p46 = por %p44, %p45
    %p47 = scmp.ne.s32.totalorder %s39, %s42
    %p48 = scmp.eq.s32.totalorder %s8, 0
    %p49 = por %p47, %p48
    %p50 = scmp.ne.s32.totalorder %s39, %s42
    %p51 = scmp.eq.s32.totalorder %s13, 1
    %p52 = por %p50, %p51
    %p53 = scmp.ne.s32.totalorder %s42, %s43
    %p54 = scmp.eq.s32.totalorder %s13, 0
    %p55 = por %p53, %p54
    %p56 = scmp.ne.s32.totalorder %s42, %s43
    %p57 = scmp.eq.s32.totalorder %s14, 1
    %p58 = por %p56, %p57
    %p60 = scmp.ne.s32.totalorder %s43, %s59
    %p61 = scmp.eq.s32.totalorder %s14, 0
    %p62 = por %p60, %p61
    %s63 = ssub.s32 %s17, %s26
    %s64 = ssub.s32 %s16, %s30
    %s65 = sor.u32 %s63, %s64
    %p66 = scmp.eq.s32.totalorder %s65, 0
    %s68 = sadd.s32 %s67, 1
    %s69 = scalar_select %p66, %s67, %s68
    %p72 = pneg %p66
    %p73 = scmp.eq.s32.totalorder %s8, 1
    %p74 = por %p72, %p73
    %p75 = scmp.ne.s32.totalorder %s67, %s70
    %p76 = scmp.eq.s32.totalorder %s8, 0
    %p77 = por %p75, %p76
    %p78 = scmp.ne.s32.totalorder %s67, %s70
    %p79 = scmp.eq.s32.totalorder %s13, 1
    %p80 = por %p78, %p79
    %p81 = scmp.ne.s32.totalorder %s70, %s71
    %p82 = scmp.eq.s32.totalorder %s13, 0
    %p83 = por %p81, %p82
    %p84 = scmp.ne.s32.totalorder %s70, %s71
    %p85 = scmp.eq.s32.totalorder %s14, 1
    %p86 = por %p84, %p85
    %p88 = scmp.ne.s32.totalorder %s71, %s87
    %p89 = scmp.eq.s32.totalorder %s14, 0
    %p90 = por %p88, %p89
    %s91 = ssub.s32 %s15, %s34
    %s92 = ssub.s32 %s16, %s30
    %s93 = sor.u32 %s91, %s92
    %p94 = scmp.eq.s32.totalorder %s93, 0
    %s96 = sadd.s32 %s95, 1
    %s97 = scalar_select %p94, %s95, %s96
    %p100 = pneg %p94
    %p101 = scmp.eq.s32.totalorder %s8, 1
    %p102 = por %p100, %p101
    %p103 = scmp.ne.s32.totalorder %s95, %s98
    %p104 = scmp.eq.s32.totalorder %s8, 0
    %p105 = por %p103, %p104
    %p106 = scmp.ne.s32.totalorder %s95, %s98
    %p107 = scmp.eq.s32.totalorder %s13, 1
    %p108 = por %p106, %p107
    %p109 = scmp.ne.s32.totalorder %s98, %s99
    %p110 = scmp.eq.s32.totalorder %s13, 0
    %p111 = por %p109, %p110
    %p112 = scmp.ne.s32.totalorder %s98, %s99
    %p113 = scmp.eq.s32.totalorder %s14, 1
    %p114 = por %p112, %p113
    %p116 = scmp.ne.s32.totalorder %s99, %s115
    %p117 = scmp.eq.s32.totalorder %s14, 0
    %p118 = por %p116, %p117
    %p119 = scmp.le.s32.totalorder 1, %s8
    %p120 = scmp.lt.s32.totalorder %s8, 3
    %p121 = pnand %p119, %p120
    %p122 = pneg %p121
    // Predicated region
    $region9: #{generator_forward.25} parent=5 // pred_check
      _
    $region10: #{generator_forward.25} parent=5 // pred_check_branch
      %124 = sbr.rel (%p121) target = $region12
    $region11: #{generator_forward.25} parent=5 // pred_region
      %s125 = ssub.s32 %s8, 1
      // Predicated region
      $region13: #{generator_forward.25} parent=11 // pred_check
        %p126 = pneg %p83
      $region14: #{generator_forward.25} parent=11 // pred_check_branch
        %128 = sbr.rel (%p126) target = $region16
      $region15: #{generator_forward.25} parent=11 // pred_region
        %s129 = smul.u32 64, %s20
        %p130 = scmp.lt.s32.totalorder %s129, 63
        %s131 = scalar_select %p130, %s129, 63
        %p132 = scmp.lt.s32.totalorder %s19, 0
        %s133 = scalar_select %p132, %s19, 0
        %s134 = sadd.s32 %s133, %s131
        %s135 = smul.addr %s134, 4
        %s136 = scalar_lea.vmem %s1, %s135
        %s137 = smul.u32 64, %s20
      $region16: #{generator_forward.25} parent=11 // pred_fallthru
        _
    $region12: #{generator_forward.25} parent=5 // pred_fallthru
      _
    %p138 = scmp.lt.s32.totalorder %s8, 2
    // Predicated region
    $region17: #{generator_forward.25} parent=5 // pred_check
      %p139 = pneg %p138
    $region18: #{generator_forward.25} parent=5 // pred_check_branch
      %141 = sbr.rel (%p139) target = $region20
    $region19: #{generator_forward.25} parent=5 // pred_region
      // Predicated region
      $region21: #{generator_forward.25} parent=19 // pred_check
        %p142 = pneg %p49
      $region22: #{generator_forward.25} parent=19 // pred_check_branch
        %144 = sbr.rel (%p142) target = $region24
      $region23: #{generator_forward.25} parent=19 // pred_region
        %s145 = smul.u32 32, %s15
        %s146 = smul.u32 4, %s17
        %p147 = scmp.lt.s32.totalorder %s145, 63
        %s148 = scalar_select %p147, %s145, 63
        %p149 = scmp.lt.s32.totalorder %s146, 3
        %s150 = scalar_select %p149, %s146, 3
        %s151 = smul.addr %s148, 4
        %s152 = sadd.s32 %s150, %s151
        %s153 = smul.addr %s152, 4
        %s154 = scalar_lea.vmem %s0, %s153
        %s155 = smul.u32 32, %s15
        %s156 = smul.u32 4, %s17
      $region24: #{generator_forward.25} parent=19 // pred_fallthru
        _
    $region20: #{generator_forward.25} parent=5 // pred_fallthru
      _
    %p157 = scmp.le.s32.totalorder 1, %s8
    %p158 = scmp.lt.s32.totalorder %s8, 3
    %p159 = pnand %p157, %p158
    %p160 = pneg %p159
    // Predicated region
    $region25: #{generator_forward.25} parent=5 // pred_check
      _
    $region26: #{generator_forward.25} parent=5 // pred_check_branch
      %162 = sbr.rel (%p159) target = $region28
    $region27: #{generator_forward.25} parent=5 // pred_region
      %s163 = ssub.s32 %s8, 1
      %s164 = smul.u32 32, %s18
      %s165 = smul.u32 4, %s20
      %p166 = scmp.lt.s32.totalorder %s164, 63
      %s167 = scalar_select %p166, %s164, 63
      %p168 = scmp.lt.s32.totalorder %s165, 3
      %s169 = scalar_select %p168, %s165, 3
      %s170 = smul.addr %s167, 4
      %s171 = sadd.s32 %s169, %s170
      %s172 = smul.addr %s171, 4
      %s173 = scalar_lea.vmem %s0, %s172
      %p174 = pneg %p55
      %p175 = pneg %p52
      %s176 = smul.u32 64, %s20
      %p177 = scmp.lt.s32.totalorder %s176, 63
      %s178 = scalar_select %p177, %s176, 63
      %p179 = scmp.lt.s32.totalorder %s19, 0
      %s180 = scalar_select %p179, %s19, 0
      %s181 = sadd.s32 %s180, %s178
      %s182 = smul.addr %s181, 4
      %s183 = scalar_lea.vmem %s1, %s182
      %p184 = pneg %p83
      %p185 = pneg %p80
      %p186 = pneg %p111
      %p187 = pneg %p108
      %s188 = smul.u32 32, %s18
      %p189 = scmp.lt.s32.totalorder %s188, 63
      %s190 = scalar_select %p189, %s188, 63
      %p191 = scmp.lt.s32.totalorder %s19, 0
      %s192 = scalar_select %p191, %s19, 0
      %s193 = sadd.s32 %s192, %s190
      %s194 = smul.addr %s193, 8
      %s195 = scalar_lea.vmem %s2, %s194
      %s196 = smul.u32 32, %s18
      %s197 = smul.u32 4, %s20
      %p198 = scmp.lt.s32.totalorder %s196, 63
      %s199 = scalar_select %p198, %s196, 63
      %p200 = scmp.lt.s32.totalorder %s197, 3
      %s201 = scalar_select %p200, %s197, 3
      %s202 = smul.addr %s199, 4
      %s203 = sadd.s32 %s201, %s202
      %s204 = smul.addr %s203, 4
      %s205 = scalar_lea.vmem %s0, %s204
      %s206 = smul.u32 32, %s18
      %s207 = smul.u32 4, %s20
      %s208 = smul.u32 64, %s20
      %p209 = scmp.lt.s32.totalorder %s208, 63
      %s210 = scalar_select %p209, %s208, 63
      %p211 = scmp.lt.s32.totalorder %s19, 0
      %s212 = scalar_select %p211, %s19, 0
      %s213 = sadd.s32 %s212, %s210
      %s214 = smul.addr %s213, 4
      %s215 = scalar_lea.vmem %s1, %s214
      %s216 = smul.u32 64, %s20
      %s217 = smul.u32 32, %s18
      %p218 = scmp.lt.s32.totalorder %s217, 63
      %s219 = scalar_select %p218, %s217, 63
      %p220 = scmp.lt.s32.totalorder %s19, 0
      %s221 = scalar_select %p220, %s19, 0
      %s222 = sadd.s32 %s221, %s219
      %s223 = smul.addr %s222, 8
      %s224 = scalar_lea.vmem %s2, %s223
      %s225 = smul.u32 32, %s18
      %p227 = scmp.eq.s32.totalorder %s20, 0
      // Predicated region
      $region29: #{generator_forward.25} parent=27 // pred_check
        %p228 = pneg %p227
      $region30: #{generator_forward.25} parent=27 // pred_check_branch
        %230 = sbr.rel (%p228) target = $region32
      $region31: #{generator_forward.25} parent=27 // pred_region
        %231 = vst [vmem:[#allocation2] sm:$0xff] 0.0
        %232 = vst [vmem:[#allocation2 + $0x8] sm:$0xff] 0.0
        %233 = vst [vmem:[#allocation2 + $0x10] sm:$0xff] 0.0
        %234 = vst [vmem:[#allocation2 + $0x18] sm:$0xff] 0.0
        %235 = vst [vmem:[#allocation2 + $0x20] sm:$0xff] 0.0
        %236 = vst [vmem:[#allocation2 + $0x28] sm:$0xff] 0.0
        %237 = vst [vmem:[#allocation2 + $0x30] sm:$0xff] 0.0
        %238 = vst [vmem:[#allocation2 + $0x38] sm:$0xff] 0.0
        %239 = vst [vmem:[#allocation2 + $0x40] sm:$0xff] 0.0
        %240 = vst [vmem:[#allocation2 + $0x48] sm:$0xff] 0.0
        %241 = vst [vmem:[#allocation2 + $0x50] sm:$0xff] 0.0
        %242 = vst [vmem:[#allocation2 + $0x58] sm:$0xff] 0.0
        %243 = vst [vmem:[#allocation2 + $0x60] sm:$0xff] 0.0
        %244 = vst [vmem:[#allocation2 + $0x68] sm:$0xff] 0.0
        %245 = vst [vmem:[#allocation2 + $0x70] sm:$0xff] 0.0
        %246 = vst [vmem:[#allocation2 + $0x78] sm:$0xff] 0.0
        %247 = vst [vmem:[#allocation2 + $0x80] sm:$0xff] 0.0
        %248 = vst [vmem:[#allocation2 + $0x88] sm:$0xff] 0.0
        %249 = vst [vmem:[#allocation2 + $0x90] sm:$0xff] 0.0
        %250 = vst [vmem:[#allocation2 + $0x98] sm:$0xff] 0.0
        %251 = vst [vmem:[#allocation2 + $0xa0] sm:$0xff] 0.0
        %252 = vst [vmem:[#allocation2 + $0xa8] sm:$0xff] 0.0
        %253 = vst [vmem:[#allocation2 + $0xb0] sm:$0xff] 0.0
        %254 = vst [vmem:[#allocation2 + $0xb8] sm:$0xff] 0.0
        %255 = vst [vmem:[#allocation2 + $0xc0] sm:$0xff] 0.0
        %256 = vst [vmem:[#allocation2 + $0xc8] sm:$0xff] 0.0
        %257 = vst [vmem:[#allocation2 + $0xd0] sm:$0xff] 0.0
        %258 = vst [vmem:[#allocation2 + $0xd8] sm:$0xff] 0.0
        %259 = vst [vmem:[#allocation2 + $0xe0] sm:$0xff] 0.0
        %260 = vst [vmem:[#allocation2 + $0xe8] sm:$0xff] 0.0
        %261 = vst [vmem:[#allocation2 + $0xf0] sm:$0xff] 0.0
        %262 = vst [vmem:[#allocation2 + $0xf8] sm:$0xff] 0.0
      $region32: #{generator_forward.25} parent=27 // pred_fallthru
        _
      %v263 = vld [vmem:[#allocation2] sm:$0xff]
      %v264 = vld [vmem:[#allocation2 + $0x8] sm:$0xff]
      %v265 = vld [vmem:[#allocation2 + $0x10] sm:$0xff]
      %v266 = vld [vmem:[#allocation2 + $0x18] sm:$0xff]
      %v267 = vld [vmem:[#allocation2 + $0x20] sm:$0xff]
      %v268 = vld [vmem:[#allocation2 + $0x28] sm:$0xff]
      %v269 = vld [vmem:[#allocation2 + $0x30] sm:$0xff]
      %v270 = vld [vmem:[#allocation2 + $0x38] sm:$0xff]
      %v271 = vld [vmem:[#allocation2 + $0x40] sm:$0xff]
      %v272 = vld [vmem:[#allocation2 + $0x48] sm:$0xff]
      %v273 = vld [vmem:[#allocation2 + $0x50] sm:$0xff]
      %v274 = vld [vmem:[#allocation2 + $0x58] sm:$0xff]
      %v275 = vld [vmem:[#allocation2 + $0x60] sm:$0xff]
      %v276 = vld [vmem:[#allocation2 + $0x68] sm:$0xff]
      %v277 = vld [vmem:[#allocation2 + $0x70] sm:$0xff]
      %v278 = vld [vmem:[#allocation2 + $0x78] sm:$0xff]
      %v279 = vld [vmem:[#allocation2 + $0x80] sm:$0xff]
      %v280 = vld [vmem:[#allocation2 + $0x88] sm:$0xff]
      %v281 = vld [vmem:[#allocation2 + $0x90] sm:$0xff]
      %v282 = vld [vmem:[#allocation2 + $0x98] sm:$0xff]
      %v283 = vld [vmem:[#allocation2 + $0xa0] sm:$0xff]
      %v284 = vld [vmem:[#allocation2 + $0xa8] sm:$0xff]
      %v285 = vld [vmem:[#allocation2 + $0xb0] sm:$0xff]
      %v286 = vld [vmem:[#allocation2 + $0xb8] sm:$0xff]
      %v287 = vld [vmem:[#allocation2 + $0xc0] sm:$0xff]
      %v288 = vld [vmem:[#allocation2 + $0xc8] sm:$0xff]
      %v289 = vld [vmem:[#allocation2 + $0xd0] sm:$0xff]
      %v290 = vld [vmem:[#allocation2 + $0xd8] sm:$0xff]
      %v291 = vld [vmem:[#allocation2 + $0xe0] sm:$0xff]
      %v292 = vld [vmem:[#allocation2 + $0xe8] sm:$0xff]
      %v293 = vld [vmem:[#allocation2 + $0xf0] sm:$0xff]
      %v294 = vld [vmem:[#allocation2 + $0xf8] sm:$0xff]
      %v295 = vld [vmem:[%s205] sm:$0xff]
      %v296 = vld [vmem:[%s205 + $0x8] sm:$0xff]
      %v297 = vld [vmem:[%s205 + $0x10] sm:$0xff]
      %v298 = vld [vmem:[%s205 + $0x18] sm:$0xff]
      %v299 = vld [vmem:[%s205 + $0x20] sm:$0xff]
      %v300 = vld [vmem:[%s205 + $0x28] sm:$0xff]
      %v301 = vld [vmem:[%s205 + $0x30] sm:$0xff]
      %v302 = vld [vmem:[%s205 + $0x38] sm:$0xff]
      %v303 = vld [vmem:[%s205 + $0x40] sm:$0xff]
      %v304 = vld [vmem:[%s205 + $0x48] sm:$0xff]
      %v305 = vld [vmem:[%s205 + $0x50] sm:$0xff]
      %v306 = vld [vmem:[%s205 + $0x58] sm:$0xff]
      %v307 = vld [vmem:[%s205 + $0x60] sm:$0xff]
      %v308 = vld [vmem:[%s205 + $0x68] sm:$0xff]
      %v309 = vld [vmem:[%s205 + $0x70] sm:$0xff]
      %v310 = vld [vmem:[%s205 + $0x78] sm:$0xff]
      %v311 = vld [vmem:[%s205 + $0x80] sm:$0xff]
      %v312 = vld [vmem:[%s205 + $0x88] sm:$0xff]
      %v313 = vld [vmem:[%s205 + $0x90] sm:$0xff]
      %v314 = vld [vmem:[%s205 + $0x98] sm:$0xff]
      %v315 = vld [vmem:[%s205 + $0xa0] sm:$0xff]
      %v316 = vld [vmem:[%s205 + $0xa8] sm:$0xff]
      %v317 = vld [vmem:[%s205 + $0xb0] sm:$0xff]
      %v318 = vld [vmem:[%s205 + $0xb8] sm:$0xff]
      %v319 = vld [vmem:[%s205 + $0xc0] sm:$0xff]
      %v320 = vld [vmem:[%s205 + $0xc8] sm:$0xff]
      %v321 = vld [vmem:[%s205 + $0xd0] sm:$0xff]
      %v322 = vld [vmem:[%s205 + $0xd8] sm:$0xff]
      %v323 = vld [vmem:[%s205 + $0xe0] sm:$0xff]
      %v324 = vld [vmem:[%s205 + $0xe8] sm:$0xff]
      %v325 = vld [vmem:[%s205 + $0xf0] sm:$0xff]
      %v326 = vld [vmem:[%s205 + $0xf8] sm:$0xff]
      %v327 = vld [vmem:[%s205 + $0x100] sm:$0xff]
      %v328 = vld [vmem:[%s205 + $0x108] sm:$0xff]
      %v329 = vld [vmem:[%s205 + $0x110] sm:$0xff]
      %v330 = vld [vmem:[%s205 + $0x118] sm:$0xff]
      %v331 = vld [vmem:[%s205 + $0x120] sm:$0xff]
      %v332 = vld [vmem:[%s205 + $0x128] sm:$0xff]
      %v333 = vld [vmem:[%s205 + $0x130] sm:$0xff]
      %v334 = vld [vmem:[%s205 + $0x138] sm:$0xff]
      %v335 = vld [vmem:[%s205 + $0x140] sm:$0xff]
      %v336 = vld [vmem:[%s205 + $0x148] sm:$0xff]
      %v337 = vld [vmem:[%s205 + $0x150] sm:$0xff]
      %v338 = vld [vmem:[%s205 + $0x158] sm:$0xff]
      %v339 = vld [vmem:[%s205 + $0x160] sm:$0xff]
      %v340 = vld [vmem:[%s205 + $0x168] sm:$0xff]
      %v341 = vld [vmem:[%s205 + $0x170] sm:$0xff]
      %v342 = vld [vmem:[%s205 + $0x178] sm:$0xff]
      %v343 = vld [vmem:[%s205 + $0x180] sm:$0xff]
      %v344 = vld [vmem:[%s205 + $0x188] sm:$0xff]
      %v345 = vld [vmem:[%s205 + $0x190] sm:$0xff]
      %v346 = vld [vmem:[%s205 + $0x198] sm:$0xff]
      %v347 = vld [vmem:[%s205 + $0x1a0] sm:$0xff]
      %v348 = vld [vmem:[%s205 + $0x1a8] sm:$0xff]
      %v349 = vld [vmem:[%s205 + $0x1b0] sm:$0xff]
      %v350 = vld [vmem:[%s205 + $0x1b8] sm:$0xff]
      %v351 = vld [vmem:[%s205 + $0x1c0] sm:$0xff]
      %v352 = vld [vmem:[%s205 + $0x1c8] sm:$0xff]
      %v353 = vld [vmem:[%s205 + $0x1d0] sm:$0xff]
      %v354 = vld [vmem:[%s205 + $0x1d8] sm:$0xff]
      %v355 = vld [vmem:[%s205 + $0x1e0] sm:$0xff]
      %v356 = vld [vmem:[%s205 + $0x1e8] sm:$0xff]
      %v357 = vld [vmem:[%s205 + $0x1f0] sm:$0xff]
      %v358 = vld [vmem:[%s205 + $0x1f8] sm:$0xff]
      %v359 = vld [vmem:[%s215] sm:$0xf]
      %v360 = vld [vmem:[%s215 + $0x4] sm:$0xf]
      %v361 = vld [vmem:[%s215 + $0x8] sm:$0xf]
      %v362 = vld [vmem:[%s215 + $0xc] sm:$0xf]
      %v363 = vld [vmem:[%s215 + $0x10] sm:$0xf]
      %v364 = vld [vmem:[%s215 + $0x14] sm:$0xf]
      %v365 = vld [vmem:[%s215 + $0x18] sm:$0xf]
      %v366 = vld [vmem:[%s215 + $0x1c] sm:$0xf]
      %v367 = vld [vmem:[%s215 + $0x20] sm:$0xf]
      %v368 = vld [vmem:[%s215 + $0x24] sm:$0xf]
      %v369 = vld [vmem:[%s215 + $0x28] sm:$0xf]
      %v370 = vld [vmem:[%s215 + $0x2c] sm:$0xf]
      %v371 = vld [vmem:[%s215 + $0x30] sm:$0xf]
      %v372 = vld [vmem:[%s215 + $0x34] sm:$0xf]
      %v373 = vld [vmem:[%s215 + $0x38] sm:$0xf]
      %v374 = vld [vmem:[%s215 + $0x3c] sm:$0xf]
      %v375 = vld [vmem:[%s215 + $0x40] sm:$0xf]
      %v376 = vld [vmem:[%s215 + $0x44] sm:$0xf]
      %v377 = vld [vmem:[%s215 + $0x48] sm:$0xf]
      %v378 = vld [vmem:[%s215 + $0x4c] sm:$0xf]
      %v379 = vld [vmem:[%s215 + $0x50] sm:$0xf]
      %v380 = vld [vmem:[%s215 + $0x54] sm:$0xf]
      %v381 = vld [vmem:[%s215 + $0x58] sm:$0xf]
      %v382 = vld [vmem:[%s215 + $0x5c] sm:$0xf]
      %v383 = vld [vmem:[%s215 + $0x60] sm:$0xf]
      %v384 = vld [vmem:[%s215 + $0x64] sm:$0xf]
      %v385 = vld [vmem:[%s215 + $0x68] sm:$0xf]
      %v386 = vld [vmem:[%s215 + $0x6c] sm:$0xf]
      %v387 = vld [vmem:[%s215 + $0x70] sm:$0xf]
      %v388 = vld [vmem:[%s215 + $0x74] sm:$0xf]
      %v389 = vld [vmem:[%s215 + $0x78] sm:$0xf]
      %v390 = vld [vmem:[%s215 + $0x7c] sm:$0xf]
      %v391 = vld [vmem:[%s215 + $0x80] sm:$0xf]
      %v392 = vld [vmem:[%s215 + $0x84] sm:$0xf]
      %v393 = vld [vmem:[%s215 + $0x88] sm:$0xf]
      %v394 = vld [vmem:[%s215 + $0x8c] sm:$0xf]
      %v395 = vld [vmem:[%s215 + $0x90] sm:$0xf]
      %v396 = vld [vmem:[%s215 + $0x94] sm:$0xf]
      %v397 = vld [vmem:[%s215 + $0x98] sm:$0xf]
      %v398 = vld [vmem:[%s215 + $0x9c] sm:$0xf]
      %v399 = vld [vmem:[%s215 + $0xa0] sm:$0xf]
      %v400 = vld [vmem:[%s215 + $0xa4] sm:$0xf]
      %v401 = vld [vmem:[%s215 + $0xa8] sm:$0xf]
      %v402 = vld [vmem:[%s215 + $0xac] sm:$0xf]
      %v403 = vld [vmem:[%s215 + $0xb0] sm:$0xf]
      %v404 = vld [vmem:[%s215 + $0xb4] sm:$0xf]
      %v405 = vld [vmem:[%s215 + $0xb8] sm:$0xf]
      %v406 = vld [vmem:[%s215 + $0xbc] sm:$0xf]
      %v407 = vld [vmem:[%s215 + $0xc0] sm:$0xf]
      %v408 = vld [vmem:[%s215 + $0xc4] sm:$0xf]
      %v409 = vld [vmem:[%s215 + $0xc8] sm:$0xf]
      %v410 = vld [vmem:[%s215 + $0xcc] sm:$0xf]
      %v411 = vld [vmem:[%s215 + $0xd0] sm:$0xf]
      %v412 = vld [vmem:[%s215 + $0xd4] sm:$0xf]
      %v413 = vld [vmem:[%s215 + $0xd8] sm:$0xf]
      %v414 = vld [vmem:[%s215 + $0xdc] sm:$0xf]
      %v415 = vld [vmem:[%s215 + $0xe0] sm:$0xf]
      %v416 = vld [vmem:[%s215 + $0xe4] sm:$0xf]
      %v417 = vld [vmem:[%s215 + $0xe8] sm:$0xf]
      %v418 = vld [vmem:[%s215 + $0xec] sm:$0xf]
      %v419 = vld [vmem:[%s215 + $0xf0] sm:$0xf]
      %v420 = vld [vmem:[%s215 + $0xf4] sm:$0xf]
      %v421 = vld [vmem:[%s215 + $0xf8] sm:$0xf]
      %v422 = vld [vmem:[%s215 + $0xfc] sm:$0xf]
      %v487 = vunpack.c.l.b16 %v295
      %v488 = vunpack.c.h.b16 %v295
      %v489 = vunpack.c.l.b16 %v296
      %v490 = vunpack.c.h.b16 %v296
      %v491 = vunpack.c.l.b16 %v297
      %v492 = vunpack.c.h.b16 %v297
      %v493 = vunpack.c.l.b16 %v298
      %v494 = vunpack.c.h.b16 %v298
      %v495 = vunpack.c.l.b16 %v299
      %v496 = vunpack.c.h.b16 %v299
      %v497 = vunpack.c.l.b16 %v300
      %v498 = vunpack.c.h.b16 %v300
      %v499 = vunpack.c.l.b16 %v301
      %v500 = vunpack.c.h.b16 %v301
      %v501 = vunpack.c.l.b16 %v302
      %v502 = vunpack.c.h.b16 %v302
      %v503 = vunpack.c.l.b16 %v303
      %v504 = vunpack.c.h.b16 %v303
      %v505 = vunpack.c.l.b16 %v304
      %v506 = vunpack.c.h.b16 %v304
      %v507 = vunpack.c.l.b16 %v305
      %v508 = vunpack.c.h.b16 %v305
      %v509 = vunpack.c.l.b16 %v306
      %v510 = vunpack.c.h.b16 %v306
      %v511 = vunpack.c.l.b16 %v307
      %v512 = vunpack.c.h.b16 %v307
      %v513 = vunpack.c.l.b16 %v308
      %v514 = vunpack.c.h.b16 %v308
      %v515 = vunpack.c.l.b16 %v309
      %v516 = vunpack.c.h.b16 %v309
      %v517 = vunpack.c.l.b16 %v310
      %v518 = vunpack.c.h.b16 %v310
      %v519 = vunpack.c.l.b16 %v311
      %v520 = vunpack.c.h.b16 %v311
      %v521 = vunpack.c.l.b16 %v312
      %v522 = vunpack.c.h.b16 %v312
      %v523 = vunpack.c.l.b16 %v313
      %v524 = vunpack.c.h.b16 %v313
      %v525 = vunpack.c.l.b16 %v314
      %v526 = vunpack.c.h.b16 %v314
      %v527 = vunpack.c.l.b16 %v315
      %v528 = vunpack.c.h.b16 %v315
      %v529 = vunpack.c.l.b16 %v316
      %v530 = vunpack.c.h.b16 %v316
      %v531 = vunpack.c.l.b16 %v317
      %v532 = vunpack.c.h.b16 %v317
      %v533 = vunpack.c.l.b16 %v318
      %v534 = vunpack.c.h.b16 %v318
      %v535 = vunpack.c.l.b16 %v319
      %v536 = vunpack.c.h.b16 %v319
      %v537 = vunpack.c.l.b16 %v320
      %v538 = vunpack.c.h.b16 %v320
      %v539 = vunpack.c.l.b16 %v321
      %v540 = vunpack.c.h.b16 %v321
      %v541 = vunpack.c.l.b16 %v322
      %v542 = vunpack.c.h.b16 %v322
      %v543 = vunpack.c.l.b16 %v323
      %v544 = vunpack.c.h.b16 %v323
      %v545 = vunpack.c.l.b16 %v324
      %v546 = vunpack.c.h.b16 %v324
      %v547 = vunpack.c.l.b16 %v325
      %v548 = vunpack.c.h.b16 %v325
      %v549 = vunpack.c.l.b16 %v326
      %v550 = vunpack.c.h.b16 %v326
      %v551 = vunpack.c.l.b16 %v327
      %v552 = vunpack.c.h.b16 %v327
      %v553 = vunpack.c.l.b16 %v328
      %v554 = vunpack.c.h.b16 %v328
      %v555 = vunpack.c.l.b16 %v329
      %v556 = vunpack.c.h.b16 %v329
      %v557 = vunpack.c.l.b16 %v330
      %v558 = vunpack.c.h.b16 %v330
      %v559 = vunpack.c.l.b16 %v331
      %v560 = vunpack.c.h.b16 %v331
      %v561 = vunpack.c.l.b16 %v332
      %v562 = vunpack.c.h.b16 %v332
      %v563 = vunpack.c.l.b16 %v333
      %v564 = vunpack.c.h.b16 %v333
      %v565 = vunpack.c.l.b16 %v334
      %v566 = vunpack.c.h.b16 %v334
      %v567 = vunpack.c.l.b16 %v335
      %v568 = vunpack.c.h.b16 %v335
      %v569 = vunpack.c.l.b16 %v336
      %v570 = vunpack.c.h.b16 %v336
      %v571 = vunpack.c.l.b16 %v337
      %v572 = vunpack.c.h.b16 %v337
      %v573 = vunpack.c.l.b16 %v338
      %v574 = vunpack.c.h.b16 %v338
      %v575 = vunpack.c.l.b16 %v339
      %v576 = vunpack.c.h.b16 %v339
      %v577 = vunpack.c.l.b16 %v340
      %v578 = vunpack.c.h.b16 %v340
      %v579 = vunpack.c.l.b16 %v341
      %v580 = vunpack.c.h.b16 %v341
      %v581 = vunpack.c.l.b16 %v342
      %v582 = vunpack.c.h.b16 %v342
      %v583 = vunpack.c.l.b16 %v343
      %v584 = vunpack.c.h.b16 %v343
      %v585 = vunpack.c.l.b16 %v344
      %v586 = vunpack.c.h.b16 %v344
      %v587 = vunpack.c.l.b16 %v345
      %v588 = vunpack.c.h.b16 %v345
      %v589 = vunpack.c.l.b16 %v346
      %v590 = vunpack.c.h.b16 %v346
      %v591 = vunpack.c.l.b16 %v347
      %v592 = vunpack.c.h.b16 %v347
      %v593 = vunpack.c.l.b16 %v348
      %v594 = vunpack.c.h.b16 %v348
      %v595 = vunpack.c.l.b16 %v349
      %v596 = vunpack.c.h.b16 %v349
      %v597 = vunpack.c.l.b16 %v350
      %v598 = vunpack.c.h.b16 %v350
      %v599 = vunpack.c.l.b16 %v351
      %v600 = vunpack.c.h.b16 %v351
      %v601 = vunpack.c.l.b16 %v352
      %v602 = vunpack.c.h.b16 %v352
      %v603 = vunpack.c.l.b16 %v353
      %v604 = vunpack.c.h.b16 %v353
      %v605 = vunpack.c.l.b16 %v354
      %v606 = vunpack.c.h.b16 %v354
      %v607 = vunpack.c.l.b16 %v355
      %v608 = vunpack.c.h.b16 %v355
      %v609 = vunpack.c.l.b16 %v356
      %v610 = vunpack.c.h.b16 %v356
      %v611 = vunpack.c.l.b16 %v357
      %v612 = vunpack.c.h.b16 %v357
      %v613 = vunpack.c.l.b16 %v358
      %v614 = vunpack.c.h.b16 %v358
      %v615 = vpack.c.b16 %v491, %v487
      %v616 = vpack.c.b16 %v492, %v488
      %v617 = vpack.c.b16 %v493, %v489
      %v618 = vpack.c.b16 %v494, %v490
      %v619 = vpack.c.b16 %v499, %v495
      %v620 = vpack.c.b16 %v500, %v496
      %v621 = vpack.c.b16 %v501, %v497
      %v622 = vpack.c.b16 %v502, %v498
      %v623 = vpack.c.b16 %v507, %v503
      %v624 = vpack.c.b16 %v508, %v504
      %v625 = vpack.c.b16 %v509, %v505
      %v626 = vpack.c.b16 %v510, %v506
      %v627 = vpack.c.b16 %v515, %v511
      %v628 = vpack.c.b16 %v516, %v512
      %v629 = vpack.c.b16 %v517, %v513
      %v630 = vpack.c.b16 %v518, %v514
      %v631 = vpack.c.b16 %v523, %v519
      %v632 = vpack.c.b16 %v524, %v520
      %v633 = vpack.c.b16 %v525, %v521
      %v634 = vpack.c.b16 %v526, %v522
      %v635 = vpack.c.b16 %v531, %v527
      %v636 = vpack.c.b16 %v532, %v528
      %v637 = vpack.c.b16 %v533, %v529
      %v638 = vpack.c.b16 %v534, %v530
      %v639 = vpack.c.b16 %v539, %v535
      %v640 = vpack.c.b16 %v540, %v536
      %v641 = vpack.c.b16 %v541, %v537
      %v642 = vpack.c.b16 %v542, %v538
      %v643 = vpack.c.b16 %v547, %v543
      %v644 = vpack.c.b16 %v548, %v544
      %v645 = vpack.c.b16 %v549, %v545
      %v646 = vpack.c.b16 %v550, %v546
      %v647 = vpack.c.b16 %v555, %v551
      %v648 = vpack.c.b16 %v556, %v552
      %v649 = vpack.c.b16 %v557, %v553
      %v650 = vpack.c.b16 %v558, %v554
      %v651 = vpack.c.b16 %v563, %v559
      %v652 = vpack.c.b16 %v564, %v560
      %v653 = vpack.c.b16 %v565, %v561
      %v654 = vpack.c.b16 %v566, %v562
      %v655 = vpack.c.b16 %v571, %v567
      %v656 = vpack.c.b16 %v572, %v568
      %v657 = vpack.c.b16 %v573, %v569
      %v658 = vpack.c.b16 %v574, %v570
      %v659 = vpack.c.b16 %v579, %v575
      %v660 = vpack.c.b16 %v580, %v576
      %v661 = vpack.c.b16 %v581, %v577
      %v662 = vpack.c.b16 %v582, %v578
      %v663 = vpack.c.b16 %v587, %v583
      %v664 = vpack.c.b16 %v588, %v584
      %v665 = vpack.c.b16 %v589, %v585
      %v666 = vpack.c.b16 %v590, %v586
      %v667 = vpack.c.b16 %v595, %v591
      %v668 = vpack.c.b16 %v596, %v592
      %v669 = vpack.c.b16 %v597, %v593
      %v670 = vpack.c.b16 %v598, %v594
      %v671 = vpack.c.b16 %v603, %v599
      %v672 = vpack.c.b16 %v604, %v600
      %v673 = vpack.c.b16 %v605, %v601
      %v674 = vpack.c.b16 %v606, %v602
      %v675 = vpack.c.b16 %v611, %v607
      %v676 = vpack.c.b16 %v612, %v608
      %v677 = vpack.c.b16 %v613, %v609
      %v678 = vpack.c.b16 %v614, %v610
      %v807 = vunpack.c.l.b16 %v359
      %v808 = vunpack.c.l.b16 %v360
      %v809 = vunpack.c.l.b16 %v361
      %v810 = vunpack.c.l.b16 %v362
      %v811 = vunpack.c.l.b16 %v363
      %v812 = vunpack.c.l.b16 %v364
      %v813 = vunpack.c.l.b16 %v365
      %v814 = vunpack.c.l.b16 %v366
      %v815 = vunpack.c.l.b16 %v367
      %v816 = vunpack.c.l.b16 %v368
      %v817 = vunpack.c.l.b16 %v369
      %v818 = vunpack.c.l.b16 %v370
      %v819 = vunpack.c.l.b16 %v371
      %v820 = vunpack.c.l.b16 %v372
      %v821 = vunpack.c.l.b16 %v373
      %v822 = vunpack.c.l.b16 %v374
      %v823 = vunpack.c.l.b16 %v375
      %v824 = vunpack.c.l.b16 %v376
      %v825 = vunpack.c.l.b16 %v377
      %v826 = vunpack.c.l.b16 %v378
      %v827 = vunpack.c.l.b16 %v379
      %v828 = vunpack.c.l.b16 %v380
      %v829 = vunpack.c.l.b16 %v381
      %v830 = vunpack.c.l.b16 %v382
      %v831 = vunpack.c.l.b16 %v383
      %v832 = vunpack.c.l.b16 %v384
      %v833 = vunpack.c.l.b16 %v385
      %v834 = vunpack.c.l.b16 %v386
      %v835 = vunpack.c.l.b16 %v387
      %v836 = vunpack.c.l.b16 %v388
      %v837 = vunpack.c.l.b16 %v389
      %v838 = vunpack.c.l.b16 %v390
      %v839 = vunpack.c.l.b16 %v391
      %v840 = vunpack.c.l.b16 %v392
      %v841 = vunpack.c.l.b16 %v393
      %v842 = vunpack.c.l.b16 %v394
      %v843 = vunpack.c.l.b16 %v395
      %v844 = vunpack.c.l.b16 %v396
      %v845 = vunpack.c.l.b16 %v397
      %v846 = vunpack.c.l.b16 %v398
      %v847 = vunpack.c.l.b16 %v399
      %v848 = vunpack.c.l.b16 %v400
      %v849 = vunpack.c.l.b16 %v401
      %v850 = vunpack.c.l.b16 %v402
      %v851 = vunpack.c.l.b16 %v403
      %v852 = vunpack.c.l.b16 %v404
      %v853 = vunpack.c.l.b16 %v405
      %v854 = vunpack.c.l.b16 %v406
      %v855 = vunpack.c.l.b16 %v407
      %v856 = vunpack.c.l.b16 %v408
      %v857 = vunpack.c.l.b16 %v409
      %v858 = vunpack.c.l.b16 %v410
      %v859 = vunpack.c.l.b16 %v411
      %v860 = vunpack.c.l.b16 %v412
      %v861 = vunpack.c.l.b16 %v413
      %v862 = vunpack.c.l.b16 %v414
      %v863 = vunpack.c.l.b16 %v415
      %v864 = vunpack.c.l.b16 %v416
      %v865 = vunpack.c.l.b16 %v417
      %v866 = vunpack.c.l.b16 %v418
      %v867 = vunpack.c.l.b16 %v419
      %v868 = vunpack.c.l.b16 %v420
      %v869 = vunpack.c.l.b16 %v421
      %v870 = vunpack.c.l.b16 %v422
      %v871 = vpack.c.b16 %v808, %v807
      %v872 = vpack.c.b16 %v810, %v809
      %v873 = vpack.c.b16 %v812, %v811
      %v874 = vpack.c.b16 %v814, %v813
      %v875 = vpack.c.b16 %v816, %v815
      %v876 = vpack.c.b16 %v818, %v817
      %v877 = vpack.c.b16 %v820, %v819
      %v878 = vpack.c.b16 %v822, %v821
      %v879 = vpack.c.b16 %v824, %v823
      %v880 = vpack.c.b16 %v826, %v825
      %v881 = vpack.c.b16 %v828, %v827
      %v882 = vpack.c.b16 %v830, %v829
      %v883 = vpack.c.b16 %v832, %v831
      %v884 = vpack.c.b16 %v834, %v833
      %v885 = vpack.c.b16 %v836, %v835
      %v886 = vpack.c.b16 %v838, %v837
      %v887 = vpack.c.b16 %v840, %v839
      %v888 = vpack.c.b16 %v842, %v841
      %v889 = vpack.c.b16 %v844, %v843
      %v890 = vpack.c.b16 %v846, %v845
      %v891 = vpack.c.b16 %v848, %v847
      %v892 = vpack.c.b16 %v850, %v849
      %v893 = vpack.c.b16 %v852, %v851
      %v894 = vpack.c.b16 %v854, %v853
      %v895 = vpack.c.b16 %v856, %v855
      %v896 = vpack.c.b16 %v858, %v857
      %v897 = vpack.c.b16 %v860, %v859
      %v898 = vpack.c.b16 %v862, %v861
      %v899 = vpack.c.b16 %v864, %v863
      %v900 = vpack.c.b16 %v866, %v865
      %v901 = vpack.c.b16 %v868, %v867
      %v902 = vpack.c.b16 %v870, %v869
      %935 = vmatprep.subr.bf16.mxu0 0
      %936 = vmatpush1.bf16.msra.mxu0 %v871
      %937 = vmatprep.subr.bf16.mxu0 0
      %938 = vmatpush1.bf16.msra.mxu0 %v872
      %939 = vmatprep.subr.bf16.mxu0 0
      %940 = vmatpush1.bf16.msra.mxu0 %v873
      %941 = vmatprep.subr.bf16.mxu0 0
      %942 = vmatpush1.bf16.msra.mxu0 %v874
      %943 = vmatprep.subr.bf16.mxu0 0
      %944 = vmatpush1.bf16.msra.mxu0 %v875
      %945 = vmatprep.subr.bf16.mxu0 0
      %946 = vmatpush1.bf16.msra.mxu0 %v876
      %947 = vmatprep.subr.bf16.mxu0 0
      %948 = vmatpush1.bf16.msra.mxu0 %v877
      %949 = vmatprep.subr.bf16.mxu0 0
      %950 = vmatpush1.bf16.msra.mxu0 %v878
      %951 = vmatprep.subr.bf16.mxu0 0
      %952 = vmatpush1.bf16.msra.mxu0 %v879
      %953 = vmatprep.subr.bf16.mxu0 0
      %954 = vmatpush1.bf16.msra.mxu0 %v880
      %955 = vmatprep.subr.bf16.mxu0 0
      %956 = vmatpush1.bf16.msra.mxu0 %v881
      %957 = vmatprep.subr.bf16.mxu0 0
      %958 = vmatpush1.bf16.msra.mxu0 %v882
      %959 = vmatprep.subr.bf16.mxu0 0
      %960 = vmatpush1.bf16.msra.mxu0 %v883
      %961 = vmatprep.subr.bf16.mxu0 0
      %962 = vmatpush1.bf16.msra.mxu0 %v884
      %963 = vmatprep.subr.bf16.mxu0 0
      %964 = vmatpush1.bf16.msra.mxu0 %v885
      %965 = vmatprep.subr.bf16.mxu0 0
      %966 = vmatpush1.bf16.msra.mxu0 %v886
      %967 = vmatprep.mubr.bf16.mxu0 %v616
      %968 = vmatmul.mubr.bf16.gmra.mrb[0].mxu0 %v615
      %v969 = vpop.f32.mrb[0].mxu0
      %v970 = vadd.f32 0.0, %v969
      %v971 = vpop.f32.mrb[0].mxu0
      %v972 = vpop.f32.mrb[0].mxu0
      %v973 = vadd.f32 0.0, %v972
      %v974 = vpop.f32.mrb[0].mxu0
      %975 = vmatprep.mubr.bf16.mxu0 %v620
      %976 = vmatmul.mubr.bf16.gmra.mrb[0].mxu0 %v619
      %v977 = vpop.f32.mrb[0].mxu0
      %v978 = vadd.f32 0.0, %v977
      %v979 = vpop.f32.mrb[0].mxu0
      %v980 = vpop.f32.mrb[0].mxu0
      %v981 = vadd.f32 0.0, %v980
      %v982 = vpop.f32.mrb[0].mxu0
      %983 = vmatprep.mubr.bf16.mxu0 %v624
      %984 = vmatmul.mubr.bf16.gmra.mrb[0].mxu0 %v623
      %v985 = vpop.f32.mrb[0].mxu0
      %v986 = vadd.f32 0.0, %v985
      %v987 = vpop.f32.mrb[0].mxu0
      %v988 = vpop.f32.mrb[0].mxu0
      %v989 = vadd.f32 0.0, %v988
      %v990 = vpop.f32.mrb[0].mxu0
      %991 = vmatprep.mubr.bf16.mxu0 %v628
      %992 = vmatmul.mubr.bf16.gmra.mrb[0].mxu0 %v627
      %v993 = vpop.f32.mrb[0].mxu0
      %v994 = vadd.f32 0.0, %v993
      %v995 = vpop.f32.mrb[0].mxu0
      %v996 = vpop.f32.mrb[0].mxu0
      %v997 = vadd.f32 0.0, %v996
      %v998 = vpop.f32.mrb[0].mxu0
      %999 = vmatprep.mubr.bf16.mxu0 %v632
      %1000 = vmatmul.mubr.bf16.gmra.mrb[0].mxu0 %v631
      %v1001 = vpop.f32.mrb[0].mxu0
      %v1002 = vadd.f32 0.0, %v1001
      %v1003 = vpop.f32.mrb[0].mxu0
      %v1004 = vpop.f32.mrb[0].mxu0
      %v1005 = vadd.f32 0.0, %v1004
      %v1006 = vpop.f32.mrb[0].mxu0
      %1007 = vmatprep.mubr.bf16.mxu0 %v636
      %1008 = vmatmul.mubr.bf16.gmra.mrb[0].mxu0 %v635
      %v1009 = vpop.f32.mrb[0].mxu0
      %v1010 = vadd.f32 0.0, %v1009
      %v1011 = vpop.f32.mrb[0].mxu0
      %v1012 = vpop.f32.mrb[0].mxu0
      %v1013 = vadd.f32 0.0, %v1012
      %v1014 = vpop.f32.mrb[0].mxu0
      %1015 = vmatprep.mubr.bf16.mxu0 %v640
      %1016 = vmatmul.mubr.bf16.gmra.mrb[0].mxu0 %v639
      %v1017 = vpop.f32.mrb[0].mxu0
      %v1018 = vadd.f32 0.0, %v1017
      %v1019 = vpop.f32.mrb[0].mxu0
      %v1020 = vpop.f32.mrb[0].mxu0
      %v1021 = vadd.f32 0.0, %v1020
      %v1022 = vpop.f32.mrb[0].mxu0
      %1023 = vmatprep.mubr.bf16.mxu0 %v644
      %1024 = vmatmul.mubr.bf16.gmra.mrb[0].mxu0 %v643
      %v1025 = vpop.f32.mrb[0].mxu0
      %v1026 = vadd.f32 0.0, %v1025
      %v1027 = vpop.f32.mrb[0].mxu0
      %v1028 = vpop.f32.mrb[0].mxu0
      %v1029 = vadd.f32 0.0, %v1028
      %v1030 = vpop.f32.mrb[0].mxu0
      %1031 = vmatprep.mubr.bf16.mxu0 %v648
      %1032 = vmatmul.mubr.bf16.gmra.mrb[0].mxu0 %v647
      %v1033 = vpop.f32.mrb[0].mxu0
      %v1034 = vadd.f32 0.0, %v1033
      %v1035 = vpop.f32.mrb[0].mxu0
      %v1036 = vpop.f32.mrb[0].mxu0
      %v1037 = vadd.f32 0.0, %v1036
      %v1038 = vpop.f32.mrb[0].mxu0
      %1039 = vmatprep.mubr.bf16.mxu0 %v652
      %1040 = vmatmul.mubr.bf16.gmra.mrb[0].mxu0 %v651
      %v1041 = vpop.f32.mrb[0].mxu0
      %v1042 = vadd.f32 0.0, %v1041
      %v1043 = vpop.f32.mrb[0].mxu0
      %v1044 = vpop.f32.mrb[0].mxu0
      %v1045 = vadd.f32 0.0, %v1044
      %v1046 = vpop.f32.mrb[0].mxu0
      %1047 = vmatprep.mubr.bf16.mxu0 %v656
      %1048 = vmatmul.mubr.bf16.gmra.mrb[0].mxu0 %v655
      %v1049 = vpop.f32.mrb[0].mxu0
      %v1050 = vadd.f32 0.0, %v1049
      %v1051 = vpop.f32.mrb[0].mxu0
      %v1052 = vpop.f32.mrb[0].mxu0
      %v1053 = vadd.f32 0.0, %v1052
      %v1054 = vpop.f32.mrb[0].mxu0
      %1055 = vmatprep.mubr.bf16.mxu0 %v660
      %1056 = vmatmul.mubr.bf16.gmra.mrb[0].mxu0 %v659
      %v1057 = vpop.f32.mrb[0].mxu0
      %v1058 = vadd.f32 0.0, %v1057
      %v1059 = vpop.f32.mrb[0].mxu0
      %v1060 = vpop.f32.mrb[0].mxu0
      %v1061 = vadd.f32 0.0, %v1060
      %v1062 = vpop.f32.mrb[0].mxu0
      %1063 = vmatprep.mubr.bf16.mxu0 %v664
      %1064 = vmatmul.mubr.bf16.gmra.mrb[0].mxu0 %v663
      %v1065 = vpop.f32.mrb[0].mxu0
      %v1066 = vadd.f32 0.0, %v1065
      %v1067 = vpop.f32.mrb[0].mxu0
      %v1068 = vpop.f32.mrb[0].mxu0
      %v1069 = vadd.f32 0.0, %v1068
      %v1070 = vpop.f32.mrb[0].mxu0
      %1071 = vmatprep.mubr.bf16.mxu0 %v668
      %1072 = vmatmul.mubr.bf16.gmra.mrb[0].mxu0 %v667
      %v1073 = vpop.f32.mrb[0].mxu0
      %v1074 = vadd.f32 0.0, %v1073
      %v1075 = vpop.f32.mrb[0].mxu0
      %v1076 = vpop.f32.mrb[0].mxu0
      %v1077 = vadd.f32 0.0, %v1076
      %v1078 = vpop.f32.mrb[0].mxu0
      %1079 = vmatprep.mubr.bf16.mxu0 %v672
      %1080 = vmatmul.mubr.bf16.gmra.mrb[0].mxu0 %v671
      %v1081 = vpop.f32.mrb[0].mxu0
      %v1082 = vadd.f32 0.0, %v1081
      %v1083 = vpop.f32.mrb[0].mxu0
      %v1084 = vpop.f32.mrb[0].mxu0
      %v1085 = vadd.f32 0.0, %v1084
      %v1086 = vpop.f32.mrb[0].mxu0
      %1087 = vmatprep.mubr.bf16.mxu0 %v676
      %1088 = vmatmul.mubr.bf16.gmra.mrb[0].mxu0 %v675
      %v1089 = vpop.f32.mrb[0].mxu0
      %v1090 = vadd.f32 0.0, %v1089
      %v1091 = vpop.f32.mrb[0].mxu0
      %v1092 = vpop.f32.mrb[0].mxu0
      %v1093 = vadd.f32 0.0, %v1092
      %v1094 = vpop.f32.mrb[0].mxu0
      %1095 = vdwg.mxu0
      %1096 = vmatprep.subr.bf16.mxu0 0
      %1097 = vmatpush1.bf16.msra.mxu0 %v887
      %1098 = vmatprep.subr.bf16.mxu0 0
      %1099 = vmatpush1.bf16.msra.mxu0 %v888
      %1100 = vmatprep.subr.bf16.mxu0 0
      %1101 = vmatpush1.bf16.msra.mxu0 %v889
      %1102 = vmatprep.subr.bf16.mxu0 0
      %1103 = vmatpush1.bf16.msra.mxu0 %v890
      %1104 = vmatprep.subr.bf16.mxu0 0
      %1105 = vmatpush1.bf16.msra.mxu0 %v891
      %1106 = vmatprep.subr.bf16.mxu0 0
      %1107 = vmatpush1.bf16.msra.mxu0 %v892
      %1108 = vmatprep.subr.bf16.mxu0 0
      %1109 = vmatpush1.bf16.msra.mxu0 %v893
      %1110 = vmatprep.subr.bf16.mxu0 0
      %1111 = vmatpush1.bf16.msra.mxu0 %v894
      %1112 = vmatprep.subr.bf16.mxu0 0
      %1113 = vmatpush1.bf16.msra.mxu0 %v895
      %1114 = vmatprep.subr.bf16.mxu0 0
      %1115 = vmatpush1.bf16.msra.mxu0 %v896
      %1116 = vmatprep.subr.bf16.mxu0 0
      %1117 = vmatpush1.bf16.msra.mxu0 %v897
      %1118 = vmatprep.subr.bf16.mxu0 0
      %1119 = vmatpush1.bf16.msra.mxu0 %v898
      %1120 = vmatprep.subr.bf16.mxu0 0
      %1121 = vmatpush1.bf16.msra.mxu0 %v899
      %1122 = vmatprep.subr.bf16.mxu0 0
      %1123 = vmatpush1.bf16.msra.mxu0 %v900
      %1124 = vmatprep.subr.bf16.mxu0 0
      %1125 = vmatpush1.bf16.msra.mxu0 %v901
      %1126 = vmatprep.subr.bf16.mxu0 0
      %1127 = vmatpush1.bf16.msra.mxu0 %v902
      %1128 = vmatprep.mubr.bf16.mxu0 %v618
      %1129 = vmatmul.mubr.bf16.gmra.mrb[0].mxu0 %v617
      %v1130 = vpop.f32.mrb[0].mxu0
      %v1131 = vadd.f32 %v970, %v1130
      %v1132 = vpop.f32.mrb[0].mxu0
      %v1133 = vpop.f32.mrb[0].mxu0
      %v1134 = vadd.f32 %v973, %v1133
      %v1135 = vpop.f32.mrb[0].mxu0
      %1136 = vmatprep.mubr.bf16.mxu0 %v622
      %1137 = vmatmul.mubr.bf16.gmra.mrb[0].mxu0 %v621
      %v1138 = vpop.f32.mrb[0].mxu0
      %v1139 = vadd.f32 %v978, %v1138
      %v1140 = vpop.f32.mrb[0].mxu0
      %v1141 = vpop.f32.mrb[0].mxu0
      %v1142 = vadd.f32 %v981, %v1141
      %v1143 = vpop.f32.mrb[0].mxu0
      %1144 = vmatprep.mubr.bf16.mxu0 %v626
      %1145 = vmatmul.mubr.bf16.gmra.mrb[0].mxu0 %v625
      %v1146 = vpop.f32.mrb[0].mxu0
      %v1147 = vadd.f32 %v986, %v1146
      %v1148 = vpop.f32.mrb[0].mxu0
      %v1149 = vpop.f32.mrb[0].mxu0
      %v1150 = vadd.f32 %v989, %v1149
      %v1151 = vpop.f32.mrb[0].mxu0
      %1152 = vmatprep.mubr.bf16.mxu0 %v630
      %1153 = vmatmul.mubr.bf16.gmra.mrb[0].mxu0 %v629
      %v1154 = vpop.f32.mrb[0].mxu0
      %v1155 = vadd.f32 %v994, %v1154
      %v1156 = vpop.f32.mrb[0].mxu0
      %v1157 = vpop.f32.mrb[0].mxu0
      %v1158 = vadd.f32 %v997, %v1157
      %v1159 = vpop.f32.mrb[0].mxu0
      %1160 = vmatprep.mubr.bf16.mxu0 %v634
      %1161 = vmatmul.mubr.bf16.gmra.mrb[0].mxu0 %v633
      %v1162 = vpop.f32.mrb[0].mxu0
      %v1163 = vadd.f32 %v1002, %v1162
      %v1164 = vpop.f32.mrb[0].mxu0
      %v1165 = vpop.f32.mrb[0].mxu0
      %v1166 = vadd.f32 %v1005, %v1165
      %v1167 = vpop.f32.mrb[0].mxu0
      %1168 = vmatprep.mubr.bf16.mxu0 %v638
      %1169 = vmatmul.mubr.bf16.gmra.mrb[0].mxu0 %v637
      %v1170 = vpop.f32.mrb[0].mxu0
      %v1171 = vadd.f32 %v1010, %v1170
      %v1172 = vpop.f32.mrb[0].mxu0
      %v1173 = vpop.f32.mrb[0].mxu0
      %v1174 = vadd.f32 %v1013, %v1173
      %v1175 = vpop.f32.mrb[0].mxu0
      %1176 = vmatprep.mubr.bf16.mxu0 %v642
      %1177 = vmatmul.mubr.bf16.gmra.mrb[0].mxu0 %v641
      %v1178 = vpop.f32.mrb[0].mxu0
      %v1179 = vadd.f32 %v1018, %v1178
      %v1180 = vpop.f32.mrb[0].mxu0
      %v1181 = vpop.f32.mrb[0].mxu0
      %v1182 = vadd.f32 %v1021, %v1181
      %v1183 = vpop.f32.mrb[0].mxu0
      %1184 = vmatprep.mubr.bf16.mxu0 %v646
      %1185 = vmatmul.mubr.bf16.gmra.mrb[0].mxu0 %v645
      %v1186 = vpop.f32.mrb[0].mxu0
      %v1187 = vadd.f32 %v1026, %v1186
      %v1188 = vpop.f32.mrb[0].mxu0
      %v1189 = vpop.f32.mrb[0].mxu0
      %v1190 = vadd.f32 %v1029, %v1189
      %v1191 = vpop.f32.mrb[0].mxu0
      %1192 = vmatprep.mubr.bf16.mxu0 %v650
      %1193 = vmatmul.mubr.bf16.gmra.mrb[0].mxu0 %v649
      %v1194 = vpop.f32.mrb[0].mxu0
      %v1195 = vadd.f32 %v1034, %v1194
      %v1196 = vpop.f32.mrb[0].mxu0
      %v1197 = vpop.f32.mrb[0].mxu0
      %v1198 = vadd.f32 %v1037, %v1197
      %v1199 = vpop.f32.mrb[0].mxu0
      %1200 = vmatprep.mubr.bf16.mxu0 %v654
      %1201 = vmatmul.mubr.bf16.gmra.mrb[0].mxu0 %v653
      %v1202 = vpop.f32.mrb[0].mxu0
      %v1203 = vadd.f32 %v1042, %v1202
      %v1204 = vpop.f32.mrb[0].mxu0
      %v1205 = vpop.f32.mrb[0].mxu0
      %v1206 = vadd.f32 %v1045, %v1205
      %v1207 = vpop.f32.mrb[0].mxu0
      %1208 = vmatprep.mubr.bf16.mxu0 %v658
      %1209 = vmatmul.mubr.bf16.gmra.mrb[0].mxu0 %v657
      %v1210 = vpop.f32.mrb[0].mxu0
      %v1211 = vadd.f32 %v1050, %v1210
      %v1212 = vpop.f32.mrb[0].mxu0
      %v1213 = vpop.f32.mrb[0].mxu0
      %v1214 = vadd.f32 %v1053, %v1213
      %v1215 = vpop.f32.mrb[0].mxu0
      %1216 = vmatprep.mubr.bf16.mxu0 %v662
      %1217 = vmatmul.mubr.bf16.gmra.mrb[0].mxu0 %v661
      %v1218 = vpop.f32.mrb[0].mxu0
      %v1219 = vadd.f32 %v1058, %v1218
      %v1220 = vpop.f32.mrb[0].mxu0
      %v1221 = vpop.f32.mrb[0].mxu0
      %v1222 = vadd.f32 %v1061, %v1221
      %v1223 = vpop.f32.mrb[0].mxu0
      %1224 = vmatprep.mubr.bf16.mxu0 %v666
      %1225 = vmatmul.mubr.bf16.gmra.mrb[0].mxu0 %v665
      %v1226 = vpop.f32.mrb[0].mxu0
      %v1227 = vadd.f32 %v1066, %v1226
      %v1228 = vpop.f32.mrb[0].mxu0
      %v1229 = vpop.f32.mrb[0].mxu0
      %v1230 = vadd.f32 %v1069, %v1229
      %v1231 = vpop.f32.mrb[0].mxu0
      %1232 = vmatprep.mubr.bf16.mxu0 %v670
      %1233 = vmatmul.mubr.bf16.gmra.mrb[0].mxu0 %v669
      %v1234 = vpop.f32.mrb[0].mxu0
      %v1235 = vadd.f32 %v1074, %v1234
      %v1236 = vpop.f32.mrb[0].mxu0
      %v1237 = vpop.f32.mrb[0].mxu0
      %v1238 = vadd.f32 %v1077, %v1237
      %v1239 = vpop.f32.mrb[0].mxu0
      %1240 = vmatprep.mubr.bf16.mxu0 %v674
      %1241 = vmatmul.mubr.bf16.gmra.mrb[0].mxu0 %v673
      %v1242 = vpop.f32.mrb[0].mxu0
      %v1243 = vadd.f32 %v1082, %v1242
      %v1244 = vpop.f32.mrb[0].mxu0
      %v1245 = vpop.f32.mrb[0].mxu0
      %v1246 = vadd.f32 %v1085, %v1245
      %v1247 = vpop.f32.mrb[0].mxu0
      %1248 = vmatprep.mubr.bf16.mxu0 %v678
      %1249 = vmatmul.mubr.bf16.gmra.mrb[0].mxu0 %v677
      %v1250 = vpop.f32.mrb[0].mxu0
      %v1251 = vadd.f32 %v1090, %v1250
      %v1252 = vpop.f32.mrb[0].mxu0
      %v1253 = vpop.f32.mrb[0].mxu0
      %v1254 = vadd.f32 %v1093, %v1253
      %v1255 = vpop.f32.mrb[0].mxu0
      %1256 = vdwg.mxu0
      %v1257 = vadd.f32 %v263, %v1131
      %v1258 = vadd.f32 %v264, %v1134
      %v1259 = vadd.f32 %v265, %v1139
      %v1260 = vadd.f32 %v266, %v1142
      %v1261 = vadd.f32 %v267, %v1147
      %v1262 = vadd.f32 %v268, %v1150
      %v1263 = vadd.f32 %v269, %v1155
      %v1264 = vadd.f32 %v270, %v1158
      %v1265 = vadd.f32 %v271, %v1163
      %v1266 = vadd.f32 %v272, %v1166
      %v1267 = vadd.f32 %v273, %v1171
      %v1268 = vadd.f32 %v274, %v1174
      %v1269 = vadd.f32 %v275, %v1179
      %v1270 = vadd.f32 %v276, %v1182
      %v1271 = vadd.f32 %v277, %v1187
      %v1272 = vadd.f32 %v278, %v1190
      %v1273 = vadd.f32 %v279, %v1195
      %v1274 = vadd.f32 %v280, %v1198
      %v1275 = vadd.f32 %v281, %v1203
      %v1276 = vadd.f32 %v282, %v1206
      %v1277 = vadd.f32 %v283, %v1211
      %v1278 = vadd.f32 %v284, %v1214
      %v1279 = vadd.f32 %v285, %v1219
      %v1280 = vadd.f32 %v286, %v1222
      %v1281 = vadd.f32 %v287, %v1227
      %v1282 = vadd.f32 %v288, %v1230
      %v1283 = vadd.f32 %v289, %v1235
      %v1284 = vadd.f32 %v290, %v1238
      %v1285 = vadd.f32 %v291, %v1243
      %v1286 = vadd.f32 %v292, %v1246
      %v1287 = vadd.f32 %v293, %v1251
      %v1288 = vadd.f32 %v294, %v1254
      %1289 = vst [vmem:[#allocation2] sm:$0xff] %v1257
      %1290 = vst [vmem:[#allocation2 + $0x8] sm:$0xff] %v1258
      %1291 = vst [vmem:[#allocation2 + $0x10] sm:$0xff] %v1259
      %1292 = vst [vmem:[#allocation2 + $0x18] sm:$0xff] %v1260
      %1293 = vst [vmem:[#allocation2 + $0x20] sm:$0xff] %v1261
      %1294 = vst [vmem:[#allocation2 + $0x28] sm:$0xff] %v1262
      %1295 = vst [vmem:[#allocation2 + $0x30] sm:$0xff] %v1263
      %1296 = vst [vmem:[#allocation2 + $0x38] sm:$0xff] %v1264
      %1297 = vst [vmem:[#allocation2 + $0x40] sm:$0xff] %v1265
      %1298 = vst [vmem:[#allocation2 + $0x48] sm:$0xff] %v1266
      %1299 = vst [vmem:[#allocation2 + $0x50] sm:$0xff] %v1267
      %1300 = vst [vmem:[#allocation2 + $0x58] sm:$0xff] %v1268
      %1301 = vst [vmem:[#allocation2 + $0x60] sm:$0xff] %v1269
      %1302 = vst [vmem:[#allocation2 + $0x68] sm:$0xff] %v1270
      %1303 = vst [vmem:[#allocation2 + $0x70] sm:$0xff] %v1271
      %1304 = vst [vmem:[#allocation2 + $0x78] sm:$0xff] %v1272
      %1305 = vst [vmem:[#allocation2 + $0x80] sm:$0xff] %v1273
      %1306 = vst [vmem:[#allocation2 + $0x88] sm:$0xff] %v1274
      %1307 = vst [vmem:[#allocation2 + $0x90] sm:$0xff] %v1275
      %1308 = vst [vmem:[#allocation2 + $0x98] sm:$0xff] %v1276
      %1309 = vst [vmem:[#allocation2 + $0xa0] sm:$0xff] %v1277
      %1310 = vst [vmem:[#allocation2 + $0xa8] sm:$0xff] %v1278
      %1311 = vst [vmem:[#allocation2 + $0xb0] sm:$0xff] %v1279
      %1312 = vst [vmem:[#allocation2 + $0xb8] sm:$0xff] %v1280
      %1313 = vst [vmem:[#allocation2 + $0xc0] sm:$0xff] %v1281
      %1314 = vst [vmem:[#allocation2 + $0xc8] sm:$0xff] %v1282
      %1315 = vst [vmem:[#allocation2 + $0xd0] sm:$0xff] %v1283
      %1316 = vst [vmem:[#allocation2 + $0xd8] sm:$0xff] %v1284
      %1317 = vst [vmem:[#allocation2 + $0xe0] sm:$0xff] %v1285
      %1318 = vst [vmem:[#allocation2 + $0xe8] sm:$0xff] %v1286
      %1319 = vst [vmem:[#allocation2 + $0xf0] sm:$0xff] %v1287
      %1320 = vst [vmem:[#allocation2 + $0xf8] sm:$0xff] %v1288
      // Predicated region
      $region33: #{generator_forward.25} parent=27 // pred_check
        %p1321 = pneg %p227
      $region34: #{generator_forward.25} parent=27 // pred_check_branch
        %1323 = sbr.rel (%p1321) target = $region36
      $region35: #{generator_forward.25} parent=27 // pred_region
        %v1324 = vld [vmem:[#allocation2] sm:$0xff]
        %v1325 = vld [vmem:[#allocation2 + $0x8] sm:$0xff]
        %v1326 = vld [vmem:[#allocation2 + $0x10] sm:$0xff]
        %v1327 = vld [vmem:[#allocation2 + $0x18] sm:$0xff]
        %v1328 = vld [vmem:[#allocation2 + $0x20] sm:$0xff]
        %v1329 = vld [vmem:[#allocation2 + $0x28] sm:$0xff]
        %v1330 = vld [vmem:[#allocation2 + $0x30] sm:$0xff]
        %v1331 = vld [vmem:[#allocation2 + $0x38] sm:$0xff]
        %v1332 = vld [vmem:[#allocation2 + $0x40] sm:$0xff]
        %v1333 = vld [vmem:[#allocation2 + $0x48] sm:$0xff]
        %v1334 = vld [vmem:[#allocation2 + $0x50] sm:$0xff]
        %v1335 = vld [vmem:[#allocation2 + $0x58] sm:$0xff]
        %v1336 = vld [vmem:[#allocation2 + $0x60] sm:$0xff]
        %v1337 = vld [vmem:[#allocation2 + $0x68] sm:$0xff]
        %v1338 = vld [vmem:[#allocation2 + $0x70] sm:$0xff]
        %v1339 = vld [vmem:[#allocation2 + $0x78] sm:$0xff]
        %v1340 = vld [vmem:[#allocation2 + $0x80] sm:$0xff]
        %v1341 = vld [vmem:[#allocation2 + $0x88] sm:$0xff]
        %v1342 = vld [vmem:[#allocation2 + $0x90] sm:$0xff]
        %v1343 = vld [vmem:[#allocation2 + $0x98] sm:$0xff]
        %v1344 = vld [vmem:[#allocation2 + $0xa0] sm:$0xff]
        %v1345 = vld [vmem:[#allocation2 + $0xa8] sm:$0xff]
        %v1346 = vld [vmem:[#allocation2 + $0xb0] sm:$0xff]
        %v1347 = vld [vmem:[#allocation2 + $0xb8] sm:$0xff]
        %v1348 = vld [vmem:[#allocation2 + $0xc0] sm:$0xff]
        %v1349 = vld [vmem:[#allocation2 + $0xc8] sm:$0xff]
        %v1350 = vld [vmem:[#allocation2 + $0xd0] sm:$0xff]
        %v1351 = vld [vmem:[#allocation2 + $0xd8] sm:$0xff]
        %v1352 = vld [vmem:[#allocation2 + $0xe0] sm:$0xff]
        %v1353 = vld [vmem:[#allocation2 + $0xe8] sm:$0xff]
        %v1354 = vld [vmem:[#allocation2 + $0xf0] sm:$0xff]
        %v1355 = vld [vmem:[#allocation2 + $0xf8] sm:$0xff]
        %1356 = vst [vmem:[%s224] sm:$0xff] %v1324
        %1357 = vst [vmem:[%s224 + $0x8] sm:$0xff] %v1325
        %1358 = vst [vmem:[%s224 + $0x10] sm:$0xff] %v1326
        %1359 = vst [vmem:[%s224 + $0x18] sm:$0xff] %v1327
        %1360 = vst [vmem:[%s224 + $0x20] sm:$0xff] %v1328
        %1361 = vst [vmem:[%s224 + $0x28] sm:$0xff] %v1329
        %1362 = vst [vmem:[%s224 + $0x30] sm:$0xff] %v1330
        %1363 = vst [vmem:[%s224 + $0x38] sm:$0xff] %v1331
        %1364 = vst [vmem:[%s224 + $0x40] sm:$0xff] %v1332
        %1365 = vst [vmem:[%s224 + $0x48] sm:$0xff] %v1333
        %1366 = vst [vmem:[%s224 + $0x50] sm:$0xff] %v1334
        %1367 = vst [vmem:[%s224 + $0x58] sm:$0xff] %v1335
        %1368 = vst [vmem:[%s224 + $0x60] sm:$0xff] %v1336
        %1369 = vst [vmem:[%s224 + $0x68] sm:$0xff] %v1337
        %1370 = vst [vmem:[%s224 + $0x70] sm:$0xff] %v1338
        %1371 = vst [vmem:[%s224 + $0x78] sm:$0xff] %v1339
        %1372 = vst [vmem:[%s224 + $0x80] sm:$0xff] %v1340
        %1373 = vst [vmem:[%s224 + $0x88] sm:$0xff] %v1341
        %1374 = vst [vmem:[%s224 + $0x90] sm:$0xff] %v1342
        %1375 = vst [vmem:[%s224 + $0x98] sm:$0xff] %v1343
        %1376 = vst [vmem:[%s224 + $0xa0] sm:$0xff] %v1344
        %1377 = vst [vmem:[%s224 + $0xa8] sm:$0xff] %v1345
        %1378 = vst [vmem:[%s224 + $0xb0] sm:$0xff] %v1346
        %1379 = vst [vmem:[%s224 + $0xb8] sm:$0xff] %v1347
        %1380 = vst [vmem:[%s224 + $0xc0] sm:$0xff] %v1348
        %1381 = vst [vmem:[%s224 + $0xc8] sm:$0xff] %v1349
        %1382 = vst [vmem:[%s224 + $0xd0] sm:$0xff] %v1350
        %1383 = vst [vmem:[%s224 + $0xd8] sm:$0xff] %v1351
        %1384 = vst [vmem:[%s224 + $0xe0] sm:$0xff] %v1352
        %1385 = vst [vmem:[%s224 + $0xe8] sm:$0xff] %v1353
        %1386 = vst [vmem:[%s224 + $0xf0] sm:$0xff] %v1354
        %1387 = vst [vmem:[%s224 + $0xf8] sm:$0xff] %v1355
      $region36: #{generator_forward.25} parent=27 // pred_fallthru
        _
      %s1388 = smul.u32 32, %s18
      %p1389 = scmp.lt.s32.totalorder %s1388, 63
      %s1390 = scalar_select %p1389, %s1388, 63
      %p1391 = scmp.lt.s32.totalorder %s19, 0
      %s1392 = scalar_select %p1391, %s19, 0
      %s1393 = sadd.s32 %s1392, %s1390
      %s1394 = smul.addr %s1393, 8
      %s1395 = scalar_lea.vmem %s2, %s1394
      // Predicated region
      $region37: #{generator_forward.25} parent=27 // pred_check
        %p1396 = pneg %p108
      $region38: #{generator_forward.25} parent=27 // pred_check_branch
        %1398 = sbr.rel (%p1396) target = $region40
      $region39: #{generator_forward.25} parent=27 // pred_region
        %s1399 = smul.u32 32, %s18
      $region40: #{generator_forward.25} parent=27 // pred_fallthru
        _
    $region28: #{generator_forward.25} parent=5 // pred_fallthru
      _
    %p1400 = scmp.le.s32.totalorder 2, %s8
    // Predicated region
    $region41: #{generator_forward.25} parent=5 // pred_check
      %p1401 = pneg %p1400
    $region42: #{generator_forward.25} parent=5 // pred_check_branch
      %1403 = sbr.rel (%p1401) target = $region44
    $region43: #{generator_forward.25} parent=5 // pred_region
      %s1404 = ssub.s32 %s8, 2
      // Predicated region
      $region45: #{generator_forward.25} parent=43 // pred_check
        %p1405 = pneg %p114
      $region46: #{generator_forward.25} parent=43 // pred_check_branch
        %1407 = sbr.rel (%p1405) target = $region48
      $region47: #{generator_forward.25} parent=43 // pred_region
        %s1408 = smul.u32 32, %s21
        %p1409 = scmp.lt.s32.totalorder %s1408, 63
        %s1410 = scalar_select %p1409, %s1408, 63
        %p1411 = scmp.lt.s32.totalorder %s22, 0
        %s1412 = scalar_select %p1411, %s22, 0
        %s1413 = sadd.s32 %s1412, %s1410
        %s1414 = smul.addr %s1413, 8
        %s1415 = scalar_lea.vmem %s2, %s1414
      $region48: #{generator_forward.25} parent=43 // pred_fallthru
        _
    $region44: #{generator_forward.25} parent=5 // pred_fallthru
      _
  $region6: #{generator_forward.25} parent=0 // loop_footer
    %s12 = sadd.s32 1, %s8
  $region7: #{generator_forward.25} parent=0 // loop_footer_branch
    %7 = sbr.rel target = $region3
  $region8: #{generator_forward.25} parent=0 // loop_exit
    _

// kernel: generator_forward.26
$region0: #{generator_forward.26}
  #allocation0 [shape = 'u32[]', space=smem, size = 0x4, offset = 0x4, fixed_abs, tag = 'smem constant byte address 0x4 - core index']
  #allocation1 [shape = 'u32[144,128]{1,0:T(1,128)}', space=vmem, size = 0x12000, scoped, tag = 'internal scratch']
  %s0 = inlined_call_operand.vmem [shape: f32[2,256,32], index: 0, kind: input, shape index: {}]
  %s1 = inlined_call_operand.vmem [shape: f32[1,32], index: 1, kind: input, shape index: {}]
  %s2 = inlined_call_operand.vmem [shape: f32[1,32], index: 2, kind: input, shape index: {}]
  %s3 = inlined_call_operand.vmem [shape: f32[2,256,32], index: 3, kind: output, shape index: {}]
  %s4 = sld [smem:[#allocation0]]
  $region45: #{generator_forward.26} parent=0
    _
  %s6 = ssub.s32 1, %s4
  %s7 = scalar_select 0, %s6, %s4
  loop: start=0, step=1, limit=4
  $region2: #{generator_forward.26} parent=0 // loop_pre_header
    _
  $region3: #{generator_forward.26} parent=0 // loop_header
    %s9 = sphi 0, %s13
    %p10 = scmp.ge.s32.totalorder %s9, 4
    %s16 = sphi 0, %s28
    %s17 = sphi 0, %s24
    %s18 = sphi 0, %s16
    %s19 = sphi 0, %s17
    %s20 = sphi 0, %s18
    %s21 = sphi 0, %s19
    %s33 = sphi 0, %s35
    %s36 = sphi 0, %s33
    %s37 = sphi 0, %s36
    %s53 = sphi 0, %s37
    %s59 = sphi 0, %s61
    %s62 = sphi 0, %s59
    %s63 = sphi 0, %s62
    %s79 = sphi 0, %s63
    %s85 = sphi 0, %s87
    %s88 = sphi 0, %s85
    %s89 = sphi 0, %s88
    %s105 = sphi 0, %s89
    %s113 = sphi 0, %s115
    %s116 = sphi 0, %s113
    %s117 = sphi 0, %s116
    %s133 = sphi 0, %s117
  $region4: #{generator_forward.26} parent=0 // loop_header_branch
    %12 = sbr.rel (%p10) target = $region8
  $region5: #{generator_forward.26} parent=0 // loop_body
    %s14 = ssub.s32 %s9, 1
    %s15 = ssub.s32 %s9, 2
    %s22 = sadd.s32 1, %s17
    %p23 = scmp.ge.s32.totalorder %s22, 1
    %s24 = scalar_select %p23, 0, %s22
    %s25 = sadd.s32 1, %s16
    %s26 = scalar_select %p23, %s25, %s16
    %p27 = scmp.ge.s32.totalorder %s26, 2
    %s28 = scalar_select %p27, 0, %s26
    %s29 = ssub.s32 %s16, %s28
    %s30 = ssub.s32 %s17, %s24
    %s31 = sor.u32 %s29, %s30
    %p32 = scmp.eq.s32.totalorder %s31, 0
    %s34 = sadd.s32 %s33, 1
    %s35 = scalar_select %p32, %s33, %s34
    %p38 = pneg %p32
    %p39 = scmp.eq.s32.totalorder %s9, 1
    %p40 = por %p38, %p39
    %p41 = scmp.ne.s32.totalorder %s33, %s36
    %p42 = scmp.eq.s32.totalorder %s9, 0
    %p43 = por %p41, %p42
    %p44 = scmp.ne.s32.totalorder %s33, %s36
    %p45 = scmp.eq.s32.totalorder %s14, 1
    %p46 = por %p44, %p45
    %p47 = scmp.ne.s32.totalorder %s36, %s37
    %p48 = scmp.eq.s32.totalorder %s14, 0
    %p49 = por %p47, %p48
    %p50 = scmp.ne.s32.totalorder %s36, %s37
    %p51 = scmp.eq.s32.totalorder %s15, 1
    %p52 = por %p50, %p51
    %p54 = scmp.ne.s32.totalorder %s37, %s53
    %p55 = scmp.eq.s32.totalorder %s15, 0
    %p56 = por %p54, %p55
    %s57 = ssub.s32 %s17, %s24
    %p58 = scmp.eq.s32.totalorder %s57, 0
    %s60 = sadd.s32 %s59, 1
    %s61 = scalar_select %p58, %s59, %s60
    %p64 = pneg %p58
    %p65 = scmp.eq.s32.totalorder %s9, 1
    %p66 = por %p64, %p65
    %p67 = scmp.ne.s32.totalorder %s59, %s62
    %p68 = scmp.eq.s32.totalorder %s9, 0
    %p69 = por %p67, %p68
    %p70 = scmp.ne.s32.totalorder %s59, %s62
    %p71 = scmp.eq.s32.totalorder %s14, 1
    %p72 = por %p70, %p71
    %p73 = scmp.ne.s32.totalorder %s62, %s63
    %p74 = scmp.eq.s32.totalorder %s14, 0
    %p75 = por %p73, %p74
    %p76 = scmp.ne.s32.totalorder %s62, %s63
    %p77 = scmp.eq.s32.totalorder %s15, 1
    %p78 = por %p76, %p77
    %p80 = scmp.ne.s32.totalorder %s63, %s79
    %p81 = scmp.eq.s32.totalorder %s15, 0
    %p82 = por %p80, %p81
    %s83 = ssub.s32 %s17, %s24
    %p84 = scmp.eq.s32.totalorder %s83, 0
    %s86 = sadd.s32 %s85, 1
    %s87 = scalar_select %p84, %s85, %s86
    %p90 = pneg %p84
    %p91 = scmp.eq.s32.totalorder %s9, 1
    %p92 = por %p90, %p91
    %p93 = scmp.ne.s32.totalorder %s85, %s88
    %p94 = scmp.eq.s32.totalorder %s9, 0
    %p95 = por %p93, %p94
    %p96 = scmp.ne.s32.totalorder %s85, %s88
    %p97 = scmp.eq.s32.totalorder %s14, 1
    %p98 = por %p96, %p97
    %p99 = scmp.ne.s32.totalorder %s88, %s89
    %p100 = scmp.eq.s32.totalorder %s14, 0
    %p101 = por %p99, %p100
    %p102 = scmp.ne.s32.totalorder %s88, %s89
    %p103 = scmp.eq.s32.totalorder %s15, 1
    %p104 = por %p102, %p103
    %p106 = scmp.ne.s32.totalorder %s89, %s105
    %p107 = scmp.eq.s32.totalorder %s15, 0
    %p108 = por %p106, %p107
    %s109 = ssub.s32 %s16, %s28
    %s110 = ssub.s32 %s17, %s24
    %s111 = sor.u32 %s109, %s110
    %p112 = scmp.eq.s32.totalorder %s111, 0
    %s114 = sadd.s32 %s113, 1
    %s115 = scalar_select %p112, %s113, %s114
    %p118 = pneg %p112
    %p119 = scmp.eq.s32.totalorder %s9, 1
    %p120 = por %p118, %p119
    %p121 = scmp.ne.s32.totalorder %s113, %s116
    %p122 = scmp.eq.s32.totalorder %s9, 0
    %p123 = por %p121, %p122
    %p124 = scmp.ne.s32.totalorder %s113, %s116
    %p125 = scmp.eq.s32.totalorder %s14, 1
    %p126 = por %p124, %p125
    %p127 = scmp.ne.s32.totalorder %s116, %s117
    %p128 = scmp.eq.s32.totalorder %s14, 0
    %p129 = por %p127, %p128
    %p130 = scmp.ne.s32.totalorder %s116, %s117
    %p131 = scmp.eq.s32.totalorder %s15, 1
    %p132 = por %p130, %p131
    %p134 = scmp.ne.s32.totalorder %s117, %s133
    %p135 = scmp.eq.s32.totalorder %s15, 0
    %p136 = por %p134, %p135
    %p137 = scmp.le.s32.totalorder 1, %s9
    %p138 = scmp.lt.s32.totalorder %s9, 3
    %p139 = pnand %p137, %p138
    %p140 = pneg %p139
    // Predicated region
    $region9: #{generator_forward.26} parent=5 // pred_check
      _
    $region10: #{generator_forward.26} parent=5 // pred_check_branch
      %142 = sbr.rel (%p139) target = $region12
    $region11: #{generator_forward.26} parent=5 // pred_region
      %s143 = ssub.s32 %s9, 1
      // Predicated region
      $region13: #{generator_forward.26} parent=11 // pred_check
        %p144 = pneg %p75
      $region14: #{generator_forward.26} parent=11 // pred_check_branch
        %146 = sbr.rel (%p144) target = $region16
      $region15: #{generator_forward.26} parent=11 // pred_region
        %p147 = scmp.lt.s32.totalorder %s19, 0
        %s148 = scalar_select %p147, %s19, 0
        %s149 = scalar_lea.vmem %s1, %s148
      $region16: #{generator_forward.26} parent=11 // pred_fallthru
        _
      // Predicated region
      $region17: #{generator_forward.26} parent=11 // pred_check
        %p150 = pneg %p101
      $region18: #{generator_forward.26} parent=11 // pred_check_branch
        %152 = sbr.rel (%p150) target = $region20
      $region19: #{generator_forward.26} parent=11 // pred_region
        %p153 = scmp.lt.s32.totalorder %s19, 0
        %s154 = scalar_select %p153, %s19, 0
        %s155 = scalar_lea.vmem %s2, %s154
      $region20: #{generator_forward.26} parent=11 // pred_fallthru
        _
    $region12: #{generator_forward.26} parent=5 // pred_fallthru
      _
    %p156 = scmp.lt.s32.totalorder %s9, 2
    // Predicated region
    $region21: #{generator_forward.26} parent=5 // pred_check
      %p157 = pneg %p156
    $region22: #{generator_forward.26} parent=5 // pred_check_branch
      %159 = sbr.rel (%p157) target = $region24
    $region23: #{generator_forward.26} parent=5 // pred_region
      // Predicated region
      $region25: #{generator_forward.26} parent=23 // pred_check
        %p160 = pneg %p43
      $region26: #{generator_forward.26} parent=23 // pred_check_branch
        %162 = sbr.rel (%p160) target = $region28
      $region27: #{generator_forward.26} parent=23 // pred_region
        %p163 = scmp.lt.s32.totalorder %s16, 1
        %s164 = scalar_select %p163, %s16, 1
        %p165 = scmp.lt.s32.totalorder %s17, 0
        %s166 = scalar_select %p165, %s17, 0
        %s167 = smul.addr %s164, 32
        %s168 = sadd.s32 %s166, %s167
        %s169 = smul.addr %s168, 8
        %s170 = scalar_lea.vmem %s0, %s169
      $region28: #{generator_forward.26} parent=23 // pred_fallthru
        _
    $region24: #{generator_forward.26} parent=5 // pred_fallthru
      _
    %p171 = scmp.le.s32.totalorder 1, %s9
    %p172 = scmp.lt.s32.totalorder %s9, 3
    %p173 = pnand %p171, %p172
    %p174 = pneg %p173
    // Predicated region
    $region29: #{generator_forward.26} parent=5 // pred_check
      _
    $region30: #{generator_forward.26} parent=5 // pred_check_branch
      %176 = sbr.rel (%p173) target = $region32
    $region31: #{generator_forward.26} parent=5 // pred_region
      %s177 = ssub.s32 %s9, 1
      %p178 = scmp.lt.s32.totalorder %s18, 1
      %s179 = scalar_select %p178, %s18, 1
      %p180 = scmp.lt.s32.totalorder %s19, 0
      %s181 = scalar_select %p180, %s19, 0
      %s182 = smul.addr %s179, 32
      %s183 = sadd.s32 %s181, %s182
      %s184 = smul.addr %s183, 8
      %s185 = scalar_lea.vmem %s0, %s184
      %p186 = pneg %p49
      %p187 = pneg %p46
      %p188 = scmp.lt.s32.totalorder %s19, 0
      %s189 = scalar_select %p188, %s19, 0
      %s190 = scalar_lea.vmem %s1, %s189
      %p191 = pneg %p75
      %p192 = pneg %p72
      %p193 = scmp.lt.s32.totalorder %s19, 0
      %s194 = scalar_select %p193, %s19, 0
      %s195 = scalar_lea.vmem %s2, %s194
      %p196 = pneg %p101
      %p197 = pneg %p98
      %p198 = pneg %p129
      %p199 = pneg %p126
      %p200 = scmp.lt.s32.totalorder %s18, 1
      %s201 = scalar_select %p200, %s18, 1
      %p202 = scmp.lt.s32.totalorder %s19, 0
      %s203 = scalar_select %p202, %s19, 0
      %s204 = smul.addr %s201, 32
      %s205 = sadd.s32 %s203, %s204
      %s206 = smul.addr %s205, 8
      %s207 = scalar_lea.vmem %s3, %s206
      %p208 = scmp.lt.s32.totalorder %s18, 1
      %s209 = scalar_select %p208, %s18, 1
      %p210 = scmp.lt.s32.totalorder %s19, 0
      %s211 = scalar_select %p210, %s19, 0
      %s212 = smul.addr %s209, 32
      %s213 = sadd.s32 %s211, %s212
      %s214 = smul.addr %s213, 8
      %s215 = scalar_lea.vmem %s0, %s214
      %p216 = scmp.lt.s32.totalorder %s19, 0
      %s217 = scalar_select %p216, %s19, 0
      %s218 = scalar_lea.vmem %s1, %s217
      %p219 = scmp.lt.s32.totalorder %s19, 0
      %s220 = scalar_select %p219, %s19, 0
      %s221 = scalar_lea.vmem %s2, %s220
      %p222 = scmp.lt.s32.totalorder %s18, 1
      %s223 = scalar_select %p222, %s18, 1
      %p224 = scmp.lt.s32.totalorder %s19, 0
      %s225 = scalar_select %p224, %s19, 0
      %s226 = smul.addr %s223, 32
      %s227 = sadd.s32 %s225, %s226
      %s228 = smul.addr %s227, 8
      %s229 = scalar_lea.vmem %s3, %s228
      %v230 = vld [vmem:[%s215] sm:$0xff]
      %v231 = vld [vmem:[%s215 + $0x8] sm:$0xff]
      %v232 = vld [vmem:[%s215 + $0x10] sm:$0xff]
      %v233 = vld [vmem:[%s215 + $0x18] sm:$0xff]
      %v234 = vld [vmem:[%s215 + $0x20] sm:$0xff]
      %v235 = vld [vmem:[%s215 + $0x28] sm:$0xff]
      %v236 = vld [vmem:[%s215 + $0x30] sm:$0xff]
      %v237 = vld [vmem:[%s215 + $0x38] sm:$0xff]
      %v238 = vld [vmem:[%s215 + $0x40] sm:$0xff]
      %v239 = vld [vmem:[%s215 + $0x48] sm:$0xff]
      %v240 = vld [vmem:[%s215 + $0x50] sm:$0xff]
      %v241 = vld [vmem:[%s215 + $0x58] sm:$0xff]
      %v242 = vld [vmem:[%s215 + $0x60] sm:$0xff]
      %v243 = vld [vmem:[%s215 + $0x68] sm:$0xff]
      %v244 = vld [vmem:[%s215 + $0x70] sm:$0xff]
      %v245 = vld [vmem:[%s215 + $0x78] sm:$0xff]
      %v246 = vld [vmem:[%s215 + $0x80] sm:$0xff]
      %v247 = vld [vmem:[%s215 + $0x88] sm:$0xff]
      %v248 = vld [vmem:[%s215 + $0x90] sm:$0xff]
      %v249 = vld [vmem:[%s215 + $0x98] sm:$0xff]
      %v250 = vld [vmem:[%s215 + $0xa0] sm:$0xff]
      %v251 = vld [vmem:[%s215 + $0xa8] sm:$0xff]
      %v252 = vld [vmem:[%s215 + $0xb0] sm:$0xff]
      %v253 = vld [vmem:[%s215 + $0xb8] sm:$0xff]
      %v254 = vld [vmem:[%s215 + $0xc0] sm:$0xff]
      %v255 = vld [vmem:[%s215 + $0xc8] sm:$0xff]
      %v256 = vld [vmem:[%s215 + $0xd0] sm:$0xff]
      %v257 = vld [vmem:[%s215 + $0xd8] sm:$0xff]
      %v258 = vld [vmem:[%s215 + $0xe0] sm:$0xff]
      %v259 = vld [vmem:[%s215 + $0xe8] sm:$0xff]
      %v260 = vld [vmem:[%s215 + $0xf0] sm:$0xff]
      %v261 = vld [vmem:[%s215 + $0xf8] sm:$0xff]
      %vm262 = vcmask 261120
      %v263 = vsel %vm262, %v230, 0.0
      %v264 = vsel %vm262, %v231, 0.0
      %v265 = vadd.f32 %v263, %v264
      %v266 = vsel %vm262, %v232, 0.0
      %v267 = vadd.f32 %v265, %v266
      %v268 = vsel %vm262, %v233, 0.0
      %v269 = vadd.f32 %v267, %v268
      %v270 = vsel %vm262, %v234, 0.0
      %v271 = vadd.f32 %v269, %v270
      %v272 = vsel %vm262, %v235, 0.0
      %v273 = vadd.f32 %v271, %v272
      %v274 = vsel %vm262, %v236, 0.0
      %v275 = vadd.f32 %v273, %v274
      %v276 = vsel %vm262, %v237, 0.0
      %v277 = vadd.f32 %v275, %v276
      %v278 = vsel %vm262, %v238, 0.0
      %v279 = vadd.f32 %v277, %v278
      %v280 = vsel %vm262, %v239, 0.0
      %v281 = vadd.f32 %v279, %v280
      %v282 = vsel %vm262, %v240, 0.0
      %v283 = vadd.f32 %v281, %v282
      %v284 = vsel %vm262, %v241, 0.0
      %v285 = vadd.f32 %v283, %v284
      %v286 = vsel %vm262, %v242, 0.0
      %v287 = vadd.f32 %v285, %v286
      %v288 = vsel %vm262, %v243, 0.0
      %v289 = vadd.f32 %v287, %v288
      %v290 = vsel %vm262, %v244, 0.0
      %v291 = vadd.f32 %v289, %v290
      %v292 = vsel %vm262, %v245, 0.0
      %v293 = vadd.f32 %v291, %v292
      %v294 = vsel %vm262, %v246, 0.0
      %v295 = vadd.f32 %v293, %v294
      %v296 = vsel %vm262, %v247, 0.0
      %v297 = vadd.f32 %v295, %v296
      %v298 = vsel %vm262, %v248, 0.0
      %v299 = vadd.f32 %v297, %v298
      %v300 = vsel %vm262, %v249, 0.0
      %v301 = vadd.f32 %v299, %v300
      %v302 = vsel %vm262, %v250, 0.0
      %v303 = vadd.f32 %v301, %v302
      %v304 = vsel %vm262, %v251, 0.0
      %v305 = vadd.f32 %v303, %v304
      %v306 = vsel %vm262, %v252, 0.0
      %v307 = vadd.f32 %v305, %v306
      %v308 = vsel %vm262, %v253, 0.0
      %v309 = vadd.f32 %v307, %v308
      %v310 = vsel %vm262, %v254, 0.0
      %v311 = vadd.f32 %v309, %v310
      %v312 = vsel %vm262, %v255, 0.0
      %v313 = vadd.f32 %v311, %v312
      %v314 = vsel %vm262, %v256, 0.0
      %v315 = vadd.f32 %v313, %v314
      %v316 = vsel %vm262, %v257, 0.0
      %v317 = vadd.f32 %v315, %v316
      %v318 = vsel %vm262, %v258, 0.0
      %v319 = vadd.f32 %v317, %v318
      %v320 = vsel %vm262, %v259, 0.0
      %v321 = vadd.f32 %v319, %v320
      %v322 = vsel %vm262, %v260, 0.0
      %v323 = vadd.f32 %v321, %v322
      %v324 = vsel %vm262, %v261, 0.0
      %v325 = vadd.f32 %v323, %v324
      %v326 = vrot.slane %v325, 4
      %v327 = vadd.f32 %v325, %v326
      %v328 = vrot.slane %v327, 2
      %v329 = vadd.f32 %v327, %v328
      %v330 = vrot.slane %v329, 1
      %v331 = vadd.f32 %v329, %v330
      %v332 = vrcp.pop 256.0
      %v333 = vmul.f32 %v331, %v332
      %v334 = vsub.f32 %v230, %v333
      %v335 = vsub.f32 %v231, %v333
      %v336 = vsub.f32 %v232, %v333
      %v337 = vsub.f32 %v233, %v333
      %v338 = vsub.f32 %v234, %v333
      %v339 = vsub.f32 %v235, %v333
      %v340 = vsub.f32 %v236, %v333
      %v341 = vsub.f32 %v237, %v333
      %v342 = vsub.f32 %v238, %v333
      %v343 = vsub.f32 %v239, %v333
      %v344 = vsub.f32 %v240, %v333
      %v345 = vsub.f32 %v241, %v333
      %v346 = vsub.f32 %v242, %v333
      %v347 = vsub.f32 %v243, %v333
      %v348 = vsub.f32 %v244, %v333
      %v349 = vsub.f32 %v245, %v333
      %v350 = vsub.f32 %v246, %v333
      %v351 = vsub.f32 %v247, %v333
      %v352 = vsub.f32 %v248, %v333
      %v353 = vsub.f32 %v249, %v333
      %v354 = vsub.f32 %v250, %v333
      %v355 = vsub.f32 %v251, %v333
      %v356 = vsub.f32 %v252, %v333
      %v357 = vsub.f32 %v253, %v333
      %v358 = vsub.f32 %v254, %v333
      %v359 = vsub.f32 %v255, %v333
      %v360 = vsub.f32 %v256, %v333
      %v361 = vsub.f32 %v257, %v333
      %v362 = vsub.f32 %v258, %v333
      %v363 = vsub.f32 %v259, %v333
      %v364 = vsub.f32 %v260, %v333
      %v365 = vsub.f32 %v261, %v333
      %v366 = vmul.f32 %v334, %v334
      %v367 = vmul.f32 %v335, %v335
      %v368 = vmul.f32 %v336, %v336
      %v369 = vmul.f32 %v337, %v337
      %v370 = vmul.f32 %v338, %v338
      %v371 = vmul.f32 %v339, %v339
      %v372 = vmul.f32 %v340, %v340
      %v373 = vmul.f32 %v341, %v341
      %v374 = vmul.f32 %v342, %v342
      %v375 = vmul.f32 %v343, %v343
      %v376 = vmul.f32 %v344, %v344
      %v377 = vmul.f32 %v345, %v345
      %v378 = vmul.f32 %v346, %v346
      %v379 = vmul.f32 %v347, %v347
      %v380 = vmul.f32 %v348, %v348
      %v381 = vmul.f32 %v349, %v349
      %v382 = vmul.f32 %v350, %v350
      %v383 = vmul.f32 %v351, %v351
      %v384 = vmul.f32 %v352, %v352
      %v385 = vmul.f32 %v353, %v353
      %v386 = vmul.f32 %v354, %v354
      %v387 = vmul.f32 %v355, %v355
      %v388 = vmul.f32 %v356, %v356
      %v389 = vmul.f32 %v357, %v357
      %v390 = vmul.f32 %v358, %v358
      %v391 = vmul.f32 %v359, %v359
      %v392 = vmul.f32 %v360, %v360
      %v393 = vmul.f32 %v361, %v361
      %v394 = vmul.f32 %v362, %v362
      %v395 = vmul.f32 %v363, %v363
      %v396 = vmul.f32 %v364, %v364
      %v397 = vmul.f32 %v365, %v365
      %v398 = vsel %vm262, %v366, 0.0
      %v399 = vsel %vm262, %v367, 0.0
      %v400 = vadd.f32 %v398, %v399
      %v401 = vsel %vm262, %v368, 0.0
      %v402 = vadd.f32 %v400, %v401
      %v403 = vsel %vm262, %v369, 0.0
      %v404 = vadd.f32 %v402, %v403
      %v405 = vsel %vm262, %v370, 0.0
      %v406 = vadd.f32 %v404, %v405
      %v407 = vsel %vm262, %v371, 0.0
      %v408 = vadd.f32 %v406, %v407
      %v409 = vsel %vm262, %v372, 0.0
      %v410 = vadd.f32 %v408, %v409
      %v411 = vsel %vm262, %v373, 0.0
      %v412 = vadd.f32 %v410, %v411
      %v413 = vsel %vm262, %v374, 0.0
      %v414 = vadd.f32 %v412, %v413
      %v415 = vsel %vm262, %v375, 0.0
      %v416 = vadd.f32 %v414, %v415
      %v417 = vsel %vm262, %v376, 0.0
      %v418 = vadd.f32 %v416, %v417
      %v419 = vsel %vm262, %v377, 0.0
      %v420 = vadd.f32 %v418, %v419
      %v421 = vsel %vm262, %v378, 0.0
      %v422 = vadd.f32 %v420, %v421
      %v423 = vsel %vm262, %v379, 0.0
      %v424 = vadd.f32 %v422, %v423
      %v425 = vsel %vm262, %v380, 0.0
      %v426 = vadd.f32 %v424, %v425
      %v427 = vsel %vm262, %v381, 0.0
      %v428 = vadd.f32 %v426, %v427
      %v429 = vsel %vm262, %v382, 0.0
      %v430 = vadd.f32 %v428, %v429
      %v431 = vsel %vm262, %v383, 0.0
      %v432 = vadd.f32 %v430, %v431
      %v433 = vsel %vm262, %v384, 0.0
      %v434 = vadd.f32 %v432, %v433
      %v435 = vsel %vm262, %v385, 0.0
      %v436 = vadd.f32 %v434, %v435
      %v437 = vsel %vm262, %v386, 0.0
      %v438 = vadd.f32 %v436, %v437
      %v439 = vsel %vm262, %v387, 0.0
      %v440 = vadd.f32 %v438, %v439
      %v441 = vsel %vm262, %v388, 0.0
      %v442 = vadd.f32 %v440, %v441
      %v443 = vsel %vm262, %v389, 0.0
      %v444 = vadd.f32 %v442, %v443
      %v445 = vsel %vm262, %v390, 0.0
      %v446 = vadd.f32 %v444, %v445
      %v447 = vsel %vm262, %v391, 0.0
      %v448 = vadd.f32 %v446, %v447
      %v449 = vsel %vm262, %v392, 0.0
      %v450 = vadd.f32 %v448, %v449
      %v451 = vsel %vm262, %v393, 0.0
      %v452 = vadd.f32 %v450, %v451
      %v453 = vsel %vm262, %v394, 0.0
      %v454 = vadd.f32 %v452, %v453
      %v455 = vsel %vm262, %v395, 0.0
      %v456 = vadd.f32 %v454, %v455
      %v457 = vsel %vm262, %v396, 0.0
      %v458 = vadd.f32 %v456, %v457
      %v459 = vsel %vm262, %v397, 0.0
      %v460 = vadd.f32 %v458, %v459
      %v461 = vrot.slane %v460, 4
      %v462 = vadd.f32 %v460, %v461
      %v463 = vrot.slane %v462, 2
      %v464 = vadd.f32 %v462, %v463
      %v465 = vrot.slane %v464, 1
      %v466 = vadd.f32 %v464, %v465
      %v467 = vmul.f32 %v466, %v332
      %v468 = vadd.f32 %v467, 1e-05
      %v469 = vrsqrt.pop %v468
      %v470 = vmul.f32 %v334, %v469
      %v471 = vmul.f32 %v335, %v469
      %v472 = vmul.f32 %v336, %v469
      %v473 = vmul.f32 %v337, %v469
      %v474 = vmul.f32 %v338, %v469
      %v475 = vmul.f32 %v339, %v469
      %v476 = vmul.f32 %v340, %v469
      %v477 = vmul.f32 %v341, %v469
      %v478 = vmul.f32 %v342, %v469
      %v479 = vmul.f32 %v343, %v469
      %v480 = vmul.f32 %v344, %v469
      %v481 = vmul.f32 %v345, %v469
      %v482 = vmul.f32 %v346, %v469
      %v483 = vmul.f32 %v347, %v469
      %v484 = vmul.f32 %v348, %v469
      %v485 = vmul.f32 %v349, %v469
      %v486 = vmul.f32 %v350, %v469
      %v487 = vmul.f32 %v351, %v469
      %v488 = vmul.f32 %v352, %v469
      %v489 = vmul.f32 %v353, %v469
      %v490 = vmul.f32 %v354, %v469
      %v491 = vmul.f32 %v355, %v469
      %v492 = vmul.f32 %v356, %v469
      %v493 = vmul.f32 %v357, %v469
      %v494 = vmul.f32 %v358, %v469
      %v495 = vmul.f32 %v359, %v469
      %v496 = vmul.f32 %v360, %v469
      %v497 = vmul.f32 %v361, %v469
      %v498 = vmul.f32 %v362, %v469
      %v499 = vmul.f32 %v363, %v469
      %v500 = vmul.f32 %v364, %v469
      %v501 = vmul.f32 %v365, %v469
      %v502 = vld [vmem:[%s218] sm:$0x1]
      %v504 = vlaneseq
      %v505 = vshrl.u32 %v504, 7
      %v506 = vsub.s32 0, %v505
      %v507 = vrot.slane %v502, %v506
      %v509 = vmul.f32 %v470, %v507
      %v510 = vmul.f32 %v471, %v507
      %v511 = vmul.f32 %v472, %v507
      %v512 = vmul.f32 %v473, %v507
      %v513 = vmul.f32 %v474, %v507
      %v514 = vmul.f32 %v475, %v507
      %v515 = vmul.f32 %v476, %v507
      %v516 = vmul.f32 %v477, %v507
      %v517 = vmul.f32 %v478, %v507
      %v518 = vmul.f32 %v479, %v507
      %v519 = vmul.f32 %v480, %v507
      %v520 = vmul.f32 %v481, %v507
      %v521 = vmul.f32 %v482, %v507
      %v522 = vmul.f32 %v483, %v507
      %v523 = vmul.f32 %v484, %v507
      %v524 = vmul.f32 %v485, %v507
      %v525 = vmul.f32 %v486, %v507
      %v526 = vmul.f32 %v487, %v507
      %v527 = vmul.f32 %v488, %v507
      %v528 = vmul.f32 %v489, %v507
      %v529 = vmul.f32 %v490, %v507
      %v530 = vmul.f32 %v491, %v507
      %v531 = vmul.f32 %v492, %v507
      %v532 = vmul.f32 %v493, %v507
      %v533 = vmul.f32 %v494, %v507
      %v534 = vmul.f32 %v495, %v507
      %v535 = vmul.f32 %v496, %v507
      %v536 = vmul.f32 %v497, %v507
      %v537 = vmul.f32 %v498, %v507
      %v538 = vmul.f32 %v499, %v507
      %v539 = vmul.f32 %v500, %v507
      %v540 = vmul.f32 %v501, %v507
      %v541 = vld [vmem:[%s221] sm:$0x1]
      %v543 = vlaneseq
      %v544 = vshrl.u32 %v543, 7
      %v545 = vsub.s32 0, %v544
      %v546 = vrot.slane %v541, %v545
      %v548 = vadd.f32 %v509, %v546
      %v549 = vadd.f32 %v510, %v546
      %v550 = vadd.f32 %v511, %v546
      %v551 = vadd.f32 %v512, %v546
      %v552 = vadd.f32 %v513, %v546
      %v553 = vadd.f32 %v514, %v546
      %v554 = vadd.f32 %v515, %v546
      %v555 = vadd.f32 %v516, %v546
      %v556 = vadd.f32 %v517, %v546
      %v557 = vadd.f32 %v518, %v546
      %v558 = vadd.f32 %v519, %v546
      %v559 = vadd.f32 %v520, %v546
      %v560 = vadd.f32 %v521, %v546
      %v561 = vadd.f32 %v522, %v546
      %v562 = vadd.f32 %v523, %v546
      %v563 = vadd.f32 %v524, %v546
      %v564 = vadd.f32 %v525, %v546
      %v565 = vadd.f32 %v526, %v546
      %v566 = vadd.f32 %v527, %v546
      %v567 = vadd.f32 %v528, %v546
      %v568 = vadd.f32 %v529, %v546
      %v569 = vadd.f32 %v530, %v546
      %v570 = vadd.f32 %v531, %v546
      %v571 = vadd.f32 %v532, %v546
      %v572 = vadd.f32 %v533, %v546
      %v573 = vadd.f32 %v534, %v546
      %v574 = vadd.f32 %v535, %v546
      %v575 = vadd.f32 %v536, %v546
      %v576 = vadd.f32 %v537, %v546
      %v577 = vadd.f32 %v538, %v546
      %v578 = vadd.f32 %v539, %v546
      %v579 = vadd.f32 %v540, %v546
      %v580 = vmax.f32 %v548, 0.0
      %v581 = vmax.f32 %v549, 0.0
      %v582 = vmax.f32 %v550, 0.0
      %v583 = vmax.f32 %v551, 0.0
      %v584 = vmax.f32 %v552, 0.0
      %v585 = vmax.f32 %v553, 0.0
      %v586 = vmax.f32 %v554, 0.0
      %v587 = vmax.f32 %v555, 0.0
      %v588 = vmax.f32 %v556, 0.0
      %v589 = vmax.f32 %v557, 0.0
      %v590 = vmax.f32 %v558, 0.0
      %v591 = vmax.f32 %v559, 0.0
      %v592 = vmax.f32 %v560, 0.0
      %v593 = vmax.f32 %v561, 0.0
      %v594 = vmax.f32 %v562, 0.0
      %v595 = vmax.f32 %v563, 0.0
      %v596 = vmax.f32 %v564, 0.0
      %v597 = vmax.f32 %v565, 0.0
      %v598 = vmax.f32 %v566, 0.0
      %v599 = vmax.f32 %v567, 0.0
      %v600 = vmax.f32 %v568, 0.0
      %v601 = vmax.f32 %v569, 0.0
      %v602 = vmax.f32 %v570, 0.0
      %v603 = vmax.f32 %v571, 0.0
      %v604 = vmax.f32 %v572, 0.0
      %v605 = vmax.f32 %v573, 0.0
      %v606 = vmax.f32 %v574, 0.0
      %v607 = vmax.f32 %v575, 0.0
      %v608 = vmax.f32 %v576, 0.0
      %v609 = vmax.f32 %v577, 0.0
      %v610 = vmax.f32 %v578, 0.0
      %v611 = vmax.f32 %v579, 0.0
      %612 = vst.msk [vmem:[%s229] sm:$0xff] %vm262, %v580
      %613 = vst.msk [vmem:[%s229 + $0x8] sm:$0xff] %vm262, %v581
      %614 = vst.msk [vmem:[%s229 + $0x10] sm:$0xff] %vm262, %v582
      %615 = vst.msk [vmem:[%s229 + $0x18] sm:$0xff] %vm262, %v583
      %616 = vst.msk [vmem:[%s229 + $0x20] sm:$0xff] %vm262, %v584
      %617 = vst.msk [vmem:[%s229 + $0x28] sm:$0xff] %vm262, %v585
      %618 = vst.msk [vmem:[%s229 + $0x30] sm:$0xff] %vm262, %v586
      %619 = vst.msk [vmem:[%s229 + $0x38] sm:$0xff] %vm262, %v587
      %620 = vst.msk [vmem:[%s229 + $0x40] sm:$0xff] %vm262, %v588
      %621 = vst.msk [vmem:[%s229 + $0x48] sm:$0xff] %vm262, %v589
      %622 = vst.msk [vmem:[%s229 + $0x50] sm:$0xff] %vm262, %v590
      %623 = vst.msk [vmem:[%s229 + $0x58] sm:$0xff] %vm262, %v591
      %624 = vst.msk [vmem:[%s229 + $0x60] sm:$0xff] %vm262, %v592
      %625 = vst.msk [vmem:[%s229 + $0x68] sm:$0xff] %vm262, %v593
      %626 = vst.msk [vmem:[%s229 + $0x70] sm:$0xff] %vm262, %v594
      %627 = vst.msk [vmem:[%s229 + $0x78] sm:$0xff] %vm262, %v595
      %628 = vst.msk [vmem:[%s229 + $0x80] sm:$0xff] %vm262, %v596
      %629 = vst.msk [vmem:[%s229 + $0x88] sm:$0xff] %vm262, %v597
      %630 = vst.msk [vmem:[%s229 + $0x90] sm:$0xff] %vm262, %v598
      %631 = vst.msk [vmem:[%s229 + $0x98] sm:$0xff] %vm262, %v599
      %632 = vst.msk [vmem:[%s229 + $0xa0] sm:$0xff] %vm262, %v600
      %633 = vst.msk [vmem:[%s229 + $0xa8] sm:$0xff] %vm262, %v601
      %634 = vst.msk [vmem:[%s229 + $0xb0] sm:$0xff] %vm262, %v602
      %635 = vst.msk [vmem:[%s229 + $0xb8] sm:$0xff] %vm262, %v603
      %636 = vst.msk [vmem:[%s229 + $0xc0] sm:$0xff] %vm262, %v604
      %637 = vst.msk [vmem:[%s229 + $0xc8] sm:$0xff] %vm262, %v605
      %638 = vst.msk [vmem:[%s229 + $0xd0] sm:$0xff] %vm262, %v606
      %639 = vst.msk [vmem:[%s229 + $0xd8] sm:$0xff] %vm262, %v607
      %640 = vst.msk [vmem:[%s229 + $0xe0] sm:$0xff] %vm262, %v608
      %641 = vst.msk [vmem:[%s229 + $0xe8] sm:$0xff] %vm262, %v609
      %642 = vst.msk [vmem:[%s229 + $0xf0] sm:$0xff] %vm262, %v610
      %643 = vst.msk [vmem:[%s229 + $0xf8] sm:$0xff] %vm262, %v611
      %p644 = scmp.lt.s32.totalorder %s18, 1
      %s645 = scalar_select %p644, %s18, 1
      %p646 = scmp.lt.s32.totalorder %s19, 0
      %s647 = scalar_select %p646, %s19, 0
      %s648 = smul.addr %s645, 32
      %s649 = sadd.s32 %s647, %s648
      %s650 = smul.addr %s649, 8
      %s651 = scalar_lea.vmem %s3, %s650
      // Predicated region
      $region33: #{generator_forward.26} parent=31 // pred_check
        %p652 = pneg %p126
      $region34: #{generator_forward.26} parent=31 // pred_check_branch
        %654 = sbr.rel (%p652) target = $region36
      $region35: #{generator_forward.26} parent=31 // pred_region
        _
      $region36: #{generator_forward.26} parent=31 // pred_fallthru
        _
    $region32: #{generator_forward.26} parent=5 // pred_fallthru
      _
    %p655 = scmp.le.s32.totalorder 2, %s9
    // Predicated region
    $region37: #{generator_forward.26} parent=5 // pred_check
      %p656 = pneg %p655
    $region38: #{generator_forward.26} parent=5 // pred_check_branch
      %658 = sbr.rel (%p656) target = $region40
    $region39: #{generator_forward.26} parent=5 // pred_region
      %s659 = ssub.s32 %s9, 2
      // Predicated region
      $region41: #{generator_forward.26} parent=39 // pred_check
        %p660 = pneg %p132
      $region42: #{generator_forward.26} parent=39 // pred_check_branch
        %662 = sbr.rel (%p660) target = $region44
      $region43: #{generator_forward.26} parent=39 // pred_region
        %p663 = scmp.lt.s32.totalorder %s20, 1
        %s664 = scalar_select %p663, %s20, 1
        %p665 = scmp.lt.s32.totalorder %s21, 0
        %s666 = scalar_select %p665, %s21, 0
        %s667 = smul.addr %s664, 32
        %s668 = sadd.s32 %s666, %s667
        %s669 = smul.addr %s668, 8
        %s670 = scalar_lea.vmem %s3, %s669
      $region44: #{generator_forward.26} parent=39 // pred_fallthru
        _
    $region40: #{generator_forward.26} parent=5 // pred_fallthru
      _
  $region6: #{generator_forward.26} parent=0 // loop_footer
    %s13 = sadd.s32 1, %s9
  $region7: #{generator_forward.26} parent=0 // loop_footer_branch
    %8 = sbr.rel target = $region3
  $region8: #{generator_forward.26} parent=0 // loop_exit
    _

// kernel: generator_forward.27
$region0: #{generator_forward.27}
  #allocation0 [shape = 'u32[]', space=smem, size = 0x4, offset = 0x4, fixed_abs, tag = 'smem constant byte address 0x4 - core index']
  #allocation1 [shape = 'u32[144,128]{1,0:T(1,128)}', space=vmem, size = 0x12000, scoped, tag = 'internal scratch']
  #allocation2 [shape = 'f32[128,128]{1,0:T(8,128)}', space=vmem, size = 0x10000, scoped, tag = 'scratch operand']
  %s0 = inlined_call_operand.vmem [shape: bf16[128,512], index: 0, kind: input, shape index: {}]
  %s1 = inlined_call_operand.vmem [shape: bf16[512,128], index: 1, kind: input, shape index: {}]
  %s2 = inlined_call_operand.vmem [shape: f32[128,128], index: 2, kind: output, shape index: {}]
  %s3 = sld [smem:[#allocation0]]
  $region26: #{generator_forward.27} parent=0
    _
  %s5 = ssub.s32 1, %s3
  %s6 = scalar_select 0, %s5, %s3
  // Predicated region
  $region2: #{generator_forward.27} parent=0 // pred_check
    _
  $region3: #{generator_forward.27} parent=0 // pred_check_branch
    %8 = sbr.rel (0) target = $region5
  $region4: #{generator_forward.27} parent=0 // pred_region
    _
  $region5: #{generator_forward.27} parent=0 // pred_fallthru
    _
  // Predicated region
  $region6: #{generator_forward.27} parent=0 // pred_check
    _
  $region7: #{generator_forward.27} parent=0 // pred_check_branch
    %10 = sbr.rel (0) target = $region9
  $region8: #{generator_forward.27} parent=0 // pred_region
    _
  $region9: #{generator_forward.27} parent=0 // pred_fallthru
    _
  %p12 = scmp.eq.s32.totalorder 0, 0
  // Predicated region
  $region10: #{generator_forward.27} parent=0 // pred_check
    %p13 = pneg %p12
  $region11: #{generator_forward.27} parent=0 // pred_check_branch
    %15 = sbr.rel (%p13) target = $region13
  $region12: #{generator_forward.27} parent=0 // pred_region
    %16 = vst [vmem:[#allocation2] sm:$0xff] 0.0
    %17 = vst [vmem:[#allocation2 + $0x8] sm:$0xff] 0.0
    %18 = vst [vmem:[#allocation2 + $0x10] sm:$0xff] 0.0
    %19 = vst [vmem:[#allocation2 + $0x18] sm:$0xff] 0.0
    %20 = vst [vmem:[#allocation2 + $0x20] sm:$0xff] 0.0
    %21 = vst [vmem:[#allocation2 + $0x28] sm:$0xff] 0.0
    %22 = vst [vmem:[#allocation2 + $0x30] sm:$0xff] 0.0
    %23 = vst [vmem:[#allocation2 + $0x38] sm:$0xff] 0.0
    %24 = vst [vmem:[#allocation2 + $0x40] sm:$0xff] 0.0
    %25 = vst [vmem:[#allocation2 + $0x48] sm:$0xff] 0.0
    %26 = vst [vmem:[#allocation2 + $0x50] sm:$0xff] 0.0
    %27 = vst [vmem:[#allocation2 + $0x58] sm:$0xff] 0.0
    %28 = vst [vmem:[#allocation2 + $0x60] sm:$0xff] 0.0
    %29 = vst [vmem:[#allocation2 + $0x68] sm:$0xff] 0.0
    %30 = vst [vmem:[#allocation2 + $0x70] sm:$0xff] 0.0
    %31 = vst [vmem:[#allocation2 + $0x78] sm:$0xff] 0.0
  $region13: #{generator_forward.27} parent=0 // pred_fallthru
    _
  %v32 = vld [vmem:[#allocation2] sm:$0xff]
  %v33 = vld [vmem:[#allocation2 + $0x8] sm:$0xff]
  %v34 = vld [vmem:[#allocation2 + $0x10] sm:$0xff]
  %v35 = vld [vmem:[#allocation2 + $0x18] sm:$0xff]
  %v36 = vld [vmem:[#allocation2 + $0x20] sm:$0xff]
  %v37 = vld [vmem:[#allocation2 + $0x28] sm:$0xff]
  %v38 = vld [vmem:[#allocation2 + $0x30] sm:$0xff]
  %v39 = vld [vmem:[#allocation2 + $0x38] sm:$0xff]
  %v40 = vld [vmem:[#allocation2 + $0x40] sm:$0xff]
  %v41 = vld [vmem:[#allocation2 + $0x48] sm:$0xff]
  %v42 = vld [vmem:[#allocation2 + $0x50] sm:$0xff]
  %v43 = vld [vmem:[#allocation2 + $0x58] sm:$0xff]
  %v44 = vld [vmem:[#allocation2 + $0x60] sm:$0xff]
  %v45 = vld [vmem:[#allocation2 + $0x68] sm:$0xff]
  %v46 = vld [vmem:[#allocation2 + $0x70] sm:$0xff]
  %v47 = vld [vmem:[#allocation2 + $0x78] sm:$0xff]
  %v48 = vld [vmem:[%s0] sm:$0xff]
  %v49 = vld [vmem:[%s0 + $0x8] sm:$0xff]
  %v50 = vld [vmem:[%s0 + $0x10] sm:$0xff]
  %v51 = vld [vmem:[%s0 + $0x18] sm:$0xff]
  %v52 = vld [vmem:[%s0 + $0x20] sm:$0xff]
  %v53 = vld [vmem:[%s0 + $0x28] sm:$0xff]
  %v54 = vld [vmem:[%s0 + $0x30] sm:$0xff]
  %v55 = vld [vmem:[%s0 + $0x38] sm:$0xff]
  %v56 = vld [vmem:[%s0 + $0x40] sm:$0xff]
  %v57 = vld [vmem:[%s0 + $0x48] sm:$0xff]
  %v58 = vld [vmem:[%s0 + $0x50] sm:$0xff]
  %v59 = vld [vmem:[%s0 + $0x58] sm:$0xff]
  %v60 = vld [vmem:[%s0 + $0x60] sm:$0xff]
  %v61 = vld [vmem:[%s0 + $0x68] sm:$0xff]
  %v62 = vld [vmem:[%s0 + $0x70] sm:$0xff]
  %v63 = vld [vmem:[%s0 + $0x78] sm:$0xff]
  %v64 = vld [vmem:[%s0 + $0x80] sm:$0xff]
  %v65 = vld [vmem:[%s0 + $0x88] sm:$0xff]
  %v66 = vld [vmem:[%s0 + $0x90] sm:$0xff]
  %v67 = vld [vmem:[%s0 + $0x98] sm:$0xff]
  %v68 = vld [vmem:[%s0 + $0xa0] sm:$0xff]
  %v69 = vld [vmem:[%s0 + $0xa8] sm:$0xff]
  %v70 = vld [vmem:[%s0 + $0xb0] sm:$0xff]
  %v71 = vld [vmem:[%s0 + $0xb8] sm:$0xff]
  %v72 = vld [vmem:[%s0 + $0xc0] sm:$0xff]
  %v73 = vld [vmem:[%s0 + $0xc8] sm:$0xff]
  %v74 = vld [vmem:[%s0 + $0xd0] sm:$0xff]
  %v75 = vld [vmem:[%s0 + $0xd8] sm:$0xff]
  %v76 = vld [vmem:[%s0 + $0xe0] sm:$0xff]
  %v77 = vld [vmem:[%s0 + $0xe8] sm:$0xff]
  %v78 = vld [vmem:[%s0 + $0xf0] sm:$0xff]
  %v79 = vld [vmem:[%s0 + $0xf8] sm:$0xff]
  %v80 = vld [vmem:[%s1] sm:$0xf]
  %v81 = vld [vmem:[%s1 + $0x4] sm:$0xf]
  %v82 = vld [vmem:[%s1 + $0x8] sm:$0xf]
  %v83 = vld [vmem:[%s1 + $0xc] sm:$0xf]
  %v84 = vld [vmem:[%s1 + $0x10] sm:$0xf]
  %v85 = vld [vmem:[%s1 + $0x14] sm:$0xf]
  %v86 = vld [vmem:[%s1 + $0x18] sm:$0xf]
  %v87 = vld [vmem:[%s1 + $0x1c] sm:$0xf]
  %v88 = vld [vmem:[%s1 + $0x20] sm:$0xf]
  %v89 = vld [vmem:[%s1 + $0x24] sm:$0xf]
  %v90 = vld [vmem:[%s1 + $0x28] sm:$0xf]
  %v91 = vld [vmem:[%s1 + $0x2c] sm:$0xf]
  %v92 = vld [vmem:[%s1 + $0x30] sm:$0xf]
  %v93 = vld [vmem:[%s1 + $0x34] sm:$0xf]
  %v94 = vld [vmem:[%s1 + $0x38] sm:$0xf]
  %v95 = vld [vmem:[%s1 + $0x3c] sm:$0xf]
  %v96 = vld [vmem:[%s1 + $0x40] sm:$0xf]
  %v97 = vld [vmem:[%s1 + $0x44] sm:$0xf]
  %v98 = vld [vmem:[%s1 + $0x48] sm:$0xf]
  %v99 = vld [vmem:[%s1 + $0x4c] sm:$0xf]
  %v100 = vld [vmem:[%s1 + $0x50] sm:$0xf]
  %v101 = vld [vmem:[%s1 + $0x54] sm:$0xf]
  %v102 = vld [vmem:[%s1 + $0x58] sm:$0xf]
  %v103 = vld [vmem:[%s1 + $0x5c] sm:$0xf]
  %v104 = vld [vmem:[%s1 + $0x60] sm:$0xf]
  %v105 = vld [vmem:[%s1 + $0x64] sm:$0xf]
  %v106 = vld [vmem:[%s1 + $0x68] sm:$0xf]
  %v107 = vld [vmem:[%s1 + $0x6c] sm:$0xf]
  %v108 = vld [vmem:[%s1 + $0x70] sm:$0xf]
  %v109 = vld [vmem:[%s1 + $0x74] sm:$0xf]
  %v110 = vld [vmem:[%s1 + $0x78] sm:$0xf]
  %v111 = vld [vmem:[%s1 + $0x7c] sm:$0xf]
  %v112 = vld [vmem:[%s1 + $0x80] sm:$0xf]
  %v113 = vld [vmem:[%s1 + $0x84] sm:$0xf]
  %v114 = vld [vmem:[%s1 + $0x88] sm:$0xf]
  %v115 = vld [vmem:[%s1 + $0x8c] sm:$0xf]
  %v116 = vld [vmem:[%s1 + $0x90] sm:$0xf]
  %v117 = vld [vmem:[%s1 + $0x94] sm:$0xf]
  %v118 = vld [vmem:[%s1 + $0x98] sm:$0xf]
  %v119 = vld [vmem:[%s1 + $0x9c] sm:$0xf]
  %v120 = vld [vmem:[%s1 + $0xa0] sm:$0xf]
  %v121 = vld [vmem:[%s1 + $0xa4] sm:$0xf]
  %v122 = vld [vmem:[%s1 + $0xa8] sm:$0xf]
  %v123 = vld [vmem:[%s1 + $0xac] sm:$0xf]
  %v124 = vld [vmem:[%s1 + $0xb0] sm:$0xf]
  %v125 = vld [vmem:[%s1 + $0xb4] sm:$0xf]
  %v126 = vld [vmem:[%s1 + $0xb8] sm:$0xf]
  %v127 = vld [vmem:[%s1 + $0xbc] sm:$0xf]
  %v128 = vld [vmem:[%s1 + $0xc0] sm:$0xf]
  %v129 = vld [vmem:[%s1 + $0xc4] sm:$0xf]
  %v130 = vld [vmem:[%s1 + $0xc8] sm:$0xf]
  %v131 = vld [vmem:[%s1 + $0xcc] sm:$0xf]
  %v132 = vld [vmem:[%s1 + $0xd0] sm:$0xf]
  %v133 = vld [vmem:[%s1 + $0xd4] sm:$0xf]
  %v134 = vld [vmem:[%s1 + $0xd8] sm:$0xf]
  %v135 = vld [vmem:[%s1 + $0xdc] sm:$0xf]
  %v136 = vld [vmem:[%s1 + $0xe0] sm:$0xf]
  %v137 = vld [vmem:[%s1 + $0xe4] sm:$0xf]
  %v138 = vld [vmem:[%s1 + $0xe8] sm:$0xf]
  %v139 = vld [vmem:[%s1 + $0xec] sm:$0xf]
  %v140 = vld [vmem:[%s1 + $0xf0] sm:$0xf]
  %v141 = vld [vmem:[%s1 + $0xf4] sm:$0xf]
  %v142 = vld [vmem:[%s1 + $0xf8] sm:$0xf]
  %v143 = vld [vmem:[%s1 + $0xfc] sm:$0xf]
  %v176 = vunpack.c.l.b16 %v48
  %v177 = vunpack.c.h.b16 %v48
  %v178 = vunpack.c.l.b16 %v49
  %v179 = vunpack.c.h.b16 %v49
  %v180 = vunpack.c.l.b16 %v50
  %v181 = vunpack.c.h.b16 %v50
  %v182 = vunpack.c.l.b16 %v51
  %v183 = vunpack.c.h.b16 %v51
  %v184 = vunpack.c.l.b16 %v52
  %v185 = vunpack.c.h.b16 %v52
  %v186 = vunpack.c.l.b16 %v53
  %v187 = vunpack.c.h.b16 %v53
  %v188 = vunpack.c.l.b16 %v54
  %v189 = vunpack.c.h.b16 %v54
  %v190 = vunpack.c.l.b16 %v55
  %v191 = vunpack.c.h.b16 %v55
  %v192 = vunpack.c.l.b16 %v56
  %v193 = vunpack.c.h.b16 %v56
  %v194 = vunpack.c.l.b16 %v57
  %v195 = vunpack.c.h.b16 %v57
  %v196 = vunpack.c.l.b16 %v58
  %v197 = vunpack.c.h.b16 %v58
  %v198 = vunpack.c.l.b16 %v59
  %v199 = vunpack.c.h.b16 %v59
  %v200 = vunpack.c.l.b16 %v60
  %v201 = vunpack.c.h.b16 %v60
  %v202 = vunpack.c.l.b16 %v61
  %v203 = vunpack.c.h.b16 %v61
  %v204 = vunpack.c.l.b16 %v62
  %v205 = vunpack.c.h.b16 %v62
  %v206 = vunpack.c.l.b16 %v63
  %v207 = vunpack.c.h.b16 %v63
  %v208 = vunpack.c.l.b16 %v64
  %v209 = vunpack.c.h.b16 %v64
  %v210 = vunpack.c.l.b16 %v65
  %v211 = vunpack.c.h.b16 %v65
  %v212 = vunpack.c.l.b16 %v66
  %v213 = vunpack.c.h.b16 %v66
  %v214 = vunpack.c.l.b16 %v67
  %v215 = vunpack.c.h.b16 %v67
  %v216 = vunpack.c.l.b16 %v68
  %v217 = vunpack.c.h.b16 %v68
  %v218 = vunpack.c.l.b16 %v69
  %v219 = vunpack.c.h.b16 %v69
  %v220 = vunpack.c.l.b16 %v70
  %v221 = vunpack.c.h.b16 %v70
  %v222 = vunpack.c.l.b16 %v71
  %v223 = vunpack.c.h.b16 %v71
  %v224 = vunpack.c.l.b16 %v72
  %v225 = vunpack.c.h.b16 %v72
  %v226 = vunpack.c.l.b16 %v73
  %v227 = vunpack.c.h.b16 %v73
  %v228 = vunpack.c.l.b16 %v74
  %v229 = vunpack.c.h.b16 %v74
  %v230 = vunpack.c.l.b16 %v75
  %v231 = vunpack.c.h.b16 %v75
  %v232 = vunpack.c.l.b16 %v76
  %v233 = vunpack.c.h.b16 %v76
  %v234 = vunpack.c.l.b16 %v77
  %v235 = vunpack.c.h.b16 %v77
  %v236 = vunpack.c.l.b16 %v78
  %v237 = vunpack.c.h.b16 %v78
  %v238 = vunpack.c.l.b16 %v79
  %v239 = vunpack.c.h.b16 %v79
  %v240 = vpack.c.b16 %v180, %v176
  %v241 = vpack.c.b16 %v181, %v177
  %v242 = vpack.c.b16 %v182, %v178
  %v243 = vpack.c.b16 %v183, %v179
  %v244 = vpack.c.b16 %v188, %v184
  %v245 = vpack.c.b16 %v189, %v185
  %v246 = vpack.c.b16 %v190, %v186
  %v247 = vpack.c.b16 %v191, %v187
  %v248 = vpack.c.b16 %v196, %v192
  %v249 = vpack.c.b16 %v197, %v193
  %v250 = vpack.c.b16 %v198, %v194
  %v251 = vpack.c.b16 %v199, %v195
  %v252 = vpack.c.b16 %v204, %v200
  %v253 = vpack.c.b16 %v205, %v201
  %v254 = vpack.c.b16 %v206, %v202
  %v255 = vpack.c.b16 %v207, %v203
  %v256 = vpack.c.b16 %v212, %v208
  %v257 = vpack.c.b16 %v213, %v209
  %v258 = vpack.c.b16 %v214, %v210
  %v259 = vpack.c.b16 %v215, %v211
  %v260 = vpack.c.b16 %v220, %v216
  %v261 = vpack.c.b16 %v221, %v217
  %v262 = vpack.c.b16 %v222, %v218
  %v263 = vpack.c.b16 %v223, %v219
  %v264 = vpack.c.b16 %v228, %v224
  %v265 = vpack.c.b16 %v229, %v225
  %v266 = vpack.c.b16 %v230, %v226
  %v267 = vpack.c.b16 %v231, %v227
  %v268 = vpack.c.b16 %v236, %v232
  %v269 = vpack.c.b16 %v237, %v233
  %v270 = vpack.c.b16 %v238, %v234
  %v271 = vpack.c.b16 %v239, %v235
  %v368 = vunpack.c.l.b16 %v80
  %v369 = vunpack.c.l.b16 %v81
  %v370 = vunpack.c.l.b16 %v82
  %v371 = vunpack.c.l.b16 %v83
  %v372 = vunpack.c.l.b16 %v84
  %v373 = vunpack.c.l.b16 %v85
  %v374 = vunpack.c.l.b16 %v86
  %v375 = vunpack.c.l.b16 %v87
  %v376 = vunpack.c.l.b16 %v88
  %v377 = vunpack.c.l.b16 %v89
  %v378 = vunpack.c.l.b16 %v90
  %v379 = vunpack.c.l.b16 %v91
  %v380 = vunpack.c.l.b16 %v92
  %v381 = vunpack.c.l.b16 %v93
  %v382 = vunpack.c.l.b16 %v94
  %v383 = vunpack.c.l.b16 %v95
  %v384 = vunpack.c.l.b16 %v96
  %v385 = vunpack.c.l.b16 %v97
  %v386 = vunpack.c.l.b16 %v98
  %v387 = vunpack.c.l.b16 %v99
  %v388 = vunpack.c.l.b16 %v100
  %v389 = vunpack.c.l.b16 %v101
  %v390 = vunpack.c.l.b16 %v102
  %v391 = vunpack.c.l.b16 %v103
  %v392 = vunpack.c.l.b16 %v104
  %v393 = vunpack.c.l.b16 %v105
  %v394 = vunpack.c.l.b16 %v106
  %v395 = vunpack.c.l.b16 %v107
  %v396 = vunpack.c.l.b16 %v108
  %v397 = vunpack.c.l.b16 %v109
  %v398 = vunpack.c.l.b16 %v110
  %v399 = vunpack.c.l.b16 %v111
  %v400 = vunpack.c.l.b16 %v112
  %v401 = vunpack.c.l.b16 %v113
  %v402 = vunpack.c.l.b16 %v114
  %v403 = vunpack.c.l.b16 %v115
  %v404 = vunpack.c.l.b16 %v116
  %v405 = vunpack.c.l.b16 %v117
  %v406 = vunpack.c.l.b16 %v118
  %v407 = vunpack.c.l.b16 %v119
  %v408 = vunpack.c.l.b16 %v120
  %v409 = vunpack.c.l.b16 %v121
  %v410 = vunpack.c.l.b16 %v122
  %v411 = vunpack.c.l.b16 %v123
  %v412 = vunpack.c.l.b16 %v124
  %v413 = vunpack.c.l.b16 %v125
  %v414 = vunpack.c.l.b16 %v126
  %v415 = vunpack.c.l.b16 %v127
  %v416 = vunpack.c.l.b16 %v128
  %v417 = vunpack.c.l.b16 %v129
  %v418 = vunpack.c.l.b16 %v130
  %v419 = vunpack.c.l.b16 %v131
  %v420 = vunpack.c.l.b16 %v132
  %v421 = vunpack.c.l.b16 %v133
  %v422 = vunpack.c.l.b16 %v134
  %v423 = vunpack.c.l.b16 %v135
  %v424 = vunpack.c.l.b16 %v136
  %v425 = vunpack.c.l.b16 %v137
  %v426 = vunpack.c.l.b16 %v138
  %v427 = vunpack.c.l.b16 %v139
  %v428 = vunpack.c.l.b16 %v140
  %v429 = vunpack.c.l.b16 %v141
  %v430 = vunpack.c.l.b16 %v142
  %v431 = vunpack.c.l.b16 %v143
  %v432 = vpack.c.b16 %v369, %v368
  %v433 = vpack.c.b16 %v371, %v370
  %v434 = vpack.c.b16 %v373, %v372
  %v435 = vpack.c.b16 %v375, %v374
  %v436 = vpack.c.b16 %v377, %v376
  %v437 = vpack.c.b16 %v379, %v378
  %v438 = vpack.c.b16 %v381, %v380
  %v439 = vpack.c.b16 %v383, %v382
  %v440 = vpack.c.b16 %v385, %v384
  %v441 = vpack.c.b16 %v387, %v386
  %v442 = vpack.c.b16 %v389, %v388
  %v443 = vpack.c.b16 %v391, %v390
  %v444 = vpack.c.b16 %v393, %v392
  %v445 = vpack.c.b16 %v395, %v394
  %v446 = vpack.c.b16 %v397, %v396
  %v447 = vpack.c.b16 %v399, %v398
  %v448 = vpack.c.b16 %v401, %v400
  %v449 = vpack.c.b16 %v403, %v402
  %v450 = vpack.c.b16 %v405, %v404
  %v451 = vpack.c.b16 %v407, %v406
  %v452 = vpack.c.b16 %v409, %v408
  %v453 = vpack.c.b16 %v411, %v410
  %v454 = vpack.c.b16 %v413, %v412
  %v455 = vpack.c.b16 %v415, %v414
  %v456 = vpack.c.b16 %v417, %v416
  %v457 = vpack.c.b16 %v419, %v418
  %v458 = vpack.c.b16 %v421, %v420
  %v459 = vpack.c.b16 %v423, %v422
  %v460 = vpack.c.b16 %v425, %v424
  %v461 = vpack.c.b16 %v427, %v426
  %v462 = vpack.c.b16 %v429, %v428
  %v463 = vpack.c.b16 %v431, %v430
  %496 = vmatprep.subr.bf16.mxu0 0
  %497 = vmatpush1.bf16.msra.mxu0 %v432
  %498 = vmatprep.subr.bf16.mxu0 0
  %499 = vmatpush1.bf16.msra.mxu0 %v433
  %500 = vmatprep.subr.bf16.mxu0 0
  %501 = vmatpush1.bf16.msra.mxu0 %v434
  %502 = vmatprep.subr.bf16.mxu0 0
  %503 = vmatpush1.bf16.msra.mxu0 %v435
  %504 = vmatprep.subr.bf16.mxu0 0
  %505 = vmatpush1.bf16.msra.mxu0 %v436
  %506 = vmatprep.subr.bf16.mxu0 0
  %507 = vmatpush1.bf16.msra.mxu0 %v437
  %508 = vmatprep.subr.bf16.mxu0 0
  %509 = vmatpush1.bf16.msra.mxu0 %v438
  %510 = vmatprep.subr.bf16.mxu0 0
  %511 = vmatpush1.bf16.msra.mxu0 %v439
  %512 = vmatprep.subr.bf16.mxu0 0
  %513 = vmatpush1.bf16.msra.mxu0 %v440
  %514 = vmatprep.subr.bf16.mxu0 0
  %515 = vmatpush1.bf16.msra.mxu0 %v441
  %516 = vmatprep.subr.bf16.mxu0 0
  %517 = vmatpush1.bf16.msra.mxu0 %v442
  %518 = vmatprep.subr.bf16.mxu0 0
  %519 = vmatpush1.bf16.msra.mxu0 %v443
  %520 = vmatprep.subr.bf16.mxu0 0
  %521 = vmatpush1.bf16.msra.mxu0 %v444
  %522 = vmatprep.subr.bf16.mxu0 0
  %523 = vmatpush1.bf16.msra.mxu0 %v445
  %524 = vmatprep.subr.bf16.mxu0 0
  %525 = vmatpush1.bf16.msra.mxu0 %v446
  %526 = vmatprep.subr.bf16.mxu0 0
  %527 = vmatpush1.bf16.msra.mxu0 %v447
  %528 = vmatprep.mubr.bf16.mxu0 %v241
  %529 = vmatmul.mubr.bf16.gmra.mrb[0].mxu0 %v240
  %v530 = vpop.f32.mrb[0].mxu0
  %v531 = vadd.f32 0.0, %v530
  %v532 = vpop.f32.mrb[0].mxu0
  %v533 = vpop.f32.mrb[0].mxu0
  %v534 = vadd.f32 0.0, %v533
  %v535 = vpop.f32.mrb[0].mxu0
  %536 = vmatprep.mubr.bf16.mxu0 %v245
  %537 = vmatmul.mubr.bf16.gmra.mrb[0].mxu0 %v244
  %v538 = vpop.f32.mrb[0].mxu0
  %v539 = vadd.f32 0.0, %v538
  %v540 = vpop.f32.mrb[0].mxu0
  %v541 = vpop.f32.mrb[0].mxu0
  %v542 = vadd.f32 0.0, %v541
  %v543 = vpop.f32.mrb[0].mxu0
  %544 = vmatprep.mubr.bf16.mxu0 %v249
  %545 = vmatmul.mubr.bf16.gmra.mrb[0].mxu0 %v248
  %v546 = vpop.f32.mrb[0].mxu0
  %v547 = vadd.f32 0.0, %v546
  %v548 = vpop.f32.mrb[0].mxu0
  %v549 = vpop.f32.mrb[0].mxu0
  %v550 = vadd.f32 0.0, %v549
  %v551 = vpop.f32.mrb[0].mxu0
  %552 = vmatprep.mubr.bf16.mxu0 %v253
  %553 = vmatmul.mubr.bf16.gmra.mrb[0].mxu0 %v252
  %v554 = vpop.f32.mrb[0].mxu0
  %v555 = vadd.f32 0.0, %v554
  %v556 = vpop.f32.mrb[0].mxu0
  %v557 = vpop.f32.mrb[0].mxu0
  %v558 = vadd.f32 0.0, %v557
  %v559 = vpop.f32.mrb[0].mxu0
  %560 = vmatprep.mubr.bf16.mxu0 %v257
  %561 = vmatmul.mubr.bf16.gmra.mrb[0].mxu0 %v256
  %v562 = vpop.f32.mrb[0].mxu0
  %v563 = vadd.f32 0.0, %v562
  %v564 = vpop.f32.mrb[0].mxu0
  %v565 = vpop.f32.mrb[0].mxu0
  %v566 = vadd.f32 0.0, %v565
  %v567 = vpop.f32.mrb[0].mxu0
  %568 = vmatprep.mubr.bf16.mxu0 %v261
  %569 = vmatmul.mubr.bf16.gmra.mrb[0].mxu0 %v260
  %v570 = vpop.f32.mrb[0].mxu0
  %v571 = vadd.f32 0.0, %v570
  %v572 = vpop.f32.mrb[0].mxu0
  %v573 = vpop.f32.mrb[0].mxu0
  %v574 = vadd.f32 0.0, %v573
  %v575 = vpop.f32.mrb[0].mxu0
  %576 = vmatprep.mubr.bf16.mxu0 %v265
  %577 = vmatmul.mubr.bf16.gmra.mrb[0].mxu0 %v264
  %v578 = vpop.f32.mrb[0].mxu0
  %v579 = vadd.f32 0.0, %v578
  %v580 = vpop.f32.mrb[0].mxu0
  %v581 = vpop.f32.mrb[0].mxu0
  %v582 = vadd.f32 0.0, %v581
  %v583 = vpop.f32.mrb[0].mxu0
  %584 = vmatprep.mubr.bf16.mxu0 %v269
  %585 = vmatmul.mubr.bf16.gmra.mrb[0].mxu0 %v268
  %v586 = vpop.f32.mrb[0].mxu0
  %v587 = vadd.f32 0.0, %v586
  %v588 = vpop.f32.mrb[0].mxu0
  %v589 = vpop.f32.mrb[0].mxu0
  %v590 = vadd.f32 0.0, %v589
  %v591 = vpop.f32.mrb[0].mxu0
  %592 = vdwg.mxu0
  %593 = vmatprep.subr.bf16.mxu0 0
  %594 = vmatpush1.bf16.msra.mxu0 %v448
  %595 = vmatprep.subr.bf16.mxu0 0
  %596 = vmatpush1.bf16.msra.mxu0 %v449
  %597 = vmatprep.subr.bf16.mxu0 0
  %598 = vmatpush1.bf16.msra.mxu0 %v450
  %599 = vmatprep.subr.bf16.mxu0 0
  %600 = vmatpush1.bf16.msra.mxu0 %v451
  %601 = vmatprep.subr.bf16.mxu0 0
  %602 = vmatpush1.bf16.msra.mxu0 %v452
  %603 = vmatprep.subr.bf16.mxu0 0
  %604 = vmatpush1.bf16.msra.mxu0 %v453
  %605 = vmatprep.subr.bf16.mxu0 0
  %606 = vmatpush1.bf16.msra.mxu0 %v454
  %607 = vmatprep.subr.bf16.mxu0 0
  %608 = vmatpush1.bf16.msra.mxu0 %v455
  %609 = vmatprep.subr.bf16.mxu0 0
  %610 = vmatpush1.bf16.msra.mxu0 %v456
  %611 = vmatprep.subr.bf16.mxu0 0
  %612 = vmatpush1.bf16.msra.mxu0 %v457
  %613 = vmatprep.subr.bf16.mxu0 0
  %614 = vmatpush1.bf16.msra.mxu0 %v458
  %615 = vmatprep.subr.bf16.mxu0 0
  %616 = vmatpush1.bf16.msra.mxu0 %v459
  %617 = vmatprep.subr.bf16.mxu0 0
  %618 = vmatpush1.bf16.msra.mxu0 %v460
  %619 = vmatprep.subr.bf16.mxu0 0
  %620 = vmatpush1.bf16.msra.mxu0 %v461
  %621 = vmatprep.subr.bf16.mxu0 0
  %622 = vmatpush1.bf16.msra.mxu0 %v462
  %623 = vmatprep.subr.bf16.mxu0 0
  %624 = vmatpush1.bf16.msra.mxu0 %v463
  %625 = vmatprep.mubr.bf16.mxu0 %v243
  %626 = vmatmul.mubr.bf16.gmra.mrb[0].mxu0 %v242
  %v627 = vpop.f32.mrb[0].mxu0
  %v628 = vadd.f32 %v531, %v627
  %v629 = vpop.f32.mrb[0].mxu0
  %v630 = vpop.f32.mrb[0].mxu0
  %v631 = vadd.f32 %v534, %v630
  %v632 = vpop.f32.mrb[0].mxu0
  %633 = vmatprep.mubr.bf16.mxu0 %v247
  %634 = vmatmul.mubr.bf16.gmra.mrb[0].mxu0 %v246
  %v635 = vpop.f32.mrb[0].mxu0
  %v636 = vadd.f32 %v539, %v635
  %v637 = vpop.f32.mrb[0].mxu0
  %v638 = vpop.f32.mrb[0].mxu0
  %v639 = vadd.f32 %v542, %v638
  %v640 = vpop.f32.mrb[0].mxu0
  %641 = vmatprep.mubr.bf16.mxu0 %v251
  %642 = vmatmul.mubr.bf16.gmra.mrb[0].mxu0 %v250
  %v643 = vpop.f32.mrb[0].mxu0
  %v644 = vadd.f32 %v547, %v643
  %v645 = vpop.f32.mrb[0].mxu0
  %v646 = vpop.f32.mrb[0].mxu0
  %v647 = vadd.f32 %v550, %v646
  %v648 = vpop.f32.mrb[0].mxu0
  %649 = vmatprep.mubr.bf16.mxu0 %v255
  %650 = vmatmul.mubr.bf16.gmra.mrb[0].mxu0 %v254
  %v651 = vpop.f32.mrb[0].mxu0
  %v652 = vadd.f32 %v555, %v651
  %v653 = vpop.f32.mrb[0].mxu0
  %v654 = vpop.f32.mrb[0].mxu0
  %v655 = vadd.f32 %v558, %v654
  %v656 = vpop.f32.mrb[0].mxu0
  %657 = vmatprep.mubr.bf16.mxu0 %v259
  %658 = vmatmul.mubr.bf16.gmra.mrb[0].mxu0 %v258
  %v659 = vpop.f32.mrb[0].mxu0
  %v660 = vadd.f32 %v563, %v659
  %v661 = vpop.f32.mrb[0].mxu0
  %v662 = vpop.f32.mrb[0].mxu0
  %v663 = vadd.f32 %v566, %v662
  %v664 = vpop.f32.mrb[0].mxu0
  %665 = vmatprep.mubr.bf16.mxu0 %v263
  %666 = vmatmul.mubr.bf16.gmra.mrb[0].mxu0 %v262
  %v667 = vpop.f32.mrb[0].mxu0
  %v668 = vadd.f32 %v571, %v667
  %v669 = vpop.f32.mrb[0].mxu0
  %v670 = vpop.f32.mrb[0].mxu0
  %v671 = vadd.f32 %v574, %v670
  %v672 = vpop.f32.mrb[0].mxu0
  %673 = vmatprep.mubr.bf16.mxu0 %v267
  %674 = vmatmul.mubr.bf16.gmra.mrb[0].mxu0 %v266
  %v675 = vpop.f32.mrb[0].mxu0
  %v676 = vadd.f32 %v579, %v675
  %v677 = vpop.f32.mrb[0].mxu0
  %v678 = vpop.f32.mrb[0].mxu0
  %v679 = vadd.f32 %v582, %v678
  %v680 = vpop.f32.mrb[0].mxu0
  %681 = vmatprep.mubr.bf16.mxu0 %v271
  %682 = vmatmul.mubr.bf16.gmra.mrb[0].mxu0 %v270
  %v683 = vpop.f32.mrb[0].mxu0
  %v684 = vadd.f32 %v587, %v683
  %v685 = vpop.f32.mrb[0].mxu0
  %v686 = vpop.f32.mrb[0].mxu0
  %v687 = vadd.f32 %v590, %v686
  %v688 = vpop.f32.mrb[0].mxu0
  %689 = vdwg.mxu0
  %v690 = vadd.f32 %v32, %v628
  %v691 = vadd.f32 %v33, %v631
  %v692 = vadd.f32 %v34, %v636
  %v693 = vadd.f32 %v35, %v639
  %v694 = vadd.f32 %v36, %v644
  %v695 = vadd.f32 %v37, %v647
  %v696 = vadd.f32 %v38, %v652
  %v697 = vadd.f32 %v39, %v655
  %v698 = vadd.f32 %v40, %v660
  %v699 = vadd.f32 %v41, %v663
  %v700 = vadd.f32 %v42, %v668
  %v701 = vadd.f32 %v43, %v671
  %v702 = vadd.f32 %v44, %v676
  %v703 = vadd.f32 %v45, %v679
  %v704 = vadd.f32 %v46, %v684
  %v705 = vadd.f32 %v47, %v687
  %706 = vst [vmem:[#allocation2] sm:$0xff] %v690
  %707 = vst [vmem:[#allocation2 + $0x8] sm:$0xff] %v691
  %708 = vst [vmem:[#allocation2 + $0x10] sm:$0xff] %v692
  %709 = vst [vmem:[#allocation2 + $0x18] sm:$0xff] %v693
  %710 = vst [vmem:[#allocation2 + $0x20] sm:$0xff] %v694
  %711 = vst [vmem:[#allocation2 + $0x28] sm:$0xff] %v695
  %712 = vst [vmem:[#allocation2 + $0x30] sm:$0xff] %v696
  %713 = vst [vmem:[#allocation2 + $0x38] sm:$0xff] %v697
  %714 = vst [vmem:[#allocation2 + $0x40] sm:$0xff] %v698
  %715 = vst [vmem:[#allocation2 + $0x48] sm:$0xff] %v699
  %716 = vst [vmem:[#allocation2 + $0x50] sm:$0xff] %v700
  %717 = vst [vmem:[#allocation2 + $0x58] sm:$0xff] %v701
  %718 = vst [vmem:[#allocation2 + $0x60] sm:$0xff] %v702
  %719 = vst [vmem:[#allocation2 + $0x68] sm:$0xff] %v703
  %720 = vst [vmem:[#allocation2 + $0x70] sm:$0xff] %v704
  %721 = vst [vmem:[#allocation2 + $0x78] sm:$0xff] %v705
  // Predicated region
  $region14: #{generator_forward.27} parent=0 // pred_check
    %p722 = pneg %p12
  $region15: #{generator_forward.27} parent=0 // pred_check_branch
    %724 = sbr.rel (%p722) target = $region17
  $region16: #{generator_forward.27} parent=0 // pred_region
    %v725 = vld [vmem:[#allocation2] sm:$0xff]
    %v726 = vld [vmem:[#allocation2 + $0x8] sm:$0xff]
    %v727 = vld [vmem:[#allocation2 + $0x10] sm:$0xff]
    %v728 = vld [vmem:[#allocation2 + $0x18] sm:$0xff]
    %v729 = vld [vmem:[#allocation2 + $0x20] sm:$0xff]
    %v730 = vld [vmem:[#allocation2 + $0x28] sm:$0xff]
    %v731 = vld [vmem:[#allocation2 + $0x30] sm:$0xff]
    %v732 = vld [vmem:[#allocation2 + $0x38] sm:$0xff]
    %v733 = vld [vmem:[#allocation2 + $0x40] sm:$0xff]
    %v734 = vld [vmem:[#allocation2 + $0x48] sm:$0xff]
    %v735 = vld [vmem:[#allocation2 + $0x50] sm:$0xff]
    %v736 = vld [vmem:[#allocation2 + $0x58] sm:$0xff]
    %v737 = vld [vmem:[#allocation2 + $0x60] sm:$0xff]
    %v738 = vld [vmem:[#allocation2 + $0x68] sm:$0xff]
    %v739 = vld [vmem:[#allocation2 + $0x70] sm:$0xff]
    %v740 = vld [vmem:[#allocation2 + $0x78] sm:$0xff]
    %741 = vst [vmem:[%s2] sm:$0xff] %v725
    %742 = vst [vmem:[%s2 + $0x8] sm:$0xff] %v726
    %743 = vst [vmem:[%s2 + $0x10] sm:$0xff] %v727
    %744 = vst [vmem:[%s2 + $0x18] sm:$0xff] %v728
    %745 = vst [vmem:[%s2 + $0x20] sm:$0xff] %v729
    %746 = vst [vmem:[%s2 + $0x28] sm:$0xff] %v730
    %747 = vst [vmem:[%s2 + $0x30] sm:$0xff] %v731
    %748 = vst [vmem:[%s2 + $0x38] sm:$0xff] %v732
    %749 = vst [vmem:[%s2 + $0x40] sm:$0xff] %v733
    %750 = vst [vmem:[%s2 + $0x48] sm:$0xff] %v734
    %751 = vst [vmem:[%s2 + $0x50] sm:$0xff] %v735
    %752 = vst [vmem:[%s2 + $0x58] sm:$0xff] %v736
    %753 = vst [vmem:[%s2 + $0x60] sm:$0xff] %v737
    %754 = vst [vmem:[%s2 + $0x68] sm:$0xff] %v738
    %755 = vst [vmem:[%s2 + $0x70] sm:$0xff] %v739
    %756 = vst [vmem:[%s2 + $0x78] sm:$0xff] %v740
  $region17: #{generator_forward.27} parent=0 // pred_fallthru
    _
  // Predicated region
  $region18: #{generator_forward.27} parent=0 // pred_check
    _
  $region19: #{generator_forward.27} parent=0 // pred_check_branch
    %758 = sbr.rel (0) target = $region21
  $region20: #{generator_forward.27} parent=0 // pred_region
    _
  $region21: #{generator_forward.27} parent=0 // pred_fallthru
    _
  // Predicated region
  $region22: #{generator_forward.27} parent=0 // pred_check
    _
  $region23: #{generator_forward.27} parent=0 // pred_check_branch
    %760 = sbr.rel (0) target = $region25
  $region24: #{generator_forward.27} parent=0 // pred_region
    _
  $region25: #{generator_forward.27} parent=0 // pred_fallthru
    _

// kernel: generator_forward.28
$region0: #{generator_forward.28}
  #allocation0 [shape = 'u32[]', space=smem, size = 0x4, offset = 0x4, fixed_abs, tag = 'smem constant byte address 0x4 - core index']
  #allocation1 [shape = 'u32[144,128]{1,0:T(1,128)}', space=vmem, size = 0x12000, scoped, tag = 'internal scratch']
  %s0 = inlined_call_operand.vmem [shape: f32[2,64,64], index: 0, kind: input, shape index: {}]
  %s1 = inlined_call_operand.vmem [shape: f32[1,64], index: 1, kind: input, shape index: {}]
  %s2 = inlined_call_operand.vmem [shape: f32[1,64], index: 2, kind: input, shape index: {}]
  %s3 = inlined_call_operand.vmem [shape: f32[2,64,64], index: 3, kind: output, shape index: {}]
  %s4 = sld [smem:[#allocation0]]
  $region45: #{generator_forward.28} parent=0
    _
  %s6 = ssub.s32 1, %s4
  %s7 = scalar_select 0, %s6, %s4
  loop: start=0, step=1, limit=4
  $region2: #{generator_forward.28} parent=0 // loop_pre_header
    _
  $region3: #{generator_forward.28} parent=0 // loop_header
    %s9 = sphi 0, %s13
    %p10 = scmp.ge.s32.totalorder %s9, 4
    %s16 = sphi 0, %s28
    %s17 = sphi 0, %s24
    %s18 = sphi 0, %s16
    %s19 = sphi 0, %s17
    %s20 = sphi 0, %s18
    %s21 = sphi 0, %s19
    %s33 = sphi 0, %s35
    %s36 = sphi 0, %s33
    %s37 = sphi 0, %s36
    %s53 = sphi 0, %s37
    %s59 = sphi 0, %s61
    %s62 = sphi 0, %s59
    %s63 = sphi 0, %s62
    %s79 = sphi 0, %s63
    %s85 = sphi 0, %s87
    %s88 = sphi 0, %s85
    %s89 = sphi 0, %s88
    %s105 = sphi 0, %s89
    %s113 = sphi 0, %s115
    %s116 = sphi 0, %s113
    %s117 = sphi 0, %s116
    %s133 = sphi 0, %s117
  $region4: #{generator_forward.28} parent=0 // loop_header_branch
    %12 = sbr.rel (%p10) target = $region8
  $region5: #{generator_forward.28} parent=0 // loop_body
    %s14 = ssub.s32 %s9, 1
    %s15 = ssub.s32 %s9, 2
    %s22 = sadd.s32 1, %s17
    %p23 = scmp.ge.s32.totalorder %s22, 1
    %s24 = scalar_select %p23, 0, %s22
    %s25 = sadd.s32 1, %s16
    %s26 = scalar_select %p23, %s25, %s16
    %p27 = scmp.ge.s32.totalorder %s26, 2
    %s28 = scalar_select %p27, 0, %s26
    %s29 = ssub.s32 %s16, %s28
    %s30 = ssub.s32 %s17, %s24
    %s31 = sor.u32 %s29, %s30
    %p32 = scmp.eq.s32.totalorder %s31, 0
    %s34 = sadd.s32 %s33, 1
    %s35 = scalar_select %p32, %s33, %s34
    %p38 = pneg %p32
    %p39 = scmp.eq.s32.totalorder %s9, 1
    %p40 = por %p38, %p39
    %p41 = scmp.ne.s32.totalorder %s33, %s36
    %p42 = scmp.eq.s32.totalorder %s9, 0
    %p43 = por %p41, %p42
    %p44 = scmp.ne.s32.totalorder %s33, %s36
    %p45 = scmp.eq.s32.totalorder %s14, 1
    %p46 = por %p44, %p45
    %p47 = scmp.ne.s32.totalorder %s36, %s37
    %p48 = scmp.eq.s32.totalorder %s14, 0
    %p49 = por %p47, %p48
    %p50 = scmp.ne.s32.totalorder %s36, %s37
    %p51 = scmp.eq.s32.totalorder %s15, 1
    %p52 = por %p50, %p51
    %p54 = scmp.ne.s32.totalorder %s37, %s53
    %p55 = scmp.eq.s32.totalorder %s15, 0
    %p56 = por %p54, %p55
    %s57 = ssub.s32 %s17, %s24
    %p58 = scmp.eq.s32.totalorder %s57, 0
    %s60 = sadd.s32 %s59, 1
    %s61 = scalar_select %p58, %s59, %s60
    %p64 = pneg %p58
    %p65 = scmp.eq.s32.totalorder %s9, 1
    %p66 = por %p64, %p65
    %p67 = scmp.ne.s32.totalorder %s59, %s62
    %p68 = scmp.eq.s32.totalorder %s9, 0
    %p69 = por %p67, %p68
    %p70 = scmp.ne.s32.totalorder %s59, %s62
    %p71 = scmp.eq.s32.totalorder %s14, 1
    %p72 = por %p70, %p71
    %p73 = scmp.ne.s32.totalorder %s62, %s63
    %p74 = scmp.eq.s32.totalorder %s14, 0
    %p75 = por %p73, %p74
    %p76 = scmp.ne.s32.totalorder %s62, %s63
    %p77 = scmp.eq.s32.totalorder %s15, 1
    %p78 = por %p76, %p77
    %p80 = scmp.ne.s32.totalorder %s63, %s79
    %p81 = scmp.eq.s32.totalorder %s15, 0
    %p82 = por %p80, %p81
    %s83 = ssub.s32 %s17, %s24
    %p84 = scmp.eq.s32.totalorder %s83, 0
    %s86 = sadd.s32 %s85, 1
    %s87 = scalar_select %p84, %s85, %s86
    %p90 = pneg %p84
    %p91 = scmp.eq.s32.totalorder %s9, 1
    %p92 = por %p90, %p91
    %p93 = scmp.ne.s32.totalorder %s85, %s88
    %p94 = scmp.eq.s32.totalorder %s9, 0
    %p95 = por %p93, %p94
    %p96 = scmp.ne.s32.totalorder %s85, %s88
    %p97 = scmp.eq.s32.totalorder %s14, 1
    %p98 = por %p96, %p97
    %p99 = scmp.ne.s32.totalorder %s88, %s89
    %p100 = scmp.eq.s32.totalorder %s14, 0
    %p101 = por %p99, %p100
    %p102 = scmp.ne.s32.totalorder %s88, %s89
    %p103 = scmp.eq.s32.totalorder %s15, 1
    %p104 = por %p102, %p103
    %p106 = scmp.ne.s32.totalorder %s89, %s105
    %p107 = scmp.eq.s32.totalorder %s15, 0
    %p108 = por %p106, %p107
    %s109 = ssub.s32 %s16, %s28
    %s110 = ssub.s32 %s17, %s24
    %s111 = sor.u32 %s109, %s110
    %p112 = scmp.eq.s32.totalorder %s111, 0
    %s114 = sadd.s32 %s113, 1
    %s115 = scalar_select %p112, %s113, %s114
    %p118 = pneg %p112
    %p119 = scmp.eq.s32.totalorder %s9, 1
    %p120 = por %p118, %p119
    %p121 = scmp.ne.s32.totalorder %s113, %s116
    %p122 = scmp.eq.s32.totalorder %s9, 0
    %p123 = por %p121, %p122
    %p124 = scmp.ne.s32.totalorder %s113, %s116
    %p125 = scmp.eq.s32.totalorder %s14, 1
    %p126 = por %p124, %p125
    %p127 = scmp.ne.s32.totalorder %s116, %s117
    %p128 = scmp.eq.s32.totalorder %s14, 0
    %p129 = por %p127, %p128
    %p130 = scmp.ne.s32.totalorder %s116, %s117
    %p131 = scmp.eq.s32.totalorder %s15, 1
    %p132 = por %p130, %p131
    %p134 = scmp.ne.s32.totalorder %s117, %s133
    %p135 = scmp.eq.s32.totalorder %s15, 0
    %p136 = por %p134, %p135
    %p137 = scmp.le.s32.totalorder 1, %s9
    %p138 = scmp.lt.s32.totalorder %s9, 3
    %p139 = pnand %p137, %p138
    %p140 = pneg %p139
    // Predicated region
    $region9: #{generator_forward.28} parent=5 // pred_check
      _
    $region10: #{generator_forward.28} parent=5 // pred_check_branch
      %142 = sbr.rel (%p139) target = $region12
    $region11: #{generator_forward.28} parent=5 // pred_region
      %s143 = ssub.s32 %s9, 1
      // Predicated region
      $region13: #{generator_forward.28} parent=11 // pred_check
        %p144 = pneg %p75
      $region14: #{generator_forward.28} parent=11 // pred_check_branch
        %146 = sbr.rel (%p144) target = $region16
      $region15: #{generator_forward.28} parent=11 // pred_region
        %p147 = scmp.lt.s32.totalorder %s19, 0
        %s148 = scalar_select %p147, %s19, 0
        %s149 = scalar_lea.vmem %s1, %s148
      $region16: #{generator_forward.28} parent=11 // pred_fallthru
        _
      // Predicated region
      $region17: #{generator_forward.28} parent=11 // pred_check
        %p150 = pneg %p101
      $region18: #{generator_forward.28} parent=11 // pred_check_branch
        %152 = sbr.rel (%p150) target = $region20
      $region19: #{generator_forward.28} parent=11 // pred_region
        %p153 = scmp.lt.s32.totalorder %s19, 0
        %s154 = scalar_select %p153, %s19, 0
        %s155 = scalar_lea.vmem %s2, %s154
      $region20: #{generator_forward.28} parent=11 // pred_fallthru
        _
    $region12: #{generator_forward.28} parent=5 // pred_fallthru
      _
    %p156 = scmp.lt.s32.totalorder %s9, 2
    // Predicated region
    $region21: #{generator_forward.28} parent=5 // pred_check
      %p157 = pneg %p156
    $region22: #{generator_forward.28} parent=5 // pred_check_branch
      %159 = sbr.rel (%p157) target = $region24
    $region23: #{generator_forward.28} parent=5 // pred_region
      // Predicated region
      $region25: #{generator_forward.28} parent=23 // pred_check
        %p160 = pneg %p43
      $region26: #{generator_forward.28} parent=23 // pred_check_branch
        %162 = sbr.rel (%p160) target = $region28
      $region27: #{generator_forward.28} parent=23 // pred_region
        %p163 = scmp.lt.s32.totalorder %s16, 1
        %s164 = scalar_select %p163, %s16, 1
        %p165 = scmp.lt.s32.totalorder %s17, 0
        %s166 = scalar_select %p165, %s17, 0
        %s167 = smul.addr %s164, 8
        %s168 = sadd.s32 %s166, %s167
        %s169 = smul.addr %s168, 8
        %s170 = scalar_lea.vmem %s0, %s169
      $region28: #{generator_forward.28} parent=23 // pred_fallthru
        _
    $region24: #{generator_forward.28} parent=5 // pred_fallthru
      _
    %p171 = scmp.le.s32.totalorder 1, %s9
    %p172 = scmp.lt.s32.totalorder %s9, 3
    %p173 = pnand %p171, %p172
    %p174 = pneg %p173
    // Predicated region
    $region29: #{generator_forward.28} parent=5 // pred_check
      _
    $region30: #{generator_forward.28} parent=5 // pred_check_branch
      %176 = sbr.rel (%p173) target = $region32
    $region31: #{generator_forward.28} parent=5 // pred_region
      %s177 = ssub.s32 %s9, 1
      %p178 = scmp.lt.s32.totalorder %s18, 1
      %s179 = scalar_select %p178, %s18, 1
      %p180 = scmp.lt.s32.totalorder %s19, 0
      %s181 = scalar_select %p180, %s19, 0
      %s182 = smul.addr %s179, 8
      %s183 = sadd.s32 %s181, %s182
      %s184 = smul.addr %s183, 8
      %s185 = scalar_lea.vmem %s0, %s184
      %p186 = pneg %p49
      %p187 = pneg %p46
      %p188 = scmp.lt.s32.totalorder %s19, 0
      %s189 = scalar_select %p188, %s19, 0
      %s190 = scalar_lea.vmem %s1, %s189
      %p191 = pneg %p75
      %p192 = pneg %p72
      %p193 = scmp.lt.s32.totalorder %s19, 0
      %s194 = scalar_select %p193, %s19, 0
      %s195 = scalar_lea.vmem %s2, %s194
      %p196 = pneg %p101
      %p197 = pneg %p98
      %p198 = pneg %p129
      %p199 = pneg %p126
      %p200 = scmp.lt.s32.totalorder %s18, 1
      %s201 = scalar_select %p200, %s18, 1
      %p202 = scmp.lt.s32.totalorder %s19, 0
      %s203 = scalar_select %p202, %s19, 0
      %s204 = smul.addr %s201, 8
      %s205 = sadd.s32 %s203, %s204
      %s206 = smul.addr %s205, 8
      %s207 = scalar_lea.vmem %s3, %s206
      %p208 = scmp.lt.s32.totalorder %s18, 1
      %s209 = scalar_select %p208, %s18, 1
      %p210 = scmp.lt.s32.totalorder %s19, 0
      %s211 = scalar_select %p210, %s19, 0
      %s212 = smul.addr %s209, 8
      %s213 = sadd.s32 %s211, %s212
      %s214 = smul.addr %s213, 8
      %s215 = scalar_lea.vmem %s0, %s214
      %p216 = scmp.lt.s32.totalorder %s19, 0
      %s217 = scalar_select %p216, %s19, 0
      %s218 = scalar_lea.vmem %s1, %s217
      %p219 = scmp.lt.s32.totalorder %s19, 0
      %s220 = scalar_select %p219, %s19, 0
      %s221 = scalar_lea.vmem %s2, %s220
      %p222 = scmp.lt.s32.totalorder %s18, 1
      %s223 = scalar_select %p222, %s18, 1
      %p224 = scmp.lt.s32.totalorder %s19, 0
      %s225 = scalar_select %p224, %s19, 0
      %s226 = smul.addr %s223, 8
      %s227 = sadd.s32 %s225, %s226
      %s228 = smul.addr %s227, 8
      %s229 = scalar_lea.vmem %s3, %s228
      %v230 = vld [vmem:[%s215] sm:$0xff]
      %v231 = vld [vmem:[%s215 + $0x8] sm:$0xff]
      %v232 = vld [vmem:[%s215 + $0x10] sm:$0xff]
      %v233 = vld [vmem:[%s215 + $0x18] sm:$0xff]
      %v234 = vld [vmem:[%s215 + $0x20] sm:$0xff]
      %v235 = vld [vmem:[%s215 + $0x28] sm:$0xff]
      %v236 = vld [vmem:[%s215 + $0x30] sm:$0xff]
      %v237 = vld [vmem:[%s215 + $0x38] sm:$0xff]
      %vm238 = vcmask 523264
      %v239 = vsel %vm238, %v230, 0.0
      %v240 = vsel %vm238, %v231, 0.0
      %v241 = vadd.f32 %v239, %v240
      %v242 = vsel %vm238, %v232, 0.0
      %v243 = vadd.f32 %v241, %v242
      %v244 = vsel %vm238, %v233, 0.0
      %v245 = vadd.f32 %v243, %v244
      %v246 = vsel %vm238, %v234, 0.0
      %v247 = vadd.f32 %v245, %v246
      %v248 = vsel %vm238, %v235, 0.0
      %v249 = vadd.f32 %v247, %v248
      %v250 = vsel %vm238, %v236, 0.0
      %v251 = vadd.f32 %v249, %v250
      %v252 = vsel %vm238, %v237, 0.0
      %v253 = vadd.f32 %v251, %v252
      %v254 = vrot.slane %v253, 4
      %v255 = vadd.f32 %v253, %v254
      %v256 = vrot.slane %v255, 2
      %v257 = vadd.f32 %v255, %v256
      %v258 = vrot.slane %v257, 1
      %v259 = vadd.f32 %v257, %v258
      %v260 = vrcp.pop 64.0
      %v261 = vmul.f32 %v259, %v260
      %v262 = vsub.f32 %v230, %v261
      %v263 = vsub.f32 %v231, %v261
      %v264 = vsub.f32 %v232, %v261
      %v265 = vsub.f32 %v233, %v261
      %v266 = vsub.f32 %v234, %v261
      %v267 = vsub.f32 %v235, %v261
      %v268 = vsub.f32 %v236, %v261
      %v269 = vsub.f32 %v237, %v261
      %v270 = vmul.f32 %v262, %v262
      %v271 = vmul.f32 %v263, %v263
      %v272 = vmul.f32 %v264, %v264
      %v273 = vmul.f32 %v265, %v265
      %v274 = vmul.f32 %v266, %v266
      %v275 = vmul.f32 %v267, %v267
      %v276 = vmul.f32 %v268, %v268
      %v277 = vmul.f32 %v269, %v269
      %v278 = vsel %vm238, %v270, 0.0
      %v279 = vsel %vm238, %v271, 0.0
      %v280 = vadd.f32 %v278, %v279
      %v281 = vsel %vm238, %v272, 0.0
      %v282 = vadd.f32 %v280, %v281
      %v283 = vsel %vm238, %v273, 0.0
      %v284 = vadd.f32 %v282, %v283
      %v285 = vsel %vm238, %v274, 0.0
      %v286 = vadd.f32 %v284, %v285
      %v287 = vsel %vm238, %v275, 0.0
      %v288 = vadd.f32 %v286, %v287
      %v289 = vsel %vm238, %v276, 0.0
      %v290 = vadd.f32 %v288, %v289
      %v291 = vsel %vm238, %v277, 0.0
      %v292 = vadd.f32 %v290, %v291
      %v293 = vrot.slane %v292, 4
      %v294 = vadd.f32 %v292, %v293
      %v295 = vrot.slane %v294, 2
      %v296 = vadd.f32 %v294, %v295
      %v297 = vrot.slane %v296, 1
      %v298 = vadd.f32 %v296, %v297
      %v299 = vmul.f32 %v298, %v260
      %v300 = vadd.f32 %v299, 1e-05
      %v301 = vrsqrt.pop %v300
      %v302 = vmul.f32 %v262, %v301
      %v303 = vmul.f32 %v263, %v301
      %v304 = vmul.f32 %v264, %v301
      %v305 = vmul.f32 %v265, %v301
      %v306 = vmul.f32 %v266, %v301
      %v307 = vmul.f32 %v267, %v301
      %v308 = vmul.f32 %v268, %v301
      %v309 = vmul.f32 %v269, %v301
      %v310 = vld [vmem:[%s218] sm:$0x1]
      %v312 = vlaneseq
      %v313 = vshrl.u32 %v312, 7
      %v314 = vsub.s32 0, %v313
      %v315 = vrot.slane %v310, %v314
      %v317 = vmul.f32 %v302, %v315
      %v318 = vmul.f32 %v303, %v315
      %v319 = vmul.f32 %v304, %v315
      %v320 = vmul.f32 %v305, %v315
      %v321 = vmul.f32 %v306, %v315
      %v322 = vmul.f32 %v307, %v315
      %v323 = vmul.f32 %v308, %v315
      %v324 = vmul.f32 %v309, %v315
      %v325 = vld [vmem:[%s221] sm:$0x1]
      %v327 = vlaneseq
      %v328 = vshrl.u32 %v327, 7
      %v329 = vsub.s32 0, %v328
      %v330 = vrot.slane %v325, %v329
      %v332 = vadd.f32 %v317, %v330
      %v333 = vadd.f32 %v318, %v330
      %v334 = vadd.f32 %v319, %v330
      %v335 = vadd.f32 %v320, %v330
      %v336 = vadd.f32 %v321, %v330
      %v337 = vadd.f32 %v322, %v330
      %v338 = vadd.f32 %v323, %v330
      %v339 = vadd.f32 %v324, %v330
      %v340 = vmax.f32 %v332, 0.0
      %v341 = vmax.f32 %v333, 0.0
      %v342 = vmax.f32 %v334, 0.0
      %v343 = vmax.f32 %v335, 0.0
      %v344 = vmax.f32 %v336, 0.0
      %v345 = vmax.f32 %v337, 0.0
      %v346 = vmax.f32 %v338, 0.0
      %v347 = vmax.f32 %v339, 0.0
      %348 = vst.msk [vmem:[%s229] sm:$0xff] %vm238, %v340
      %349 = vst.msk [vmem:[%s229 + $0x8] sm:$0xff] %vm238, %v341
      %350 = vst.msk [vmem:[%s229 + $0x10] sm:$0xff] %vm238, %v342
      %351 = vst.msk [vmem:[%s229 + $0x18] sm:$0xff] %vm238, %v343
      %352 = vst.msk [vmem:[%s229 + $0x20] sm:$0xff] %vm238, %v344
      %353 = vst.msk [vmem:[%s229 + $0x28] sm:$0xff] %vm238, %v345
      %354 = vst.msk [vmem:[%s229 + $0x30] sm:$0xff] %vm238, %v346
      %355 = vst.msk [vmem:[%s229 + $0x38] sm:$0xff] %vm238, %v347
      %p356 = scmp.lt.s32.totalorder %s18, 1
      %s357 = scalar_select %p356, %s18, 1
      %p358 = scmp.lt.s32.totalorder %s19, 0
      %s359 = scalar_select %p358, %s19, 0
      %s360 = smul.addr %s357, 8
      %s361 = sadd.s32 %s359, %s360
      %s362 = smul.addr %s361, 8
      %s363 = scalar_lea.vmem %s3, %s362
      // Predicated region
      $region33: #{generator_forward.28} parent=31 // pred_check
        %p364 = pneg %p126
      $region34: #{generator_forward.28} parent=31 // pred_check_branch
        %366 = sbr.rel (%p364) target = $region36
      $region35: #{generator_forward.28} parent=31 // pred_region
        _
      $region36: #{generator_forward.28} parent=31 // pred_fallthru
        _
    $region32: #{generator_forward.28} parent=5 // pred_fallthru
      _
    %p367 = scmp.le.s32.totalorder 2, %s9
    // Predicated region
    $region37: #{generator_forward.28} parent=5 // pred_check
      %p368 = pneg %p367
    $region38: #{generator_forward.28} parent=5 // pred_check_branch
      %370 = sbr.rel (%p368) target = $region40
    $region39: #{generator_forward.28} parent=5 // pred_region
      %s371 = ssub.s32 %s9, 2
      // Predicated region
      $region41: #{generator_forward.28} parent=39 // pred_check
        %p372 = pneg %p132
      $region42: #{generator_forward.28} parent=39 // pred_check_branch
        %374 = sbr.rel (%p372) target = $region44
      $region43: #{generator_forward.28} parent=39 // pred_region
        %p375 = scmp.lt.s32.totalorder %s20, 1
        %s376 = scalar_select %p375, %s20, 1
        %p377 = scmp.lt.s32.totalorder %s21, 0
        %s378 = scalar_select %p377, %s21, 0
        %s379 = smul.addr %s376, 8
        %s380 = sadd.s32 %s378, %s379
        %s381 = smul.addr %s380, 8
        %s382 = scalar_lea.vmem %s3, %s381
      $region44: #{generator_forward.28} parent=39 // pred_fallthru
        _
    $region40: #{generator_forward.28} parent=5 // pred_fallthru
      _
  $region6: #{generator_forward.28} parent=0 // loop_footer
    %s13 = sadd.s32 1, %s9
  $region7: #{generator_forward.28} parent=0 // loop_footer_branch
    %8 = sbr.rel target = $region3
  $region8: #{generator_forward.28} parent=0 // loop_exit
    _

// kernel: generator_forward.30
$region0: #{generator_forward.30}
  #allocation0 [shape = 'u32[]', space=smem, size = 0x4, offset = 0x4, fixed_abs, tag = 'smem constant byte address 0x4 - core index']
  #allocation1 [shape = 'u32[144,128]{1,0:T(1,128)}', space=vmem, size = 0x12000, scoped, tag = 'internal scratch']
  %s0 = inlined_call_operand.vmem [shape: f32[2,16,128], index: 0, kind: input, shape index: {}]
  %s1 = inlined_call_operand.vmem [shape: f32[1,128], index: 1, kind: input, shape index: {}]
  %s2 = inlined_call_operand.vmem [shape: f32[1,128], index: 2, kind: input, shape index: {}]
  %s3 = inlined_call_operand.vmem [shape: f32[2,16,128], index: 3, kind: output, shape index: {}]
  %s4 = sld [smem:[#allocation0]]
  $region45: #{generator_forward.30} parent=0
    _
  %s6 = ssub.s32 1, %s4
  %s7 = scalar_select 0, %s6, %s4
  loop: start=0, step=1, limit=4
  $region2: #{generator_forward.30} parent=0 // loop_pre_header
    _
  $region3: #{generator_forward.30} parent=0 // loop_header
    %s9 = sphi 0, %s13
    %p10 = scmp.ge.s32.totalorder %s9, 4
    %s16 = sphi 0, %s28
    %s17 = sphi 0, %s24
    %s18 = sphi 0, %s16
    %s19 = sphi 0, %s17
    %s20 = sphi 0, %s18
    %s21 = sphi 0, %s19
    %s33 = sphi 0, %s35
    %s36 = sphi 0, %s33
    %s37 = sphi 0, %s36
    %s53 = sphi 0, %s37
    %s59 = sphi 0, %s61
    %s62 = sphi 0, %s59
    %s63 = sphi 0, %s62
    %s79 = sphi 0, %s63
    %s85 = sphi 0, %s87
    %s88 = sphi 0, %s85
    %s89 = sphi 0, %s88
    %s105 = sphi 0, %s89
    %s113 = sphi 0, %s115
    %s116 = sphi 0, %s113
    %s117 = sphi 0, %s116
    %s133 = sphi 0, %s117
  $region4: #{generator_forward.30} parent=0 // loop_header_branch
    %12 = sbr.rel (%p10) target = $region8
  $region5: #{generator_forward.30} parent=0 // loop_body
    %s14 = ssub.s32 %s9, 1
    %s15 = ssub.s32 %s9, 2
    %s22 = sadd.s32 1, %s17
    %p23 = scmp.ge.s32.totalorder %s22, 1
    %s24 = scalar_select %p23, 0, %s22
    %s25 = sadd.s32 1, %s16
    %s26 = scalar_select %p23, %s25, %s16
    %p27 = scmp.ge.s32.totalorder %s26, 2
    %s28 = scalar_select %p27, 0, %s26
    %s29 = ssub.s32 %s16, %s28
    %s30 = ssub.s32 %s17, %s24
    %s31 = sor.u32 %s29, %s30
    %p32 = scmp.eq.s32.totalorder %s31, 0
    %s34 = sadd.s32 %s33, 1
    %s35 = scalar_select %p32, %s33, %s34
    %p38 = pneg %p32
    %p39 = scmp.eq.s32.totalorder %s9, 1
    %p40 = por %p38, %p39
    %p41 = scmp.ne.s32.totalorder %s33, %s36
    %p42 = scmp.eq.s32.totalorder %s9, 0
    %p43 = por %p41, %p42
    %p44 = scmp.ne.s32.totalorder %s33, %s36
    %p45 = scmp.eq.s32.totalorder %s14, 1
    %p46 = por %p44, %p45
    %p47 = scmp.ne.s32.totalorder %s36, %s37
    %p48 = scmp.eq.s32.totalorder %s14, 0
    %p49 = por %p47, %p48
    %p50 = scmp.ne.s32.totalorder %s36, %s37
    %p51 = scmp.eq.s32.totalorder %s15, 1
    %p52 = por %p50, %p51
    %p54 = scmp.ne.s32.totalorder %s37, %s53
    %p55 = scmp.eq.s32.totalorder %s15, 0
    %p56 = por %p54, %p55
    %s57 = ssub.s32 %s17, %s24
    %p58 = scmp.eq.s32.totalorder %s57, 0
    %s60 = sadd.s32 %s59, 1
    %s61 = scalar_select %p58, %s59, %s60
    %p64 = pneg %p58
    %p65 = scmp.eq.s32.totalorder %s9, 1
    %p66 = por %p64, %p65
    %p67 = scmp.ne.s32.totalorder %s59, %s62
    %p68 = scmp.eq.s32.totalorder %s9, 0
    %p69 = por %p67, %p68
    %p70 = scmp.ne.s32.totalorder %s59, %s62
    %p71 = scmp.eq.s32.totalorder %s14, 1
    %p72 = por %p70, %p71
    %p73 = scmp.ne.s32.totalorder %s62, %s63
    %p74 = scmp.eq.s32.totalorder %s14, 0
    %p75 = por %p73, %p74
    %p76 = scmp.ne.s32.totalorder %s62, %s63
    %p77 = scmp.eq.s32.totalorder %s15, 1
    %p78 = por %p76, %p77
    %p80 = scmp.ne.s32.totalorder %s63, %s79
    %p81 = scmp.eq.s32.totalorder %s15, 0
    %p82 = por %p80, %p81
    %s83 = ssub.s32 %s17, %s24
    %p84 = scmp.eq.s32.totalorder %s83, 0
    %s86 = sadd.s32 %s85, 1
    %s87 = scalar_select %p84, %s85, %s86
    %p90 = pneg %p84
    %p91 = scmp.eq.s32.totalorder %s9, 1
    %p92 = por %p90, %p91
    %p93 = scmp.ne.s32.totalorder %s85, %s88
    %p94 = scmp.eq.s32.totalorder %s9, 0
    %p95 = por %p93, %p94
    %p96 = scmp.ne.s32.totalorder %s85, %s88
    %p97 = scmp.eq.s32.totalorder %s14, 1
    %p98 = por %p96, %p97
    %p99 = scmp.ne.s32.totalorder %s88, %s89
    %p100 = scmp.eq.s32.totalorder %s14, 0
    %p101 = por %p99, %p100
    %p102 = scmp.ne.s32.totalorder %s88, %s89
    %p103 = scmp.eq.s32.totalorder %s15, 1
    %p104 = por %p102, %p103
    %p106 = scmp.ne.s32.totalorder %s89, %s105
    %p107 = scmp.eq.s32.totalorder %s15, 0
    %p108 = por %p106, %p107
    %s109 = ssub.s32 %s16, %s28
    %s110 = ssub.s32 %s17, %s24
    %s111 = sor.u32 %s109, %s110
    %p112 = scmp.eq.s32.totalorder %s111, 0
    %s114 = sadd.s32 %s113, 1
    %s115 = scalar_select %p112, %s113, %s114
    %p118 = pneg %p112
    %p119 = scmp.eq.s32.totalorder %s9, 1
    %p120 = por %p118, %p119
    %p121 = scmp.ne.s32.totalorder %s113, %s116
    %p122 = scmp.eq.s32.totalorder %s9, 0
    %p123 = por %p121, %p122
    %p124 = scmp.ne.s32.totalorder %s113, %s116
    %p125 = scmp.eq.s32.totalorder %s14, 1
    %p126 = por %p124, %p125
    %p127 = scmp.ne.s32.totalorder %s116, %s117
    %p128 = scmp.eq.s32.totalorder %s14, 0
    %p129 = por %p127, %p128
    %p130 = scmp.ne.s32.totalorder %s116, %s117
    %p131 = scmp.eq.s32.totalorder %s15, 1
    %p132 = por %p130, %p131
    %p134 = scmp.ne.s32.totalorder %s117, %s133
    %p135 = scmp.eq.s32.totalorder %s15, 0
    %p136 = por %p134, %p135
    %p137 = scmp.le.s32.totalorder 1, %s9
    %p138 = scmp.lt.s32.totalorder %s9, 3
    %p139 = pnand %p137, %p138
    %p140 = pneg %p139
    // Predicated region
    $region9: #{generator_forward.30} parent=5 // pred_check
      _
    $region10: #{generator_forward.30} parent=5 // pred_check_branch
      %142 = sbr.rel (%p139) target = $region12
    $region11: #{generator_forward.30} parent=5 // pred_region
      %s143 = ssub.s32 %s9, 1
      // Predicated region
      $region13: #{generator_forward.30} parent=11 // pred_check
        %p144 = pneg %p75
      $region14: #{generator_forward.30} parent=11 // pred_check_branch
        %146 = sbr.rel (%p144) target = $region16
      $region15: #{generator_forward.30} parent=11 // pred_region
        %p147 = scmp.lt.s32.totalorder %s19, 0
        %s148 = scalar_select %p147, %s19, 0
        %s149 = scalar_lea.vmem %s1, %s148
      $region16: #{generator_forward.30} parent=11 // pred_fallthru
        _
      // Predicated region
      $region17: #{generator_forward.30} parent=11 // pred_check
        %p150 = pneg %p101
      $region18: #{generator_forward.30} parent=11 // pred_check_branch
        %152 = sbr.rel (%p150) target = $region20
      $region19: #{generator_forward.30} parent=11 // pred_region
        %p153 = scmp.lt.s32.totalorder %s19, 0
        %s154 = scalar_select %p153, %s19, 0
        %s155 = scalar_lea.vmem %s2, %s154
      $region20: #{generator_forward.30} parent=11 // pred_fallthru
        _
    $region12: #{generator_forward.30} parent=5 // pred_fallthru
      _
    %p156 = scmp.lt.s32.totalorder %s9, 2
    // Predicated region
    $region21: #{generator_forward.30} parent=5 // pred_check
      %p157 = pneg %p156
    $region22: #{generator_forward.30} parent=5 // pred_check_branch
      %159 = sbr.rel (%p157) target = $region24
    $region23: #{generator_forward.30} parent=5 // pred_region
      // Predicated region
      $region25: #{generator_forward.30} parent=23 // pred_check
        %p160 = pneg %p43
      $region26: #{generator_forward.30} parent=23 // pred_check_branch
        %162 = sbr.rel (%p160) target = $region28
      $region27: #{generator_forward.30} parent=23 // pred_region
        %p163 = scmp.lt.s32.totalorder %s16, 1
        %s164 = scalar_select %p163, %s16, 1
        %p165 = scmp.lt.s32.totalorder %s17, 0
        %s166 = scalar_select %p165, %s17, 0
        %s167 = smul.addr %s164, 2
        %s168 = sadd.s32 %s166, %s167
        %s169 = smul.addr %s168, 8
        %s170 = scalar_lea.vmem %s0, %s169
      $region28: #{generator_forward.30} parent=23 // pred_fallthru
        _
    $region24: #{generator_forward.30} parent=5 // pred_fallthru
      _
    %p171 = scmp.le.s32.totalorder 1, %s9
    %p172 = scmp.lt.s32.totalorder %s9, 3
    %p173 = pnand %p171, %p172
    %p174 = pneg %p173
    // Predicated region
    $region29: #{generator_forward.30} parent=5 // pred_check
      _
    $region30: #{generator_forward.30} parent=5 // pred_check_branch
      %176 = sbr.rel (%p173) target = $region32
    $region31: #{generator_forward.30} parent=5 // pred_region
      %s177 = ssub.s32 %s9, 1
      %p178 = scmp.lt.s32.totalorder %s18, 1
      %s179 = scalar_select %p178, %s18, 1
      %p180 = scmp.lt.s32.totalorder %s19, 0
      %s181 = scalar_select %p180, %s19, 0
      %s182 = smul.addr %s179, 2
      %s183 = sadd.s32 %s181, %s182
      %s184 = smul.addr %s183, 8
      %s185 = scalar_lea.vmem %s0, %s184
      %p186 = pneg %p49
      %p187 = pneg %p46
      %p188 = scmp.lt.s32.totalorder %s19, 0
      %s189 = scalar_select %p188, %s19, 0
      %s190 = scalar_lea.vmem %s1, %s189
      %p191 = pneg %p75
      %p192 = pneg %p72
      %p193 = scmp.lt.s32.totalorder %s19, 0
      %s194 = scalar_select %p193, %s19, 0
      %s195 = scalar_lea.vmem %s2, %s194
      %p196 = pneg %p101
      %p197 = pneg %p98
      %p198 = pneg %p129
      %p199 = pneg %p126
      %p200 = scmp.lt.s32.totalorder %s18, 1
      %s201 = scalar_select %p200, %s18, 1
      %p202 = scmp.lt.s32.totalorder %s19, 0
      %s203 = scalar_select %p202, %s19, 0
      %s204 = smul.addr %s201, 2
      %s205 = sadd.s32 %s203, %s204
      %s206 = smul.addr %s205, 8
      %s207 = scalar_lea.vmem %s3, %s206
      %p208 = scmp.lt.s32.totalorder %s18, 1
      %s209 = scalar_select %p208, %s18, 1
      %p210 = scmp.lt.s32.totalorder %s19, 0
      %s211 = scalar_select %p210, %s19, 0
      %s212 = smul.addr %s209, 2
      %s213 = sadd.s32 %s211, %s212
      %s214 = smul.addr %s213, 8
      %s215 = scalar_lea.vmem %s0, %s214
      %p216 = scmp.lt.s32.totalorder %s19, 0
      %s217 = scalar_select %p216, %s19, 0
      %s218 = scalar_lea.vmem %s1, %s217
      %p219 = scmp.lt.s32.totalorder %s19, 0
      %s220 = scalar_select %p219, %s19, 0
      %s221 = scalar_lea.vmem %s2, %s220
      %p222 = scmp.lt.s32.totalorder %s18, 1
      %s223 = scalar_select %p222, %s18, 1
      %p224 = scmp.lt.s32.totalorder %s19, 0
      %s225 = scalar_select %p224, %s19, 0
      %s226 = smul.addr %s223, 2
      %s227 = sadd.s32 %s225, %s226
      %s228 = smul.addr %s227, 8
      %s229 = scalar_lea.vmem %s3, %s228
      %v230 = vld [vmem:[%s215] sm:$0xff]
      %v231 = vld [vmem:[%s215 + $0x8] sm:$0xff]
      %v232 = vadd.f32 %v230, %v231
      %v233 = vrot.slane %v232, 4
      %v234 = vadd.f32 %v232, %v233
      %v235 = vrot.slane %v234, 2
      %v236 = vadd.f32 %v234, %v235
      %v237 = vrot.slane %v236, 1
      %v238 = vadd.f32 %v236, %v237
      %v239 = vrcp.pop 16.0
      %v240 = vmul.f32 %v238, %v239
      %v241 = vsub.f32 %v230, %v240
      %v242 = vsub.f32 %v231, %v240
      %v243 = vmul.f32 %v241, %v241
      %v244 = vmul.f32 %v242, %v242
      %v245 = vadd.f32 %v243, %v244
      %v246 = vrot.slane %v245, 4
      %v247 = vadd.f32 %v245, %v246
      %v248 = vrot.slane %v247, 2
      %v249 = vadd.f32 %v247, %v248
      %v250 = vrot.slane %v249, 1
      %v251 = vadd.f32 %v249, %v250
      %v252 = vmul.f32 %v251, %v239
      %v253 = vadd.f32 %v252, 1e-05
      %v254 = vrsqrt.pop %v253
      %v255 = vmul.f32 %v241, %v254
      %v256 = vmul.f32 %v242, %v254
      %v257 = vld [vmem:[%s218] sm:$0x1]
      %v259 = vlaneseq
      %v260 = vshrl.u32 %v259, 7
      %v261 = vsub.s32 0, %v260
      %v262 = vrot.slane %v257, %v261
      %v264 = vmul.f32 %v255, %v262
      %v265 = vmul.f32 %v256, %v262
      %v266 = vld [vmem:[%s221] sm:$0x1]
      %v268 = vlaneseq
      %v269 = vshrl.u32 %v268, 7
      %v270 = vsub.s32 0, %v269
      %v271 = vrot.slane %v266, %v270
      %v273 = vadd.f32 %v264, %v271
      %v274 = vadd.f32 %v265, %v271
      %v275 = vmax.f32 %v273, 0.0
      %v276 = vmax.f32 %v274, 0.0
      %277 = vst [vmem:[%s229] sm:$0xff] %v275
      %278 = vst [vmem:[%s229 + $0x8] sm:$0xff] %v276
      %p279 = scmp.lt.s32.totalorder %s18, 1
      %s280 = scalar_select %p279, %s18, 1
      %p281 = scmp.lt.s32.totalorder %s19, 0
      %s282 = scalar_select %p281, %s19, 0
      %s283 = smul.addr %s280, 2
      %s284 = sadd.s32 %s282, %s283
      %s285 = smul.addr %s284, 8
      %s286 = scalar_lea.vmem %s3, %s285
      // Predicated region
      $region33: #{generator_forward.30} parent=31 // pred_check
        %p287 = pneg %p126
      $region34: #{generator_forward.30} parent=31 // pred_check_branch
        %289 = sbr.rel (%p287) target = $region36
      $region35: #{generator_forward.30} parent=31 // pred_region
        _
      $region36: #{generator_forward.30} parent=31 // pred_fallthru
        _
    $region32: #{generator_forward.30} parent=5 // pred_fallthru
      _
    %p290 = scmp.le.s32.totalorder 2, %s9
    // Predicated region
    $region37: #{generator_forward.30} parent=5 // pred_check
      %p291 = pneg %p290
    $region38: #{generator_forward.30} parent=5 // pred_check_branch
      %293 = sbr.rel (%p291) target = $region40
    $region39: #{generator_forward.30} parent=5 // pred_region
      %s294 = ssub.s32 %s9, 2
      // Predicated region
      $region41: #{generator_forward.30} parent=39 // pred_check
        %p295 = pneg %p132
      $region42: #{generator_forward.30} parent=39 // pred_check_branch
        %297 = sbr.rel (%p295) target = $region44
      $region43: #{generator_forward.30} parent=39 // pred_region
        %p298 = scmp.lt.s32.totalorder %s20, 1
        %s299 = scalar_select %p298, %s20, 1
        %p300 = scmp.lt.s32.totalorder %s21, 0
        %s301 = scalar_select %p300, %s21, 0
        %s302 = smul.addr %s299, 2
        %s303 = sadd.s32 %s301, %s302
        %s304 = smul.addr %s303, 8
        %s305 = scalar_lea.vmem %s3, %s304
      $region44: #{generator_forward.30} parent=39 // pred_fallthru
        _
    $region40: #{generator_forward.30} parent=5 // pred_fallthru
      _
  $region6: #{generator_forward.30} parent=0 // loop_footer
    %s13 = sadd.s32 1, %s9
  $region7: #{generator_forward.30} parent=0 // loop_footer_branch
    %8 = sbr.rel target = $region3
  $region8: #{generator_forward.30} parent=0 // loop_exit
    _

// kernel: generator_forward.29
$region0: #{generator_forward.29}
  #allocation0 [shape = 'u32[]', space=smem, size = 0x4, offset = 0x4, fixed_abs, tag = 'smem constant byte address 0x4 - core index']
  #allocation1 [shape = 'u32[144,128]{1,0:T(1,128)}', space=vmem, size = 0x12000, scoped, tag = 'internal scratch']
  #allocation2 [shape = 'f32[32,128]{1,0:T(8,128)}', space=vmem, size = 0x4000, scoped, tag = 'scratch operand']
  %s0 = inlined_call_operand.vmem [shape: bf16[32,1024], index: 0, kind: input, shape index: {}]
  %s1 = inlined_call_operand.vmem [shape: bf16[1024,128], index: 1, kind: input, shape index: {}]
  %s2 = inlined_call_operand.vmem [shape: f32[32,128], index: 2, kind: output, shape index: {}]
  %s3 = sld [smem:[#allocation0]]
  $region72: #{generator_forward.29} parent=0
    _
  %s5 = ssub.s32 1, %s3
  %s6 = scalar_select 0, %s5, %s3
  $region1: #{generator_forward.29} parent=0
    #allocation3 [shape = 'u8[65536]{0}', space=vmem, size = 0x10000, scoped, tag = 'input window, operand 0']
    loop: start=0, step=1, limit=4
    $region2: #{generator_forward.29} parent=1 // loop_pre_header
      _
    $region3: #{generator_forward.29} parent=1 // loop_header
      %s8 = sphi 0, %s12
      %p9 = scmp.ge.s32.totalorder %s8, 4
      %s15 = sphi 0, %s34
      %s16 = sphi 0, %s30
      %s17 = sphi 0, %s26
      %s18 = sphi 0, %s15
      %s19 = sphi 0, %s16
      %s20 = sphi 0, %s17
      %s21 = sphi 0, %s18
      %s22 = sphi 0, %s19
      %s23 = sphi 0, %s20
      %s39 = sphi 0, %s41
      %s42 = sphi 0, %s39
      %s43 = sphi 0, %s42
      %s59 = sphi 0, %s43
      %s67 = sphi 0, %s69
      %s70 = sphi 0, %s67
      %s71 = sphi 0, %s70
      %s87 = sphi 0, %s71
      %s95 = sphi 0, %s97
      %s98 = sphi 0, %s95
      %s99 = sphi 0, %s98
      %s115 = sphi 0, %s99
    $region4: #{generator_forward.29} parent=1 // loop_header_branch
      %11 = sbr.rel (%p9) target = $region8
    $region5: #{generator_forward.29} parent=1 // loop_body
      %s13 = ssub.s32 %s8, 1
      %s14 = ssub.s32 %s8, 2
      %s24 = sadd.s32 1, %s17
      %p25 = scmp.ge.s32.totalorder %s24, 2
      %s26 = scalar_select %p25, 0, %s24
      %s27 = sadd.s32 1, %s16
      %s28 = scalar_select %p25, %s27, %s16
      %p29 = scmp.ge.s32.totalorder %s28, 1
      %s30 = scalar_select %p29, 0, %s28
      %s31 = sadd.s32 1, %s15
      %s32 = scalar_select %p29, %s31, %s15
      %p33 = scmp.ge.s32.totalorder %s32, 1
      %s34 = scalar_select %p33, 0, %s32
      %s35 = ssub.s32 %s15, %s34
      %s36 = ssub.s32 %s17, %s26
      %s37 = sor.u32 %s35, %s36
      %p38 = scmp.eq.s32.totalorder %s37, 0
      %s40 = sadd.s32 %s39, 1
      %s41 = scalar_select %p38, %s39, %s40
      %p44 = pneg %p38
      %p45 = scmp.eq.s32.totalorder %s8, 1
      %p46 = por %p44, %p45
      %p47 = scmp.ne.s32.totalorder %s39, %s42
      %p48 = scmp.eq.s32.totalorder %s8, 0
      %p49 = por %p47, %p48
      %p50 = scmp.ne.s32.totalorder %s39, %s42
      %p51 = scmp.eq.s32.totalorder %s13, 1
      %p52 = por %p50, %p51
      %p53 = scmp.ne.s32.totalorder %s42, %s43
      %p54 = scmp.eq.s32.totalorder %s13, 0
      %p55 = por %p53, %p54
      %p56 = scmp.ne.s32.totalorder %s42, %s43
      %p57 = scmp.eq.s32.totalorder %s14, 1
      %p58 = por %p56, %p57
      %p60 = scmp.ne.s32.totalorder %s43, %s59
      %p61 = scmp.eq.s32.totalorder %s14, 0
      %p62 = por %p60, %p61
      %s63 = ssub.s32 %s17, %s26
      %s64 = ssub.s32 %s16, %s30
      %s65 = sor.u32 %s63, %s64
      %p66 = scmp.eq.s32.totalorder %s65, 0
      %s68 = sadd.s32 %s67, 1
      %s69 = scalar_select %p66, %s67, %s68
      %p72 = pneg %p66
      %p73 = scmp.eq.s32.totalorder %s8, 1
      %p74 = por %p72, %p73
      %p75 = scmp.ne.s32.totalorder %s67, %s70
      %p76 = scmp.eq.s32.totalorder %s8, 0
      %p77 = por %p75, %p76
      %p78 = scmp.ne.s32.totalorder %s67, %s70
      %p79 = scmp.eq.s32.totalorder %s13, 1
      %p80 = por %p78, %p79
      %p81 = scmp.ne.s32.totalorder %s70, %s71
      %p82 = scmp.eq.s32.totalorder %s13, 0
      %p83 = por %p81, %p82
      %p84 = scmp.ne.s32.totalorder %s70, %s71
      %p85 = scmp.eq.s32.totalorder %s14, 1
      %p86 = por %p84, %p85
      %p88 = scmp.ne.s32.totalorder %s71, %s87
      %p89 = scmp.eq.s32.totalorder %s14, 0
      %p90 = por %p88, %p89
      %s91 = ssub.s32 %s15, %s34
      %s92 = ssub.s32 %s16, %s30
      %s93 = sor.u32 %s91, %s92
      %p94 = scmp.eq.s32.totalorder %s93, 0
      %s96 = sadd.s32 %s95, 1
      %s97 = scalar_select %p94, %s95, %s96
      %p100 = pneg %p94
      %p101 = scmp.eq.s32.totalorder %s8, 1
      %p102 = por %p100, %p101
      %p103 = scmp.ne.s32.totalorder %s95, %s98
      %p104 = scmp.eq.s32.totalorder %s8, 0
      %p105 = por %p103, %p104
      %p106 = scmp.ne.s32.totalorder %s95, %s98
      %p107 = scmp.eq.s32.totalorder %s13, 1
      %p108 = por %p106, %p107
      %p109 = scmp.ne.s32.totalorder %s98, %s99
      %p110 = scmp.eq.s32.totalorder %s13, 0
      %p111 = por %p109, %p110
      %p112 = scmp.ne.s32.totalorder %s98, %s99
      %p113 = scmp.eq.s32.totalorder %s14, 1
      %p114 = por %p112, %p113
      %p116 = scmp.ne.s32.totalorder %s99, %s115
      %p117 = scmp.eq.s32.totalorder %s14, 0
      %p118 = por %p116, %p117
      %p119 = scmp.le.s32.totalorder 1, %s8
      %p120 = scmp.lt.s32.totalorder %s8, 3
      %p121 = pnand %p119, %p120
      %p122 = pneg %p121
      // Predicated region
      $region9: #{generator_forward.29} parent=5 // pred_check
        _
      $region10: #{generator_forward.29} parent=5 // pred_check_branch
        %124 = sbr.rel (%p121) target = $region12
      $region11: #{generator_forward.29} parent=5 // pred_region
        %s125 = ssub.s32 %s8, 1
      $region12: #{generator_forward.29} parent=5 // pred_fallthru
        _
      %p126 = scmp.lt.s32.totalorder %s8, 2
      // Predicated region
      $region13: #{generator_forward.29} parent=5 // pred_check
        %p127 = pneg %p126
      $region14: #{generator_forward.29} parent=5 // pred_check_branch
        %129 = sbr.rel (%p127) target = $region16
      $region15: #{generator_forward.29} parent=5 // pred_region
        // Predicated region
        $region17: #{generator_forward.29} parent=15 // pred_check
          %p130 = pneg %p49
        $region18: #{generator_forward.29} parent=15 // pred_check_branch
          %132 = sbr.rel (%p130) target = $region20
        $region19: #{generator_forward.29} parent=15 // pred_region
          %s133 = sand.u32 %s39, 1
          %s134 = sand.u32 %s39, 1
          %s135 = smul.addr %s134, 64
          %s136 = scalar_lea.vmem [#allocation3], %s135
          %s137 = smul.u32 4, %s15
          %s138 = smul.u32 4, %s17
          %s139 = smul.addr %s137, 8
          %s140 = sadd.s32 %s138, %s139
          %s141 = smul.addr %s140, 4
          %s142 = scalar_lea.vmem %s0, %s141
          // Predicated region
          $region21: #{generator_forward.29} parent=19 // pred_check
            _
          $region22: #{generator_forward.29} parent=19 // pred_check_branch
            %144 = sbr.rel (0) target = $region24
          $region23: #{generator_forward.29} parent=19 // pred_region
            // Predicated region
            $region25: #{generator_forward.29} parent=23 // pred_check
              _
            $region26: #{generator_forward.29} parent=23 // pred_check_branch
              %146 = sbr.rel (0) target = $region28
            $region27: #{generator_forward.29} parent=23 // pred_region
              loop: start=0, step=1, limit=1
              $region29: #{generator_forward.29} parent=27 // loop_pre_header
                _
              $region30: #{generator_forward.29} parent=27 // loop_header
                %s148 = sphi 0, %s152
                %p149 = scmp.ge.s32.totalorder %s148, 1
                %s153 = sphi %s142, %s142
                %s154 = sphi %s136, %s136
              $region31: #{generator_forward.29} parent=27 // loop_header_branch
                %151 = sbr.rel (%p149) target = $region35
              $region32: #{generator_forward.29} parent=27 // loop_body
                %v155 = vld [vmem:[%s153] sm:$0xff]
                %156 = vst [vmem:[%s154] sm:$0xff] %v155
                %v157 = vld [vmem:[%s153 + $0x8] sm:$0xff]
                %158 = vst [vmem:[%s154 + $0x8] sm:$0xff] %v157
                %v159 = vld [vmem:[%s153 + $0x20] sm:$0xff]
                %160 = vst [vmem:[%s154 + $0x10] sm:$0xff] %v159
                %v161 = vld [vmem:[%s153 + $0x28] sm:$0xff]
                %162 = vst [vmem:[%s154 + $0x18] sm:$0xff] %v161
                %v163 = vld [vmem:[%s153 + $0x40] sm:$0xff]
                %164 = vst [vmem:[%s154 + $0x20] sm:$0xff] %v163
                %v165 = vld [vmem:[%s153 + $0x48] sm:$0xff]
                %166 = vst [vmem:[%s154 + $0x28] sm:$0xff] %v165
                %v167 = vld [vmem:[%s153 + $0x60] sm:$0xff]
                %168 = vst [vmem:[%s154 + $0x30] sm:$0xff] %v167
                %v169 = vld [vmem:[%s153 + $0x68] sm:$0xff]
                %170 = vst [vmem:[%s154 + $0x38] sm:$0xff] %v169
              $region33: #{generator_forward.29} parent=27 // loop_footer
                %s152 = sadd.s32 1, %s148
              $region34: #{generator_forward.29} parent=27 // loop_footer_branch
                %147 = sbr.rel target = $region30
              $region35: #{generator_forward.29} parent=27 // loop_exit
                _
            $region28: #{generator_forward.29} parent=23 // pred_fallthru
              _
            // Predicated region
            $region36: #{generator_forward.29} parent=23 // pred_check
              _
            $region37: #{generator_forward.29} parent=23 // pred_check_branch
              %172 = sbr.rel target = $region39
            $region38: #{generator_forward.29} parent=23 // pred_region
              _
            $region39: #{generator_forward.29} parent=23 // pred_fallthru
              _
          $region24: #{generator_forward.29} parent=19 // pred_fallthru
            _
          %173 = vnop
        $region20: #{generator_forward.29} parent=15 // pred_fallthru
          _
        // Predicated region
        $region40: #{generator_forward.29} parent=15 // pred_check
          %p174 = pneg %p77
        $region41: #{generator_forward.29} parent=15 // pred_check_branch
          %176 = sbr.rel (%p174) target = $region43
        $region42: #{generator_forward.29} parent=15 // pred_region
          %s177 = smul.u32 64, %s17
          %p178 = scmp.lt.s32.totalorder %s177, 127
          %s179 = scalar_select %p178, %s177, 127
          %p180 = scmp.lt.s32.totalorder %s16, 0
          %s181 = scalar_select %p180, %s16, 0
          %s182 = sadd.s32 %s181, %s179
          %s183 = smul.addr %s182, 4
          %s184 = scalar_lea.vmem %s1, %s183
          %s185 = smul.u32 64, %s17
        $region43: #{generator_forward.29} parent=15 // pred_fallthru
          _
      $region16: #{generator_forward.29} parent=5 // pred_fallthru
        _
      %p186 = scmp.le.s32.totalorder 1, %s8
      %p187 = scmp.lt.s32.totalorder %s8, 3
      %p188 = pnand %p186, %p187
      %p189 = pneg %p188
      // Predicated region
      $region44: #{generator_forward.29} parent=5 // pred_check
        _
      $region45: #{generator_forward.29} parent=5 // pred_check_branch
        %191 = sbr.rel (%p188) target = $region47
      $region46: #{generator_forward.29} parent=5 // pred_region
        %s192 = ssub.s32 %s8, 1
        %s193 = sand.u32 %s42, 1
        %s194 = sand.u32 %s42, 1
        %s195 = smul.addr %s194, 64
        %s196 = scalar_lea.vmem [#allocation3], %s195
        // Predicated region
        $region48: #{generator_forward.29} parent=46 // pred_check
          %p197 = pneg %p55
        $region49: #{generator_forward.29} parent=46 // pred_check_branch
          %199 = sbr.rel (%p197) target = $region51
        $region50: #{generator_forward.29} parent=46 // pred_region
          _
        $region51: #{generator_forward.29} parent=46 // pred_fallthru
          _
        %s200 = sand.u32 %s42, 1
        %s201 = sand.u32 %s42, 1
        %s202 = smul.addr %s201, 64
        %s203 = scalar_lea.vmem [#allocation3], %s202
        %p204 = pneg %p55
        %p205 = pneg %p52
        %s206 = smul.u32 64, %s20
        %p207 = scmp.lt.s32.totalorder %s206, 127
        %s208 = scalar_select %p207, %s206, 127
        %p209 = scmp.lt.s32.totalorder %s19, 0
        %s210 = scalar_select %p209, %s19, 0
        %s211 = sadd.s32 %s210, %s208
        %s212 = smul.addr %s211, 4
        %s213 = scalar_lea.vmem %s1, %s212
        %p214 = pneg %p83
        %p215 = pneg %p80
        %p216 = pneg %p111
        %p217 = pneg %p108
        %s218 = smul.u32 4, %s18
        %p219 = scmp.lt.s32.totalorder %s218, 3
        %s220 = scalar_select %p219, %s218, 3
        %p221 = scmp.lt.s32.totalorder %s19, 0
        %s222 = scalar_select %p221, %s19, 0
        %s223 = sadd.s32 %s222, %s220
        %s224 = smul.addr %s223, 8
        %s225 = scalar_lea.vmem %s2, %s224
        %s226 = smul.u32 4, %s18
        %s227 = smul.u32 4, %s20
        %s228 = smul.u32 64, %s20
        %p229 = scmp.lt.s32.totalorder %s228, 127
        %s230 = scalar_select %p229, %s228, 127
        %p231 = scmp.lt.s32.totalorder %s19, 0
        %s232 = scalar_select %p231, %s19, 0
        %s233 = sadd.s32 %s232, %s230
        %s234 = smul.addr %s233, 4
        %s235 = scalar_lea.vmem %s1, %s234
        %s236 = smul.u32 64, %s20
        %s237 = smul.u32 4, %s18
        %p238 = scmp.lt.s32.totalorder %s237, 3
        %s239 = scalar_select %p238, %s237, 3
        %p240 = scmp.lt.s32.totalorder %s19, 0
        %s241 = scalar_select %p240, %s19, 0
        %s242 = sadd.s32 %s241, %s239
        %s243 = smul.addr %s242, 8
        %s244 = scalar_lea.vmem %s2, %s243
        %s245 = smul.u32 4, %s18
        %p247 = scmp.eq.s32.totalorder %s20, 0
        // Predicated region
        $region52: #{generator_forward.29} parent=46 // pred_check
          %p248 = pneg %p247
        $region53: #{generator_forward.29} parent=46 // pred_check_branch
          %250 = sbr.rel (%p248) target = $region55
        $region54: #{generator_forward.29} parent=46 // pred_region
          %251 = vst [vmem:[#allocation2] sm:$0xff] 0.0
          %252 = vst [vmem:[#allocation2 + $0x8] sm:$0xff] 0.0
          %253 = vst [vmem:[#allocation2 + $0x10] sm:$0xff] 0.0
          %254 = vst [vmem:[#allocation2 + $0x18] sm:$0xff] 0.0
        $region55: #{generator_forward.29} parent=46 // pred_fallthru
          _
        %v255 = vld [vmem:[#allocation2] sm:$0xff]
        %v256 = vld [vmem:[#allocation2 + $0x8] sm:$0xff]
        %v257 = vld [vmem:[#allocation2 + $0x10] sm:$0xff]
        %v258 = vld [vmem:[#allocation2 + $0x18] sm:$0xff]
        %v259 = vld [vmem:[%s196] sm:$0xff]
        %v260 = vld [vmem:[%s196 + $0x8] sm:$0xff]
        %v261 = vld [vmem:[%s196 + $0x10] sm:$0xff]
        %v262 = vld [vmem:[%s196 + $0x18] sm:$0xff]
        %v263 = vld [vmem:[%s196 + $0x20] sm:$0xff]
        %v264 = vld [vmem:[%s196 + $0x28] sm:$0xff]
        %v265 = vld [vmem:[%s196 + $0x30] sm:$0xff]
        %v266 = vld [vmem:[%s196 + $0x38] sm:$0xff]
        %v267 = vld [vmem:[%s235] sm:$0xf]
        %v268 = vld [vmem:[%s235 + $0x4] sm:$0xf]
        %v269 = vld [vmem:[%s235 + $0x8] sm:$0xf]
        %v270 = vld [vmem:[%s235 + $0xc] sm:$0xf]
        %v271 = vld [vmem:[%s235 + $0x10] sm:$0xf]
        %v272 = vld [vmem:[%s235 + $0x14] sm:$0xf]
        %v273 = vld [vmem:[%s235 + $0x18] sm:$0xf]
        %v274 = vld [vmem:[%s235 + $0x1c] sm:$0xf]
        %v275 = vld [vmem:[%s235 + $0x20] sm:$0xf]
        %v276 = vld [vmem:[%s235 + $0x24] sm:$0xf]
        %v277 = vld [vmem:[%s235 + $0x28] sm:$0xf]
        %v278 = vld [vmem:[%s235 + $0x2c] sm:$0xf]
        %v279 = vld [vmem:[%s235 + $0x30] sm:$0xf]
        %v280 = vld [vmem:[%s235 + $0x34] sm:$0xf]
        %v281 = vld [vmem:[%s235 + $0x38] sm:$0xf]
        %v282 = vld [vmem:[%s235 + $0x3c] sm:$0xf]
        %v283 = vld [vmem:[%s235 + $0x40] sm:$0xf]
        %v284 = vld [vmem:[%s235 + $0x44] sm:$0xf]
        %v285 = vld [vmem:[%s235 + $0x48] sm:$0xf]
        %v286 = vld [vmem:[%s235 + $0x4c] sm:$0xf]
        %v287 = vld [vmem:[%s235 + $0x50] sm:$0xf]
        %v288 = vld [vmem:[%s235 + $0x54] sm:$0xf]
        %v289 = vld [vmem:[%s235 + $0x58] sm:$0xf]
        %v290 = vld [vmem:[%s235 + $0x5c] sm:$0xf]
        %v291 = vld [vmem:[%s235 + $0x60] sm:$0xf]
        %v292 = vld [vmem:[%s235 + $0x64] sm:$0xf]
        %v293 = vld [vmem:[%s235 + $0x68] sm:$0xf]
        %v294 = vld [vmem:[%s235 + $0x6c] sm:$0xf]
        %v295 = vld [vmem:[%s235 + $0x70] sm:$0xf]
        %v296 = vld [vmem:[%s235 + $0x74] sm:$0xf]
        %v297 = vld [vmem:[%s235 + $0x78] sm:$0xf]
        %v298 = vld [vmem:[%s235 + $0x7c] sm:$0xf]
        %v299 = vld [vmem:[%s235 + $0x80] sm:$0xf]
        %v300 = vld [vmem:[%s235 + $0x84] sm:$0xf]
        %v301 = vld [vmem:[%s235 + $0x88] sm:$0xf]
        %v302 = vld [vmem:[%s235 + $0x8c] sm:$0xf]
        %v303 = vld [vmem:[%s235 + $0x90] sm:$0xf]
        %v304 = vld [vmem:[%s235 + $0x94] sm:$0xf]
        %v305 = vld [vmem:[%s235 + $0x98] sm:$0xf]
        %v306 = vld [vmem:[%s235 + $0x9c] sm:$0xf]
        %v307 = vld [vmem:[%s235 + $0xa0] sm:$0xf]
        %v308 = vld [vmem:[%s235 + $0xa4] sm:$0xf]
        %v309 = vld [vmem:[%s235 + $0xa8] sm:$0xf]
        %v310 = vld [vmem:[%s235 + $0xac] sm:$0xf]
        %v311 = vld [vmem:[%s235 + $0xb0] sm:$0xf]
        %v312 = vld [vmem:[%s235 + $0xb4] sm:$0xf]
        %v313 = vld [vmem:[%s235 + $0xb8] sm:$0xf]
        %v314 = vld [vmem:[%s235 + $0xbc] sm:$0xf]
        %v315 = vld [vmem:[%s235 + $0xc0] sm:$0xf]
        %v316 = vld [vmem:[%s235 + $0xc4] sm:$0xf]
        %v317 = vld [vmem:[%s235 + $0xc8] sm:$0xf]
        %v318 = vld [vmem:[%s235 + $0xcc] sm:$0xf]
        %v319 = vld [vmem:[%s235 + $0xd0] sm:$0xf]
        %v320 = vld [vmem:[%s235 + $0xd4] sm:$0xf]
        %v321 = vld [vmem:[%s235 + $0xd8] sm:$0xf]
        %v322 = vld [vmem:[%s235 + $0xdc] sm:$0xf]
        %v323 = vld [vmem:[%s235 + $0xe0] sm:$0xf]
        %v324 = vld [vmem:[%s235 + $0xe4] sm:$0xf]
        %v325 = vld [vmem:[%s235 + $0xe8] sm:$0xf]
        %v326 = vld [vmem:[%s235 + $0xec] sm:$0xf]
        %v327 = vld [vmem:[%s235 + $0xf0] sm:$0xf]
        %v328 = vld [vmem:[%s235 + $0xf4] sm:$0xf]
        %v329 = vld [vmem:[%s235 + $0xf8] sm:$0xf]
        %v330 = vld [vmem:[%s235 + $0xfc] sm:$0xf]
        %v339 = vunpack.c.l.b16 %v259
        %v340 = vunpack.c.h.b16 %v259
        %v341 = vunpack.c.l.b16 %v260
        %v342 = vunpack.c.h.b16 %v260
        %v343 = vunpack.c.l.b16 %v261
        %v344 = vunpack.c.h.b16 %v261
        %v345 = vunpack.c.l.b16 %v262
        %v346 = vunpack.c.h.b16 %v262
        %v347 = vunpack.c.l.b16 %v263
        %v348 = vunpack.c.h.b16 %v263
        %v349 = vunpack.c.l.b16 %v264
        %v350 = vunpack.c.h.b16 %v264
        %v351 = vunpack.c.l.b16 %v265
        %v352 = vunpack.c.h.b16 %v265
        %v353 = vunpack.c.l.b16 %v266
        %v354 = vunpack.c.h.b16 %v266
        %v355 = vpack.c.b16 %v343, %v339
        %v356 = vpack.c.b16 %v344, %v340
        %v357 = vpack.c.b16 %v345, %v341
        %v358 = vpack.c.b16 %v346, %v342
        %v359 = vpack.c.b16 %v351, %v347
        %v360 = vpack.c.b16 %v352, %v348
        %v361 = vpack.c.b16 %v353, %v349
        %v362 = vpack.c.b16 %v354, %v350
        %v435 = vunpack.c.l.b16 %v267
        %v436 = vunpack.c.l.b16 %v268
        %v437 = vunpack.c.l.b16 %v269
        %v438 = vunpack.c.l.b16 %v270
        %v439 = vunpack.c.l.b16 %v271
        %v440 = vunpack.c.l.b16 %v272
        %v441 = vunpack.c.l.b16 %v273
        %v442 = vunpack.c.l.b16 %v274
        %v443 = vunpack.c.l.b16 %v275
        %v444 = vunpack.c.l.b16 %v276
        %v445 = vunpack.c.l.b16 %v277
        %v446 = vunpack.c.l.b16 %v278
        %v447 = vunpack.c.l.b16 %v279
        %v448 = vunpack.c.l.b16 %v280
        %v449 = vunpack.c.l.b16 %v281
        %v450 = vunpack.c.l.b16 %v282
        %v451 = vunpack.c.l.b16 %v283
        %v452 = vunpack.c.l.b16 %v284
        %v453 = vunpack.c.l.b16 %v285
        %v454 = vunpack.c.l.b16 %v286
        %v455 = vunpack.c.l.b16 %v287
        %v456 = vunpack.c.l.b16 %v288
        %v457 = vunpack.c.l.b16 %v289
        %v458 = vunpack.c.l.b16 %v290
        %v459 = vunpack.c.l.b16 %v291
        %v460 = vunpack.c.l.b16 %v292
        %v461 = vunpack.c.l.b16 %v293
        %v462 = vunpack.c.l.b16 %v294
        %v463 = vunpack.c.l.b16 %v295
        %v464 = vunpack.c.l.b16 %v296
        %v465 = vunpack.c.l.b16 %v297
        %v466 = vunpack.c.l.b16 %v298
        %v467 = vunpack.c.l.b16 %v299
        %v468 = vunpack.c.l.b16 %v300
        %v469 = vunpack.c.l.b16 %v301
        %v470 = vunpack.c.l.b16 %v302
        %v471 = vunpack.c.l.b16 %v303
        %v472 = vunpack.c.l.b16 %v304
        %v473 = vunpack.c.l.b16 %v305
        %v474 = vunpack.c.l.b16 %v306
        %v475 = vunpack.c.l.b16 %v307
        %v476 = vunpack.c.l.b16 %v308
        %v477 = vunpack.c.l.b16 %v309
        %v478 = vunpack.c.l.b16 %v310
        %v479 = vunpack.c.l.b16 %v311
        %v480 = vunpack.c.l.b16 %v312
        %v481 = vunpack.c.l.b16 %v313
        %v482 = vunpack.c.l.b16 %v314
        %v483 = vunpack.c.l.b16 %v315
        %v484 = vunpack.c.l.b16 %v316
        %v485 = vunpack.c.l.b16 %v317
        %v486 = vunpack.c.l.b16 %v318
        %v487 = vunpack.c.l.b16 %v319
        %v488 = vunpack.c.l.b16 %v320
        %v489 = vunpack.c.l.b16 %v321
        %v490 = vunpack.c.l.b16 %v322
        %v491 = vunpack.c.l.b16 %v323
        %v492 = vunpack.c.l.b16 %v324
        %v493 = vunpack.c.l.b16 %v325
        %v494 = vunpack.c.l.b16 %v326
        %v495 = vunpack.c.l.b16 %v327
        %v496 = vunpack.c.l.b16 %v328
        %v497 = vunpack.c.l.b16 %v329
        %v498 = vunpack.c.l.b16 %v330
        %v499 = vpack.c.b16 %v436, %v435
        %v500 = vpack.c.b16 %v438, %v437
        %v501 = vpack.c.b16 %v440, %v439
        %v502 = vpack.c.b16 %v442, %v441
        %v503 = vpack.c.b16 %v444, %v443
        %v504 = vpack.c.b16 %v446, %v445
        %v505 = vpack.c.b16 %v448, %v447
        %v506 = vpack.c.b16 %v450, %v449
        %v507 = vpack.c.b16 %v452, %v451
        %v508 = vpack.c.b16 %v454, %v453
        %v509 = vpack.c.b16 %v456, %v455
        %v510 = vpack.c.b16 %v458, %v457
        %v511 = vpack.c.b16 %v460, %v459
        %v512 = vpack.c.b16 %v462, %v461
        %v513 = vpack.c.b16 %v464, %v463
        %v514 = vpack.c.b16 %v466, %v465
        %v515 = vpack.c.b16 %v468, %v467
        %v516 = vpack.c.b16 %v470, %v469
        %v517 = vpack.c.b16 %v472, %v471
        %v518 = vpack.c.b16 %v474, %v473
        %v519 = vpack.c.b16 %v476, %v475
        %v520 = vpack.c.b16 %v478, %v477
        %v521 = vpack.c.b16 %v480, %v479
        %v522 = vpack.c.b16 %v482, %v481
        %v523 = vpack.c.b16 %v484, %v483
        %v524 = vpack.c.b16 %v486, %v485
        %v525 = vpack.c.b16 %v488, %v487
        %v526 = vpack.c.b16 %v490, %v489
        %v527 = vpack.c.b16 %v492, %v491
        %v528 = vpack.c.b16 %v494, %v493
        %v529 = vpack.c.b16 %v496, %v495
        %v530 = vpack.c.b16 %v498, %v497
        %563 = vmatprep.subr.bf16.mxu0 0
        %564 = vmatpush1.bf16.msra.mxu0 %v499
        %565 = vmatprep.subr.bf16.mxu0 0
        %566 = vmatpush1.bf16.msra.mxu0 %v500
        %567 = vmatprep.subr.bf16.mxu0 0
        %568 = vmatpush1.bf16.msra.mxu0 %v501
        %569 = vmatprep.subr.bf16.mxu0 0
        %570 = vmatpush1.bf16.msra.mxu0 %v502
        %571 = vmatprep.subr.bf16.mxu0 0
        %572 = vmatpush1.bf16.msra.mxu0 %v503
        %573 = vmatprep.subr.bf16.mxu0 0
        %574 = vmatpush1.bf16.msra.mxu0 %v504
        %575 = vmatprep.subr.bf16.mxu0 0
        %576 = vmatpush1.bf16.msra.mxu0 %v505
        %577 = vmatprep.subr.bf16.mxu0 0
        %578 = vmatpush1.bf16.msra.mxu0 %v506
        %579 = vmatprep.subr.bf16.mxu0 0
        %580 = vmatpush1.bf16.msra.mxu0 %v507
        %581 = vmatprep.subr.bf16.mxu0 0
        %582 = vmatpush1.bf16.msra.mxu0 %v508
        %583 = vmatprep.subr.bf16.mxu0 0
        %584 = vmatpush1.bf16.msra.mxu0 %v509
        %585 = vmatprep.subr.bf16.mxu0 0
        %586 = vmatpush1.bf16.msra.mxu0 %v510
        %587 = vmatprep.subr.bf16.mxu0 0
        %588 = vmatpush1.bf16.msra.mxu0 %v511
        %589 = vmatprep.subr.bf16.mxu0 0
        %590 = vmatpush1.bf16.msra.mxu0 %v512
        %591 = vmatprep.subr.bf16.mxu0 0
        %592 = vmatpush1.bf16.msra.mxu0 %v513
        %593 = vmatprep.subr.bf16.mxu0 0
        %594 = vmatpush1.bf16.msra.mxu0 %v514
        %595 = vmatprep.mubr.bf16.mxu0 %v356
        %596 = vmatmul.mubr.bf16.gmra.mrb[0].mxu0 %v355
        %v597 = vpop.f32.mrb[0].mxu0
        %v598 = vadd.f32 0.0, %v597
        %v599 = vpop.f32.mrb[0].mxu0
        %v600 = vpop.f32.mrb[0].mxu0
        %v601 = vadd.f32 0.0, %v600
        %v602 = vpop.f32.mrb[0].mxu0
        %603 = vmatprep.mubr.bf16.mxu0 %v360
        %604 = vmatmul.mubr.bf16.gmra.mrb[0].mxu0 %v359
        %v605 = vpop.f32.mrb[0].mxu0
        %v606 = vadd.f32 0.0, %v605
        %v607 = vpop.f32.mrb[0].mxu0
        %v608 = vpop.f32.mrb[0].mxu0
        %v609 = vadd.f32 0.0, %v608
        %v610 = vpop.f32.mrb[0].mxu0
        %611 = vdwg.mxu0
        %612 = vmatprep.subr.bf16.mxu0 0
        %613 = vmatpush1.bf16.msra.mxu0 %v515
        %614 = vmatprep.subr.bf16.mxu0 0
        %615 = vmatpush1.bf16.msra.mxu0 %v516
        %616 = vmatprep.subr.bf16.mxu0 0
        %617 = vmatpush1.bf16.msra.mxu0 %v517
        %618 = vmatprep.subr.bf16.mxu0 0
        %619 = vmatpush1.bf16.msra.mxu0 %v518
        %620 = vmatprep.subr.bf16.mxu0 0
        %621 = vmatpush1.bf16.msra.mxu0 %v519
        %622 = vmatprep.subr.bf16.mxu0 0
        %623 = vmatpush1.bf16.msra.mxu0 %v520
        %624 = vmatprep.subr.bf16.mxu0 0
        %625 = vmatpush1.bf16.msra.mxu0 %v521
        %626 = vmatprep.subr.bf16.mxu0 0
        %627 = vmatpush1.bf16.msra.mxu0 %v522
        %628 = vmatprep.subr.bf16.mxu0 0
        %629 = vmatpush1.bf16.msra.mxu0 %v523
        %630 = vmatprep.subr.bf16.mxu0 0
        %631 = vmatpush1.bf16.msra.mxu0 %v524
        %632 = vmatprep.subr.bf16.mxu0 0
        %633 = vmatpush1.bf16.msra.mxu0 %v525
        %634 = vmatprep.subr.bf16.mxu0 0
        %635 = vmatpush1.bf16.msra.mxu0 %v526
        %636 = vmatprep.subr.bf16.mxu0 0
        %637 = vmatpush1.bf16.msra.mxu0 %v527
        %638 = vmatprep.subr.bf16.mxu0 0
        %639 = vmatpush1.bf16.msra.mxu0 %v528
        %640 = vmatprep.subr.bf16.mxu0 0
        %641 = vmatpush1.bf16.msra.mxu0 %v529
        %642 = vmatprep.subr.bf16.mxu0 0
        %643 = vmatpush1.bf16.msra.mxu0 %v530
        %644 = vmatprep.mubr.bf16.mxu0 %v358
        %645 = vmatmul.mubr.bf16.gmra.mrb[0].mxu0 %v357
        %v646 = vpop.f32.mrb[0].mxu0
        %v647 = vadd.f32 %v598, %v646
        %v648 = vpop.f32.mrb[0].mxu0
        %v649 = vpop.f32.mrb[0].mxu0
        %v650 = vadd.f32 %v601, %v649
        %v651 = vpop.f32.mrb[0].mxu0
        %652 = vmatprep.mubr.bf16.mxu0 %v362
        %653 = vmatmul.mubr.bf16.gmra.mrb[0].mxu0 %v361
        %v654 = vpop.f32.mrb[0].mxu0
        %v655 = vadd.f32 %v606, %v654
        %v656 = vpop.f32.mrb[0].mxu0
        %v657 = vpop.f32.mrb[0].mxu0
        %v658 = vadd.f32 %v609, %v657
        %v659 = vpop.f32.mrb[0].mxu0
        %660 = vdwg.mxu0
        %v661 = vadd.f32 %v255, %v647
        %v662 = vadd.f32 %v256, %v650
        %v663 = vadd.f32 %v257, %v655
        %v664 = vadd.f32 %v258, %v658
        %665 = vst [vmem:[#allocation2] sm:$0xff] %v661
        %666 = vst [vmem:[#allocation2 + $0x8] sm:$0xff] %v662
        %667 = vst [vmem:[#allocation2 + $0x10] sm:$0xff] %v663
        %668 = vst [vmem:[#allocation2 + $0x18] sm:$0xff] %v664
        %p669 = scmp.eq.s32.totalorder %s20, 1
        // Predicated region
        $region56: #{generator_forward.29} parent=46 // pred_check
          %p670 = pneg %p669
        $region57: #{generator_forward.29} parent=46 // pred_check_branch
          %672 = sbr.rel (%p670) target = $region59
        $region58: #{generator_forward.29} parent=46 // pred_region
          %v673 = vld [vmem:[#allocation2] sm:$0xff]
          %v674 = vld [vmem:[#allocation2 + $0x8] sm:$0xff]
          %v675 = vld [vmem:[#allocation2 + $0x10] sm:$0xff]
          %v676 = vld [vmem:[#allocation2 + $0x18] sm:$0xff]
          %677 = vst [vmem:[%s244] sm:$0xff] %v673
          %678 = vst [vmem:[%s244 + $0x8] sm:$0xff] %v674
          %679 = vst [vmem:[%s244 + $0x10] sm:$0xff] %v675
          %680 = vst [vmem:[%s244 + $0x18] sm:$0xff] %v676
        $region59: #{generator_forward.29} parent=46 // pred_fallthru
          _
        %s681 = smul.u32 4, %s18
        %p682 = scmp.lt.s32.totalorder %s681, 3
        %s683 = scalar_select %p682, %s681, 3
        %p684 = scmp.lt.s32.totalorder %s19, 0
        %s685 = scalar_select %p684, %s19, 0
        %s686 = sadd.s32 %s685, %s683
        %s687 = smul.addr %s686, 8
        %s688 = scalar_lea.vmem %s2, %s687
        // Predicated region
        $region60: #{generator_forward.29} parent=46 // pred_check
          %p689 = pneg %p108
        $region61: #{generator_forward.29} parent=46 // pred_check_branch
          %691 = sbr.rel (%p689) target = $region63
        $region62: #{generator_forward.29} parent=46 // pred_region
          %s692 = smul.u32 4, %s18
        $region63: #{generator_forward.29} parent=46 // pred_fallthru
          _
        // Predicated region
        $region64: #{generator_forward.29} parent=46 // pred_check
          %p693 = pneg %p108
        $region65: #{generator_forward.29} parent=46 // pred_check_branch
          %695 = sbr.rel (%p693) target = $region67
        $region66: #{generator_forward.29} parent=46 // pred_region
          %s696 = smul.u32 4, %s18
          %p697 = scmp.lt.s32.totalorder %s696, 3
          %s698 = scalar_select %p697, %s696, 3
          %p699 = scmp.lt.s32.totalorder %s19, 0
          %s700 = scalar_select %p699, %s19, 0
          %s701 = sadd.s32 %s700, %s698
          %s702 = smul.addr %s701, 8
          %s703 = scalar_lea.vmem %s2, %s702
        $region67: #{generator_forward.29} parent=46 // pred_fallthru
          _
      $region47: #{generator_forward.29} parent=5 // pred_fallthru
        _
      %p704 = scmp.le.s32.totalorder 2, %s8
      // Predicated region
      $region68: #{generator_forward.29} parent=5 // pred_check
        %p705 = pneg %p704
      $region69: #{generator_forward.29} parent=5 // pred_check_branch
        %707 = sbr.rel (%p705) target = $region71
      $region70: #{generator_forward.29} parent=5 // pred_region
        %s708 = ssub.s32 %s8, 2
      $region71: #{generator_forward.29} parent=5 // pred_fallthru
        _
    $region6: #{generator_forward.29} parent=1 // loop_footer
      %s12 = sadd.s32 1, %s8
    $region7: #{generator_forward.29} parent=1 // loop_footer_branch
      %7 = sbr.rel target = $region3
    $region8: #{generator_forward.29} parent=1 // loop_exit
      _

// kernel: generator_forward.34
$region0: #{generator_forward.34}
  #allocation0 [shape = 'u32[]', space=smem, size = 0x4, offset = 0x4, fixed_abs, tag = 'smem constant byte address 0x4 - core index']
  #allocation1 [shape = 'u32[144,128]{1,0:T(1,128)}', space=vmem, size = 0x12000, scoped, tag = 'internal scratch']
  %s0 = inlined_call_operand.vmem [shape: f32[2,16,128], index: 0, kind: input, shape index: {}]
  %s1 = inlined_call_operand.vmem [shape: f32[1,128], index: 1, kind: input, shape index: {}]
  %s2 = inlined_call_operand.vmem [shape: f32[1,128], index: 2, kind: input, shape index: {}]
  %s3 = inlined_call_operand.vmem [shape: f32[2,16,128], index: 3, kind: input, shape index: {}]
  %s4 = inlined_call_operand.vmem [shape: f32[2,16,128], index: 4, kind: output, shape index: {}]
  %s5 = sld [smem:[#allocation0]]
  $region49: #{generator_forward.34} parent=0
    _
  %s7 = ssub.s32 1, %s5
  %s8 = scalar_select 0, %s7, %s5
  loop: start=0, step=1, limit=4
  $region2: #{generator_forward.34} parent=0 // loop_pre_header
    _
  $region3: #{generator_forward.34} parent=0 // loop_header
    %s10 = sphi 0, %s14
    %p11 = scmp.ge.s32.totalorder %s10, 4
    %s17 = sphi 0, %s29
    %s18 = sphi 0, %s25
    %s19 = sphi 0, %s17
    %s20 = sphi 0, %s18
    %s21 = sphi 0, %s19
    %s22 = sphi 0, %s20
    %s34 = sphi 0, %s36
    %s37 = sphi 0, %s34
    %s38 = sphi 0, %s37
    %s54 = sphi 0, %s38
    %s60 = sphi 0, %s62
    %s63 = sphi 0, %s60
    %s64 = sphi 0, %s63
    %s80 = sphi 0, %s64
    %s86 = sphi 0, %s88
    %s89 = sphi 0, %s86
    %s90 = sphi 0, %s89
    %s106 = sphi 0, %s90
    %s114 = sphi 0, %s116
    %s117 = sphi 0, %s114
    %s118 = sphi 0, %s117
    %s134 = sphi 0, %s118
    %s142 = sphi 0, %s144
    %s145 = sphi 0, %s142
    %s146 = sphi 0, %s145
    %s162 = sphi 0, %s146
  $region4: #{generator_forward.34} parent=0 // loop_header_branch
    %13 = sbr.rel (%p11) target = $region8
  $region5: #{generator_forward.34} parent=0 // loop_body
    %s15 = ssub.s32 %s10, 1
    %s16 = ssub.s32 %s10, 2
    %s23 = sadd.s32 1, %s18
    %p24 = scmp.ge.s32.totalorder %s23, 1
    %s25 = scalar_select %p24, 0, %s23
    %s26 = sadd.s32 1, %s17
    %s27 = scalar_select %p24, %s26, %s17
    %p28 = scmp.ge.s32.totalorder %s27, 2
    %s29 = scalar_select %p28, 0, %s27
    %s30 = ssub.s32 %s17, %s29
    %s31 = ssub.s32 %s18, %s25
    %s32 = sor.u32 %s30, %s31
    %p33 = scmp.eq.s32.totalorder %s32, 0
    %s35 = sadd.s32 %s34, 1
    %s36 = scalar_select %p33, %s34, %s35
    %p39 = pneg %p33
    %p40 = scmp.eq.s32.totalorder %s10, 1
    %p41 = por %p39, %p40
    %p42 = scmp.ne.s32.totalorder %s34, %s37
    %p43 = scmp.eq.s32.totalorder %s10, 0
    %p44 = por %p42, %p43
    %p45 = scmp.ne.s32.totalorder %s34, %s37
    %p46 = scmp.eq.s32.totalorder %s15, 1
    %p47 = por %p45, %p46
    %p48 = scmp.ne.s32.totalorder %s37, %s38
    %p49 = scmp.eq.s32.totalorder %s15, 0
    %p50 = por %p48, %p49
    %p51 = scmp.ne.s32.totalorder %s37, %s38
    %p52 = scmp.eq.s32.totalorder %s16, 1
    %p53 = por %p51, %p52
    %p55 = scmp.ne.s32.totalorder %s38, %s54
    %p56 = scmp.eq.s32.totalorder %s16, 0
    %p57 = por %p55, %p56
    %s58 = ssub.s32 %s18, %s25
    %p59 = scmp.eq.s32.totalorder %s58, 0
    %s61 = sadd.s32 %s60, 1
    %s62 = scalar_select %p59, %s60, %s61
    %p65 = pneg %p59
    %p66 = scmp.eq.s32.totalorder %s10, 1
    %p67 = por %p65, %p66
    %p68 = scmp.ne.s32.totalorder %s60, %s63
    %p69 = scmp.eq.s32.totalorder %s10, 0
    %p70 = por %p68, %p69
    %p71 = scmp.ne.s32.totalorder %s60, %s63
    %p72 = scmp.eq.s32.totalorder %s15, 1
    %p73 = por %p71, %p72
    %p74 = scmp.ne.s32.totalorder %s63, %s64
    %p75 = scmp.eq.s32.totalorder %s15, 0
    %p76 = por %p74, %p75
    %p77 = scmp.ne.s32.totalorder %s63, %s64
    %p78 = scmp.eq.s32.totalorder %s16, 1
    %p79 = por %p77, %p78
    %p81 = scmp.ne.s32.totalorder %s64, %s80
    %p82 = scmp.eq.s32.totalorder %s16, 0
    %p83 = por %p81, %p82
    %s84 = ssub.s32 %s18, %s25
    %p85 = scmp.eq.s32.totalorder %s84, 0
    %s87 = sadd.s32 %s86, 1
    %s88 = scalar_select %p85, %s86, %s87
    %p91 = pneg %p85
    %p92 = scmp.eq.s32.totalorder %s10, 1
    %p93 = por %p91, %p92
    %p94 = scmp.ne.s32.totalorder %s86, %s89
    %p95 = scmp.eq.s32.totalorder %s10, 0
    %p96 = por %p94, %p95
    %p97 = scmp.ne.s32.totalorder %s86, %s89
    %p98 = scmp.eq.s32.totalorder %s15, 1
    %p99 = por %p97, %p98
    %p100 = scmp.ne.s32.totalorder %s89, %s90
    %p101 = scmp.eq.s32.totalorder %s15, 0
    %p102 = por %p100, %p101
    %p103 = scmp.ne.s32.totalorder %s89, %s90
    %p104 = scmp.eq.s32.totalorder %s16, 1
    %p105 = por %p103, %p104
    %p107 = scmp.ne.s32.totalorder %s90, %s106
    %p108 = scmp.eq.s32.totalorder %s16, 0
    %p109 = por %p107, %p108
    %s110 = ssub.s32 %s17, %s29
    %s111 = ssub.s32 %s18, %s25
    %s112 = sor.u32 %s110, %s111
    %p113 = scmp.eq.s32.totalorder %s112, 0
    %s115 = sadd.s32 %s114, 1
    %s116 = scalar_select %p113, %s114, %s115
    %p119 = pneg %p113
    %p120 = scmp.eq.s32.totalorder %s10, 1
    %p121 = por %p119, %p120
    %p122 = scmp.ne.s32.totalorder %s114, %s117
    %p123 = scmp.eq.s32.totalorder %s10, 0
    %p124 = por %p122, %p123
    %p125 = scmp.ne.s32.totalorder %s114, %s117
    %p126 = scmp.eq.s32.totalorder %s15, 1
    %p127 = por %p125, %p126
    %p128 = scmp.ne.s32.totalorder %s117, %s118
    %p129 = scmp.eq.s32.totalorder %s15, 0
    %p130 = por %p128, %p129
    %p131 = scmp.ne.s32.totalorder %s117, %s118
    %p132 = scmp.eq.s32.totalorder %s16, 1
    %p133 = por %p131, %p132
    %p135 = scmp.ne.s32.totalorder %s118, %s134
    %p136 = scmp.eq.s32.totalorder %s16, 0
    %p137 = por %p135, %p136
    %s138 = ssub.s32 %s17, %s29
    %s139 = ssub.s32 %s18, %s25
    %s140 = sor.u32 %s138, %s139
    %p141 = scmp.eq.s32.totalorder %s140, 0
    %s143 = sadd.s32 %s142, 1
    %s144 = scalar_select %p141, %s142, %s143
    %p147 = pneg %p141
    %p148 = scmp.eq.s32.totalorder %s10, 1
    %p149 = por %p147, %p148
    %p150 = scmp.ne.s32.totalorder %s142, %s145
    %p151 = scmp.eq.s32.totalorder %s10, 0
    %p152 = por %p150, %p151
    %p153 = scmp.ne.s32.totalorder %s142, %s145
    %p154 = scmp.eq.s32.totalorder %s15, 1
    %p155 = por %p153, %p154
    %p156 = scmp.ne.s32.totalorder %s145, %s146
    %p157 = scmp.eq.s32.totalorder %s15, 0
    %p158 = por %p156, %p157
    %p159 = scmp.ne.s32.totalorder %s145, %s146
    %p160 = scmp.eq.s32.totalorder %s16, 1
    %p161 = por %p159, %p160
    %p163 = scmp.ne.s32.totalorder %s146, %s162
    %p164 = scmp.eq.s32.totalorder %s16, 0
    %p165 = por %p163, %p164
    %p166 = scmp.le.s32.totalorder 1, %s10
    %p167 = scmp.lt.s32.totalorder %s10, 3
    %p168 = pnand %p166, %p167
    %p169 = pneg %p168
    // Predicated region
    $region9: #{generator_forward.34} parent=5 // pred_check
      _
    $region10: #{generator_forward.34} parent=5 // pred_check_branch
      %171 = sbr.rel (%p168) target = $region12
    $region11: #{generator_forward.34} parent=5 // pred_region
      %s172 = ssub.s32 %s10, 1
      // Predicated region
      $region13: #{generator_forward.34} parent=11 // pred_check
        %p173 = pneg %p76
      $region14: #{generator_forward.34} parent=11 // pred_check_branch
        %175 = sbr.rel (%p173) target = $region16
      $region15: #{generator_forward.34} parent=11 // pred_region
        %p176 = scmp.lt.s32.totalorder %s20, 0
        %s177 = scalar_select %p176, %s20, 0
        %s178 = scalar_lea.vmem %s1, %s177
      $region16: #{generator_forward.34} parent=11 // pred_fallthru
        _
      // Predicated region
      $region17: #{generator_forward.34} parent=11 // pred_check
        %p179 = pneg %p102
      $region18: #{generator_forward.34} parent=11 // pred_check_branch
        %181 = sbr.rel (%p179) target = $region20
      $region19: #{generator_forward.34} parent=11 // pred_region
        %p182 = scmp.lt.s32.totalorder %s20, 0
        %s183 = scalar_select %p182, %s20, 0
        %s184 = scalar_lea.vmem %s2, %s183
      $region20: #{generator_forward.34} parent=11 // pred_fallthru
        _
    $region12: #{generator_forward.34} parent=5 // pred_fallthru
      _
    %p185 = scmp.lt.s32.totalorder %s10, 2
    // Predicated region
    $region21: #{generator_forward.34} parent=5 // pred_check
      %p186 = pneg %p185
    $region22: #{generator_forward.34} parent=5 // pred_check_branch
      %188 = sbr.rel (%p186) target = $region24
    $region23: #{generator_forward.34} parent=5 // pred_region
      // Predicated region
      $region25: #{generator_forward.34} parent=23 // pred_check
        %p189 = pneg %p44
      $region26: #{generator_forward.34} parent=23 // pred_check_branch
        %191 = sbr.rel (%p189) target = $region28
      $region27: #{generator_forward.34} parent=23 // pred_region
        %p192 = scmp.lt.s32.totalorder %s17, 1
        %s193 = scalar_select %p192, %s17, 1
        %p194 = scmp.lt.s32.totalorder %s18, 0
        %s195 = scalar_select %p194, %s18, 0
        %s196 = smul.addr %s193, 2
        %s197 = sadd.s32 %s195, %s196
        %s198 = smul.addr %s197, 8
        %s199 = scalar_lea.vmem %s0, %s198
      $region28: #{generator_forward.34} parent=23 // pred_fallthru
        _
      // Predicated region
      $region29: #{generator_forward.34} parent=23 // pred_check
        %p200 = pneg %p124
      $region30: #{generator_forward.34} parent=23 // pred_check_branch
        %202 = sbr.rel (%p200) target = $region32
      $region31: #{generator_forward.34} parent=23 // pred_region
        %p203 = scmp.lt.s32.totalorder %s17, 1
        %s204 = scalar_select %p203, %s17, 1
        %p205 = scmp.lt.s32.totalorder %s18, 0
        %s206 = scalar_select %p205, %s18, 0
        %s207 = smul.addr %s204, 2
        %s208 = sadd.s32 %s206, %s207
        %s209 = smul.addr %s208, 8
        %s210 = scalar_lea.vmem %s3, %s209
      $region32: #{generator_forward.34} parent=23 // pred_fallthru
        _
    $region24: #{generator_forward.34} parent=5 // pred_fallthru
      _
    %p211 = scmp.le.s32.totalorder 1, %s10
    %p212 = scmp.lt.s32.totalorder %s10, 3
    %p213 = pnand %p211, %p212
    %p214 = pneg %p213
    // Predicated region
    $region33: #{generator_forward.34} parent=5 // pred_check
      _
    $region34: #{generator_forward.34} parent=5 // pred_check_branch
      %216 = sbr.rel (%p213) target = $region36
    $region35: #{generator_forward.34} parent=5 // pred_region
      %s217 = ssub.s32 %s10, 1
      %p218 = scmp.lt.s32.totalorder %s19, 1
      %s219 = scalar_select %p218, %s19, 1
      %p220 = scmp.lt.s32.totalorder %s20, 0
      %s221 = scalar_select %p220, %s20, 0
      %s222 = smul.addr %s219, 2
      %s223 = sadd.s32 %s221, %s222
      %s224 = smul.addr %s223, 8
      %s225 = scalar_lea.vmem %s0, %s224
      %p226 = pneg %p50
      %p227 = pneg %p47
      %p228 = scmp.lt.s32.totalorder %s20, 0
      %s229 = scalar_select %p228, %s20, 0
      %s230 = scalar_lea.vmem %s1, %s229
      %p231 = pneg %p76
      %p232 = pneg %p73
      %p233 = scmp.lt.s32.totalorder %s20, 0
      %s234 = scalar_select %p233, %s20, 0
      %s235 = scalar_lea.vmem %s2, %s234
      %p236 = pneg %p102
      %p237 = pneg %p99
      %p238 = scmp.lt.s32.totalorder %s19, 1
      %s239 = scalar_select %p238, %s19, 1
      %p240 = scmp.lt.s32.totalorder %s20, 0
      %s241 = scalar_select %p240, %s20, 0
      %s242 = smul.addr %s239, 2
      %s243 = sadd.s32 %s241, %s242
      %s244 = smul.addr %s243, 8
      %s245 = scalar_lea.vmem %s3, %s244
      %p246 = pneg %p130
      %p247 = pneg %p127
      %p248 = pneg %p158
      %p249 = pneg %p155
      %p250 = scmp.lt.s32.totalorder %s19, 1
      %s251 = scalar_select %p250, %s19, 1
      %p252 = scmp.lt.s32.totalorder %s20, 0
      %s253 = scalar_select %p252, %s20, 0
      %s254 = smul.addr %s251, 2
      %s255 = sadd.s32 %s253, %s254
      %s256 = smul.addr %s255, 8
      %s257 = scalar_lea.vmem %s4, %s256
      %p258 = scmp.lt.s32.totalorder %s19, 1
      %s259 = scalar_select %p258, %s19, 1
      %p260 = scmp.lt.s32.totalorder %s20, 0
      %s261 = scalar_select %p260, %s20, 0
      %s262 = smul.addr %s259, 2
      %s263 = sadd.s32 %s261, %s262
      %s264 = smul.addr %s263, 8
      %s265 = scalar_lea.vmem %s0, %s264
      %p266 = scmp.lt.s32.totalorder %s20, 0
      %s267 = scalar_select %p266, %s20, 0
      %s268 = scalar_lea.vmem %s1, %s267
      %p269 = scmp.lt.s32.totalorder %s20, 0
      %s270 = scalar_select %p269, %s20, 0
      %s271 = scalar_lea.vmem %s2, %s270
      %p272 = scmp.lt.s32.totalorder %s19, 1
      %s273 = scalar_select %p272, %s19, 1
      %p274 = scmp.lt.s32.totalorder %s20, 0
      %s275 = scalar_select %p274, %s20, 0
      %s276 = smul.addr %s273, 2
      %s277 = sadd.s32 %s275, %s276
      %s278 = smul.addr %s277, 8
      %s279 = scalar_lea.vmem %s3, %s278
      %p280 = scmp.lt.s32.totalorder %s19, 1
      %s281 = scalar_select %p280, %s19, 1
      %p282 = scmp.lt.s32.totalorder %s20, 0
      %s283 = scalar_select %p282, %s20, 0
      %s284 = smul.addr %s281, 2
      %s285 = sadd.s32 %s283, %s284
      %s286 = smul.addr %s285, 8
      %s287 = scalar_lea.vmem %s4, %s286
      %v288 = vld [vmem:[%s265] sm:$0xff]
      %v289 = vld [vmem:[%s265 + $0x8] sm:$0xff]
      %v290 = vadd.f32 %v288, %v289
      %v291 = vrot.slane %v290, 4
      %v292 = vadd.f32 %v290, %v291
      %v293 = vrot.slane %v292, 2
      %v294 = vadd.f32 %v292, %v293
      %v295 = vrot.slane %v294, 1
      %v296 = vadd.f32 %v294, %v295
      %v297 = vrcp.pop 16.0
      %v298 = vmul.f32 %v296, %v297
      %v299 = vsub.f32 %v288, %v298
      %v300 = vsub.f32 %v289, %v298
      %v301 = vmul.f32 %v299, %v299
      %v302 = vmul.f32 %v300, %v300
      %v303 = vadd.f32 %v301, %v302
      %v304 = vrot.slane %v303, 4
      %v305 = vadd.f32 %v303, %v304
      %v306 = vrot.slane %v305, 2
      %v307 = vadd.f32 %v305, %v306
      %v308 = vrot.slane %v307, 1
      %v309 = vadd.f32 %v307, %v308
      %v310 = vmul.f32 %v309, %v297
      %v311 = vadd.f32 %v310, 1e-05
      %v312 = vrsqrt.pop %v311
      %v313 = vmul.f32 %v299, %v312
      %v314 = vmul.f32 %v300, %v312
      %v315 = vld [vmem:[%s268] sm:$0x1]
      %v317 = vlaneseq
      %v318 = vshrl.u32 %v317, 7
      %v319 = vsub.s32 0, %v318
      %v320 = vrot.slane %v315, %v319
      %v322 = vmul.f32 %v313, %v320
      %v323 = vmul.f32 %v314, %v320
      %v324 = vld [vmem:[%s271] sm:$0x1]
      %v326 = vlaneseq
      %v327 = vshrl.u32 %v326, 7
      %v328 = vsub.s32 0, %v327
      %v329 = vrot.slane %v324, %v328
      %v331 = vadd.f32 %v322, %v329
      %v332 = vadd.f32 %v323, %v329
      %v333 = vld [vmem:[%s279] sm:$0xff]
      %v334 = vld [vmem:[%s279 + $0x8] sm:$0xff]
      %v335 = vadd.f32 %v331, %v333
      %v336 = vadd.f32 %v332, %v334
      %337 = vst [vmem:[%s287] sm:$0xff] %v335
      %338 = vst [vmem:[%s287 + $0x8] sm:$0xff] %v336
      %p339 = scmp.lt.s32.totalorder %s19, 1
      %s340 = scalar_select %p339, %s19, 1
      %p341 = scmp.lt.s32.totalorder %s20, 0
      %s342 = scalar_select %p341, %s20, 0
      %s343 = smul.addr %s340, 2
      %s344 = sadd.s32 %s342, %s343
      %s345 = smul.addr %s344, 8
      %s346 = scalar_lea.vmem %s4, %s345
      // Predicated region
      $region37: #{generator_forward.34} parent=35 // pred_check
        %p347 = pneg %p155
      $region38: #{generator_forward.34} parent=35 // pred_check_branch
        %349 = sbr.rel (%p347) target = $region40
      $region39: #{generator_forward.34} parent=35 // pred_region
        _
      $region40: #{generator_forward.34} parent=35 // pred_fallthru
        _
    $region36: #{generator_forward.34} parent=5 // pred_fallthru
      _
    %p350 = scmp.le.s32.totalorder 2, %s10
    // Predicated region
    $region41: #{generator_forward.34} parent=5 // pred_check
      %p351 = pneg %p350
    $region42: #{generator_forward.34} parent=5 // pred_check_branch
      %353 = sbr.rel (%p351) target = $region44
    $region43: #{generator_forward.34} parent=5 // pred_region
      %s354 = ssub.s32 %s10, 2
      // Predicated region
      $region45: #{generator_forward.34} parent=43 // pred_check
        %p355 = pneg %p161
      $region46: #{generator_forward.34} parent=43 // pred_check_branch
        %357 = sbr.rel (%p355) target = $region48
      $region47: #{generator_forward.34} parent=43 // pred_region
        %p358 = scmp.lt.s32.totalorder %s21, 1
        %s359 = scalar_select %p358, %s21, 1
        %p360 = scmp.lt.s32.totalorder %s22, 0
        %s361 = scalar_select %p360, %s22, 0
        %s362 = smul.addr %s359, 2
        %s363 = sadd.s32 %s361, %s362
        %s364 = smul.addr %s363, 8
        %s365 = scalar_lea.vmem %s4, %s364
      $region48: #{generator_forward.34} parent=43 // pred_fallthru
        _
    $region44: #{generator_forward.34} parent=5 // pred_fallthru
      _
  $region6: #{generator_forward.34} parent=0 // loop_footer
    %s14 = sadd.s32 1, %s10
  $region7: #{generator_forward.34} parent=0 // loop_footer_branch
    %9 = sbr.rel target = $region3
  $region8: #{generator_forward.34} parent=0 // loop_exit
    _

// kernel: generator_forward.31
$region0: #{generator_forward.31}
  #allocation0 [shape = 'u32[]', space=smem, size = 0x4, offset = 0x4, fixed_abs, tag = 'smem constant byte address 0x4 - core index']
  #allocation1 [shape = 'u32[144,128]{1,0:T(1,128)}', space=vmem, size = 0x12000, scoped, tag = 'internal scratch']
  #allocation2 [shape = 'f32[32,128]{1,0:T(8,128)}', space=vmem, size = 0x4000, scoped, tag = 'scratch operand']
  %s0 = inlined_call_operand.vmem [shape: bf16[32,1536], index: 0, kind: input, shape index: {}]
  %s1 = inlined_call_operand.vmem [shape: bf16[1536,128], index: 1, kind: input, shape index: {}]
  %s2 = inlined_call_operand.vmem [shape: f32[32,128], index: 2, kind: output, shape index: {}]
  %s3 = sld [smem:[#allocation0]]
  $region72: #{generator_forward.31} parent=0
    _
  %s5 = ssub.s32 1, %s3
  %s6 = scalar_select 0, %s5, %s3
  $region1: #{generator_forward.31} parent=0
    #allocation3 [shape = 'u8[65536]{0}', space=vmem, size = 0x10000, scoped, tag = 'input window, operand 0']
    loop: start=0, step=1, limit=5
    $region2: #{generator_forward.31} parent=1 // loop_pre_header
      _
    $region3: #{generator_forward.31} parent=1 // loop_header
      %s8 = sphi 0, %s12
      %p9 = scmp.ge.s32.totalorder %s8, 5
      %s15 = sphi 0, %s34
      %s16 = sphi 0, %s30
      %s17 = sphi 0, %s26
      %s18 = sphi 0, %s15
      %s19 = sphi 0, %s16
      %s20 = sphi 0, %s17
      %s21 = sphi 0, %s18
      %s22 = sphi 0, %s19
      %s23 = sphi 0, %s20
      %s39 = sphi 0, %s41
      %s42 = sphi 0, %s39
      %s43 = sphi 0, %s42
      %s59 = sphi 0, %s43
      %s67 = sphi 0, %s69
      %s70 = sphi 0, %s67
      %s71 = sphi 0, %s70
      %s87 = sphi 0, %s71
      %s95 = sphi 0, %s97
      %s98 = sphi 0, %s95
      %s99 = sphi 0, %s98
      %s115 = sphi 0, %s99
    $region4: #{generator_forward.31} parent=1 // loop_header_branch
      %11 = sbr.rel (%p9) target = $region8
    $region5: #{generator_forward.31} parent=1 // loop_body
      %s13 = ssub.s32 %s8, 1
      %s14 = ssub.s32 %s8, 2
      %s24 = sadd.s32 1, %s17
      %p25 = scmp.ge.s32.totalorder %s24, 3
      %s26 = scalar_select %p25, 0, %s24
      %s27 = sadd.s32 1, %s16
      %s28 = scalar_select %p25, %s27, %s16
      %p29 = scmp.ge.s32.totalorder %s28, 1
      %s30 = scalar_select %p29, 0, %s28
      %s31 = sadd.s32 1, %s15
      %s32 = scalar_select %p29, %s31, %s15
      %p33 = scmp.ge.s32.totalorder %s32, 1
      %s34 = scalar_select %p33, 0, %s32
      %s35 = ssub.s32 %s15, %s34
      %s36 = ssub.s32 %s17, %s26
      %s37 = sor.u32 %s35, %s36
      %p38 = scmp.eq.s32.totalorder %s37, 0
      %s40 = sadd.s32 %s39, 1
      %s41 = scalar_select %p38, %s39, %s40
      %p44 = pneg %p38
      %p45 = scmp.eq.s32.totalorder %s8, 2
      %p46 = por %p44, %p45
      %p47 = scmp.ne.s32.totalorder %s39, %s42
      %p48 = scmp.eq.s32.totalorder %s8, 0
      %p49 = por %p47, %p48
      %p50 = scmp.ne.s32.totalorder %s39, %s42
      %p51 = scmp.eq.s32.totalorder %s13, 2
      %p52 = por %p50, %p51
      %p53 = scmp.ne.s32.totalorder %s42, %s43
      %p54 = scmp.eq.s32.totalorder %s13, 0
      %p55 = por %p53, %p54
      %p56 = scmp.ne.s32.totalorder %s42, %s43
      %p57 = scmp.eq.s32.totalorder %s14, 2
      %p58 = por %p56, %p57
      %p60 = scmp.ne.s32.totalorder %s43, %s59
      %p61 = scmp.eq.s32.totalorder %s14, 0
      %p62 = por %p60, %p61
      %s63 = ssub.s32 %s17, %s26
      %s64 = ssub.s32 %s16, %s30
      %s65 = sor.u32 %s63, %s64
      %p66 = scmp.eq.s32.totalorder %s65, 0
      %s68 = sadd.s32 %s67, 1
      %s69 = scalar_select %p66, %s67, %s68
      %p72 = pneg %p66
      %p73 = scmp.eq.s32.totalorder %s8, 2
      %p74 = por %p72, %p73
      %p75 = scmp.ne.s32.totalorder %s67, %s70
      %p76 = scmp.eq.s32.totalorder %s8, 0
      %p77 = por %p75, %p76
      %p78 = scmp.ne.s32.totalorder %s67, %s70
      %p79 = scmp.eq.s32.totalorder %s13, 2
      %p80 = por %p78, %p79
      %p81 = scmp.ne.s32.totalorder %s70, %s71
      %p82 = scmp.eq.s32.totalorder %s13, 0
      %p83 = por %p81, %p82
      %p84 = scmp.ne.s32.totalorder %s70, %s71
      %p85 = scmp.eq.s32.totalorder %s14, 2
      %p86 = por %p84, %p85
      %p88 = scmp.ne.s32.totalorder %s71, %s87
      %p89 = scmp.eq.s32.totalorder %s14, 0
      %p90 = por %p88, %p89
      %s91 = ssub.s32 %s15, %s34
      %s92 = ssub.s32 %s16, %s30
      %s93 = sor.u32 %s91, %s92
      %p94 = scmp.eq.s32.totalorder %s93, 0
      %s96 = sadd.s32 %s95, 1
      %s97 = scalar_select %p94, %s95, %s96
      %p100 = pneg %p94
      %p101 = scmp.eq.s32.totalorder %s8, 2
      %p102 = por %p100, %p101
      %p103 = scmp.ne.s32.totalorder %s95, %s98
      %p104 = scmp.eq.s32.totalorder %s8, 0
      %p105 = por %p103, %p104
      %p106 = scmp.ne.s32.totalorder %s95, %s98
      %p107 = scmp.eq.s32.totalorder %s13, 2
      %p108 = por %p106, %p107
      %p109 = scmp.ne.s32.totalorder %s98, %s99
      %p110 = scmp.eq.s32.totalorder %s13, 0
      %p111 = por %p109, %p110
      %p112 = scmp.ne.s32.totalorder %s98, %s99
      %p113 = scmp.eq.s32.totalorder %s14, 2
      %p114 = por %p112, %p113
      %p116 = scmp.ne.s32.totalorder %s99, %s115
      %p117 = scmp.eq.s32.totalorder %s14, 0
      %p118 = por %p116, %p117
      %p119 = scmp.le.s32.totalorder 1, %s8
      %p120 = scmp.lt.s32.totalorder %s8, 4
      %p121 = pnand %p119, %p120
      %p122 = pneg %p121
      // Predicated region
      $region9: #{generator_forward.31} parent=5 // pred_check
        _
      $region10: #{generator_forward.31} parent=5 // pred_check_branch
        %124 = sbr.rel (%p121) target = $region12
      $region11: #{generator_forward.31} parent=5 // pred_region
        %s125 = ssub.s32 %s8, 1
      $region12: #{generator_forward.31} parent=5 // pred_fallthru
        _
      %p126 = scmp.lt.s32.totalorder %s8, 3
      // Predicated region
      $region13: #{generator_forward.31} parent=5 // pred_check
        %p127 = pneg %p126
      $region14: #{generator_forward.31} parent=5 // pred_check_branch
        %129 = sbr.rel (%p127) target = $region16
      $region15: #{generator_forward.31} parent=5 // pred_region
        // Predicated region
        $region17: #{generator_forward.31} parent=15 // pred_check
          %p130 = pneg %p49
        $region18: #{generator_forward.31} parent=15 // pred_check_branch
          %132 = sbr.rel (%p130) target = $region20
        $region19: #{generator_forward.31} parent=15 // pred_region
          %s133 = sand.u32 %s39, 1
          %s134 = sand.u32 %s39, 1
          %s135 = smul.addr %s134, 64
          %s136 = scalar_lea.vmem [#allocation3], %s135
          %s137 = smul.u32 4, %s15
          %s138 = smul.u32 4, %s17
          %s139 = smul.addr %s137, 12
          %s140 = sadd.s32 %s138, %s139
          %s141 = smul.addr %s140, 4
          %s142 = scalar_lea.vmem %s0, %s141
          // Predicated region
          $region21: #{generator_forward.31} parent=19 // pred_check
            _
          $region22: #{generator_forward.31} parent=19 // pred_check_branch
            %144 = sbr.rel (0) target = $region24
          $region23: #{generator_forward.31} parent=19 // pred_region
            // Predicated region
            $region25: #{generator_forward.31} parent=23 // pred_check
              _
            $region26: #{generator_forward.31} parent=23 // pred_check_branch
              %146 = sbr.rel (0) target = $region28
            $region27: #{generator_forward.31} parent=23 // pred_region
              loop: start=0, step=1, limit=1
              $region29: #{generator_forward.31} parent=27 // loop_pre_header
                _
              $region30: #{generator_forward.31} parent=27 // loop_header
                %s148 = sphi 0, %s152
                %p149 = scmp.ge.s32.totalorder %s148, 1
                %s153 = sphi %s142, %s142
                %s154 = sphi %s136, %s136
              $region31: #{generator_forward.31} parent=27 // loop_header_branch
                %151 = sbr.rel (%p149) target = $region35
              $region32: #{generator_forward.31} parent=27 // loop_body
                %v155 = vld [vmem:[%s153] sm:$0xff]
                %156 = vst [vmem:[%s154] sm:$0xff] %v155
                %v157 = vld [vmem:[%s153 + $0x8] sm:$0xff]
                %158 = vst [vmem:[%s154 + $0x8] sm:$0xff] %v157
                %v159 = vld [vmem:[%s153 + $0x30] sm:$0xff]
                %160 = vst [vmem:[%s154 + $0x10] sm:$0xff] %v159
                %v161 = vld [vmem:[%s153 + $0x38] sm:$0xff]
                %162 = vst [vmem:[%s154 + $0x18] sm:$0xff] %v161
                %v163 = vld [vmem:[%s153 + $0x60] sm:$0xff]
                %164 = vst [vmem:[%s154 + $0x20] sm:$0xff] %v163
                %v165 = vld [vmem:[%s153 + $0x68] sm:$0xff]
                %166 = vst [vmem:[%s154 + $0x28] sm:$0xff] %v165
                %v167 = vld [vmem:[%s153 + $0x90] sm:$0xff]
                %168 = vst [vmem:[%s154 + $0x30] sm:$0xff] %v167
                %v169 = vld [vmem:[%s153 + $0x98] sm:$0xff]
                %170 = vst [vmem:[%s154 + $0x38] sm:$0xff] %v169
              $region33: #{generator_forward.31} parent=27 // loop_footer
                %s152 = sadd.s32 1, %s148
              $region34: #{generator_forward.31} parent=27 // loop_footer_branch
                %147 = sbr.rel target = $region30
              $region35: #{generator_forward.31} parent=27 // loop_exit
                _
            $region28: #{generator_forward.31} parent=23 // pred_fallthru
              _
            // Predicated region
            $region36: #{generator_forward.31} parent=23 // pred_check
              _
            $region37: #{generator_forward.31} parent=23 // pred_check_branch
              %172 = sbr.rel target = $region39
            $region38: #{generator_forward.31} parent=23 // pred_region
              _
            $region39: #{generator_forward.31} parent=23 // pred_fallthru
              _
          $region24: #{generator_forward.31} parent=19 // pred_fallthru
            _
          %173 = vnop
        $region20: #{generator_forward.31} parent=15 // pred_fallthru
          _
        // Predicated region
        $region40: #{generator_forward.31} parent=15 // pred_check
          %p174 = pneg %p77
        $region41: #{generator_forward.31} parent=15 // pred_check_branch
          %176 = sbr.rel (%p174) target = $region43
        $region42: #{generator_forward.31} parent=15 // pred_region
          %s177 = smul.u32 64, %s17
          %p178 = scmp.lt.s32.totalorder %s177, 191
          %s179 = scalar_select %p178, %s177, 191
          %p180 = scmp.lt.s32.totalorder %s16, 0
          %s181 = scalar_select %p180, %s16, 0
          %s182 = sadd.s32 %s181, %s179
          %s183 = smul.addr %s182, 4
          %s184 = scalar_lea.vmem %s1, %s183
          %s185 = smul.u32 64, %s17
        $region43: #{generator_forward.31} parent=15 // pred_fallthru
          _
      $region16: #{generator_forward.31} parent=5 // pred_fallthru
        _
      %p186 = scmp.le.s32.totalorder 1, %s8
      %p187 = scmp.lt.s32.totalorder %s8, 4
      %p188 = pnand %p186, %p187
      %p189 = pneg %p188
      // Predicated region
      $region44: #{generator_forward.31} parent=5 // pred_check
        _
      $region45: #{generator_forward.31} parent=5 // pred_check_branch
        %191 = sbr.rel (%p188) target = $region47
      $region46: #{generator_forward.31} parent=5 // pred_region
        %s192 = ssub.s32 %s8, 1
        %s193 = sand.u32 %s42, 1
        %s194 = sand.u32 %s42, 1
        %s195 = smul.addr %s194, 64
        %s196 = scalar_lea.vmem [#allocation3], %s195
        // Predicated region
        $region48: #{generator_forward.31} parent=46 // pred_check
          %p197 = pneg %p55
        $region49: #{generator_forward.31} parent=46 // pred_check_branch
          %199 = sbr.rel (%p197) target = $region51
        $region50: #{generator_forward.31} parent=46 // pred_region
          _
        $region51: #{generator_forward.31} parent=46 // pred_fallthru
          _
        %s200 = sand.u32 %s42, 1
        %s201 = sand.u32 %s42, 1
        %s202 = smul.addr %s201, 64
        %s203 = scalar_lea.vmem [#allocation3], %s202
        %p204 = pneg %p55
        %p205 = pneg %p52
        %s206 = smul.u32 64, %s20
        %p207 = scmp.lt.s32.totalorder %s206, 191
        %s208 = scalar_select %p207, %s206, 191
        %p209 = scmp.lt.s32.totalorder %s19, 0
        %s210 = scalar_select %p209, %s19, 0
        %s211 = sadd.s32 %s210, %s208
        %s212 = smul.addr %s211, 4
        %s213 = scalar_lea.vmem %s1, %s212
        %p214 = pneg %p83
        %p215 = pneg %p80
        %p216 = pneg %p111
        %p217 = pneg %p108
        %s218 = smul.u32 4, %s18
        %p219 = scmp.lt.s32.totalorder %s218, 3
        %s220 = scalar_select %p219, %s218, 3
        %p221 = scmp.lt.s32.totalorder %s19, 0
        %s222 = scalar_select %p221, %s19, 0
        %s223 = sadd.s32 %s222, %s220
        %s224 = smul.addr %s223, 8
        %s225 = scalar_lea.vmem %s2, %s224
        %s226 = smul.u32 4, %s18
        %s227 = smul.u32 4, %s20
        %s228 = smul.u32 64, %s20
        %p229 = scmp.lt.s32.totalorder %s228, 191
        %s230 = scalar_select %p229, %s228, 191
        %p231 = scmp.lt.s32.totalorder %s19, 0
        %s232 = scalar_select %p231, %s19, 0
        %s233 = sadd.s32 %s232, %s230
        %s234 = smul.addr %s233, 4
        %s235 = scalar_lea.vmem %s1, %s234
        %s236 = smul.u32 64, %s20
        %s237 = smul.u32 4, %s18
        %p238 = scmp.lt.s32.totalorder %s237, 3
        %s239 = scalar_select %p238, %s237, 3
        %p240 = scmp.lt.s32.totalorder %s19, 0
        %s241 = scalar_select %p240, %s19, 0
        %s242 = sadd.s32 %s241, %s239
        %s243 = smul.addr %s242, 8
        %s244 = scalar_lea.vmem %s2, %s243
        %s245 = smul.u32 4, %s18
        %p247 = scmp.eq.s32.totalorder %s20, 0
        // Predicated region
        $region52: #{generator_forward.31} parent=46 // pred_check
          %p248 = pneg %p247
        $region53: #{generator_forward.31} parent=46 // pred_check_branch
          %250 = sbr.rel (%p248) target = $region55
        $region54: #{generator_forward.31} parent=46 // pred_region
          %251 = vst [vmem:[#allocation2] sm:$0xff] 0.0
          %252 = vst [vmem:[#allocation2 + $0x8] sm:$0xff] 0.0
          %253 = vst [vmem:[#allocation2 + $0x10] sm:$0xff] 0.0
          %254 = vst [vmem:[#allocation2 + $0x18] sm:$0xff] 0.0
        $region55: #{generator_forward.31} parent=46 // pred_fallthru
          _
        %v255 = vld [vmem:[#allocation2] sm:$0xff]
        %v256 = vld [vmem:[#allocation2 + $0x8] sm:$0xff]
        %v257 = vld [vmem:[#allocation2 + $0x10] sm:$0xff]
        %v258 = vld [vmem:[#allocation2 + $0x18] sm:$0xff]
        %v259 = vld [vmem:[%s196] sm:$0xff]
        %v260 = vld [vmem:[%s196 + $0x8] sm:$0xff]
        %v261 = vld [vmem:[%s196 + $0x10] sm:$0xff]
        %v262 = vld [vmem:[%s196 + $0x18] sm:$0xff]
        %v263 = vld [vmem:[%s196 + $0x20] sm:$0xff]
        %v264 = vld [vmem:[%s196 + $0x28] sm:$0xff]
        %v265 = vld [vmem:[%s196 + $0x30] sm:$0xff]
        %v266 = vld [vmem:[%s196 + $0x38] sm:$0xff]
        %v267 = vld [vmem:[%s235] sm:$0xf]
        %v268 = vld [vmem:[%s235 + $0x4] sm:$0xf]
        %v269 = vld [vmem:[%s235 + $0x8] sm:$0xf]
        %v270 = vld [vmem:[%s235 + $0xc] sm:$0xf]
        %v271 = vld [vmem:[%s235 + $0x10] sm:$0xf]
        %v272 = vld [vmem:[%s235 + $0x14] sm:$0xf]
        %v273 = vld [vmem:[%s235 + $0x18] sm:$0xf]
        %v274 = vld [vmem:[%s235 + $0x1c] sm:$0xf]
        %v275 = vld [vmem:[%s235 + $0x20] sm:$0xf]
        %v276 = vld [vmem:[%s235 + $0x24] sm:$0xf]
        %v277 = vld [vmem:[%s235 + $0x28] sm:$0xf]
        %v278 = vld [vmem:[%s235 + $0x2c] sm:$0xf]
        %v279 = vld [vmem:[%s235 + $0x30] sm:$0xf]
        %v280 = vld [vmem:[%s235 + $0x34] sm:$0xf]
        %v281 = vld [vmem:[%s235 + $0x38] sm:$0xf]
        %v282 = vld [vmem:[%s235 + $0x3c] sm:$0xf]
        %v283 = vld [vmem:[%s235 + $0x40] sm:$0xf]
        %v284 = vld [vmem:[%s235 + $0x44] sm:$0xf]
        %v285 = vld [vmem:[%s235 + $0x48] sm:$0xf]
        %v286 = vld [vmem:[%s235 + $0x4c] sm:$0xf]
        %v287 = vld [vmem:[%s235 + $0x50] sm:$0xf]
        %v288 = vld [vmem:[%s235 + $0x54] sm:$0xf]
        %v289 = vld [vmem:[%s235 + $0x58] sm:$0xf]
        %v290 = vld [vmem:[%s235 + $0x5c] sm:$0xf]
        %v291 = vld [vmem:[%s235 + $0x60] sm:$0xf]
        %v292 = vld [vmem:[%s235 + $0x64] sm:$0xf]
        %v293 = vld [vmem:[%s235 + $0x68] sm:$0xf]
        %v294 = vld [vmem:[%s235 + $0x6c] sm:$0xf]
        %v295 = vld [vmem:[%s235 + $0x70] sm:$0xf]
        %v296 = vld [vmem:[%s235 + $0x74] sm:$0xf]
        %v297 = vld [vmem:[%s235 + $0x78] sm:$0xf]
        %v298 = vld [vmem:[%s235 + $0x7c] sm:$0xf]
        %v299 = vld [vmem:[%s235 + $0x80] sm:$0xf]
        %v300 = vld [vmem:[%s235 + $0x84] sm:$0xf]
        %v301 = vld [vmem:[%s235 + $0x88] sm:$0xf]
        %v302 = vld [vmem:[%s235 + $0x8c] sm:$0xf]
        %v303 = vld [vmem:[%s235 + $0x90] sm:$0xf]
        %v304 = vld [vmem:[%s235 + $0x94] sm:$0xf]
        %v305 = vld [vmem:[%s235 + $0x98] sm:$0xf]
        %v306 = vld [vmem:[%s235 + $0x9c] sm:$0xf]
        %v307 = vld [vmem:[%s235 + $0xa0] sm:$0xf]
        %v308 = vld [vmem:[%s235 + $0xa4] sm:$0xf]
        %v309 = vld [vmem:[%s235 + $0xa8] sm:$0xf]
        %v310 = vld [vmem:[%s235 + $0xac] sm:$0xf]
        %v311 = vld [vmem:[%s235 + $0xb0] sm:$0xf]
        %v312 = vld [vmem:[%s235 + $0xb4] sm:$0xf]
        %v313 = vld [vmem:[%s235 + $0xb8] sm:$0xf]
        %v314 = vld [vmem:[%s235 + $0xbc] sm:$0xf]
        %v315 = vld [vmem:[%s235 + $0xc0] sm:$0xf]
        %v316 = vld [vmem:[%s235 + $0xc4] sm:$0xf]
        %v317 = vld [vmem:[%s235 + $0xc8] sm:$0xf]
        %v318 = vld [vmem:[%s235 + $0xcc] sm:$0xf]
        %v319 = vld [vmem:[%s235 + $0xd0] sm:$0xf]
        %v320 = vld [vmem:[%s235 + $0xd4] sm:$0xf]
        %v321 = vld [vmem:[%s235 + $0xd8] sm:$0xf]
        %v322 = vld [vmem:[%s235 + $0xdc] sm:$0xf]
        %v323 = vld [vmem:[%s235 + $0xe0] sm:$0xf]
        %v324 = vld [vmem:[%s235 + $0xe4] sm:$0xf]
        %v325 = vld [vmem:[%s235 + $0xe8] sm:$0xf]
        %v326 = vld [vmem:[%s235 + $0xec] sm:$0xf]
        %v327 = vld [vmem:[%s235 + $0xf0] sm:$0xf]
        %v328 = vld [vmem:[%s235 + $0xf4] sm:$0xf]
        %v329 = vld [vmem:[%s235 + $0xf8] sm:$0xf]
        %v330 = vld [vmem:[%s235 + $0xfc] sm:$0xf]
        %v339 = vunpack.c.l.b16 %v259
        %v340 = vunpack.c.h.b16 %v259
        %v341 = vunpack.c.l.b16 %v260
        %v342 = vunpack.c.h.b16 %v260
        %v343 = vunpack.c.l.b16 %v261
        %v344 = vunpack.c.h.b16 %v261
        %v345 = vunpack.c.l.b16 %v262
        %v346 = vunpack.c.h.b16 %v262
        %v347 = vunpack.c.l.b16 %v263
        %v348 = vunpack.c.h.b16 %v263
        %v349 = vunpack.c.l.b16 %v264
        %v350 = vunpack.c.h.b16 %v264
        %v351 = vunpack.c.l.b16 %v265
        %v352 = vunpack.c.h.b16 %v265
        %v353 = vunpack.c.l.b16 %v266
        %v354 = vunpack.c.h.b16 %v266
        %v355 = vpack.c.b16 %v343, %v339
        %v356 = vpack.c.b16 %v344, %v340
        %v357 = vpack.c.b16 %v345, %v341
        %v358 = vpack.c.b16 %v346, %v342
        %v359 = vpack.c.b16 %v351, %v347
        %v360 = vpack.c.b16 %v352, %v348
        %v361 = vpack.c.b16 %v353, %v349
        %v362 = vpack.c.b16 %v354, %v350
        %v435 = vunpack.c.l.b16 %v267
        %v436 = vunpack.c.l.b16 %v268
        %v437 = vunpack.c.l.b16 %v269
        %v438 = vunpack.c.l.b16 %v270
        %v439 = vunpack.c.l.b16 %v271
        %v440 = vunpack.c.l.b16 %v272
        %v441 = vunpack.c.l.b16 %v273
        %v442 = vunpack.c.l.b16 %v274
        %v443 = vunpack.c.l.b16 %v275
        %v444 = vunpack.c.l.b16 %v276
        %v445 = vunpack.c.l.b16 %v277
        %v446 = vunpack.c.l.b16 %v278
        %v447 = vunpack.c.l.b16 %v279
        %v448 = vunpack.c.l.b16 %v280
        %v449 = vunpack.c.l.b16 %v281
        %v450 = vunpack.c.l.b16 %v282
        %v451 = vunpack.c.l.b16 %v283
        %v452 = vunpack.c.l.b16 %v284
        %v453 = vunpack.c.l.b16 %v285
        %v454 = vunpack.c.l.b16 %v286
        %v455 = vunpack.c.l.b16 %v287
        %v456 = vunpack.c.l.b16 %v288
        %v457 = vunpack.c.l.b16 %v289
        %v458 = vunpack.c.l.b16 %v290
        %v459 = vunpack.c.l.b16 %v291
        %v460 = vunpack.c.l.b16 %v292
        %v461 = vunpack.c.l.b16 %v293
        %v462 = vunpack.c.l.b16 %v294
        %v463 = vunpack.c.l.b16 %v295
        %v464 = vunpack.c.l.b16 %v296
        %v465 = vunpack.c.l.b16 %v297
        %v466 = vunpack.c.l.b16 %v298
        %v467 = vunpack.c.l.b16 %v299
        %v468 = vunpack.c.l.b16 %v300
        %v469 = vunpack.c.l.b16 %v301
        %v470 = vunpack.c.l.b16 %v302
        %v471 = vunpack.c.l.b16 %v303
        %v472 = vunpack.c.l.b16 %v304
        %v473 = vunpack.c.l.b16 %v305
        %v474 = vunpack.c.l.b16 %v306
        %v475 = vunpack.c.l.b16 %v307
        %v476 = vunpack.c.l.b16 %v308
        %v477 = vunpack.c.l.b16 %v309
        %v478 = vunpack.c.l.b16 %v310
        %v479 = vunpack.c.l.b16 %v311
        %v480 = vunpack.c.l.b16 %v312
        %v481 = vunpack.c.l.b16 %v313
        %v482 = vunpack.c.l.b16 %v314
        %v483 = vunpack.c.l.b16 %v315
        %v484 = vunpack.c.l.b16 %v316
        %v485 = vunpack.c.l.b16 %v317
        %v486 = vunpack.c.l.b16 %v318
        %v487 = vunpack.c.l.b16 %v319
        %v488 = vunpack.c.l.b16 %v320
        %v489 = vunpack.c.l.b16 %v321
        %v490 = vunpack.c.l.b16 %v322
        %v491 = vunpack.c.l.b16 %v323
        %v492 = vunpack.c.l.b16 %v324
        %v493 = vunpack.c.l.b16 %v325
        %v494 = vunpack.c.l.b16 %v326
        %v495 = vunpack.c.l.b16 %v327
        %v496 = vunpack.c.l.b16 %v328
        %v497 = vunpack.c.l.b16 %v329
        %v498 = vunpack.c.l.b16 %v330
        %v499 = vpack.c.b16 %v436, %v435
        %v500 = vpack.c.b16 %v438, %v437
        %v501 = vpack.c.b16 %v440, %v439
        %v502 = vpack.c.b16 %v442, %v441
        %v503 = vpack.c.b16 %v444, %v443
        %v504 = vpack.c.b16 %v446, %v445
        %v505 = vpack.c.b16 %v448, %v447
        %v506 = vpack.c.b16 %v450, %v449
        %v507 = vpack.c.b16 %v452, %v451
        %v508 = vpack.c.b16 %v454, %v453
        %v509 = vpack.c.b16 %v456, %v455
        %v510 = vpack.c.b16 %v458, %v457
        %v511 = vpack.c.b16 %v460, %v459
        %v512 = vpack.c.b16 %v462, %v461
        %v513 = vpack.c.b16 %v464, %v463
        %v514 = vpack.c.b16 %v466, %v465
        %v515 = vpack.c.b16 %v468, %v467
        %v516 = vpack.c.b16 %v470, %v469
        %v517 = vpack.c.b16 %v472, %v471
        %v518 = vpack.c.b16 %v474, %v473
        %v519 = vpack.c.b16 %v476, %v475
        %v520 = vpack.c.b16 %v478, %v477
        %v521 = vpack.c.b16 %v480, %v479
        %v522 = vpack.c.b16 %v482, %v481
        %v523 = vpack.c.b16 %v484, %v483
        %v524 = vpack.c.b16 %v486, %v485
        %v525 = vpack.c.b16 %v488, %v487
        %v526 = vpack.c.b16 %v490, %v489
        %v527 = vpack.c.b16 %v492, %v491
        %v528 = vpack.c.b16 %v494, %v493
        %v529 = vpack.c.b16 %v496, %v495
        %v530 = vpack.c.b16 %v498, %v497
        %563 = vmatprep.subr.bf16.mxu0 0
        %564 = vmatpush1.bf16.msra.mxu0 %v499
        %565 = vmatprep.subr.bf16.mxu0 0
        %566 = vmatpush1.bf16.msra.mxu0 %v500
        %567 = vmatprep.subr.bf16.mxu0 0
        %568 = vmatpush1.bf16.msra.mxu0 %v501
        %569 = vmatprep.subr.bf16.mxu0 0
        %570 = vmatpush1.bf16.msra.mxu0 %v502
        %571 = vmatprep.subr.bf16.mxu0 0
        %572 = vmatpush1.bf16.msra.mxu0 %v503
        %573 = vmatprep.subr.bf16.mxu0 0
        %574 = vmatpush1.bf16.msra.mxu0 %v504
        %575 = vmatprep.subr.bf16.mxu0 0
        %576 = vmatpush1.bf16.msra.mxu0 %v505
        %577 = vmatprep.subr.bf16.mxu0 0
        %578 = vmatpush1.bf16.msra.mxu0 %v506
        %579 = vmatprep.subr.bf16.mxu0 0
        %580 = vmatpush1.bf16.msra.mxu0 %v507
        %581 = vmatprep.subr.bf16.mxu0 0
        %582 = vmatpush1.bf16.msra.mxu0 %v508
        %583 = vmatprep.subr.bf16.mxu0 0
        %584 = vmatpush1.bf16.msra.mxu0 %v509
        %585 = vmatprep.subr.bf16.mxu0 0
        %586 = vmatpush1.bf16.msra.mxu0 %v510
        %587 = vmatprep.subr.bf16.mxu0 0
        %588 = vmatpush1.bf16.msra.mxu0 %v511
        %589 = vmatprep.subr.bf16.mxu0 0
        %590 = vmatpush1.bf16.msra.mxu0 %v512
        %591 = vmatprep.subr.bf16.mxu0 0
        %592 = vmatpush1.bf16.msra.mxu0 %v513
        %593 = vmatprep.subr.bf16.mxu0 0
        %594 = vmatpush1.bf16.msra.mxu0 %v514
        %595 = vmatprep.mubr.bf16.mxu0 %v356
        %596 = vmatmul.mubr.bf16.gmra.mrb[0].mxu0 %v355
        %v597 = vpop.f32.mrb[0].mxu0
        %v598 = vadd.f32 0.0, %v597
        %v599 = vpop.f32.mrb[0].mxu0
        %v600 = vpop.f32.mrb[0].mxu0
        %v601 = vadd.f32 0.0, %v600
        %v602 = vpop.f32.mrb[0].mxu0
        %603 = vmatprep.mubr.bf16.mxu0 %v360
        %604 = vmatmul.mubr.bf16.gmra.mrb[0].mxu0 %v359
        %v605 = vpop.f32.mrb[0].mxu0
        %v606 = vadd.f32 0.0, %v605
        %v607 = vpop.f32.mrb[0].mxu0
        %v608 = vpop.f32.mrb[0].mxu0
        %v609 = vadd.f32 0.0, %v608
        %v610 = vpop.f32.mrb[0].mxu0
        %611 = vdwg.mxu0
        %612 = vmatprep.subr.bf16.mxu0 0
        %613 = vmatpush1.bf16.msra.mxu0 %v515
        %614 = vmatprep.subr.bf16.mxu0 0
        %615 = vmatpush1.bf16.msra.mxu0 %v516
        %616 = vmatprep.subr.bf16.mxu0 0
        %617 = vmatpush1.bf16.msra.mxu0 %v517
        %618 = vmatprep.subr.bf16.mxu0 0
        %619 = vmatpush1.bf16.msra.mxu0 %v518
        %620 = vmatprep.subr.bf16.mxu0 0
        %621 = vmatpush1.bf16.msra.mxu0 %v519
        %622 = vmatprep.subr.bf16.mxu0 0
        %623 = vmatpush1.bf16.msra.mxu0 %v520
        %624 = vmatprep.subr.bf16.mxu0 0
        %625 = vmatpush1.bf16.msra.mxu0 %v521
        %626 = vmatprep.subr.bf16.mxu0 0
        %627 = vmatpush1.bf16.msra.mxu0 %v522
        %628 = vmatprep.subr.bf16.mxu0 0
        %629 = vmatpush1.bf16.msra.mxu0 %v523
        %630 = vmatprep.subr.bf16.mxu0 0
        %631 = vmatpush1.bf16.msra.mxu0 %v524
        %632 = vmatprep.subr.bf16.mxu0 0
        %633 = vmatpush1.bf16.msra.mxu0 %v525
        %634 = vmatprep.subr.bf16.mxu0 0
        %635 = vmatpush1.bf16.msra.mxu0 %v526
        %636 = vmatprep.subr.bf16.mxu0 0
        %637 = vmatpush1.bf16.msra.mxu0 %v527
        %638 = vmatprep.subr.bf16.mxu0 0
        %639 = vmatpush1.bf16.msra.mxu0 %v528
        %640 = vmatprep.subr.bf16.mxu0 0
        %641 = vmatpush1.bf16.msra.mxu0 %v529
        %642 = vmatprep.subr.bf16.mxu0 0
        %643 = vmatpush1.bf16.msra.mxu0 %v530
        %644 = vmatprep.mubr.bf16.mxu0 %v358
        %645 = vmatmul.mubr.bf16.gmra.mrb[0].mxu0 %v357
        %v646 = vpop.f32.mrb[0].mxu0
        %v647 = vadd.f32 %v598, %v646
        %v648 = vpop.f32.mrb[0].mxu0
        %v649 = vpop.f32.mrb[0].mxu0
        %v650 = vadd.f32 %v601, %v649
        %v651 = vpop.f32.mrb[0].mxu0
        %652 = vmatprep.mubr.bf16.mxu0 %v362
        %653 = vmatmul.mubr.bf16.gmra.mrb[0].mxu0 %v361
        %v654 = vpop.f32.mrb[0].mxu0
        %v655 = vadd.f32 %v606, %v654
        %v656 = vpop.f32.mrb[0].mxu0
        %v657 = vpop.f32.mrb[0].mxu0
        %v658 = vadd.f32 %v609, %v657
        %v659 = vpop.f32.mrb[0].mxu0
        %660 = vdwg.mxu0
        %v661 = vadd.f32 %v255, %v647
        %v662 = vadd.f32 %v256, %v650
        %v663 = vadd.f32 %v257, %v655
        %v664 = vadd.f32 %v258, %v658
        %665 = vst [vmem:[#allocation2] sm:$0xff] %v661
        %666 = vst [vmem:[#allocation2 + $0x8] sm:$0xff] %v662
        %667 = vst [vmem:[#allocation2 + $0x10] sm:$0xff] %v663
        %668 = vst [vmem:[#allocation2 + $0x18] sm:$0xff] %v664
        %p669 = scmp.eq.s32.totalorder %s20, 2
        // Predicated region
        $region56: #{generator_forward.31} parent=46 // pred_check
          %p670 = pneg %p669
        $region57: #{generator_forward.31} parent=46 // pred_check_branch
          %672 = sbr.rel (%p670) target = $region59
        $region58: #{generator_forward.31} parent=46 // pred_region
          %v673 = vld [vmem:[#allocation2] sm:$0xff]
          %v674 = vld [vmem:[#allocation2 + $0x8] sm:$0xff]
          %v675 = vld [vmem:[#allocation2 + $0x10] sm:$0xff]
          %v676 = vld [vmem:[#allocation2 + $0x18] sm:$0xff]
          %677 = vst [vmem:[%s244] sm:$0xff] %v673
          %678 = vst [vmem:[%s244 + $0x8] sm:$0xff] %v674
          %679 = vst [vmem:[%s244 + $0x10] sm:$0xff] %v675
          %680 = vst [vmem:[%s244 + $0x18] sm:$0xff] %v676
        $region59: #{generator_forward.31} parent=46 // pred_fallthru
          _
        %s681 = smul.u32 4, %s18
        %p682 = scmp.lt.s32.totalorder %s681, 3
        %s683 = scalar_select %p682, %s681, 3
        %p684 = scmp.lt.s32.totalorder %s19, 0
        %s685 = scalar_select %p684, %s19, 0
        %s686 = sadd.s32 %s685, %s683
        %s687 = smul.addr %s686, 8
        %s688 = scalar_lea.vmem %s2, %s687
        // Predicated region
        $region60: #{generator_forward.31} parent=46 // pred_check
          %p689 = pneg %p108
        $region61: #{generator_forward.31} parent=46 // pred_check_branch
          %691 = sbr.rel (%p689) target = $region63
        $region62: #{generator_forward.31} parent=46 // pred_region
          %s692 = smul.u32 4, %s18
        $region63: #{generator_forward.31} parent=46 // pred_fallthru
          _
        // Predicated region
        $region64: #{generator_forward.31} parent=46 // pred_check
          %p693 = pneg %p108
        $region65: #{generator_forward.31} parent=46 // pred_check_branch
          %695 = sbr.rel (%p693) target = $region67
        $region66: #{generator_forward.31} parent=46 // pred_region
          %s696 = smul.u32 4, %s18
          %p697 = scmp.lt.s32.totalorder %s696, 3
          %s698 = scalar_select %p697, %s696, 3
          %p699 = scmp.lt.s32.totalorder %s19, 0
          %s700 = scalar_select %p699, %s19, 0
          %s701 = sadd.s32 %s700, %s698
          %s702 = smul.addr %s701, 8
          %s703 = scalar_lea.vmem %s2, %s702
        $region67: #{generator_forward.31} parent=46 // pred_fallthru
          _
      $region47: #{generator_forward.31} parent=5 // pred_fallthru
        _
      %p704 = scmp.le.s32.totalorder 2, %s8
      // Predicated region
      $region68: #{generator_forward.31} parent=5 // pred_check
        %p705 = pneg %p704
      $region69: #{generator_forward.31} parent=5 // pred_check_branch
        %707 = sbr.rel (%p705) target = $region71
      $region70: #{generator_forward.31} parent=5 // pred_region
        %s708 = ssub.s32 %s8, 2
      $region71: #{generator_forward.31} parent=5 // pred_fallthru
        _
    $region6: #{generator_forward.31} parent=1 // loop_footer
      %s12 = sadd.s32 1, %s8
    $region7: #{generator_forward.31} parent=1 // loop_footer_branch
      %7 = sbr.rel target = $region3
    $region8: #{generator_forward.31} parent=1 // loop_exit
      _

// kernel: generator_forward.39
$region0: #{generator_forward.39}
  #allocation0 [shape = 'u32[]', space=smem, size = 0x4, offset = 0x4, fixed_abs, tag = 'smem constant byte address 0x4 - core index']
  #allocation1 [shape = 'u32[144,128]{1,0:T(1,128)}', space=vmem, size = 0x12000, scoped, tag = 'internal scratch']
  #allocation2 [shape = 'f32[32,128]{1,0:T(8,128)}', space=vmem, size = 0x4000, scoped, tag = 'scratch operand']
  %s0 = inlined_call_operand.vmem [shape: bf16[32,512], index: 0, kind: input, shape index: {}]
  %s1 = inlined_call_operand.vmem [shape: bf16[512,128], index: 1, kind: input, shape index: {}]
  %s2 = inlined_call_operand.vmem [shape: f32[32,128], index: 2, kind: output, shape index: {}]
  %s3 = sld [smem:[#allocation0]]
  $region26: #{generator_forward.39} parent=0
    _
  %s5 = ssub.s32 1, %s3
  %s6 = scalar_select 0, %s5, %s3
  // Predicated region
  $region2: #{generator_forward.39} parent=0 // pred_check
    _
  $region3: #{generator_forward.39} parent=0 // pred_check_branch
    %8 = sbr.rel (0) target = $region5
  $region4: #{generator_forward.39} parent=0 // pred_region
    _
  $region5: #{generator_forward.39} parent=0 // pred_fallthru
    _
  // Predicated region
  $region6: #{generator_forward.39} parent=0 // pred_check
    _
  $region7: #{generator_forward.39} parent=0 // pred_check_branch
    %10 = sbr.rel (0) target = $region9
  $region8: #{generator_forward.39} parent=0 // pred_region
    _
  $region9: #{generator_forward.39} parent=0 // pred_fallthru
    _
  %p12 = scmp.eq.s32.totalorder 0, 0
  // Predicated region
  $region10: #{generator_forward.39} parent=0 // pred_check
    %p13 = pneg %p12
  $region11: #{generator_forward.39} parent=0 // pred_check_branch
    %15 = sbr.rel (%p13) target = $region13
  $region12: #{generator_forward.39} parent=0 // pred_region
    %16 = vst [vmem:[#allocation2] sm:$0xff] 0.0
    %17 = vst [vmem:[#allocation2 + $0x8] sm:$0xff] 0.0
    %18 = vst [vmem:[#allocation2 + $0x10] sm:$0xff] 0.0
    %19 = vst [vmem:[#allocation2 + $0x18] sm:$0xff] 0.0
  $region13: #{generator_forward.39} parent=0 // pred_fallthru
    _
  %v20 = vld [vmem:[#allocation2] sm:$0xff]
  %v21 = vld [vmem:[#allocation2 + $0x8] sm:$0xff]
  %v22 = vld [vmem:[#allocation2 + $0x10] sm:$0xff]
  %v23 = vld [vmem:[#allocation2 + $0x18] sm:$0xff]
  %v24 = vld [vmem:[%s0] sm:$0xff]
  %v25 = vld [vmem:[%s0 + $0x8] sm:$0xff]
  %v26 = vld [vmem:[%s0 + $0x10] sm:$0xff]
  %v27 = vld [vmem:[%s0 + $0x18] sm:$0xff]
  %v28 = vld [vmem:[%s0 + $0x20] sm:$0xff]
  %v29 = vld [vmem:[%s0 + $0x28] sm:$0xff]
  %v30 = vld [vmem:[%s0 + $0x30] sm:$0xff]
  %v31 = vld [vmem:[%s0 + $0x38] sm:$0xff]
  %v32 = vld [vmem:[%s1] sm:$0xf]
  %v33 = vld [vmem:[%s1 + $0x4] sm:$0xf]
  %v34 = vld [vmem:[%s1 + $0x8] sm:$0xf]
  %v35 = vld [vmem:[%s1 + $0xc] sm:$0xf]
  %v36 = vld [vmem:[%s1 + $0x10] sm:$0xf]
  %v37 = vld [vmem:[%s1 + $0x14] sm:$0xf]
  %v38 = vld [vmem:[%s1 + $0x18] sm:$0xf]
  %v39 = vld [vmem:[%s1 + $0x1c] sm:$0xf]
  %v40 = vld [vmem:[%s1 + $0x20] sm:$0xf]
  %v41 = vld [vmem:[%s1 + $0x24] sm:$0xf]
  %v42 = vld [vmem:[%s1 + $0x28] sm:$0xf]
  %v43 = vld [vmem:[%s1 + $0x2c] sm:$0xf]
  %v44 = vld [vmem:[%s1 + $0x30] sm:$0xf]
  %v45 = vld [vmem:[%s1 + $0x34] sm:$0xf]
  %v46 = vld [vmem:[%s1 + $0x38] sm:$0xf]
  %v47 = vld [vmem:[%s1 + $0x3c] sm:$0xf]
  %v48 = vld [vmem:[%s1 + $0x40] sm:$0xf]
  %v49 = vld [vmem:[%s1 + $0x44] sm:$0xf]
  %v50 = vld [vmem:[%s1 + $0x48] sm:$0xf]
  %v51 = vld [vmem:[%s1 + $0x4c] sm:$0xf]
  %v52 = vld [vmem:[%s1 + $0x50] sm:$0xf]
  %v53 = vld [vmem:[%s1 + $0x54] sm:$0xf]
  %v54 = vld [vmem:[%s1 + $0x58] sm:$0xf]
  %v55 = vld [vmem:[%s1 + $0x5c] sm:$0xf]
  %v56 = vld [vmem:[%s1 + $0x60] sm:$0xf]
  %v57 = vld [vmem:[%s1 + $0x64] sm:$0xf]
  %v58 = vld [vmem:[%s1 + $0x68] sm:$0xf]
  %v59 = vld [vmem:[%s1 + $0x6c] sm:$0xf]
  %v60 = vld [vmem:[%s1 + $0x70] sm:$0xf]
  %v61 = vld [vmem:[%s1 + $0x74] sm:$0xf]
  %v62 = vld [vmem:[%s1 + $0x78] sm:$0xf]
  %v63 = vld [vmem:[%s1 + $0x7c] sm:$0xf]
  %v64 = vld [vmem:[%s1 + $0x80] sm:$0xf]
  %v65 = vld [vmem:[%s1 + $0x84] sm:$0xf]
  %v66 = vld [vmem:[%s1 + $0x88] sm:$0xf]
  %v67 = vld [vmem:[%s1 + $0x8c] sm:$0xf]
  %v68 = vld [vmem:[%s1 + $0x90] sm:$0xf]
  %v69 = vld [vmem:[%s1 + $0x94] sm:$0xf]
  %v70 = vld [vmem:[%s1 + $0x98] sm:$0xf]
  %v71 = vld [vmem:[%s1 + $0x9c] sm:$0xf]
  %v72 = vld [vmem:[%s1 + $0xa0] sm:$0xf]
  %v73 = vld [vmem:[%s1 + $0xa4] sm:$0xf]
  %v74 = vld [vmem:[%s1 + $0xa8] sm:$0xf]
  %v75 = vld [vmem:[%s1 + $0xac] sm:$0xf]
  %v76 = vld [vmem:[%s1 + $0xb0] sm:$0xf]
  %v77 = vld [vmem:[%s1 + $0xb4] sm:$0xf]
  %v78 = vld [vmem:[%s1 + $0xb8] sm:$0xf]
  %v79 = vld [vmem:[%s1 + $0xbc] sm:$0xf]
  %v80 = vld [vmem:[%s1 + $0xc0] sm:$0xf]
  %v81 = vld [vmem:[%s1 + $0xc4] sm:$0xf]
  %v82 = vld [vmem:[%s1 + $0xc8] sm:$0xf]
  %v83 = vld [vmem:[%s1 + $0xcc] sm:$0xf]
  %v84 = vld [vmem:[%s1 + $0xd0] sm:$0xf]
  %v85 = vld [vmem:[%s1 + $0xd4] sm:$0xf]
  %v86 = vld [vmem:[%s1 + $0xd8] sm:$0xf]
  %v87 = vld [vmem:[%s1 + $0xdc] sm:$0xf]
  %v88 = vld [vmem:[%s1 + $0xe0] sm:$0xf]
  %v89 = vld [vmem:[%s1 + $0xe4] sm:$0xf]
  %v90 = vld [vmem:[%s1 + $0xe8] sm:$0xf]
  %v91 = vld [vmem:[%s1 + $0xec] sm:$0xf]
  %v92 = vld [vmem:[%s1 + $0xf0] sm:$0xf]
  %v93 = vld [vmem:[%s1 + $0xf4] sm:$0xf]
  %v94 = vld [vmem:[%s1 + $0xf8] sm:$0xf]
  %v95 = vld [vmem:[%s1 + $0xfc] sm:$0xf]
  %v104 = vunpack.c.l.b16 %v24
  %v105 = vunpack.c.h.b16 %v24
  %v106 = vunpack.c.l.b16 %v25
  %v107 = vunpack.c.h.b16 %v25
  %v108 = vunpack.c.l.b16 %v26
  %v109 = vunpack.c.h.b16 %v26
  %v110 = vunpack.c.l.b16 %v27
  %v111 = vunpack.c.h.b16 %v27
  %v112 = vunpack.c.l.b16 %v28
  %v113 = vunpack.c.h.b16 %v28
  %v114 = vunpack.c.l.b16 %v29
  %v115 = vunpack.c.h.b16 %v29
  %v116 = vunpack.c.l.b16 %v30
  %v117 = vunpack.c.h.b16 %v30
  %v118 = vunpack.c.l.b16 %v31
  %v119 = vunpack.c.h.b16 %v31
  %v120 = vpack.c.b16 %v108, %v104
  %v121 = vpack.c.b16 %v109, %v105
  %v122 = vpack.c.b16 %v110, %v106
  %v123 = vpack.c.b16 %v111, %v107
  %v124 = vpack.c.b16 %v116, %v112
  %v125 = vpack.c.b16 %v117, %v113
  %v126 = vpack.c.b16 %v118, %v114
  %v127 = vpack.c.b16 %v119, %v115
  %v200 = vunpack.c.l.b16 %v32
  %v201 = vunpack.c.l.b16 %v33
  %v202 = vunpack.c.l.b16 %v34
  %v203 = vunpack.c.l.b16 %v35
  %v204 = vunpack.c.l.b16 %v36
  %v205 = vunpack.c.l.b16 %v37
  %v206 = vunpack.c.l.b16 %v38
  %v207 = vunpack.c.l.b16 %v39
  %v208 = vunpack.c.l.b16 %v40
  %v209 = vunpack.c.l.b16 %v41
  %v210 = vunpack.c.l.b16 %v42
  %v211 = vunpack.c.l.b16 %v43
  %v212 = vunpack.c.l.b16 %v44
  %v213 = vunpack.c.l.b16 %v45
  %v214 = vunpack.c.l.b16 %v46
  %v215 = vunpack.c.l.b16 %v47
  %v216 = vunpack.c.l.b16 %v48
  %v217 = vunpack.c.l.b16 %v49
  %v218 = vunpack.c.l.b16 %v50
  %v219 = vunpack.c.l.b16 %v51
  %v220 = vunpack.c.l.b16 %v52
  %v221 = vunpack.c.l.b16 %v53
  %v222 = vunpack.c.l.b16 %v54
  %v223 = vunpack.c.l.b16 %v55
  %v224 = vunpack.c.l.b16 %v56
  %v225 = vunpack.c.l.b16 %v57
  %v226 = vunpack.c.l.b16 %v58
  %v227 = vunpack.c.l.b16 %v59
  %v228 = vunpack.c.l.b16 %v60
  %v229 = vunpack.c.l.b16 %v61
  %v230 = vunpack.c.l.b16 %v62
  %v231 = vunpack.c.l.b16 %v63
  %v232 = vunpack.c.l.b16 %v64
  %v233 = vunpack.c.l.b16 %v65
  %v234 = vunpack.c.l.b16 %v66
  %v235 = vunpack.c.l.b16 %v67
  %v236 = vunpack.c.l.b16 %v68
  %v237 = vunpack.c.l.b16 %v69
  %v238 = vunpack.c.l.b16 %v70
  %v239 = vunpack.c.l.b16 %v71
  %v240 = vunpack.c.l.b16 %v72
  %v241 = vunpack.c.l.b16 %v73
  %v242 = vunpack.c.l.b16 %v74
  %v243 = vunpack.c.l.b16 %v75
  %v244 = vunpack.c.l.b16 %v76
  %v245 = vunpack.c.l.b16 %v77
  %v246 = vunpack.c.l.b16 %v78
  %v247 = vunpack.c.l.b16 %v79
  %v248 = vunpack.c.l.b16 %v80
  %v249 = vunpack.c.l.b16 %v81
  %v250 = vunpack.c.l.b16 %v82
  %v251 = vunpack.c.l.b16 %v83
  %v252 = vunpack.c.l.b16 %v84
  %v253 = vunpack.c.l.b16 %v85
  %v254 = vunpack.c.l.b16 %v86
  %v255 = vunpack.c.l.b16 %v87
  %v256 = vunpack.c.l.b16 %v88
  %v257 = vunpack.c.l.b16 %v89
  %v258 = vunpack.c.l.b16 %v90
  %v259 = vunpack.c.l.b16 %v91
  %v260 = vunpack.c.l.b16 %v92
  %v261 = vunpack.c.l.b16 %v93
  %v262 = vunpack.c.l.b16 %v94
  %v263 = vunpack.c.l.b16 %v95
  %v264 = vpack.c.b16 %v201, %v200
  %v265 = vpack.c.b16 %v203, %v202
  %v266 = vpack.c.b16 %v205, %v204
  %v267 = vpack.c.b16 %v207, %v206
  %v268 = vpack.c.b16 %v209, %v208
  %v269 = vpack.c.b16 %v211, %v210
  %v270 = vpack.c.b16 %v213, %v212
  %v271 = vpack.c.b16 %v215, %v214
  %v272 = vpack.c.b16 %v217, %v216
  %v273 = vpack.c.b16 %v219, %v218
  %v274 = vpack.c.b16 %v221, %v220
  %v275 = vpack.c.b16 %v223, %v222
  %v276 = vpack.c.b16 %v225, %v224
  %v277 = vpack.c.b16 %v227, %v226
  %v278 = vpack.c.b16 %v229, %v228
  %v279 = vpack.c.b16 %v231, %v230
  %v280 = vpack.c.b16 %v233, %v232
  %v281 = vpack.c.b16 %v235, %v234
  %v282 = vpack.c.b16 %v237, %v236
  %v283 = vpack.c.b16 %v239, %v238
  %v284 = vpack.c.b16 %v241, %v240
  %v285 = vpack.c.b16 %v243, %v242
  %v286 = vpack.c.b16 %v245, %v244
  %v287 = vpack.c.b16 %v247, %v246
  %v288 = vpack.c.b16 %v249, %v248
  %v289 = vpack.c.b16 %v251, %v250
  %v290 = vpack.c.b16 %v253, %v252
  %v291 = vpack.c.b16 %v255, %v254
  %v292 = vpack.c.b16 %v257, %v256
  %v293 = vpack.c.b16 %v259, %v258
  %v294 = vpack.c.b16 %v261, %v260
  %v295 = vpack.c.b16 %v263, %v262
  %328 = vmatprep.subr.bf16.mxu0 0
  %329 = vmatpush1.bf16.msra.mxu0 %v264
  %330 = vmatprep.subr.bf16.mxu0 0
  %331 = vmatpush1.bf16.msra.mxu0 %v265
  %332 = vmatprep.subr.bf16.mxu0 0
  %333 = vmatpush1.bf16.msra.mxu0 %v266
  %334 = vmatprep.subr.bf16.mxu0 0
  %335 = vmatpush1.bf16.msra.mxu0 %v267
  %336 = vmatprep.subr.bf16.mxu0 0
  %337 = vmatpush1.bf16.msra.mxu0 %v268
  %338 = vmatprep.subr.bf16.mxu0 0
  %339 = vmatpush1.bf16.msra.mxu0 %v269
  %340 = vmatprep.subr.bf16.mxu0 0
  %341 = vmatpush1.bf16.msra.mxu0 %v270
  %342 = vmatprep.subr.bf16.mxu0 0
  %343 = vmatpush1.bf16.msra.mxu0 %v271
  %344 = vmatprep.subr.bf16.mxu0 0
  %345 = vmatpush1.bf16.msra.mxu0 %v272
  %346 = vmatprep.subr.bf16.mxu0 0
  %347 = vmatpush1.bf16.msra.mxu0 %v273
  %348 = vmatprep.subr.bf16.mxu0 0
  %349 = vmatpush1.bf16.msra.mxu0 %v274
  %350 = vmatprep.subr.bf16.mxu0 0
  %351 = vmatpush1.bf16.msra.mxu0 %v275
  %352 = vmatprep.subr.bf16.mxu0 0
  %353 = vmatpush1.bf16.msra.mxu0 %v276
  %354 = vmatprep.subr.bf16.mxu0 0
  %355 = vmatpush1.bf16.msra.mxu0 %v277
  %356 = vmatprep.subr.bf16.mxu0 0
  %357 = vmatpush1.bf16.msra.mxu0 %v278
  %358 = vmatprep.subr.bf16.mxu0 0
  %359 = vmatpush1.bf16.msra.mxu0 %v279
  %360 = vmatprep.mubr.bf16.mxu0 %v121
  %361 = vmatmul.mubr.bf16.gmra.mrb[0].mxu0 %v120
  %v362 = vpop.f32.mrb[0].mxu0
  %v363 = vadd.f32 0.0, %v362
  %v364 = vpop.f32.mrb[0].mxu0
  %v365 = vpop.f32.mrb[0].mxu0
  %v366 = vadd.f32 0.0, %v365
  %v367 = vpop.f32.mrb[0].mxu0
  %368 = vmatprep.mubr.bf16.mxu0 %v125
  %369 = vmatmul.mubr.bf16.gmra.mrb[0].mxu0 %v124
  %v370 = vpop.f32.mrb[0].mxu0
  %v371 = vadd.f32 0.0, %v370
  %v372 = vpop.f32.mrb[0].mxu0
  %v373 = vpop.f32.mrb[0].mxu0
  %v374 = vadd.f32 0.0, %v373
  %v375 = vpop.f32.mrb[0].mxu0
  %376 = vdwg.mxu0
  %377 = vmatprep.subr.bf16.mxu0 0
  %378 = vmatpush1.bf16.msra.mxu0 %v280
  %379 = vmatprep.subr.bf16.mxu0 0
  %380 = vmatpush1.bf16.msra.mxu0 %v281
  %381 = vmatprep.subr.bf16.mxu0 0
  %382 = vmatpush1.bf16.msra.mxu0 %v282
  %383 = vmatprep.subr.bf16.mxu0 0
  %384 = vmatpush1.bf16.msra.mxu0 %v283
  %385 = vmatprep.subr.bf16.mxu0 0
  %386 = vmatpush1.bf16.msra.mxu0 %v284
  %387 = vmatprep.subr.bf16.mxu0 0
  %388 = vmatpush1.bf16.msra.mxu0 %v285
  %389 = vmatprep.subr.bf16.mxu0 0
  %390 = vmatpush1.bf16.msra.mxu0 %v286
  %391 = vmatprep.subr.bf16.mxu0 0
  %392 = vmatpush1.bf16.msra.mxu0 %v287
  %393 = vmatprep.subr.bf16.mxu0 0
  %394 = vmatpush1.bf16.msra.mxu0 %v288
  %395 = vmatprep.subr.bf16.mxu0 0
  %396 = vmatpush1.bf16.msra.mxu0 %v289
  %397 = vmatprep.subr.bf16.mxu0 0
  %398 = vmatpush1.bf16.msra.mxu0 %v290
  %399 = vmatprep.subr.bf16.mxu0 0
  %400 = vmatpush1.bf16.msra.mxu0 %v291
  %401 = vmatprep.subr.bf16.mxu0 0
  %402 = vmatpush1.bf16.msra.mxu0 %v292
  %403 = vmatprep.subr.bf16.mxu0 0
  %404 = vmatpush1.bf16.msra.mxu0 %v293
  %405 = vmatprep.subr.bf16.mxu0 0
  %406 = vmatpush1.bf16.msra.mxu0 %v294
  %407 = vmatprep.subr.bf16.mxu0 0
  %408 = vmatpush1.bf16.msra.mxu0 %v295
  %409 = vmatprep.mubr.bf16.mxu0 %v123
  %410 = vmatmul.mubr.bf16.gmra.mrb[0].mxu0 %v122
  %v411 = vpop.f32.mrb[0].mxu0
  %v412 = vadd.f32 %v363, %v411
  %v413 = vpop.f32.mrb[0].mxu0
  %v414 = vpop.f32.mrb[0].mxu0
  %v415 = vadd.f32 %v366, %v414
  %v416 = vpop.f32.mrb[0].mxu0
  %417 = vmatprep.mubr.bf16.mxu0 %v127
  %418 = vmatmul.mubr.bf16.gmra.mrb[0].mxu0 %v126
  %v419 = vpop.f32.mrb[0].mxu0
  %v420 = vadd.f32 %v371, %v419
  %v421 = vpop.f32.mrb[0].mxu0
  %v422 = vpop.f32.mrb[0].mxu0
  %v423 = vadd.f32 %v374, %v422
  %v424 = vpop.f32.mrb[0].mxu0
  %425 = vdwg.mxu0
  %v426 = vadd.f32 %v20, %v412
  %v427 = vadd.f32 %v21, %v415
  %v428 = vadd.f32 %v22, %v420
  %v429 = vadd.f32 %v23, %v423
  %430 = vst [vmem:[#allocation2] sm:$0xff] %v426
  %431 = vst [vmem:[#allocation2 + $0x8] sm:$0xff] %v427
  %432 = vst [vmem:[#allocation2 + $0x10] sm:$0xff] %v428
  %433 = vst [vmem:[#allocation2 + $0x18] sm:$0xff] %v429
  // Predicated region
  $region14: #{generator_forward.39} parent=0 // pred_check
    %p434 = pneg %p12
  $region15: #{generator_forward.39} parent=0 // pred_check_branch
    %436 = sbr.rel (%p434) target = $region17
  $region16: #{generator_forward.39} parent=0 // pred_region
    %v437 = vld [vmem:[#allocation2] sm:$0xff]
    %v438 = vld [vmem:[#allocation2 + $0x8] sm:$0xff]
    %v439 = vld [vmem:[#allocation2 + $0x10] sm:$0xff]
    %v440 = vld [vmem:[#allocation2 + $0x18] sm:$0xff]
    %441 = vst [vmem:[%s2] sm:$0xff] %v437
    %442 = vst [vmem:[%s2 + $0x8] sm:$0xff] %v438
    %443 = vst [vmem:[%s2 + $0x10] sm:$0xff] %v439
    %444 = vst [vmem:[%s2 + $0x18] sm:$0xff] %v440
  $region17: #{generator_forward.39} parent=0 // pred_fallthru
    _
  // Predicated region
  $region18: #{generator_forward.39} parent=0 // pred_check
    _
  $region19: #{generator_forward.39} parent=0 // pred_check_branch
    %446 = sbr.rel (0) target = $region21
  $region20: #{generator_forward.39} parent=0 // pred_region
    _
  $region21: #{generator_forward.39} parent=0 // pred_fallthru
    _
  // Predicated region
  $region22: #{generator_forward.39} parent=0 // pred_check
    _
  $region23: #{generator_forward.39} parent=0 // pred_check_branch
    %448 = sbr.rel (0) target = $region25
  $region24: #{generator_forward.39} parent=0 // pred_region
    _
  $region25: #{generator_forward.39} parent=0 // pred_fallthru
    _

// kernel: generator_forward.44
$region0: #{generator_forward.44}
  #allocation0 [shape = 'u32[]', space=smem, size = 0x4, offset = 0x4, fixed_abs, tag = 'smem constant byte address 0x4 - core index']
  #allocation1 [shape = 'u32[144,128]{1,0:T(1,128)}', space=vmem, size = 0x12000, scoped, tag = 'internal scratch']
  #allocation2 [shape = 'f32[128,128]{1,0:T(8,128)}', space=vmem, size = 0x10000, scoped, tag = 'scratch operand']
  %s0 = inlined_call_operand.vmem [shape: bf16[128,256], index: 0, kind: input, shape index: {}]
  %s1 = inlined_call_operand.vmem [shape: bf16[256,128], index: 1, kind: input, shape index: {}]
  %s2 = inlined_call_operand.vmem [shape: f32[128,128], index: 2, kind: output, shape index: {}]
  %s3 = sld [smem:[#allocation0]]
  $region26: #{generator_forward.44} parent=0
    _
  %s5 = ssub.s32 1, %s3
  %s6 = scalar_select 0, %s5, %s3
  // Predicated region
  $region2: #{generator_forward.44} parent=0 // pred_check
    _
  $region3: #{generator_forward.44} parent=0 // pred_check_branch
    %8 = sbr.rel (0) target = $region5
  $region4: #{generator_forward.44} parent=0 // pred_region
    _
  $region5: #{generator_forward.44} parent=0 // pred_fallthru
    _
  // Predicated region
  $region6: #{generator_forward.44} parent=0 // pred_check
    _
  $region7: #{generator_forward.44} parent=0 // pred_check_branch
    %10 = sbr.rel (0) target = $region9
  $region8: #{generator_forward.44} parent=0 // pred_region
    _
  $region9: #{generator_forward.44} parent=0 // pred_fallthru
    _
  %p12 = scmp.eq.s32.totalorder 0, 0
  // Predicated region
  $region10: #{generator_forward.44} parent=0 // pred_check
    %p13 = pneg %p12
  $region11: #{generator_forward.44} parent=0 // pred_check_branch
    %15 = sbr.rel (%p13) target = $region13
  $region12: #{generator_forward.44} parent=0 // pred_region
    %16 = vst [vmem:[#allocation2] sm:$0xff] 0.0
    %17 = vst [vmem:[#allocation2 + $0x8] sm:$0xff] 0.0
    %18 = vst [vmem:[#allocation2 + $0x10] sm:$0xff] 0.0
    %19 = vst [vmem:[#allocation2 + $0x18] sm:$0xff] 0.0
    %20 = vst [vmem:[#allocation2 + $0x20] sm:$0xff] 0.0
    %21 = vst [vmem:[#allocation2 + $0x28] sm:$0xff] 0.0
    %22 = vst [vmem:[#allocation2 + $0x30] sm:$0xff] 0.0
    %23 = vst [vmem:[#allocation2 + $0x38] sm:$0xff] 0.0
    %24 = vst [vmem:[#allocation2 + $0x40] sm:$0xff] 0.0
    %25 = vst [vmem:[#allocation2 + $0x48] sm:$0xff] 0.0
    %26 = vst [vmem:[#allocation2 + $0x50] sm:$0xff] 0.0
    %27 = vst [vmem:[#allocation2 + $0x58] sm:$0xff] 0.0
    %28 = vst [vmem:[#allocation2 + $0x60] sm:$0xff] 0.0
    %29 = vst [vmem:[#allocation2 + $0x68] sm:$0xff] 0.0
    %30 = vst [vmem:[#allocation2 + $0x70] sm:$0xff] 0.0
    %31 = vst [vmem:[#allocation2 + $0x78] sm:$0xff] 0.0
  $region13: #{generator_forward.44} parent=0 // pred_fallthru
    _
  %v32 = vld [vmem:[#allocation2] sm:$0xff]
  %v33 = vld [vmem:[#allocation2 + $0x8] sm:$0xff]
  %v34 = vld [vmem:[#allocation2 + $0x10] sm:$0xff]
  %v35 = vld [vmem:[#allocation2 + $0x18] sm:$0xff]
  %v36 = vld [vmem:[#allocation2 + $0x20] sm:$0xff]
  %v37 = vld [vmem:[#allocation2 + $0x28] sm:$0xff]
  %v38 = vld [vmem:[#allocation2 + $0x30] sm:$0xff]
  %v39 = vld [vmem:[#allocation2 + $0x38] sm:$0xff]
  %v40 = vld [vmem:[#allocation2 + $0x40] sm:$0xff]
  %v41 = vld [vmem:[#allocation2 + $0x48] sm:$0xff]
  %v42 = vld [vmem:[#allocation2 + $0x50] sm:$0xff]
  %v43 = vld [vmem:[#allocation2 + $0x58] sm:$0xff]
  %v44 = vld [vmem:[#allocation2 + $0x60] sm:$0xff]
  %v45 = vld [vmem:[#allocation2 + $0x68] sm:$0xff]
  %v46 = vld [vmem:[#allocation2 + $0x70] sm:$0xff]
  %v47 = vld [vmem:[#allocation2 + $0x78] sm:$0xff]
  %v48 = vld [vmem:[%s0] sm:$0xff]
  %v49 = vld [vmem:[%s0 + $0x8] sm:$0xff]
  %v50 = vld [vmem:[%s0 + $0x10] sm:$0xff]
  %v51 = vld [vmem:[%s0 + $0x18] sm:$0xff]
  %v52 = vld [vmem:[%s0 + $0x20] sm:$0xff]
  %v53 = vld [vmem:[%s0 + $0x28] sm:$0xff]
  %v54 = vld [vmem:[%s0 + $0x30] sm:$0xff]
  %v55 = vld [vmem:[%s0 + $0x38] sm:$0xff]
  %v56 = vld [vmem:[%s0 + $0x40] sm:$0xff]
  %v57 = vld [vmem:[%s0 + $0x48] sm:$0xff]
  %v58 = vld [vmem:[%s0 + $0x50] sm:$0xff]
  %v59 = vld [vmem:[%s0 + $0x58] sm:$0xff]
  %v60 = vld [vmem:[%s0 + $0x60] sm:$0xff]
  %v61 = vld [vmem:[%s0 + $0x68] sm:$0xff]
  %v62 = vld [vmem:[%s0 + $0x70] sm:$0xff]
  %v63 = vld [vmem:[%s0 + $0x78] sm:$0xff]
  %v64 = vld [vmem:[%s1] sm:$0xf]
  %v65 = vld [vmem:[%s1 + $0x4] sm:$0xf]
  %v66 = vld [vmem:[%s1 + $0x8] sm:$0xf]
  %v67 = vld [vmem:[%s1 + $0xc] sm:$0xf]
  %v68 = vld [vmem:[%s1 + $0x10] sm:$0xf]
  %v69 = vld [vmem:[%s1 + $0x14] sm:$0xf]
  %v70 = vld [vmem:[%s1 + $0x18] sm:$0xf]
  %v71 = vld [vmem:[%s1 + $0x1c] sm:$0xf]
  %v72 = vld [vmem:[%s1 + $0x20] sm:$0xf]
  %v73 = vld [vmem:[%s1 + $0x24] sm:$0xf]
  %v74 = vld [vmem:[%s1 + $0x28] sm:$0xf]
  %v75 = vld [vmem:[%s1 + $0x2c] sm:$0xf]
  %v76 = vld [vmem:[%s1 + $0x30] sm:$0xf]
  %v77 = vld [vmem:[%s1 + $0x34] sm:$0xf]
  %v78 = vld [vmem:[%s1 + $0x38] sm:$0xf]
  %v79 = vld [vmem:[%s1 + $0x3c] sm:$0xf]
  %v80 = vld [vmem:[%s1 + $0x40] sm:$0xf]
  %v81 = vld [vmem:[%s1 + $0x44] sm:$0xf]
  %v82 = vld [vmem:[%s1 + $0x48] sm:$0xf]
  %v83 = vld [vmem:[%s1 + $0x4c] sm:$0xf]
  %v84 = vld [vmem:[%s1 + $0x50] sm:$0xf]
  %v85 = vld [vmem:[%s1 + $0x54] sm:$0xf]
  %v86 = vld [vmem:[%s1 + $0x58] sm:$0xf]
  %v87 = vld [vmem:[%s1 + $0x5c] sm:$0xf]
  %v88 = vld [vmem:[%s1 + $0x60] sm:$0xf]
  %v89 = vld [vmem:[%s1 + $0x64] sm:$0xf]
  %v90 = vld [vmem:[%s1 + $0x68] sm:$0xf]
  %v91 = vld [vmem:[%s1 + $0x6c] sm:$0xf]
  %v92 = vld [vmem:[%s1 + $0x70] sm:$0xf]
  %v93 = vld [vmem:[%s1 + $0x74] sm:$0xf]
  %v94 = vld [vmem:[%s1 + $0x78] sm:$0xf]
  %v95 = vld [vmem:[%s1 + $0x7c] sm:$0xf]
  %v112 = vunpack.c.l.b16 %v48
  %v113 = vunpack.c.h.b16 %v48
  %v114 = vunpack.c.l.b16 %v49
  %v115 = vunpack.c.h.b16 %v49
  %v116 = vunpack.c.l.b16 %v50
  %v117 = vunpack.c.h.b16 %v50
  %v118 = vunpack.c.l.b16 %v51
  %v119 = vunpack.c.h.b16 %v51
  %v120 = vunpack.c.l.b16 %v52
  %v121 = vunpack.c.h.b16 %v52
  %v122 = vunpack.c.l.b16 %v53
  %v123 = vunpack.c.h.b16 %v53
  %v124 = vunpack.c.l.b16 %v54
  %v125 = vunpack.c.h.b16 %v54
  %v126 = vunpack.c.l.b16 %v55
  %v127 = vunpack.c.h.b16 %v55
  %v128 = vunpack.c.l.b16 %v56
  %v129 = vunpack.c.h.b16 %v56
  %v130 = vunpack.c.l.b16 %v57
  %v131 = vunpack.c.h.b16 %v57
  %v132 = vunpack.c.l.b16 %v58
  %v133 = vunpack.c.h.b16 %v58
  %v134 = vunpack.c.l.b16 %v59
  %v135 = vunpack.c.h.b16 %v59
  %v136 = vunpack.c.l.b16 %v60
  %v137 = vunpack.c.h.b16 %v60
  %v138 = vunpack.c.l.b16 %v61
  %v139 = vunpack.c.h.b16 %v61
  %v140 = vunpack.c.l.b16 %v62
  %v141 = vunpack.c.h.b16 %v62
  %v142 = vunpack.c.l.b16 %v63
  %v143 = vunpack.c.h.b16 %v63
  %v144 = vpack.c.b16 %v114, %v112
  %v145 = vpack.c.b16 %v115, %v113
  %v146 = vpack.c.b16 %v118, %v116
  %v147 = vpack.c.b16 %v119, %v117
  %v148 = vpack.c.b16 %v122, %v120
  %v149 = vpack.c.b16 %v123, %v121
  %v150 = vpack.c.b16 %v126, %v124
  %v151 = vpack.c.b16 %v127, %v125
  %v152 = vpack.c.b16 %v130, %v128
  %v153 = vpack.c.b16 %v131, %v129
  %v154 = vpack.c.b16 %v134, %v132
  %v155 = vpack.c.b16 %v135, %v133
  %v156 = vpack.c.b16 %v138, %v136
  %v157 = vpack.c.b16 %v139, %v137
  %v158 = vpack.c.b16 %v142, %v140
  %v159 = vpack.c.b16 %v143, %v141
  %v208 = vunpack.c.l.b16 %v64
  %v209 = vunpack.c.l.b16 %v65
  %v210 = vunpack.c.l.b16 %v66
  %v211 = vunpack.c.l.b16 %v67
  %v212 = vunpack.c.l.b16 %v68
  %v213 = vunpack.c.l.b16 %v69
  %v214 = vunpack.c.l.b16 %v70
  %v215 = vunpack.c.l.b16 %v71
  %v216 = vunpack.c.l.b16 %v72
  %v217 = vunpack.c.l.b16 %v73
  %v218 = vunpack.c.l.b16 %v74
  %v219 = vunpack.c.l.b16 %v75
  %v220 = vunpack.c.l.b16 %v76
  %v221 = vunpack.c.l.b16 %v77
  %v222 = vunpack.c.l.b16 %v78
  %v223 = vunpack.c.l.b16 %v79
  %v224 = vunpack.c.l.b16 %v80
  %v225 = vunpack.c.l.b16 %v81
  %v226 = vunpack.c.l.b16 %v82
  %v227 = vunpack.c.l.b16 %v83
  %v228 = vunpack.c.l.b16 %v84
  %v229 = vunpack.c.l.b16 %v85
  %v230 = vunpack.c.l.b16 %v86
  %v231 = vunpack.c.l.b16 %v87
  %v232 = vunpack.c.l.b16 %v88
  %v233 = vunpack.c.l.b16 %v89
  %v234 = vunpack.c.l.b16 %v90
  %v235 = vunpack.c.l.b16 %v91
  %v236 = vunpack.c.l.b16 %v92
  %v237 = vunpack.c.l.b16 %v93
  %v238 = vunpack.c.l.b16 %v94
  %v239 = vunpack.c.l.b16 %v95
  %v240 = vpack.c.b16 %v209, %v208
  %v241 = vpack.c.b16 %v211, %v210
  %v242 = vpack.c.b16 %v213, %v212
  %v243 = vpack.c.b16 %v215, %v214
  %v244 = vpack.c.b16 %v217, %v216
  %v245 = vpack.c.b16 %v219, %v218
  %v246 = vpack.c.b16 %v221, %v220
  %v247 = vpack.c.b16 %v223, %v222
  %v248 = vpack.c.b16 %v225, %v224
  %v249 = vpack.c.b16 %v227, %v226
  %v250 = vpack.c.b16 %v229, %v228
  %v251 = vpack.c.b16 %v231, %v230
  %v252 = vpack.c.b16 %v233, %v232
  %v253 = vpack.c.b16 %v235, %v234
  %v254 = vpack.c.b16 %v237, %v236
  %v255 = vpack.c.b16 %v239, %v238
  %272 = vmatprep.subr.bf16.mxu0 0
  %273 = vmatpush1.bf16.msra.mxu0 %v240
  %274 = vmatprep.subr.bf16.mxu0 0
  %275 = vmatpush1.bf16.msra.mxu0 %v241
  %276 = vmatprep.subr.bf16.mxu0 0
  %277 = vmatpush1.bf16.msra.mxu0 %v242
  %278 = vmatprep.subr.bf16.mxu0 0
  %279 = vmatpush1.bf16.msra.mxu0 %v243
  %280 = vmatprep.subr.bf16.mxu0 0
  %281 = vmatpush1.bf16.msra.mxu0 %v244
  %282 = vmatprep.subr.bf16.mxu0 0
  %283 = vmatpush1.bf16.msra.mxu0 %v245
  %284 = vmatprep.subr.bf16.mxu0 0
  %285 = vmatpush1.bf16.msra.mxu0 %v246
  %286 = vmatprep.subr.bf16.mxu0 0
  %287 = vmatpush1.bf16.msra.mxu0 %v247
  %288 = vmatprep.subr.bf16.mxu0 0
  %289 = vmatpush1.bf16.msra.mxu0 %v248
  %290 = vmatprep.subr.bf16.mxu0 0
  %291 = vmatpush1.bf16.msra.mxu0 %v249
  %292 = vmatprep.subr.bf16.mxu0 0
  %293 = vmatpush1.bf16.msra.mxu0 %v250
  %294 = vmatprep.subr.bf16.mxu0 0
  %295 = vmatpush1.bf16.msra.mxu0 %v251
  %296 = vmatprep.subr.bf16.mxu0 0
  %297 = vmatpush1.bf16.msra.mxu0 %v252
  %298 = vmatprep.subr.bf16.mxu0 0
  %299 = vmatpush1.bf16.msra.mxu0 %v253
  %300 = vmatprep.subr.bf16.mxu0 0
  %301 = vmatpush1.bf16.msra.mxu0 %v254
  %302 = vmatprep.subr.bf16.mxu0 0
  %303 = vmatpush1.bf16.msra.mxu0 %v255
  %304 = vmatprep.mubr.bf16.mxu0 %v145
  %305 = vmatmul.mubr.bf16.gmra.mrb[0].mxu0 %v144
  %v306 = vpop.f32.mrb[0].mxu0
  %v307 = vadd.f32 0.0, %v306
  %v308 = vpop.f32.mrb[0].mxu0
  %v309 = vpop.f32.mrb[0].mxu0
  %v310 = vadd.f32 0.0, %v309
  %v311 = vpop.f32.mrb[0].mxu0
  %312 = vmatprep.mubr.bf16.mxu0 %v147
  %313 = vmatmul.mubr.bf16.gmra.mrb[0].mxu0 %v146
  %v314 = vpop.f32.mrb[0].mxu0
  %v315 = vadd.f32 0.0, %v314
  %v316 = vpop.f32.mrb[0].mxu0
  %v317 = vpop.f32.mrb[0].mxu0
  %v318 = vadd.f32 0.0, %v317
  %v319 = vpop.f32.mrb[0].mxu0
  %320 = vmatprep.mubr.bf16.mxu0 %v149
  %321 = vmatmul.mubr.bf16.gmra.mrb[0].mxu0 %v148
  %v322 = vpop.f32.mrb[0].mxu0
  %v323 = vadd.f32 0.0, %v322
  %v324 = vpop.f32.mrb[0].mxu0
  %v325 = vpop.f32.mrb[0].mxu0
  %v326 = vadd.f32 0.0, %v325
  %v327 = vpop.f32.mrb[0].mxu0
  %328 = vmatprep.mubr.bf16.mxu0 %v151
  %329 = vmatmul.mubr.bf16.gmra.mrb[0].mxu0 %v150
  %v330 = vpop.f32.mrb[0].mxu0
  %v331 = vadd.f32 0.0, %v330
  %v332 = vpop.f32.mrb[0].mxu0
  %v333 = vpop.f32.mrb[0].mxu0
  %v334 = vadd.f32 0.0, %v333
  %v335 = vpop.f32.mrb[0].mxu0
  %336 = vmatprep.mubr.bf16.mxu0 %v153
  %337 = vmatmul.mubr.bf16.gmra.mrb[0].mxu0 %v152
  %v338 = vpop.f32.mrb[0].mxu0
  %v339 = vadd.f32 0.0, %v338
  %v340 = vpop.f32.mrb[0].mxu0
  %v341 = vpop.f32.mrb[0].mxu0
  %v342 = vadd.f32 0.0, %v341
  %v343 = vpop.f32.mrb[0].mxu0
  %344 = vmatprep.mubr.bf16.mxu0 %v155
  %345 = vmatmul.mubr.bf16.gmra.mrb[0].mxu0 %v154
  %v346 = vpop.f32.mrb[0].mxu0
  %v347 = vadd.f32 0.0, %v346
  %v348 = vpop.f32.mrb[0].mxu0
  %v349 = vpop.f32.mrb[0].mxu0
  %v350 = vadd.f32 0.0, %v349
  %v351 = vpop.f32.mrb[0].mxu0
  %352 = vmatprep.mubr.bf16.mxu0 %v157
  %353 = vmatmul.mubr.bf16.gmra.mrb[0].mxu0 %v156
  %v354 = vpop.f32.mrb[0].mxu0
  %v355 = vadd.f32 0.0, %v354
  %v356 = vpop.f32.mrb[0].mxu0
  %v357 = vpop.f32.mrb[0].mxu0
  %v358 = vadd.f32 0.0, %v357
  %v359 = vpop.f32.mrb[0].mxu0
  %360 = vmatprep.mubr.bf16.mxu0 %v159
  %361 = vmatmul.mubr.bf16.gmra.mrb[0].mxu0 %v158
  %v362 = vpop.f32.mrb[0].mxu0
  %v363 = vadd.f32 0.0, %v362
  %v364 = vpop.f32.mrb[0].mxu0
  %v365 = vpop.f32.mrb[0].mxu0
  %v366 = vadd.f32 0.0, %v365
  %v367 = vpop.f32.mrb[0].mxu0
  %368 = vdwg.mxu0
  %v369 = vadd.f32 %v32, %v307
  %v370 = vadd.f32 %v33, %v310
  %v371 = vadd.f32 %v34, %v315
  %v372 = vadd.f32 %v35, %v318
  %v373 = vadd.f32 %v36, %v323
  %v374 = vadd.f32 %v37, %v326
  %v375 = vadd.f32 %v38, %v331
  %v376 = vadd.f32 %v39, %v334
  %v377 = vadd.f32 %v40, %v339
  %v378 = vadd.f32 %v41, %v342
  %v379 = vadd.f32 %v42, %v347
  %v380 = vadd.f32 %v43, %v350
  %v381 = vadd.f32 %v44, %v355
  %v382 = vadd.f32 %v45, %v358
  %v383 = vadd.f32 %v46, %v363
  %v384 = vadd.f32 %v47, %v366
  %385 = vst [vmem:[#allocation2] sm:$0xff] %v369
  %386 = vst [vmem:[#allocation2 + $0x8] sm:$0xff] %v370
  %387 = vst [vmem:[#allocation2 + $0x10] sm:$0xff] %v371
  %388 = vst [vmem:[#allocation2 + $0x18] sm:$0xff] %v372
  %389 = vst [vmem:[#allocation2 + $0x20] sm:$0xff] %v373
  %390 = vst [vmem:[#allocation2 + $0x28] sm:$0xff] %v374
  %391 = vst [vmem:[#allocation2 + $0x30] sm:$0xff] %v375
  %392 = vst [vmem:[#allocation2 + $0x38] sm:$0xff] %v376
  %393 = vst [vmem:[#allocation2 + $0x40] sm:$0xff] %v377
  %394 = vst [vmem:[#allocation2 + $0x48] sm:$0xff] %v378
  %395 = vst [vmem:[#allocation2 + $0x50] sm:$0xff] %v379
  %396 = vst [vmem:[#allocation2 + $0x58] sm:$0xff] %v380
  %397 = vst [vmem:[#allocation2 + $0x60] sm:$0xff] %v381
  %398 = vst [vmem:[#allocation2 + $0x68] sm:$0xff] %v382
  %399 = vst [vmem:[#allocation2 + $0x70] sm:$0xff] %v383
  %400 = vst [vmem:[#allocation2 + $0x78] sm:$0xff] %v384
  // Predicated region
  $region14: #{generator_forward.44} parent=0 // pred_check
    %p401 = pneg %p12
  $region15: #{generator_forward.44} parent=0 // pred_check_branch
    %403 = sbr.rel (%p401) target = $region17
  $region16: #{generator_forward.44} parent=0 // pred_region
    %v404 = vld [vmem:[#allocation2] sm:$0xff]
    %v405 = vld [vmem:[#allocation2 + $0x8] sm:$0xff]
    %v406 = vld [vmem:[#allocation2 + $0x10] sm:$0xff]
    %v407 = vld [vmem:[#allocation2 + $0x18] sm:$0xff]
    %v408 = vld [vmem:[#allocation2 + $0x20] sm:$0xff]
    %v409 = vld [vmem:[#allocation2 + $0x28] sm:$0xff]
    %v410 = vld [vmem:[#allocation2 + $0x30] sm:$0xff]
    %v411 = vld [vmem:[#allocation2 + $0x38] sm:$0xff]
    %v412 = vld [vmem:[#allocation2 + $0x40] sm:$0xff]
    %v413 = vld [vmem:[#allocation2 + $0x48] sm:$0xff]
    %v414 = vld [vmem:[#allocation2 + $0x50] sm:$0xff]
    %v415 = vld [vmem:[#allocation2 + $0x58] sm:$0xff]
    %v416 = vld [vmem:[#allocation2 + $0x60] sm:$0xff]
    %v417 = vld [vmem:[#allocation2 + $0x68] sm:$0xff]
    %v418 = vld [vmem:[#allocation2 + $0x70] sm:$0xff]
    %v419 = vld [vmem:[#allocation2 + $0x78] sm:$0xff]
    %420 = vst [vmem:[%s2] sm:$0xff] %v404
    %421 = vst [vmem:[%s2 + $0x8] sm:$0xff] %v405
    %422 = vst [vmem:[%s2 + $0x10] sm:$0xff] %v406
    %423 = vst [vmem:[%s2 + $0x18] sm:$0xff] %v407
    %424 = vst [vmem:[%s2 + $0x20] sm:$0xff] %v408
    %425 = vst [vmem:[%s2 + $0x28] sm:$0xff] %v409
    %426 = vst [vmem:[%s2 + $0x30] sm:$0xff] %v410
    %427 = vst [vmem:[%s2 + $0x38] sm:$0xff] %v411
    %428 = vst [vmem:[%s2 + $0x40] sm:$0xff] %v412
    %429 = vst [vmem:[%s2 + $0x48] sm:$0xff] %v413
    %430 = vst [vmem:[%s2 + $0x50] sm:$0xff] %v414
    %431 = vst [vmem:[%s2 + $0x58] sm:$0xff] %v415
    %432 = vst [vmem:[%s2 + $0x60] sm:$0xff] %v416
    %433 = vst [vmem:[%s2 + $0x68] sm:$0xff] %v417
    %434 = vst [vmem:[%s2 + $0x70] sm:$0xff] %v418
    %435 = vst [vmem:[%s2 + $0x78] sm:$0xff] %v419
  $region17: #{generator_forward.44} parent=0 // pred_fallthru
    _
  // Predicated region
  $region18: #{generator_forward.44} parent=0 // pred_check
    _
  $region19: #{generator_forward.44} parent=0 // pred_check_branch
    %437 = sbr.rel (0) target = $region21
  $region20: #{generator_forward.44} parent=0 // pred_region
    _
  $region21: #{generator_forward.44} parent=0 // pred_fallthru
    _
  // Predicated region
  $region22: #{generator_forward.44} parent=0 // pred_check
    _
  $region23: #{generator_forward.44} parent=0 // pred_check_branch
    %439 = sbr.rel (0) target = $region25
  $region24: #{generator_forward.44} parent=0 // pred_region
    _
  $region25: #{generator_forward.44} parent=0 // pred_fallthru
    _

// kernel: generator_forward.49
$region0: #{generator_forward.49}
  #allocation0 [shape = 'u32[]', space=smem, size = 0x4, offset = 0x4, fixed_abs, tag = 'smem constant byte address 0x4 - core index']
  #allocation1 [shape = 'u32[144,128]{1,0:T(1,128)}', space=vmem, size = 0x12000, scoped, tag = 'internal scratch']
  #allocation2 [shape = 'f32[256,128]{1,0:T(8,128)}', space=vmem, size = 0x20000, scoped, tag = 'scratch operand']
  %s0 = inlined_call_operand.vmem [shape: bf16[512,2048], index: 0, kind: input, shape index: {}]
  %s1 = inlined_call_operand.vmem [shape: bf16[2048,128], index: 1, kind: input, shape index: {}]
  %s2 = inlined_call_operand.vmem [shape: f32[512,128], index: 2, kind: output, shape index: {}]
  %s3 = sld [smem:[#allocation0]]
  $region72: #{generator_forward.49} parent=0
    _
  %s5 = ssub.s32 1, %s3
  %s6 = scalar_select 0, %s5, %s3
  $region1: #{generator_forward.49} parent=0
    #allocation3 [shape = 'u8[524288]{0}', space=vmem, size = 0x80000, scoped, tag = 'input window, operand 0']
    loop: start=0, step=1, limit=10
    $region2: #{generator_forward.49} parent=1 // loop_pre_header
      _
    $region3: #{generator_forward.49} parent=1 // loop_header
      %s8 = sphi 0, %s12
      %p9 = scmp.ge.s32.totalorder %s8, 10
      %s15 = sphi 0, %s34
      %s16 = sphi 0, %s30
      %s17 = sphi 0, %s26
      %s18 = sphi 0, %s15
      %s19 = sphi 0, %s16
      %s20 = sphi 0, %s17
      %s21 = sphi 0, %s18
      %s22 = sphi 0, %s19
      %s23 = sphi 0, %s20
      %s39 = sphi 0, %s41
      %s42 = sphi 0, %s39
      %s43 = sphi 0, %s42
      %s59 = sphi 0, %s43
      %s67 = sphi 0, %s69
      %s70 = sphi 0, %s67
      %s71 = sphi 0, %s70
      %s87 = sphi 0, %s71
      %s95 = sphi 0, %s97
      %s98 = sphi 0, %s95
      %s99 = sphi 0, %s98
      %s115 = sphi 0, %s99
    $region4: #{generator_forward.49} parent=1 // loop_header_branch
      %11 = sbr.rel (%p9) target = $region8
    $region5: #{generator_forward.49} parent=1 // loop_body
      %s13 = ssub.s32 %s8, 1
      %s14 = ssub.s32 %s8, 2
      %s24 = sadd.s32 1, %s17
      %p25 = scmp.ge.s32.totalorder %s24, 4
      %s26 = scalar_select %p25, 0, %s24
      %s27 = sadd.s32 1, %s16
      %s28 = scalar_select %p25, %s27, %s16
      %p29 = scmp.ge.s32.totalorder %s28, 1
      %s30 = scalar_select %p29, 0, %s28
      %s31 = sadd.s32 1, %s15
      %s32 = scalar_select %p29, %s31, %s15
      %p33 = scmp.ge.s32.totalorder %s32, 2
      %s34 = scalar_select %p33, 0, %s32
      %s35 = ssub.s32 %s15, %s34
      %s36 = ssub.s32 %s17, %s26
      %s37 = sor.u32 %s35, %s36
      %p38 = scmp.eq.s32.totalorder %s37, 0
      %s40 = sadd.s32 %s39, 1
      %s41 = scalar_select %p38, %s39, %s40
      %p44 = pneg %p38
      %p45 = scmp.eq.s32.totalorder %s8, 7
      %p46 = por %p44, %p45
      %p47 = scmp.ne.s32.totalorder %s39, %s42
      %p48 = scmp.eq.s32.totalorder %s8, 0
      %p49 = por %p47, %p48
      %p50 = scmp.ne.s32.totalorder %s39, %s42
      %p51 = scmp.eq.s32.totalorder %s13, 7
      %p52 = por %p50, %p51
      %p53 = scmp.ne.s32.totalorder %s42, %s43
      %p54 = scmp.eq.s32.totalorder %s13, 0
      %p55 = por %p53, %p54
      %p56 = scmp.ne.s32.totalorder %s42, %s43
      %p57 = scmp.eq.s32.totalorder %s14, 7
      %p58 = por %p56, %p57
      %p60 = scmp.ne.s32.totalorder %s43, %s59
      %p61 = scmp.eq.s32.totalorder %s14, 0
      %p62 = por %p60, %p61
      %s63 = ssub.s32 %s17, %s26
      %s64 = ssub.s32 %s16, %s30
      %s65 = sor.u32 %s63, %s64
      %p66 = scmp.eq.s32.totalorder %s65, 0
      %s68 = sadd.s32 %s67, 1
      %s69 = scalar_select %p66, %s67, %s68
      %p72 = pneg %p66
      %p73 = scmp.eq.s32.totalorder %s8, 7
      %p74 = por %p72, %p73
      %p75 = scmp.ne.s32.totalorder %s67, %s70
      %p76 = scmp.eq.s32.totalorder %s8, 0
      %p77 = por %p75, %p76
      %p78 = scmp.ne.s32.totalorder %s67, %s70
      %p79 = scmp.eq.s32.totalorder %s13, 7
      %p80 = por %p78, %p79
      %p81 = scmp.ne.s32.totalorder %s70, %s71
      %p82 = scmp.eq.s32.totalorder %s13, 0
      %p83 = por %p81, %p82
      %p84 = scmp.ne.s32.totalorder %s70, %s71
      %p85 = scmp.eq.s32.totalorder %s14, 7
      %p86 = por %p84, %p85
      %p88 = scmp.ne.s32.totalorder %s71, %s87
      %p89 = scmp.eq.s32.totalorder %s14, 0
      %p90 = por %p88, %p89
      %s91 = ssub.s32 %s15, %s34
      %s92 = ssub.s32 %s16, %s30
      %s93 = sor.u32 %s91, %s92
      %p94 = scmp.eq.s32.totalorder %s93, 0
      %s96 = sadd.s32 %s95, 1
      %s97 = scalar_select %p94, %s95, %s96
      %p100 = pneg %p94
      %p101 = scmp.eq.s32.totalorder %s8, 7
      %p102 = por %p100, %p101
      %p103 = scmp.ne.s32.totalorder %s95, %s98
      %p104 = scmp.eq.s32.totalorder %s8, 0
      %p105 = por %p103, %p104
      %p106 = scmp.ne.s32.totalorder %s95, %s98
      %p107 = scmp.eq.s32.totalorder %s13, 7
      %p108 = por %p106, %p107
      %p109 = scmp.ne.s32.totalorder %s98, %s99
      %p110 = scmp.eq.s32.totalorder %s13, 0
      %p111 = por %p109, %p110
      %p112 = scmp.ne.s32.totalorder %s98, %s99
      %p113 = scmp.eq.s32.totalorder %s14, 7
      %p114 = por %p112, %p113
      %p116 = scmp.ne.s32.totalorder %s99, %s115
      %p117 = scmp.eq.s32.totalorder %s14, 0
      %p118 = por %p116, %p117
      %p119 = scmp.le.s32.totalorder 1, %s8
      %p120 = scmp.lt.s32.totalorder %s8, 9
      %p121 = pnand %p119, %p120
      %p122 = pneg %p121
      // Predicated region
      $region9: #{generator_forward.49} parent=5 // pred_check
        _
      $region10: #{generator_forward.49} parent=5 // pred_check_branch
        %124 = sbr.rel (%p121) target = $region12
      $region11: #{generator_forward.49} parent=5 // pred_region
        %s125 = ssub.s32 %s8, 1
      $region12: #{generator_forward.49} parent=5 // pred_fallthru
        _
      %p126 = scmp.lt.s32.totalorder %s8, 8
      // Predicated region
      $region13: #{generator_forward.49} parent=5 // pred_check
        %p127 = pneg %p126
      $region14: #{generator_forward.49} parent=5 // pred_check_branch
        %129 = sbr.rel (%p127) target = $region16
      $region15: #{generator_forward.49} parent=5 // pred_region
        // Predicated region
        $region17: #{generator_forward.49} parent=15 // pred_check
          %p130 = pneg %p49
        $region18: #{generator_forward.49} parent=15 // pred_check_branch
          %132 = sbr.rel (%p130) target = $region20
        $region19: #{generator_forward.49} parent=15 // pred_region
          %s133 = sand.u32 %s39, 1
          %s134 = sand.u32 %s39, 1
          %s135 = smul.addr %s134, 512
          %s136 = scalar_lea.vmem [#allocation3], %s135
          %s137 = smul.u32 32, %s15
          %s138 = smul.u32 4, %s17
          %s139 = smul.addr %s137, 16
          %s140 = sadd.s32 %s138, %s139
          %s141 = smul.addr %s140, 4
          %s142 = scalar_lea.vmem %s0, %s141
          // Predicated region
          $region21: #{generator_forward.49} parent=19 // pred_check
            _
          $region22: #{generator_forward.49} parent=19 // pred_check_branch
            %144 = sbr.rel (0) target = $region24
          $region23: #{generator_forward.49} parent=19 // pred_region
            // Predicated region
            $region25: #{generator_forward.49} parent=23 // pred_check
              _
            $region26: #{generator_forward.49} parent=23 // pred_check_branch
              %146 = sbr.rel (0) target = $region28
            $region27: #{generator_forward.49} parent=23 // pred_region
              loop: start=0, step=1, limit=1
              $region29: #{generator_forward.49} parent=27 // loop_pre_header
                _
              $region30: #{generator_forward.49} parent=27 // loop_header
                %s148 = sphi 0, %s152
                %p149 = scmp.ge.s32.totalorder %s148, 1
                %s153 = sphi %s142, %s142
                %s154 = sphi %s136, %s136
              $region31: #{generator_forward.49} parent=27 // loop_header_branch
                %151 = sbr.rel (%p149) target = $region35
              $region32: #{generator_forward.49} parent=27 // loop_body
                %v155 = vld [vmem:[%s153] sm:$0xff]
                %156 = vst [vmem:[%s154] sm:$0xff] %v155
                %v157 = vld [vmem:[%s153 + $0x8] sm:$0xff]
                %158 = vst [vmem:[%s154 + $0x8] sm:$0xff] %v157
                %v159 = vld [vmem:[%s153 + $0x40] sm:$0xff]
                %160 = vst [vmem:[%s154 + $0x10] sm:$0xff] %v159
                %v161 = vld [vmem:[%s153 + $0x48] sm:$0xff]
                %162 = vst [vmem:[%s154 + $0x18] sm:$0xff] %v161
                %v163 = vld [vmem:[%s153 + $0x80] sm:$0xff]
                %164 = vst [vmem:[%s154 + $0x20] sm:$0xff] %v163
                %v165 = vld [vmem:[%s153 + $0x88] sm:$0xff]
                %166 = vst [vmem:[%s154 + $0x28] sm:$0xff] %v165
                %v167 = vld [vmem:[%s153 + $0xc0] sm:$0xff]
                %168 = vst [vmem:[%s154 + $0x30] sm:$0xff] %v167
                %v169 = vld [vmem:[%s153 + $0xc8] sm:$0xff]
                %170 = vst [vmem:[%s154 + $0x38] sm:$0xff] %v169
                %v171 = vld [vmem:[%s153 + $0x100] sm:$0xff]
                %172 = vst [vmem:[%s154 + $0x40] sm:$0xff] %v171
                %v173 = vld [vmem:[%s153 + $0x108] sm:$0xff]
                %174 = vst [vmem:[%s154 + $0x48] sm:$0xff] %v173
                %v175 = vld [vmem:[%s153 + $0x140] sm:$0xff]
                %176 = vst [vmem:[%s154 + $0x50] sm:$0xff] %v175
                %v177 = vld [vmem:[%s153 + $0x148] sm:$0xff]
                %178 = vst [vmem:[%s154 + $0x58] sm:$0xff] %v177
                %v179 = vld [vmem:[%s153 + $0x180] sm:$0xff]
                %180 = vst [vmem:[%s154 + $0x60] sm:$0xff] %v179
                %v181 = vld [vmem:[%s153 + $0x188] sm:$0xff]
                %182 = vst [vmem:[%s154 + $0x68] sm:$0xff] %v181
                %v183 = vld [vmem:[%s153 + $0x1c0] sm:$0xff]
                %184 = vst [vmem:[%s154 + $0x70] sm:$0xff] %v183
                %v185 = vld [vmem:[%s153 + $0x1c8] sm:$0xff]
                %186 = vst [vmem:[%s154 + $0x78] sm:$0xff] %v185
                %v187 = vld [vmem:[%s153 + $0x200] sm:$0xff]
                %188 = vst [vmem:[%s154 + $0x80] sm:$0xff] %v187
                %v189 = vld [vmem:[%s153 + $0x208] sm:$0xff]
                %190 = vst [vmem:[%s154 + $0x88] sm:$0xff] %v189
                %v191 = vld [vmem:[%s153 + $0x240] sm:$0xff]
                %192 = vst [vmem:[%s154 + $0x90] sm:$0xff] %v191
                %v193 = vld [vmem:[%s153 + $0x248] sm:$0xff]
                %194 = vst [vmem:[%s154 + $0x98] sm:$0xff] %v193
                %v195 = vld [vmem:[%s153 + $0x280] sm:$0xff]
                %196 = vst [vmem:[%s154 + $0xa0] sm:$0xff] %v195
                %v197 = vld [vmem:[%s153 + $0x288] sm:$0xff]
                %198 = vst [vmem:[%s154 + $0xa8] sm:$0xff] %v197
                %v199 = vld [vmem:[%s153 + $0x2c0] sm:$0xff]
                %200 = vst [vmem:[%s154 + $0xb0] sm:$0xff] %v199
                %v201 = vld [vmem:[%s153 + $0x2c8] sm:$0xff]
                %202 = vst [vmem:[%s154 + $0xb8] sm:$0xff] %v201
                %v203 = vld [vmem:[%s153 + $0x300] sm:$0xff]
                %204 = vst [vmem:[%s154 + $0xc0] sm:$0xff] %v203
                %v205 = vld [vmem:[%s153 + $0x308] sm:$0xff]
                %206 = vst [vmem:[%s154 + $0xc8] sm:$0xff] %v205
                %v207 = vld [vmem:[%s153 + $0x340] sm:$0xff]
                %208 = vst [vmem:[%s154 + $0xd0] sm:$0xff] %v207
                %v209 = vld [vmem:[%s153 + $0x348] sm:$0xff]
                %210 = vst [vmem:[%s154 + $0xd8] sm:$0xff] %v209
                %v211 = vld [vmem:[%s153 + $0x380] sm:$0xff]
                %212 = vst [vmem:[%s154 + $0xe0] sm:$0xff] %v211
                %v213 = vld [vmem:[%s153 + $0x388] sm:$0xff]
                %214 = vst [vmem:[%s154 + $0xe8] sm:$0xff] %v213
                %v215 = vld [vmem:[%s153 + $0x3c0] sm:$0xff]
                %216 = vst [vmem:[%s154 + $0xf0] sm:$0xff] %v215
                %v217 = vld [vmem:[%s153 + $0x3c8] sm:$0xff]
                %218 = vst [vmem:[%s154 + $0xf8] sm:$0xff] %v217
                %v219 = vld [vmem:[%s153 + $0x400] sm:$0xff]
                %220 = vst [vmem:[%s154 + $0x100] sm:$0xff] %v219
                %v221 = vld [vmem:[%s153 + $0x408] sm:$0xff]
                %222 = vst [vmem:[%s154 + $0x108] sm:$0xff] %v221
                %v223 = vld [vmem:[%s153 + $0x440] sm:$0xff]
                %224 = vst [vmem:[%s154 + $0x110] sm:$0xff] %v223
                %v225 = vld [vmem:[%s153 + $0x448] sm:$0xff]
                %226 = vst [vmem:[%s154 + $0x118] sm:$0xff] %v225
                %v227 = vld [vmem:[%s153 + $0x480] sm:$0xff]
                %228 = vst [vmem:[%s154 + $0x120] sm:$0xff] %v227
                %v229 = vld [vmem:[%s153 + $0x488] sm:$0xff]
                %230 = vst [vmem:[%s154 + $0x128] sm:$0xff] %v229
                %v231 = vld [vmem:[%s153 + $0x4c0] sm:$0xff]
                %232 = vst [vmem:[%s154 + $0x130] sm:$0xff] %v231
                %v233 = vld [vmem:[%s153 + $0x4c8] sm:$0xff]
                %234 = vst [vmem:[%s154 + $0x138] sm:$0xff] %v233
                %v235 = vld [vmem:[%s153 + $0x500] sm:$0xff]
                %236 = vst [vmem:[%s154 + $0x140] sm:$0xff] %v235
                %v237 = vld [vmem:[%s153 + $0x508] sm:$0xff]
                %238 = vst [vmem:[%s154 + $0x148] sm:$0xff] %v237
                %v239 = vld [vmem:[%s153 + $0x540] sm:$0xff]
                %240 = vst [vmem:[%s154 + $0x150] sm:$0xff] %v239
                %v241 = vld [vmem:[%s153 + $0x548] sm:$0xff]
                %242 = vst [vmem:[%s154 + $0x158] sm:$0xff] %v241
                %v243 = vld [vmem:[%s153 + $0x580] sm:$0xff]
                %244 = vst [vmem:[%s154 + $0x160] sm:$0xff] %v243
                %v245 = vld [vmem:[%s153 + $0x588] sm:$0xff]
                %246 = vst [vmem:[%s154 + $0x168] sm:$0xff] %v245
                %v247 = vld [vmem:[%s153 + $0x5c0] sm:$0xff]
                %248 = vst [vmem:[%s154 + $0x170] sm:$0xff] %v247
                %v249 = vld [vmem:[%s153 + $0x5c8] sm:$0xff]
                %250 = vst [vmem:[%s154 + $0x178] sm:$0xff] %v249
                %v251 = vld [vmem:[%s153 + $0x600] sm:$0xff]
                %252 = vst [vmem:[%s154 + $0x180] sm:$0xff] %v251
                %v253 = vld [vmem:[%s153 + $0x608] sm:$0xff]
                %254 = vst [vmem:[%s154 + $0x188] sm:$0xff] %v253
                %v255 = vld [vmem:[%s153 + $0x640] sm:$0xff]
                %256 = vst [vmem:[%s154 + $0x190] sm:$0xff] %v255
                %v257 = vld [vmem:[%s153 + $0x648] sm:$0xff]
                %258 = vst [vmem:[%s154 + $0x198] sm:$0xff] %v257
                %v259 = vld [vmem:[%s153 + $0x680] sm:$0xff]
                %260 = vst [vmem:[%s154 + $0x1a0] sm:$0xff] %v259
                %v261 = vld [vmem:[%s153 + $0x688] sm:$0xff]
                %262 = vst [vmem:[%s154 + $0x1a8] sm:$0xff] %v261
                %v263 = vld [vmem:[%s153 + $0x6c0] sm:$0xff]
                %264 = vst [vmem:[%s154 + $0x1b0] sm:$0xff] %v263
                %v265 = vld [vmem:[%s153 + $0x6c8] sm:$0xff]
                %266 = vst [vmem:[%s154 + $0x1b8] sm:$0xff] %v265
                %v267 = vld [vmem:[%s153 + $0x700] sm:$0xff]
                %268 = vst [vmem:[%s154 + $0x1c0] sm:$0xff] %v267
                %v269 = vld [vmem:[%s153 + $0x708] sm:$0xff]
                %270 = vst [vmem:[%s154 + $0x1c8] sm:$0xff] %v269
                %v271 = vld [vmem:[%s153 + $0x740] sm:$0xff]
                %272 = vst [vmem:[%s154 + $0x1d0] sm:$0xff] %v271
                %v273 = vld [vmem:[%s153 + $0x748] sm:$0xff]
                %274 = vst [vmem:[%s154 + $0x1d8] sm:$0xff] %v273
                %v275 = vld [vmem:[%s153 + $0x780] sm:$0xff]
                %276 = vst [vmem:[%s154 + $0x1e0] sm:$0xff] %v275
                %v277 = vld [vmem:[%s153 + $0x788] sm:$0xff]
                %278 = vst [vmem:[%s154 + $0x1e8] sm:$0xff] %v277
                %v279 = vld [vmem:[%s153 + $0x7c0] sm:$0xff]
                %280 = vst [vmem:[%s154 + $0x1f0] sm:$0xff] %v279
                %v281 = vld [vmem:[%s153 + $0x7c8] sm:$0xff]
                %282 = vst [vmem:[%s154 + $0x1f8] sm:$0xff] %v281
              $region33: #{generator_forward.49} parent=27 // loop_footer
                %s152 = sadd.s32 1, %s148
              $region34: #{generator_forward.49} parent=27 // loop_footer_branch
                %147 = sbr.rel target = $region30
              $region35: #{generator_forward.49} parent=27 // loop_exit
                _
            $region28: #{generator_forward.49} parent=23 // pred_fallthru
              _
            // Predicated region
            $region36: #{generator_forward.49} parent=23 // pred_check
              _
            $region37: #{generator_forward.49} parent=23 // pred_check_branch
              %284 = sbr.rel target = $region39
            $region38: #{generator_forward.49} parent=23 // pred_region
              _
            $region39: #{generator_forward.49} parent=23 // pred_fallthru
              _
          $region24: #{generator_forward.49} parent=19 // pred_fallthru
            _
          %285 = vnop
        $region20: #{generator_forward.49} parent=15 // pred_fallthru
          _
        // Predicated region
        $region40: #{generator_forward.49} parent=15 // pred_check
          %p286 = pneg %p77
        $region41: #{generator_forward.49} parent=15 // pred_check_branch
          %288 = sbr.rel (%p286) target = $region43
        $region42: #{generator_forward.49} parent=15 // pred_region
          %s289 = smul.u32 64, %s17
          %p290 = scmp.lt.s32.totalorder %s289, 255
          %s291 = scalar_select %p290, %s289, 255
          %p292 = scmp.lt.s32.totalorder %s16, 0
          %s293 = scalar_select %p292, %s16, 0
          %s294 = sadd.s32 %s293, %s291
          %s295 = smul.addr %s294, 4
          %s296 = scalar_lea.vmem %s1, %s295
          %s297 = smul.u32 64, %s17
        $region43: #{generator_forward.49} parent=15 // pred_fallthru
          _
      $region16: #{generator_forward.49} parent=5 // pred_fallthru
        _
      %p298 = scmp.le.s32.totalorder 1, %s8
      %p299 = scmp.lt.s32.totalorder %s8, 9
      %p300 = pnand %p298, %p299
      %p301 = pneg %p300
      // Predicated region
      $region44: #{generator_forward.49} parent=5 // pred_check
        _
      $region45: #{generator_forward.49} parent=5 // pred_check_branch
        %303 = sbr.rel (%p300) target = $region47
      $region46: #{generator_forward.49} parent=5 // pred_region
        %s304 = ssub.s32 %s8, 1
        %s305 = sand.u32 %s42, 1
        %s306 = sand.u32 %s42, 1
        %s307 = smul.addr %s306, 512
        %s308 = scalar_lea.vmem [#allocation3], %s307
        // Predicated region
        $region48: #{generator_forward.49} parent=46 // pred_check
          %p309 = pneg %p55
        $region49: #{generator_forward.49} parent=46 // pred_check_branch
          %311 = sbr.rel (%p309) target = $region51
        $region50: #{generator_forward.49} parent=46 // pred_region
          _
        $region51: #{generator_forward.49} parent=46 // pred_fallthru
          _
        %s312 = sand.u32 %s42, 1
        %s313 = sand.u32 %s42, 1
        %s314 = smul.addr %s313, 512
        %s315 = scalar_lea.vmem [#allocation3], %s314
        %p316 = pneg %p55
        %p317 = pneg %p52
        %s318 = smul.u32 64, %s20
        %p319 = scmp.lt.s32.totalorder %s318, 255
        %s320 = scalar_select %p319, %s318, 255
        %p321 = scmp.lt.s32.totalorder %s19, 0
        %s322 = scalar_select %p321, %s19, 0
        %s323 = sadd.s32 %s322, %s320
        %s324 = smul.addr %s323, 4
        %s325 = scalar_lea.vmem %s1, %s324
        %p326 = pneg %p83
        %p327 = pneg %p80
        %p328 = pneg %p111
        %p329 = pneg %p108
        %s330 = smul.u32 32, %s18
        %p331 = scmp.lt.s32.totalorder %s330, 63
        %s332 = scalar_select %p331, %s330, 63
        %p333 = scmp.lt.s32.totalorder %s19, 0
        %s334 = scalar_select %p333, %s19, 0
        %s335 = sadd.s32 %s334, %s332
        %s336 = smul.addr %s335, 8
        %s337 = scalar_lea.vmem %s2, %s336
        %s338 = smul.u32 32, %s18
        %s339 = smul.u32 4, %s20
        %s340 = smul.u32 64, %s20
        %p341 = scmp.lt.s32.totalorder %s340, 255
        %s342 = scalar_select %p341, %s340, 255
        %p343 = scmp.lt.s32.totalorder %s19, 0
        %s344 = scalar_select %p343, %s19, 0
        %s345 = sadd.s32 %s344, %s342
        %s346 = smul.addr %s345, 4
        %s347 = scalar_lea.vmem %s1, %s346
        %s348 = smul.u32 64, %s20
        %s349 = smul.u32 32, %s18
        %p350 = scmp.lt.s32.totalorder %s349, 63
        %s351 = scalar_select %p350, %s349, 63
        %p352 = scmp.lt.s32.totalorder %s19, 0
        %s353 = scalar_select %p352, %s19, 0
        %s354 = sadd.s32 %s353, %s351
        %s355 = smul.addr %s354, 8
        %s356 = scalar_lea.vmem %s2, %s355
        %s357 = smul.u32 32, %s18
        %p359 = scmp.eq.s32.totalorder %s20, 0
        // Predicated region
        $region52: #{generator_forward.49} parent=46 // pred_check
          %p360 = pneg %p359
        $region53: #{generator_forward.49} parent=46 // pred_check_branch
          %362 = sbr.rel (%p360) target = $region55
        $region54: #{generator_forward.49} parent=46 // pred_region
          %363 = vst [vmem:[#allocation2] sm:$0xff] 0.0
          %364 = vst [vmem:[#allocation2 + $0x8] sm:$0xff] 0.0
          %365 = vst [vmem:[#allocation2 + $0x10] sm:$0xff] 0.0
          %366 = vst [vmem:[#allocation2 + $0x18] sm:$0xff] 0.0
          %367 = vst [vmem:[#allocation2 + $0x20] sm:$0xff] 0.0
          %368 = vst [vmem:[#allocation2 + $0x28] sm:$0xff] 0.0
          %369 = vst [vmem:[#allocation2 + $0x30] sm:$0xff] 0.0
          %370 = vst [vmem:[#allocation2 + $0x38] sm:$0xff] 0.0
          %371 = vst [vmem:[#allocation2 + $0x40] sm:$0xff] 0.0
          %372 = vst [vmem:[#allocation2 + $0x48] sm:$0xff] 0.0
          %373 = vst [vmem:[#allocation2 + $0x50] sm:$0xff] 0.0
          %374 = vst [vmem:[#allocation2 + $0x58] sm:$0xff] 0.0
          %375 = vst [vmem:[#allocation2 + $0x60] sm:$0xff] 0.0
          %376 = vst [vmem:[#allocation2 + $0x68] sm:$0xff] 0.0
          %377 = vst [vmem:[#allocation2 + $0x70] sm:$0xff] 0.0
          %378 = vst [vmem:[#allocation2 + $0x78] sm:$0xff] 0.0
          %379 = vst [vmem:[#allocation2 + $0x80] sm:$0xff] 0.0
          %380 = vst [vmem:[#allocation2 + $0x88] sm:$0xff] 0.0
          %381 = vst [vmem:[#allocation2 + $0x90] sm:$0xff] 0.0
          %382 = vst [vmem:[#allocation2 + $0x98] sm:$0xff] 0.0
          %383 = vst [vmem:[#allocation2 + $0xa0] sm:$0xff] 0.0
          %384 = vst [vmem:[#allocation2 + $0xa8] sm:$0xff] 0.0
          %385 = vst [vmem:[#allocation2 + $0xb0] sm:$0xff] 0.0
          %386 = vst [vmem:[#allocation2 + $0xb8] sm:$0xff] 0.0
          %387 = vst [vmem:[#allocation2 + $0xc0] sm:$0xff] 0.0
          %388 = vst [vmem:[#allocation2 + $0xc8] sm:$0xff] 0.0
          %389 = vst [vmem:[#allocation2 + $0xd0] sm:$0xff] 0.0
          %390 = vst [vmem:[#allocation2 + $0xd8] sm:$0xff] 0.0
          %391 = vst [vmem:[#allocation2 + $0xe0] sm:$0xff] 0.0
          %392 = vst [vmem:[#allocation2 + $0xe8] sm:$0xff] 0.0
          %393 = vst [vmem:[#allocation2 + $0xf0] sm:$0xff] 0.0
          %394 = vst [vmem:[#allocation2 + $0xf8] sm:$0xff] 0.0
        $region55: #{generator_forward.49} parent=46 // pred_fallthru
          _
        %v395 = vld [vmem:[#allocation2] sm:$0xff]
        %v396 = vld [vmem:[#allocation2 + $0x8] sm:$0xff]
        %v397 = vld [vmem:[#allocation2 + $0x10] sm:$0xff]
        %v398 = vld [vmem:[#allocation2 + $0x18] sm:$0xff]
        %v399 = vld [vmem:[#allocation2 + $0x20] sm:$0xff]
        %v400 = vld [vmem:[#allocation2 + $0x28] sm:$0xff]
        %v401 = vld [vmem:[#allocation2 + $0x30] sm:$0xff]
        %v402 = vld [vmem:[#allocation2 + $0x38] sm:$0xff]
        %v403 = vld [vmem:[#allocation2 + $0x40] sm:$0xff]
        %v404 = vld [vmem:[#allocation2 + $0x48] sm:$0xff]
        %v405 = vld [vmem:[#allocation2 + $0x50] sm:$0xff]
        %v406 = vld [vmem:[#allocation2 + $0x58] sm:$0xff]
        %v407 = vld [vmem:[#allocation2 + $0x60] sm:$0xff]
        %v408 = vld [vmem:[#allocation2 + $0x68] sm:$0xff]
        %v409 = vld [vmem:[#allocation2 + $0x70] sm:$0xff]
        %v410 = vld [vmem:[#allocation2 + $0x78] sm:$0xff]
        %v411 = vld [vmem:[#allocation2 + $0x80] sm:$0xff]
        %v412 = vld [vmem:[#allocation2 + $0x88] sm:$0xff]
        %v413 = vld [vmem:[#allocation2 + $0x90] sm:$0xff]
        %v414 = vld [vmem:[#allocation2 + $0x98] sm:$0xff]
        %v415 = vld [vmem:[#allocation2 + $0xa0] sm:$0xff]
        %v416 = vld [vmem:[#allocation2 + $0xa8] sm:$0xff]
        %v417 = vld [vmem:[#allocation2 + $0xb0] sm:$0xff]
        %v418 = vld [vmem:[#allocation2 + $0xb8] sm:$0xff]
        %v419 = vld [vmem:[#allocation2 + $0xc0] sm:$0xff]
        %v420 = vld [vmem:[#allocation2 + $0xc8] sm:$0xff]
        %v421 = vld [vmem:[#allocation2 + $0xd0] sm:$0xff]
        %v422 = vld [vmem:[#allocation2 + $0xd8] sm:$0xff]
        %v423 = vld [vmem:[#allocation2 + $0xe0] sm:$0xff]
        %v424 = vld [vmem:[#allocation2 + $0xe8] sm:$0xff]
        %v425 = vld [vmem:[#allocation2 + $0xf0] sm:$0xff]
        %v426 = vld [vmem:[#allocation2 + $0xf8] sm:$0xff]
        %v427 = vld [vmem:[%s308] sm:$0xff]
        %v428 = vld [vmem:[%s308 + $0x8] sm:$0xff]
        %v429 = vld [vmem:[%s308 + $0x10] sm:$0xff]
        %v430 = vld [vmem:[%s308 + $0x18] sm:$0xff]
        %v431 = vld [vmem:[%s308 + $0x20] sm:$0xff]
        %v432 = vld [vmem:[%s308 + $0x28] sm:$0xff]
        %v433 = vld [vmem:[%s308 + $0x30] sm:$0xff]
        %v434 = vld [vmem:[%s308 + $0x38] sm:$0xff]
        %v435 = vld [vmem:[%s308 + $0x40] sm:$0xff]
        %v436 = vld [vmem:[%s308 + $0x48] sm:$0xff]
        %v437 = vld [vmem:[%s308 + $0x50] sm:$0xff]
        %v438 = vld [vmem:[%s308 + $0x58] sm:$0xff]
        %v439 = vld [vmem:[%s308 + $0x60] sm:$0xff]
        %v440 = vld [vmem:[%s308 + $0x68] sm:$0xff]
        %v441 = vld [vmem:[%s308 + $0x70] sm:$0xff]
        %v442 = vld [vmem:[%s308 + $0x78] sm:$0xff]
        %v443 = vld [vmem:[%s308 + $0x80] sm:$0xff]
        %v444 = vld [vmem:[%s308 + $0x88] sm:$0xff]
        %v445 = vld [vmem:[%s308 + $0x90] sm:$0xff]
        %v446 = vld [vmem:[%s308 + $0x98] sm:$0xff]
        %v447 = vld [vmem:[%s308 + $0xa0] sm:$0xff]
        %v448 = vld [vmem:[%s308 + $0xa8] sm:$0xff]
        %v449 = vld [vmem:[%s308 + $0xb0] sm:$0xff]
        %v450 = vld [vmem:[%s308 + $0xb8] sm:$0xff]
        %v451 = vld [vmem:[%s308 + $0xc0] sm:$0xff]
        %v452 = vld [vmem:[%s308 + $0xc8] sm:$0xff]
        %v453 = vld [vmem:[%s308 + $0xd0] sm:$0xff]
        %v454 = vld [vmem:[%s308 + $0xd8] sm:$0xff]
        %v455 = vld [vmem:[%s308 + $0xe0] sm:$0xff]
        %v456 = vld [vmem:[%s308 + $0xe8] sm:$0xff]
        %v457 = vld [vmem:[%s308 + $0xf0] sm:$0xff]
        %v458 = vld [vmem:[%s308 + $0xf8] sm:$0xff]
        %v459 = vld [vmem:[%s308 + $0x100] sm:$0xff]
        %v460 = vld [vmem:[%s308 + $0x108] sm:$0xff]
        %v461 = vld [vmem:[%s308 + $0x110] sm:$0xff]
        %v462 = vld [vmem:[%s308 + $0x118] sm:$0xff]
        %v463 = vld [vmem:[%s308 + $0x120] sm:$0xff]
        %v464 = vld [vmem:[%s308 + $0x128] sm:$0xff]
        %v465 = vld [vmem:[%s308 + $0x130] sm:$0xff]
        %v466 = vld [vmem:[%s308 + $0x138] sm:$0xff]
        %v467 = vld [vmem:[%s308 + $0x140] sm:$0xff]
        %v468 = vld [vmem:[%s308 + $0x148] sm:$0xff]
        %v469 = vld [vmem:[%s308 + $0x150] sm:$0xff]
        %v470 = vld [vmem:[%s308 + $0x158] sm:$0xff]
        %v471 = vld [vmem:[%s308 + $0x160] sm:$0xff]
        %v472 = vld [vmem:[%s308 + $0x168] sm:$0xff]
        %v473 = vld [vmem:[%s308 + $0x170] sm:$0xff]
        %v474 = vld [vmem:[%s308 + $0x178] sm:$0xff]
        %v475 = vld [vmem:[%s308 + $0x180] sm:$0xff]
        %v476 = vld [vmem:[%s308 + $0x188] sm:$0xff]
        %v477 = vld [vmem:[%s308 + $0x190] sm:$0xff]
        %v478 = vld [vmem:[%s308 + $0x198] sm:$0xff]
        %v479 = vld [vmem:[%s308 + $0x1a0] sm:$0xff]
        %v480 = vld [vmem:[%s308 + $0x1a8] sm:$0xff]
        %v481 = vld [vmem:[%s308 + $0x1b0] sm:$0xff]
        %v482 = vld [vmem:[%s308 + $0x1b8] sm:$0xff]
        %v483 = vld [vmem:[%s308 + $0x1c0] sm:$0xff]
        %v484 = vld [vmem:[%s308 + $0x1c8] sm:$0xff]
        %v485 = vld [vmem:[%s308 + $0x1d0] sm:$0xff]
        %v486 = vld [vmem:[%s308 + $0x1d8] sm:$0xff]
        %v487 = vld [vmem:[%s308 + $0x1e0] sm:$0xff]
        %v488 = vld [vmem:[%s308 + $0x1e8] sm:$0xff]
        %v489 = vld [vmem:[%s308 + $0x1f0] sm:$0xff]
        %v490 = vld [vmem:[%s308 + $0x1f8] sm:$0xff]
        %v491 = vld [vmem:[%s347] sm:$0xf]
        %v492 = vld [vmem:[%s347 + $0x4] sm:$0xf]
        %v493 = vld [vmem:[%s347 + $0x8] sm:$0xf]
        %v494 = vld [vmem:[%s347 + $0xc] sm:$0xf]
        %v495 = vld [vmem:[%s347 + $0x10] sm:$0xf]
        %v496 = vld [vmem:[%s347 + $0x14] sm:$0xf]
        %v497 = vld [vmem:[%s347 + $0x18] sm:$0xf]
        %v498 = vld [vmem:[%s347 + $0x1c] sm:$0xf]
        %v499 = vld [vmem:[%s347 + $0x20] sm:$0xf]
        %v500 = vld [vmem:[%s347 + $0x24] sm:$0xf]
        %v501 = vld [vmem:[%s347 + $0x28] sm:$0xf]
        %v502 = vld [vmem:[%s347 + $0x2c] sm:$0xf]
        %v503 = vld [vmem:[%s347 + $0x30] sm:$0xf]
        %v504 = vld [vmem:[%s347 + $0x34] sm:$0xf]
        %v505 = vld [vmem:[%s347 + $0x38] sm:$0xf]
        %v506 = vld [vmem:[%s347 + $0x3c] sm:$0xf]
        %v507 = vld [vmem:[%s347 + $0x40] sm:$0xf]
        %v508 = vld [vmem:[%s347 + $0x44] sm:$0xf]
        %v509 = vld [vmem:[%s347 + $0x48] sm:$0xf]
        %v510 = vld [vmem:[%s347 + $0x4c] sm:$0xf]
        %v511 = vld [vmem:[%s347 + $0x50] sm:$0xf]
        %v512 = vld [vmem:[%s347 + $0x54] sm:$0xf]
        %v513 = vld [vmem:[%s347 + $0x58] sm:$0xf]
        %v514 = vld [vmem:[%s347 + $0x5c] sm:$0xf]
        %v515 = vld [vmem:[%s347 + $0x60] sm:$0xf]
        %v516 = vld [vmem:[%s347 + $0x64] sm:$0xf]
        %v517 = vld [vmem:[%s347 + $0x68] sm:$0xf]
        %v518 = vld [vmem:[%s347 + $0x6c] sm:$0xf]
        %v519 = vld [vmem:[%s347 + $0x70] sm:$0xf]
        %v520 = vld [vmem:[%s347 + $0x74] sm:$0xf]
        %v521 = vld [vmem:[%s347 + $0x78] sm:$0xf]
        %v522 = vld [vmem:[%s347 + $0x7c] sm:$0xf]
        %v523 = vld [vmem:[%s347 + $0x80] sm:$0xf]
        %v524 = vld [vmem:[%s347 + $0x84] sm:$0xf]
        %v525 = vld [vmem:[%s347 + $0x88] sm:$0xf]
        %v526 = vld [vmem:[%s347 + $0x8c] sm:$0xf]
        %v527 = vld [vmem:[%s347 + $0x90] sm:$0xf]
        %v528 = vld [vmem:[%s347 + $0x94] sm:$0xf]
        %v529 = vld [vmem:[%s347 + $0x98] sm:$0xf]
        %v530 = vld [vmem:[%s347 + $0x9c] sm:$0xf]
        %v531 = vld [vmem:[%s347 + $0xa0] sm:$0xf]
        %v532 = vld [vmem:[%s347 + $0xa4] sm:$0xf]
        %v533 = vld [vmem:[%s347 + $0xa8] sm:$0xf]
        %v534 = vld [vmem:[%s347 + $0xac] sm:$0xf]
        %v535 = vld [vmem:[%s347 + $0xb0] sm:$0xf]
        %v536 = vld [vmem:[%s347 + $0xb4] sm:$0xf]
        %v537 = vld [vmem:[%s347 + $0xb8] sm:$0xf]
        %v538 = vld [vmem:[%s347 + $0xbc] sm:$0xf]
        %v539 = vld [vmem:[%s347 + $0xc0] sm:$0xf]
        %v540 = vld [vmem:[%s347 + $0xc4] sm:$0xf]
        %v541 = vld [vmem:[%s347 + $0xc8] sm:$0xf]
        %v542 = vld [vmem:[%s347 + $0xcc] sm:$0xf]
        %v543 = vld [vmem:[%s347 + $0xd0] sm:$0xf]
        %v544 = vld [vmem:[%s347 + $0xd4] sm:$0xf]
        %v545 = vld [vmem:[%s347 + $0xd8] sm:$0xf]
        %v546 = vld [vmem:[%s347 + $0xdc] sm:$0xf]
        %v547 = vld [vmem:[%s347 + $0xe0] sm:$0xf]
        %v548 = vld [vmem:[%s347 + $0xe4] sm:$0xf]
        %v549 = vld [vmem:[%s347 + $0xe8] sm:$0xf]
        %v550 = vld [vmem:[%s347 + $0xec] sm:$0xf]
        %v551 = vld [vmem:[%s347 + $0xf0] sm:$0xf]
        %v552 = vld [vmem:[%s347 + $0xf4] sm:$0xf]
        %v553 = vld [vmem:[%s347 + $0xf8] sm:$0xf]
        %v554 = vld [vmem:[%s347 + $0xfc] sm:$0xf]
        %v619 = vunpack.c.l.b16 %v427
        %v620 = vunpack.c.h.b16 %v427
        %v621 = vunpack.c.l.b16 %v428
        %v622 = vunpack.c.h.b16 %v428
        %v623 = vunpack.c.l.b16 %v429
        %v624 = vunpack.c.h.b16 %v429
        %v625 = vunpack.c.l.b16 %v430
        %v626 = vunpack.c.h.b16 %v430
        %v627 = vunpack.c.l.b16 %v431
        %v628 = vunpack.c.h.b16 %v431
        %v629 = vunpack.c.l.b16 %v432
        %v630 = vunpack.c.h.b16 %v432
        %v631 = vunpack.c.l.b16 %v433
        %v632 = vunpack.c.h.b16 %v433
        %v633 = vunpack.c.l.b16 %v434
        %v634 = vunpack.c.h.b16 %v434
        %v635 = vunpack.c.l.b16 %v435
        %v636 = vunpack.c.h.b16 %v435
        %v637 = vunpack.c.l.b16 %v436
        %v638 = vunpack.c.h.b16 %v436
        %v639 = vunpack.c.l.b16 %v437
        %v640 = vunpack.c.h.b16 %v437
        %v641 = vunpack.c.l.b16 %v438
        %v642 = vunpack.c.h.b16 %v438
        %v643 = vunpack.c.l.b16 %v439
        %v644 = vunpack.c.h.b16 %v439
        %v645 = vunpack.c.l.b16 %v440
        %v646 = vunpack.c.h.b16 %v440
        %v647 = vunpack.c.l.b16 %v441
        %v648 = vunpack.c.h.b16 %v441
        %v649 = vunpack.c.l.b16 %v442
        %v650 = vunpack.c.h.b16 %v442
        %v651 = vunpack.c.l.b16 %v443
        %v652 = vunpack.c.h.b16 %v443
        %v653 = vunpack.c.l.b16 %v444
        %v654 = vunpack.c.h.b16 %v444
        %v655 = vunpack.c.l.b16 %v445
        %v656 = vunpack.c.h.b16 %v445
        %v657 = vunpack.c.l.b16 %v446
        %v658 = vunpack.c.h.b16 %v446
        %v659 = vunpack.c.l.b16 %v447
        %v660 = vunpack.c.h.b16 %v447
        %v661 = vunpack.c.l.b16 %v448
        %v662 = vunpack.c.h.b16 %v448
        %v663 = vunpack.c.l.b16 %v449
        %v664 = vunpack.c.h.b16 %v449
        %v665 = vunpack.c.l.b16 %v450
        %v666 = vunpack.c.h.b16 %v450
        %v667 = vunpack.c.l.b16 %v451
        %v668 = vunpack.c.h.b16 %v451
        %v669 = vunpack.c.l.b16 %v452
        %v670 = vunpack.c.h.b16 %v452
        %v671 = vunpack.c.l.b16 %v453
        %v672 = vunpack.c.h.b16 %v453
        %v673 = vunpack.c.l.b16 %v454
        %v674 = vunpack.c.h.b16 %v454
        %v675 = vunpack.c.l.b16 %v455
        %v676 = vunpack.c.h.b16 %v455
        %v677 = vunpack.c.l.b16 %v456
        %v678 = vunpack.c.h.b16 %v456
        %v679 = vunpack.c.l.b16 %v457
        %v680 = vunpack.c.h.b16 %v457
        %v681 = vunpack.c.l.b16 %v458
        %v682 = vunpack.c.h.b16 %v458
        %v683 = vunpack.c.l.b16 %v459
        %v684 = vunpack.c.h.b16 %v459
        %v685 = vunpack.c.l.b16 %v460
        %v686 = vunpack.c.h.b16 %v460
        %v687 = vunpack.c.l.b16 %v461
        %v688 = vunpack.c.h.b16 %v461
        %v689 = vunpack.c.l.b16 %v462
        %v690 = vunpack.c.h.b16 %v462
        %v691 = vunpack.c.l.b16 %v463
        %v692 = vunpack.c.h.b16 %v463
        %v693 = vunpack.c.l.b16 %v464
        %v694 = vunpack.c.h.b16 %v464
        %v695 = vunpack.c.l.b16 %v465
        %v696 = vunpack.c.h.b16 %v465
        %v697 = vunpack.c.l.b16 %v466
        %v698 = vunpack.c.h.b16 %v466
        %v699 = vunpack.c.l.b16 %v467
        %v700 = vunpack.c.h.b16 %v467
        %v701 = vunpack.c.l.b16 %v468
        %v702 = vunpack.c.h.b16 %v468
        %v703 = vunpack.c.l.b16 %v469
        %v704 = vunpack.c.h.b16 %v469
        %v705 = vunpack.c.l.b16 %v470
        %v706 = vunpack.c.h.b16 %v470
        %v707 = vunpack.c.l.b16 %v471
        %v708 = vunpack.c.h.b16 %v471
        %v709 = vunpack.c.l.b16 %v472
        %v710 = vunpack.c.h.b16 %v472
        %v711 = vunpack.c.l.b16 %v473
        %v712 = vunpack.c.h.b16 %v473
        %v713 = vunpack.c.l.b16 %v474
        %v714 = vunpack.c.h.b16 %v474
        %v715 = vunpack.c.l.b16 %v475
        %v716 = vunpack.c.h.b16 %v475
        %v717 = vunpack.c.l.b16 %v476
        %v718 = vunpack.c.h.b16 %v476
        %v719 = vunpack.c.l.b16 %v477
        %v720 = vunpack.c.h.b16 %v477
        %v721 = vunpack.c.l.b16 %v478
        %v722 = vunpack.c.h.b16 %v478
        %v723 = vunpack.c.l.b16 %v479
        %v724 = vunpack.c.h.b16 %v479
        %v725 = vunpack.c.l.b16 %v480
        %v726 = vunpack.c.h.b16 %v480
        %v727 = vunpack.c.l.b16 %v481
        %v728 = vunpack.c.h.b16 %v481
        %v729 = vunpack.c.l.b16 %v482
        %v730 = vunpack.c.h.b16 %v482
        %v731 = vunpack.c.l.b16 %v483
        %v732 = vunpack.c.h.b16 %v483
        %v733 = vunpack.c.l.b16 %v484
        %v734 = vunpack.c.h.b16 %v484
        %v735 = vunpack.c.l.b16 %v485
        %v736 = vunpack.c.h.b16 %v485
        %v737 = vunpack.c.l.b16 %v486
        %v738 = vunpack.c.h.b16 %v486
        %v739 = vunpack.c.l.b16 %v487
        %v740 = vunpack.c.h.b16 %v487
        %v741 = vunpack.c.l.b16 %v488
        %v742 = vunpack.c.h.b16 %v488
        %v743 = vunpack.c.l.b16 %v489
        %v744 = vunpack.c.h.b16 %v489
        %v745 = vunpack.c.l.b16 %v490
        %v746 = vunpack.c.h.b16 %v490
        %v747 = vpack.c.b16 %v623, %v619
        %v748 = vpack.c.b16 %v624, %v620
        %v749 = vpack.c.b16 %v625, %v621
        %v750 = vpack.c.b16 %v626, %v622
        %v751 = vpack.c.b16 %v631, %v627
        %v752 = vpack.c.b16 %v632, %v628
        %v753 = vpack.c.b16 %v633, %v629
        %v754 = vpack.c.b16 %v634, %v630
        %v755 = vpack.c.b16 %v639, %v635
        %v756 = vpack.c.b16 %v640, %v636
        %v757 = vpack.c.b16 %v641, %v637
        %v758 = vpack.c.b16 %v642, %v638
        %v759 = vpack.c.b16 %v647, %v643
        %v760 = vpack.c.b16 %v648, %v644
        %v761 = vpack.c.b16 %v649, %v645
        %v762 = vpack.c.b16 %v650, %v646
        %v763 = vpack.c.b16 %v655, %v651
        %v764 = vpack.c.b16 %v656, %v652
        %v765 = vpack.c.b16 %v657, %v653
        %v766 = vpack.c.b16 %v658, %v654
        %v767 = vpack.c.b16 %v663, %v659
        %v768 = vpack.c.b16 %v664, %v660
        %v769 = vpack.c.b16 %v665, %v661
        %v770 = vpack.c.b16 %v666, %v662
        %v771 = vpack.c.b16 %v671, %v667
        %v772 = vpack.c.b16 %v672, %v668
        %v773 = vpack.c.b16 %v673, %v669
        %v774 = vpack.c.b16 %v674, %v670
        %v775 = vpack.c.b16 %v679, %v675
        %v776 = vpack.c.b16 %v680, %v676
        %v777 = vpack.c.b16 %v681, %v677
        %v778 = vpack.c.b16 %v682, %v678
        %v779 = vpack.c.b16 %v687, %v683
        %v780 = vpack.c.b16 %v688, %v684
        %v781 = vpack.c.b16 %v689, %v685
        %v782 = vpack.c.b16 %v690, %v686
        %v783 = vpack.c.b16 %v695, %v691
        %v784 = vpack.c.b16 %v696, %v692
        %v785 = vpack.c.b16 %v697, %v693
        %v786 = vpack.c.b16 %v698, %v694
        %v787 = vpack.c.b16 %v703, %v699
        %v788 = vpack.c.b16 %v704, %v700
        %v789 = vpack.c.b16 %v705, %v701
        %v790 = vpack.c.b16 %v706, %v702
        %v791 = vpack.c.b16 %v711, %v707
        %v792 = vpack.c.b16 %v712, %v708
        %v793 = vpack.c.b16 %v713, %v709
        %v794 = vpack.c.b16 %v714, %v710
        %v795 = vpack.c.b16 %v719, %v715
        %v796 = vpack.c.b16 %v720, %v716
        %v797 = vpack.c.b16 %v721, %v717
        %v798 = vpack.c.b16 %v722, %v718
        %v799 = vpack.c.b16 %v727, %v723
        %v800 = vpack.c.b16 %v728, %v724
        %v801 = vpack.c.b16 %v729, %v725
        %v802 = vpack.c.b16 %v730, %v726
        %v803 = vpack.c.b16 %v735, %v731
        %v804 = vpack.c.b16 %v736, %v732
        %v805 = vpack.c.b16 %v737, %v733
        %v806 = vpack.c.b16 %v738, %v734
        %v807 = vpack.c.b16 %v743, %v739
        %v808 = vpack.c.b16 %v744, %v740
        %v809 = vpack.c.b16 %v745, %v741
        %v810 = vpack.c.b16 %v746, %v742
        %v939 = vunpack.c.l.b16 %v491
        %v940 = vunpack.c.l.b16 %v492
        %v941 = vunpack.c.l.b16 %v493
        %v942 = vunpack.c.l.b16 %v494
        %v943 = vunpack.c.l.b16 %v495
        %v944 = vunpack.c.l.b16 %v496
        %v945 = vunpack.c.l.b16 %v497
        %v946 = vunpack.c.l.b16 %v498
        %v947 = vunpack.c.l.b16 %v499
        %v948 = vunpack.c.l.b16 %v500
        %v949 = vunpack.c.l.b16 %v501
        %v950 = vunpack.c.l.b16 %v502
        %v951 = vunpack.c.l.b16 %v503
        %v952 = vunpack.c.l.b16 %v504
        %v953 = vunpack.c.l.b16 %v505
        %v954 = vunpack.c.l.b16 %v506
        %v955 = vunpack.c.l.b16 %v507
        %v956 = vunpack.c.l.b16 %v508
        %v957 = vunpack.c.l.b16 %v509
        %v958 = vunpack.c.l.b16 %v510
        %v959 = vunpack.c.l.b16 %v511
        %v960 = vunpack.c.l.b16 %v512
        %v961 = vunpack.c.l.b16 %v513
        %v962 = vunpack.c.l.b16 %v514
        %v963 = vunpack.c.l.b16 %v515
        %v964 = vunpack.c.l.b16 %v516
        %v965 = vunpack.c.l.b16 %v517
        %v966 = vunpack.c.l.b16 %v518
        %v967 = vunpack.c.l.b16 %v519
        %v968 = vunpack.c.l.b16 %v520
        %v969 = vunpack.c.l.b16 %v521
        %v970 = vunpack.c.l.b16 %v522
        %v971 = vunpack.c.l.b16 %v523
        %v972 = vunpack.c.l.b16 %v524
        %v973 = vunpack.c.l.b16 %v525
        %v974 = vunpack.c.l.b16 %v526
        %v975 = vunpack.c.l.b16 %v527
        %v976 = vunpack.c.l.b16 %v528
        %v977 = vunpack.c.l.b16 %v529
        %v978 = vunpack.c.l.b16 %v530
        %v979 = vunpack.c.l.b16 %v531
        %v980 = vunpack.c.l.b16 %v532
        %v981 = vunpack.c.l.b16 %v533
        %v982 = vunpack.c.l.b16 %v534
        %v983 = vunpack.c.l.b16 %v535
        %v984 = vunpack.c.l.b16 %v536
        %v985 = vunpack.c.l.b16 %v537
        %v986 = vunpack.c.l.b16 %v538
        %v987 = vunpack.c.l.b16 %v539
        %v988 = vunpack.c.l.b16 %v540
        %v989 = vunpack.c.l.b16 %v541
        %v990 = vunpack.c.l.b16 %v542
        %v991 = vunpack.c.l.b16 %v543
        %v992 = vunpack.c.l.b16 %v544
        %v993 = vunpack.c.l.b16 %v545
        %v994 = vunpack.c.l.b16 %v546
        %v995 = vunpack.c.l.b16 %v547
        %v996 = vunpack.c.l.b16 %v548
        %v997 = vunpack.c.l.b16 %v549
        %v998 = vunpack.c.l.b16 %v550
        %v999 = vunpack.c.l.b16 %v551
        %v1000 = vunpack.c.l.b16 %v552
        %v1001 = vunpack.c.l.b16 %v553
        %v1002 = vunpack.c.l.b16 %v554
        %v1003 = vpack.c.b16 %v940, %v939
        %v1004 = vpack.c.b16 %v942, %v941
        %v1005 = vpack.c.b16 %v944, %v943
        %v1006 = vpack.c.b16 %v946, %v945
        %v1007 = vpack.c.b16 %v948, %v947
        %v1008 = vpack.c.b16 %v950, %v949
        %v1009 = vpack.c.b16 %v952, %v951
        %v1010 = vpack.c.b16 %v954, %v953
        %v1011 = vpack.c.b16 %v956, %v955
        %v1012 = vpack.c.b16 %v958, %v957
        %v1013 = vpack.c.b16 %v960, %v959
        %v1014 = vpack.c.b16 %v962, %v961
        %v1015 = vpack.c.b16 %v964, %v963
        %v1016 = vpack.c.b16 %v966, %v965
        %v1017 = vpack.c.b16 %v968, %v967
        %v1018 = vpack.c.b16 %v970, %v969
        %v1019 = vpack.c.b16 %v972, %v971
        %v1020 = vpack.c.b16 %v974, %v973
        %v1021 = vpack.c.b16 %v976, %v975
        %v1022 = vpack.c.b16 %v978, %v977
        %v1023 = vpack.c.b16 %v980, %v979
        %v1024 = vpack.c.b16 %v982, %v981
        %v1025 = vpack.c.b16 %v984, %v983
        %v1026 = vpack.c.b16 %v986, %v985
        %v1027 = vpack.c.b16 %v988, %v987
        %v1028 = vpack.c.b16 %v990, %v989
        %v1029 = vpack.c.b16 %v992, %v991
        %v1030 = vpack.c.b16 %v994, %v993
        %v1031 = vpack.c.b16 %v996, %v995
        %v1032 = vpack.c.b16 %v998, %v997
        %v1033 = vpack.c.b16 %v1000, %v999
        %v1034 = vpack.c.b16 %v1002, %v1001
        %1067 = vmatprep.subr.bf16.mxu0 0
        %1068 = vmatpush1.bf16.msra.mxu0 %v1003
        %1069 = vmatprep.subr.bf16.mxu0 0
        %1070 = vmatpush1.bf16.msra.mxu0 %v1004
        %1071 = vmatprep.subr.bf16.mxu0 0
        %1072 = vmatpush1.bf16.msra.mxu0 %v1005
        %1073 = vmatprep.subr.bf16.mxu0 0
        %1074 = vmatpush1.bf16.msra.mxu0 %v1006
        %1075 = vmatprep.subr.bf16.mxu0 0
        %1076 = vmatpush1.bf16.msra.mxu0 %v1007
        %1077 = vmatprep.subr.bf16.mxu0 0
        %1078 = vmatpush1.bf16.msra.mxu0 %v1008
        %1079 = vmatprep.subr.bf16.mxu0 0
        %1080 = vmatpush1.bf16.msra.mxu0 %v1009
        %1081 = vmatprep.subr.bf16.mxu0 0
        %1082 = vmatpush1.bf16.msra.mxu0 %v1010
        %1083 = vmatprep.subr.bf16.mxu0 0
        %1084 = vmatpush1.bf16.msra.mxu0 %v1011
        %1085 = vmatprep.subr.bf16.mxu0 0
        %1086 = vmatpush1.bf16.msra.mxu0 %v1012
        %1087 = vmatprep.subr.bf16.mxu0 0
        %1088 = vmatpush1.bf16.msra.mxu0 %v1013
        %1089 = vmatprep.subr.bf16.mxu0 0
        %1090 = vmatpush1.bf16.msra.mxu0 %v1014
        %1091 = vmatprep.subr.bf16.mxu0 0
        %1092 = vmatpush1.bf16.msra.mxu0 %v1015
        %1093 = vmatprep.subr.bf16.mxu0 0
        %1094 = vmatpush1.bf16.msra.mxu0 %v1016
        %1095 = vmatprep.subr.bf16.mxu0 0
        %1096 = vmatpush1.bf16.msra.mxu0 %v1017
        %1097 = vmatprep.subr.bf16.mxu0 0
        %1098 = vmatpush1.bf16.msra.mxu0 %v1018
        %1099 = vmatprep.mubr.bf16.mxu0 %v748
        %1100 = vmatmul.mubr.bf16.gmra.mrb[0].mxu0 %v747
        %v1101 = vpop.f32.mrb[0].mxu0
        %v1102 = vadd.f32 0.0, %v1101
        %v1103 = vpop.f32.mrb[0].mxu0
        %v1104 = vpop.f32.mrb[0].mxu0
        %v1105 = vadd.f32 0.0, %v1104
        %v1106 = vpop.f32.mrb[0].mxu0
        %1107 = vmatprep.mubr.bf16.mxu0 %v752
        %1108 = vmatmul.mubr.bf16.gmra.mrb[0].mxu0 %v751
        %v1109 = vpop.f32.mrb[0].mxu0
        %v1110 = vadd.f32 0.0, %v1109
        %v1111 = vpop.f32.mrb[0].mxu0
        %v1112 = vpop.f32.mrb[0].mxu0
        %v1113 = vadd.f32 0.0, %v1112
        %v1114 = vpop.f32.mrb[0].mxu0
        %1115 = vmatprep.mubr.bf16.mxu0 %v756
        %1116 = vmatmul.mubr.bf16.gmra.mrb[0].mxu0 %v755
        %v1117 = vpop.f32.mrb[0].mxu0
        %v1118 = vadd.f32 0.0, %v1117
        %v1119 = vpop.f32.mrb[0].mxu0
        %v1120 = vpop.f32.mrb[0].mxu0
        %v1121 = vadd.f32 0.0, %v1120
        %v1122 = vpop.f32.mrb[0].mxu0
        %1123 = vmatprep.mubr.bf16.mxu0 %v760
        %1124 = vmatmul.mubr.bf16.gmra.mrb[0].mxu0 %v759
        %v1125 = vpop.f32.mrb[0].mxu0
        %v1126 = vadd.f32 0.0, %v1125
        %v1127 = vpop.f32.mrb[0].mxu0
        %v1128 = vpop.f32.mrb[0].mxu0
        %v1129 = vadd.f32 0.0, %v1128
        %v1130 = vpop.f32.mrb[0].mxu0
        %1131 = vmatprep.mubr.bf16.mxu0 %v764
        %1132 = vmatmul.mubr.bf16.gmra.mrb[0].mxu0 %v763
        %v1133 = vpop.f32.mrb[0].mxu0
        %v1134 = vadd.f32 0.0, %v1133
        %v1135 = vpop.f32.mrb[0].mxu0
        %v1136 = vpop.f32.mrb[0].mxu0
        %v1137 = vadd.f32 0.0, %v1136
        %v1138 = vpop.f32.mrb[0].mxu0
        %1139 = vmatprep.mubr.bf16.mxu0 %v768
        %1140 = vmatmul.mubr.bf16.gmra.mrb[0].mxu0 %v767
        %v1141 = vpop.f32.mrb[0].mxu0
        %v1142 = vadd.f32 0.0, %v1141
        %v1143 = vpop.f32.mrb[0].mxu0
        %v1144 = vpop.f32.mrb[0].mxu0
        %v1145 = vadd.f32 0.0, %v1144
        %v1146 = vpop.f32.mrb[0].mxu0
        %1147 = vmatprep.mubr.bf16.mxu0 %v772
        %1148 = vmatmul.mubr.bf16.gmra.mrb[0].mxu0 %v771
        %v1149 = vpop.f32.mrb[0].mxu0
        %v1150 = vadd.f32 0.0, %v1149
        %v1151 = vpop.f32.mrb[0].mxu0
        %v1152 = vpop.f32.mrb[0].mxu0
        %v1153 = vadd.f32 0.0, %v1152
        %v1154 = vpop.f32.mrb[0].mxu0
        %1155 = vmatprep.mubr.bf16.mxu0 %v776
        %1156 = vmatmul.mubr.bf16.gmra.mrb[0].mxu0 %v775
        %v1157 = vpop.f32.mrb[0].mxu0
        %v1158 = vadd.f32 0.0, %v1157
        %v1159 = vpop.f32.mrb[0].mxu0
        %v1160 = vpop.f32.mrb[0].mxu0
        %v1161 = vadd.f32 0.0, %v1160
        %v1162 = vpop.f32.mrb[0].mxu0
        %1163 = vmatprep.mubr.bf16.mxu0 %v780
        %1164 = vmatmul.mubr.bf16.gmra.mrb[0].mxu0 %v779
        %v1165 = vpop.f32.mrb[0].mxu0
        %v1166 = vadd.f32 0.0, %v1165
        %v1167 = vpop.f32.mrb[0].mxu0
        %v1168 = vpop.f32.mrb[0].mxu0
        %v1169 = vadd.f32 0.0, %v1168
        %v1170 = vpop.f32.mrb[0].mxu0
        %1171 = vmatprep.mubr.bf16.mxu0 %v784
        %1172 = vmatmul.mubr.bf16.gmra.mrb[0].mxu0 %v783
        %v1173 = vpop.f32.mrb[0].mxu0
        %v1174 = vadd.f32 0.0, %v1173
        %v1175 = vpop.f32.mrb[0].mxu0
        %v1176 = vpop.f32.mrb[0].mxu0
        %v1177 = vadd.f32 0.0, %v1176
        %v1178 = vpop.f32.mrb[0].mxu0
        %1179 = vmatprep.mubr.bf16.mxu0 %v788
        %1180 = vmatmul.mubr.bf16.gmra.mrb[0].mxu0 %v787
        %v1181 = vpop.f32.mrb[0].mxu0
        %v1182 = vadd.f32 0.0, %v1181
        %v1183 = vpop.f32.mrb[0].mxu0
        %v1184 = vpop.f32.mrb[0].mxu0
        %v1185 = vadd.f32 0.0, %v1184
        %v1186 = vpop.f32.mrb[0].mxu0
        %1187 = vmatprep.mubr.bf16.mxu0 %v792
        %1188 = vmatmul.mubr.bf16.gmra.mrb[0].mxu0 %v791
        %v1189 = vpop.f32.mrb[0].mxu0
        %v1190 = vadd.f32 0.0, %v1189
        %v1191 = vpop.f32.mrb[0].mxu0
        %v1192 = vpop.f32.mrb[0].mxu0
        %v1193 = vadd.f32 0.0, %v1192
        %v1194 = vpop.f32.mrb[0].mxu0
        %1195 = vmatprep.mubr.bf16.mxu0 %v796
        %1196 = vmatmul.mubr.bf16.gmra.mrb[0].mxu0 %v795
        %v1197 = vpop.f32.mrb[0].mxu0
        %v1198 = vadd.f32 0.0, %v1197
        %v1199 = vpop.f32.mrb[0].mxu0
        %v1200 = vpop.f32.mrb[0].mxu0
        %v1201 = vadd.f32 0.0, %v1200
        %v1202 = vpop.f32.mrb[0].mxu0
        %1203 = vmatprep.mubr.bf16.mxu0 %v800
        %1204 = vmatmul.mubr.bf16.gmra.mrb[0].mxu0 %v799
        %v1205 = vpop.f32.mrb[0].mxu0
        %v1206 = vadd.f32 0.0, %v1205
        %v1207 = vpop.f32.mrb[0].mxu0
        %v1208 = vpop.f32.mrb[0].mxu0
        %v1209 = vadd.f32 0.0, %v1208
        %v1210 = vpop.f32.mrb[0].mxu0
        %1211 = vmatprep.mubr.bf16.mxu0 %v804
        %1212 = vmatmul.mubr.bf16.gmra.mrb[0].mxu0 %v803
        %v1213 = vpop.f32.mrb[0].mxu0
        %v1214 = vadd.f32 0.0, %v1213
        %v1215 = vpop.f32.mrb[0].mxu0
        %v1216 = vpop.f32.mrb[0].mxu0
        %v1217 = vadd.f32 0.0, %v1216
        %v1218 = vpop.f32.mrb[0].mxu0
        %1219 = vmatprep.mubr.bf16.mxu0 %v808
        %1220 = vmatmul.mubr.bf16.gmra.mrb[0].mxu0 %v807
        %v1221 = vpop.f32.mrb[0].mxu0
        %v1222 = vadd.f32 0.0, %v1221
        %v1223 = vpop.f32.mrb[0].mxu0
        %v1224 = vpop.f32.mrb[0].mxu0
        %v1225 = vadd.f32 0.0, %v1224
        %v1226 = vpop.f32.mrb[0].mxu0
        %1227 = vdwg.mxu0
        %1228 = vmatprep.subr.bf16.mxu0 0
        %1229 = vmatpush1.bf16.msra.mxu0 %v1019
        %1230 = vmatprep.subr.bf16.mxu0 0
        %1231 = vmatpush1.bf16.msra.mxu0 %v1020
        %1232 = vmatprep.subr.bf16.mxu0 0
        %1233 = vmatpush1.bf16.msra.mxu0 %v1021
        %1234 = vmatprep.subr.bf16.mxu0 0
        %1235 = vmatpush1.bf16.msra.mxu0 %v1022
        %1236 = vmatprep.subr.bf16.mxu0 0
        %1237 = vmatpush1.bf16.msra.mxu0 %v1023
        %1238 = vmatprep.subr.bf16.mxu0 0
        %1239 = vmatpush1.bf16.msra.mxu0 %v1024
        %1240 = vmatprep.subr.bf16.mxu0 0
        %1241 = vmatpush1.bf16.msra.mxu0 %v1025
        %1242 = vmatprep.subr.bf16.mxu0 0
        %1243 = vmatpush1.bf16.msra.mxu0 %v1026
        %1244 = vmatprep.subr.bf16.mxu0 0
        %1245 = vmatpush1.bf16.msra.mxu0 %v1027
        %1246 = vmatprep.subr.bf16.mxu0 0
        %1247 = vmatpush1.bf16.msra.mxu0 %v1028
        %1248 = vmatprep.subr.bf16.mxu0 0
        %1249 = vmatpush1.bf16.msra.mxu0 %v1029
        %1250 = vmatprep.subr.bf16.mxu0 0
        %1251 = vmatpush1.bf16.msra.mxu0 %v1030
        %1252 = vmatprep.subr.bf16.mxu0 0
        %1253 = vmatpush1.bf16.msra.mxu0 %v1031
        %1254 = vmatprep.subr.bf16.mxu0 0
        %1255 = vmatpush1.bf16.msra.mxu0 %v1032
        %1256 = vmatprep.subr.bf16.mxu0 0
        %1257 = vmatpush1.bf16.msra.mxu0 %v1033
        %1258 = vmatprep.subr.bf16.mxu0 0
        %1259 = vmatpush1.bf16.msra.mxu0 %v1034
        %1260 = vmatprep.mubr.bf16.mxu0 %v750
        %1261 = vmatmul.mubr.bf16.gmra.mrb[0].mxu0 %v749
        %v1262 = vpop.f32.mrb[0].mxu0
        %v1263 = vadd.f32 %v1102, %v1262
        %v1264 = vpop.f32.mrb[0].mxu0
        %v1265 = vpop.f32.mrb[0].mxu0
        %v1266 = vadd.f32 %v1105, %v1265
        %v1267 = vpop.f32.mrb[0].mxu0
        %1268 = vmatprep.mubr.bf16.mxu0 %v754
        %1269 = vmatmul.mubr.bf16.gmra.mrb[0].mxu0 %v753
        %v1270 = vpop.f32.mrb[0].mxu0
        %v1271 = vadd.f32 %v1110, %v1270
        %v1272 = vpop.f32.mrb[0].mxu0
        %v1273 = vpop.f32.mrb[0].mxu0
        %v1274 = vadd.f32 %v1113, %v1273
        %v1275 = vpop.f32.mrb[0].mxu0
        %1276 = vmatprep.mubr.bf16.mxu0 %v758
        %1277 = vmatmul.mubr.bf16.gmra.mrb[0].mxu0 %v757
        %v1278 = vpop.f32.mrb[0].mxu0
        %v1279 = vadd.f32 %v1118, %v1278
        %v1280 = vpop.f32.mrb[0].mxu0
        %v1281 = vpop.f32.mrb[0].mxu0
        %v1282 = vadd.f32 %v1121, %v1281
        %v1283 = vpop.f32.mrb[0].mxu0
        %1284 = vmatprep.mubr.bf16.mxu0 %v762
        %1285 = vmatmul.mubr.bf16.gmra.mrb[0].mxu0 %v761
        %v1286 = vpop.f32.mrb[0].mxu0
        %v1287 = vadd.f32 %v1126, %v1286
        %v1288 = vpop.f32.mrb[0].mxu0
        %v1289 = vpop.f32.mrb[0].mxu0
        %v1290 = vadd.f32 %v1129, %v1289
        %v1291 = vpop.f32.mrb[0].mxu0
        %1292 = vmatprep.mubr.bf16.mxu0 %v766
        %1293 = vmatmul.mubr.bf16.gmra.mrb[0].mxu0 %v765
        %v1294 = vpop.f32.mrb[0].mxu0
        %v1295 = vadd.f32 %v1134, %v1294
        %v1296 = vpop.f32.mrb[0].mxu0
        %v1297 = vpop.f32.mrb[0].mxu0
        %v1298 = vadd.f32 %v1137, %v1297
        %v1299 = vpop.f32.mrb[0].mxu0
        %1300 = vmatprep.mubr.bf16.mxu0 %v770
        %1301 = vmatmul.mubr.bf16.gmra.mrb[0].mxu0 %v769
        %v1302 = vpop.f32.mrb[0].mxu0
        %v1303 = vadd.f32 %v1142, %v1302
        %v1304 = vpop.f32.mrb[0].mxu0
        %v1305 = vpop.f32.mrb[0].mxu0
        %v1306 = vadd.f32 %v1145, %v1305
        %v1307 = vpop.f32.mrb[0].mxu0
        %1308 = vmatprep.mubr.bf16.mxu0 %v774
        %1309 = vmatmul.mubr.bf16.gmra.mrb[0].mxu0 %v773
        %v1310 = vpop.f32.mrb[0].mxu0
        %v1311 = vadd.f32 %v1150, %v1310
        %v1312 = vpop.f32.mrb[0].mxu0
        %v1313 = vpop.f32.mrb[0].mxu0
        %v1314 = vadd.f32 %v1153, %v1313
        %v1315 = vpop.f32.mrb[0].mxu0
        %1316 = vmatprep.mubr.bf16.mxu0 %v778
        %1317 = vmatmul.mubr.bf16.gmra.mrb[0].mxu0 %v777
        %v1318 = vpop.f32.mrb[0].mxu0
        %v1319 = vadd.f32 %v1158, %v1318
        %v1320 = vpop.f32.mrb[0].mxu0
        %v1321 = vpop.f32.mrb[0].mxu0
        %v1322 = vadd.f32 %v1161, %v1321
        %v1323 = vpop.f32.mrb[0].mxu0
        %1324 = vmatprep.mubr.bf16.mxu0 %v782
        %1325 = vmatmul.mubr.bf16.gmra.mrb[0].mxu0 %v781
        %v1326 = vpop.f32.mrb[0].mxu0
        %v1327 = vadd.f32 %v1166, %v1326
        %v1328 = vpop.f32.mrb[0].mxu0
        %v1329 = vpop.f32.mrb[0].mxu0
        %v1330 = vadd.f32 %v1169, %v1329
        %v1331 = vpop.f32.mrb[0].mxu0
        %1332 = vmatprep.mubr.bf16.mxu0 %v786
        %1333 = vmatmul.mubr.bf16.gmra.mrb[0].mxu0 %v785
        %v1334 = vpop.f32.mrb[0].mxu0
        %v1335 = vadd.f32 %v1174, %v1334
        %v1336 = vpop.f32.mrb[0].mxu0
        %v1337 = vpop.f32.mrb[0].mxu0
        %v1338 = vadd.f32 %v1177, %v1337
        %v1339 = vpop.f32.mrb[0].mxu0
        %1340 = vmatprep.mubr.bf16.mxu0 %v790
        %1341 = vmatmul.mubr.bf16.gmra.mrb[0].mxu0 %v789
        %v1342 = vpop.f32.mrb[0].mxu0
        %v1343 = vadd.f32 %v1182, %v1342
        %v1344 = vpop.f32.mrb[0].mxu0
        %v1345 = vpop.f32.mrb[0].mxu0
        %v1346 = vadd.f32 %v1185, %v1345
        %v1347 = vpop.f32.mrb[0].mxu0
        %1348 = vmatprep.mubr.bf16.mxu0 %v794
        %1349 = vmatmul.mubr.bf16.gmra.mrb[0].mxu0 %v793
        %v1350 = vpop.f32.mrb[0].mxu0
        %v1351 = vadd.f32 %v1190, %v1350
        %v1352 = vpop.f32.mrb[0].mxu0
        %v1353 = vpop.f32.mrb[0].mxu0
        %v1354 = vadd.f32 %v1193, %v1353
        %v1355 = vpop.f32.mrb[0].mxu0
        %1356 = vmatprep.mubr.bf16.mxu0 %v798
        %1357 = vmatmul.mubr.bf16.gmra.mrb[0].mxu0 %v797
        %v1358 = vpop.f32.mrb[0].mxu0
        %v1359 = vadd.f32 %v1198, %v1358
        %v1360 = vpop.f32.mrb[0].mxu0
        %v1361 = vpop.f32.mrb[0].mxu0
        %v1362 = vadd.f32 %v1201, %v1361
        %v1363 = vpop.f32.mrb[0].mxu0
        %1364 = vmatprep.mubr.bf16.mxu0 %v802
        %1365 = vmatmul.mubr.bf16.gmra.mrb[0].mxu0 %v801
        %v1366 = vpop.f32.mrb[0].mxu0
        %v1367 = vadd.f32 %v1206, %v1366
        %v1368 = vpop.f32.mrb[0].mxu0
        %v1369 = vpop.f32.mrb[0].mxu0
        %v1370 = vadd.f32 %v1209, %v1369
        %v1371 = vpop.f32.mrb[0].mxu0
        %1372 = vmatprep.mubr.bf16.mxu0 %v806
        %1373 = vmatmul.mubr.bf16.gmra.mrb[0].mxu0 %v805
        %v1374 = vpop.f32.mrb[0].mxu0
        %v1375 = vadd.f32 %v1214, %v1374
        %v1376 = vpop.f32.mrb[0].mxu0
        %v1377 = vpop.f32.mrb[0].mxu0
        %v1378 = vadd.f32 %v1217, %v1377
        %v1379 = vpop.f32.mrb[0].mxu0
        %1380 = vmatprep.mubr.bf16.mxu0 %v810
        %1381 = vmatmul.mubr.bf16.gmra.mrb[0].mxu0 %v809
        %v1382 = vpop.f32.mrb[0].mxu0
        %v1383 = vadd.f32 %v1222, %v1382
        %v1384 = vpop.f32.mrb[0].mxu0
        %v1385 = vpop.f32.mrb[0].mxu0
        %v1386 = vadd.f32 %v1225, %v1385
        %v1387 = vpop.f32.mrb[0].mxu0
        %1388 = vdwg.mxu0
        %v1389 = vadd.f32 %v395, %v1263
        %v1390 = vadd.f32 %v396, %v1266
        %v1391 = vadd.f32 %v397, %v1271
        %v1392 = vadd.f32 %v398, %v1274
        %v1393 = vadd.f32 %v399, %v1279
        %v1394 = vadd.f32 %v400, %v1282
        %v1395 = vadd.f32 %v401, %v1287
        %v1396 = vadd.f32 %v402, %v1290
        %v1397 = vadd.f32 %v403, %v1295
        %v1398 = vadd.f32 %v404, %v1298
        %v1399 = vadd.f32 %v405, %v1303
        %v1400 = vadd.f32 %v406, %v1306
        %v1401 = vadd.f32 %v407, %v1311
        %v1402 = vadd.f32 %v408, %v1314
        %v1403 = vadd.f32 %v409, %v1319
        %v1404 = vadd.f32 %v410, %v1322
        %v1405 = vadd.f32 %v411, %v1327
        %v1406 = vadd.f32 %v412, %v1330
        %v1407 = vadd.f32 %v413, %v1335
        %v1408 = vadd.f32 %v414, %v1338
        %v1409 = vadd.f32 %v415, %v1343
        %v1410 = vadd.f32 %v416, %v1346
        %v1411 = vadd.f32 %v417, %v1351
        %v1412 = vadd.f32 %v418, %v1354
        %v1413 = vadd.f32 %v419, %v1359
        %v1414 = vadd.f32 %v420, %v1362
        %v1415 = vadd.f32 %v421, %v1367
        %v1416 = vadd.f32 %v422, %v1370
        %v1417 = vadd.f32 %v423, %v1375
        %v1418 = vadd.f32 %v424, %v1378
        %v1419 = vadd.f32 %v425, %v1383
        %v1420 = vadd.f32 %v426, %v1386
        %1421 = vst [vmem:[#allocation2] sm:$0xff] %v1389
        %1422 = vst [vmem:[#allocation2 + $0x8] sm:$0xff] %v1390
        %1423 = vst [vmem:[#allocation2 + $0x10] sm:$0xff] %v1391
        %1424 = vst [vmem:[#allocation2 + $0x18] sm:$0xff] %v1392
        %1425 = vst [vmem:[#allocation2 + $0x20] sm:$0xff] %v1393
        %1426 = vst [vmem:[#allocation2 + $0x28] sm:$0xff] %v1394
        %1427 = vst [vmem:[#allocation2 + $0x30] sm:$0xff] %v1395
        %1428 = vst [vmem:[#allocation2 + $0x38] sm:$0xff] %v1396
        %1429 = vst [vmem:[#allocation2 + $0x40] sm:$0xff] %v1397
        %1430 = vst [vmem:[#allocation2 + $0x48] sm:$0xff] %v1398
        %1431 = vst [vmem:[#allocation2 + $0x50] sm:$0xff] %v1399
        %1432 = vst [vmem:[#allocation2 + $0x58] sm:$0xff] %v1400
        %1433 = vst [vmem:[#allocation2 + $0x60] sm:$0xff] %v1401
        %1434 = vst [vmem:[#allocation2 + $0x68] sm:$0xff] %v1402
        %1435 = vst [vmem:[#allocation2 + $0x70] sm:$0xff] %v1403
        %1436 = vst [vmem:[#allocation2 + $0x78] sm:$0xff] %v1404
        %1437 = vst [vmem:[#allocation2 + $0x80] sm:$0xff] %v1405
        %1438 = vst [vmem:[#allocation2 + $0x88] sm:$0xff] %v1406
        %1439 = vst [vmem:[#allocation2 + $0x90] sm:$0xff] %v1407
        %1440 = vst [vmem:[#allocation2 + $0x98] sm:$0xff] %v1408
        %1441 = vst [vmem:[#allocation2 + $0xa0] sm:$0xff] %v1409
        %1442 = vst [vmem:[#allocation2 + $0xa8] sm:$0xff] %v1410
        %1443 = vst [vmem:[#allocation2 + $0xb0] sm:$0xff] %v1411
        %1444 = vst [vmem:[#allocation2 + $0xb8] sm:$0xff] %v1412
        %1445 = vst [vmem:[#allocation2 + $0xc0] sm:$0xff] %v1413
        %1446 = vst [vmem:[#allocation2 + $0xc8] sm:$0xff] %v1414
        %1447 = vst [vmem:[#allocation2 + $0xd0] sm:$0xff] %v1415
        %1448 = vst [vmem:[#allocation2 + $0xd8] sm:$0xff] %v1416
        %1449 = vst [vmem:[#allocation2 + $0xe0] sm:$0xff] %v1417
        %1450 = vst [vmem:[#allocation2 + $0xe8] sm:$0xff] %v1418
        %1451 = vst [vmem:[#allocation2 + $0xf0] sm:$0xff] %v1419
        %1452 = vst [vmem:[#allocation2 + $0xf8] sm:$0xff] %v1420
        %p1453 = scmp.eq.s32.totalorder %s20, 3
        // Predicated region
        $region56: #{generator_forward.49} parent=46 // pred_check
          %p1454 = pneg %p1453
        $region57: #{generator_forward.49} parent=46 // pred_check_branch
          %1456 = sbr.rel (%p1454) target = $region59
        $region58: #{generator_forward.49} parent=46 // pred_region
          %v1457 = vld [vmem:[#allocation2] sm:$0xff]
          %v1458 = vld [vmem:[#allocation2 + $0x8] sm:$0xff]
          %v1459 = vld [vmem:[#allocation2 + $0x10] sm:$0xff]
          %v1460 = vld [vmem:[#allocation2 + $0x18] sm:$0xff]
          %v1461 = vld [vmem:[#allocation2 + $0x20] sm:$0xff]
          %v1462 = vld [vmem:[#allocation2 + $0x28] sm:$0xff]
          %v1463 = vld [vmem:[#allocation2 + $0x30] sm:$0xff]
          %v1464 = vld [vmem:[#allocation2 + $0x38] sm:$0xff]
          %v1465 = vld [vmem:[#allocation2 + $0x40] sm:$0xff]
          %v1466 = vld [vmem:[#allocation2 + $0x48] sm:$0xff]
          %v1467 = vld [vmem:[#allocation2 + $0x50] sm:$0xff]
          %v1468 = vld [vmem:[#allocation2 + $0x58] sm:$0xff]
          %v1469 = vld [vmem:[#allocation2 + $0x60] sm:$0xff]
          %v1470 = vld [vmem:[#allocation2 + $0x68] sm:$0xff]
          %v1471 = vld [vmem:[#allocation2 + $0x70] sm:$0xff]
          %v1472 = vld [vmem:[#allocation2 + $0x78] sm:$0xff]
          %v1473 = vld [vmem:[#allocation2 + $0x80] sm:$0xff]
          %v1474 = vld [vmem:[#allocation2 + $0x88] sm:$0xff]
          %v1475 = vld [vmem:[#allocation2 + $0x90] sm:$0xff]
          %v1476 = vld [vmem:[#allocation2 + $0x98] sm:$0xff]
          %v1477 = vld [vmem:[#allocation2 + $0xa0] sm:$0xff]
          %v1478 = vld [vmem:[#allocation2 + $0xa8] sm:$0xff]
          %v1479 = vld [vmem:[#allocation2 + $0xb0] sm:$0xff]
          %v1480 = vld [vmem:[#allocation2 + $0xb8] sm:$0xff]
          %v1481 = vld [vmem:[#allocation2 + $0xc0] sm:$0xff]
          %v1482 = vld [vmem:[#allocation2 + $0xc8] sm:$0xff]
          %v1483 = vld [vmem:[#allocation2 + $0xd0] sm:$0xff]
          %v1484 = vld [vmem:[#allocation2 + $0xd8] sm:$0xff]
          %v1485 = vld [vmem:[#allocation2 + $0xe0] sm:$0xff]
          %v1486 = vld [vmem:[#allocation2 + $0xe8] sm:$0xff]
          %v1487 = vld [vmem:[#allocation2 + $0xf0] sm:$0xff]
          %v1488 = vld [vmem:[#allocation2 + $0xf8] sm:$0xff]
          %v1489 = vtanh.pop %v1457
          %v1490 = vtanh.pop %v1458
          %v1491 = vtanh.pop %v1459
          %v1492 = vtanh.pop %v1460
          %v1493 = vtanh.pop %v1461
          %v1494 = vtanh.pop %v1462
          %v1495 = vtanh.pop %v1463
          %v1496 = vtanh.pop %v1464
          %v1497 = vtanh.pop %v1465
          %v1498 = vtanh.pop %v1466
          %v1499 = vtanh.pop %v1467
          %v1500 = vtanh.pop %v1468
          %v1501 = vtanh.pop %v1469
          %v1502 = vtanh.pop %v1470
          %v1503 = vtanh.pop %v1471
          %v1504 = vtanh.pop %v1472
          %v1505 = vtanh.pop %v1473
          %v1506 = vtanh.pop %v1474
          %v1507 = vtanh.pop %v1475
          %v1508 = vtanh.pop %v1476
          %v1509 = vtanh.pop %v1477
          %v1510 = vtanh.pop %v1478
          %v1511 = vtanh.pop %v1479
          %v1512 = vtanh.pop %v1480
          %v1513 = vtanh.pop %v1481
          %v1514 = vtanh.pop %v1482
          %v1515 = vtanh.pop %v1483
          %v1516 = vtanh.pop %v1484
          %v1517 = vtanh.pop %v1485
          %v1518 = vtanh.pop %v1486
          %v1519 = vtanh.pop %v1487
          %v1520 = vtanh.pop %v1488
          %1521 = vst [vmem:[%s356] sm:$0xff] %v1489
          %1522 = vst [vmem:[%s356 + $0x8] sm:$0xff] %v1490
          %1523 = vst [vmem:[%s356 + $0x10] sm:$0xff] %v1491
          %1524 = vst [vmem:[%s356 + $0x18] sm:$0xff] %v1492
          %1525 = vst [vmem:[%s356 + $0x20] sm:$0xff] %v1493
          %1526 = vst [vmem:[%s356 + $0x28] sm:$0xff] %v1494
          %1527 = vst [vmem:[%s356 + $0x30] sm:$0xff] %v1495
          %1528 = vst [vmem:[%s356 + $0x38] sm:$0xff] %v1496
          %1529 = vst [vmem:[%s356 + $0x40] sm:$0xff] %v1497
          %1530 = vst [vmem:[%s356 + $0x48] sm:$0xff] %v1498
          %1531 = vst [vmem:[%s356 + $0x50] sm:$0xff] %v1499
          %1532 = vst [vmem:[%s356 + $0x58] sm:$0xff] %v1500
          %1533 = vst [vmem:[%s356 + $0x60] sm:$0xff] %v1501
          %1534 = vst [vmem:[%s356 + $0x68] sm:$0xff] %v1502
          %1535 = vst [vmem:[%s356 + $0x70] sm:$0xff] %v1503
          %1536 = vst [vmem:[%s356 + $0x78] sm:$0xff] %v1504
          %1537 = vst [vmem:[%s356 + $0x80] sm:$0xff] %v1505
          %1538 = vst [vmem:[%s356 + $0x88] sm:$0xff] %v1506
          %1539 = vst [vmem:[%s356 + $0x90] sm:$0xff] %v1507
          %1540 = vst [vmem:[%s356 + $0x98] sm:$0xff] %v1508
          %1541 = vst [vmem:[%s356 + $0xa0] sm:$0xff] %v1509
          %1542 = vst [vmem:[%s356 + $0xa8] sm:$0xff] %v1510
          %1543 = vst [vmem:[%s356 + $0xb0] sm:$0xff] %v1511
          %1544 = vst [vmem:[%s356 + $0xb8] sm:$0xff] %v1512
          %1545 = vst [vmem:[%s356 + $0xc0] sm:$0xff] %v1513
          %1546 = vst [vmem:[%s356 + $0xc8] sm:$0xff] %v1514
          %1547 = vst [vmem:[%s356 + $0xd0] sm:$0xff] %v1515
          %1548 = vst [vmem:[%s356 + $0xd8] sm:$0xff] %v1516
          %1549 = vst [vmem:[%s356 + $0xe0] sm:$0xff] %v1517
          %1550 = vst [vmem:[%s356 + $0xe8] sm:$0xff] %v1518
          %1551 = vst [vmem:[%s356 + $0xf0] sm:$0xff] %v1519
          %1552 = vst [vmem:[%s356 + $0xf8] sm:$0xff] %v1520
        $region59: #{generator_forward.49} parent=46 // pred_fallthru
          _
        %s1553 = smul.u32 32, %s18
        %p1554 = scmp.lt.s32.totalorder %s1553, 63
        %s1555 = scalar_select %p1554, %s1553, 63
        %p1556 = scmp.lt.s32.totalorder %s19, 0
        %s1557 = scalar_select %p1556, %s19, 0
        %s1558 = sadd.s32 %s1557, %s1555
        %s1559 = smul.addr %s1558, 8
        %s1560 = scalar_lea.vmem %s2, %s1559
        // Predicated region
        $region60: #{generator_forward.49} parent=46 // pred_check
          %p1561 = pneg %p108
        $region61: #{generator_forward.49} parent=46 // pred_check_branch
          %1563 = sbr.rel (%p1561) target = $region63
        $region62: #{generator_forward.49} parent=46 // pred_region
          %s1564 = smul.u32 32, %s18
        $region63: #{generator_forward.49} parent=46 // pred_fallthru
          _
      $region47: #{generator_forward.49} parent=5 // pred_fallthru
        _
      %p1565 = scmp.le.s32.totalorder 2, %s8
      // Predicated region
      $region64: #{generator_forward.49} parent=5 // pred_check
        %p1566 = pneg %p1565
      $region65: #{generator_forward.49} parent=5 // pred_check_branch
        %1568 = sbr.rel (%p1566) target = $region67
      $region66: #{generator_forward.49} parent=5 // pred_region
        %s1569 = ssub.s32 %s8, 2
        // Predicated region
        $region68: #{generator_forward.49} parent=66 // pred_check
          %p1570 = pneg %p114
        $region69: #{generator_forward.49} parent=66 // pred_check_branch
          %1572 = sbr.rel (%p1570) target = $region71
        $region70: #{generator_forward.49} parent=66 // pred_region
          %s1573 = smul.u32 32, %s21
          %p1574 = scmp.lt.s32.totalorder %s1573, 63
          %s1575 = scalar_select %p1574, %s1573, 63
          %p1576 = scmp.lt.s32.totalorder %s22, 0
          %s1577 = scalar_select %p1576, %s22, 0
          %s1578 = sadd.s32 %s1577, %s1575
          %s1579 = smul.addr %s1578, 8
          %s1580 = scalar_lea.vmem %s2, %s1579
        $region71: #{generator_forward.49} parent=66 // pred_fallthru
          _
      $region67: #{generator_forward.49} parent=5 // pred_fallthru
        _
    $region6: #{generator_forward.49} parent=1 // loop_footer
      %s12 = sadd.s32 1, %s8
    $region7: #{generator_forward.49} parent=1 // loop_footer_branch
      %7 = sbr.rel target = $region3
    $region8: #{generator_forward.49} parent=1 // loop_exit
      _

</llo_original>
